<compile_context>
chip_gen: v7x
topology: tpu7x:2x2x1
jax: 0.10.0
libtpu: 0.0.40
codegen_flags: <defaults>
</compile_context>

<pallas_src>
import functools
import math

import jax
import jax.numpy as jnp
from jax import lax
from jax.experimental import pallas as pl
from jax.experimental.pallas import tpu as pltpu


_VMEM_LIMIT = 32 * 1024 * 1024


def _cparams():
    return pltpu.CompilerParams(dimension_semantics=("parallel",),
                                vmem_limit_bytes=_VMEM_LIMIT)


def _bn_silu(y, scale, bias):
    # y: (M, C) f32; scale/bias: (1, C) f32 folded eval-mode BatchNorm.
    y = y * scale + bias
    # sigmoid via EUP reciprocal (own bundle slot, not a VPU divide).
    return y * pl.reciprocal(1.0 + jnp.exp(-y), approx=True)


# ----------------------------------------------------------------------------
# Kernel A: fused conv1 (1x1) + conv_1 (1x1) + ECA pooled-mean side output.
# ----------------------------------------------------------------------------
def _conv1_conv_1_kernel(x_ref, w0_ref, s0_ref, b0_ref, w1_ref, s1_ref, b1_ref,
                         h0_ref, h1p_ref, pool_ref, *, H, W, out_pad):
    x = x_ref[0]                                                  # (HW, Cin) bf16
    h0 = _bn_silu(jnp.dot(x, w0_ref[...], preferred_element_type=jnp.float32),
                  s0_ref[...], b0_ref[...])                       # (HW, hid) f32
    h0_bf = h0.astype(h0_ref.dtype)
    h0_ref[0] = h0_bf
    h1 = _bn_silu(jnp.dot(h0_bf, w1_ref[...], preferred_element_type=jnp.float32),
                  s1_ref[...], b1_ref[...])                       # (HW, hid) f32
    # ECA global average pool of the raw conv_1 output (tiny side output).
    pool_ref[0] = jnp.mean(h1, axis=0, keepdims=True)
    hid = h1.shape[-1]
    # Write h1 pre-padded (zero halo) for the following dilation-2 conv.
    h1p_ref[...] = jnp.zeros_like(h1p_ref)
    h1p_ref[0, pl.ds(out_pad, H), pl.ds(out_pad, W), :] = (
        h1.reshape(H, W, hid).astype(h1p_ref.dtype))


def fused_conv1_conv_1(x_nmc, p_conv1, p_conv_1, *, H, W, out_pad):
    N, HW, Cin = x_nmc.shape
    hid = p_conv1["w"].shape[1]
    Hp, Wp = H + 2 * out_pad, W + 2 * out_pad
    kernel = functools.partial(_conv1_conv_1_kernel, H=H, W=W, out_pad=out_pad)
    return pl.pallas_call(
        kernel,
        out_shape=(
            jax.ShapeDtypeStruct((N, HW, hid), jnp.bfloat16),      # h0
            jax.ShapeDtypeStruct((N, Hp, Wp, hid), jnp.bfloat16),  # h1 (padded)
            jax.ShapeDtypeStruct((N, 1, hid), jnp.float32),        # mean(h1)
        ),
        grid=(N,),
        in_specs=[
            pl.BlockSpec((1, HW, Cin), lambda n: (n, 0, 0)),
            pl.BlockSpec((Cin, hid), lambda n: (0, 0)),
            pl.BlockSpec((1, hid), lambda n: (0, 0)),
            pl.BlockSpec((1, hid), lambda n: (0, 0)),
            pl.BlockSpec((hid, hid), lambda n: (0, 0)),
            pl.BlockSpec((1, hid), lambda n: (0, 0)),
            pl.BlockSpec((1, hid), lambda n: (0, 0)),
        ],
        out_specs=(
            pl.BlockSpec((1, HW, hid), lambda n: (n, 0, 0)),
            pl.BlockSpec((1, Hp, Wp, hid), lambda n: (n, 0, 0, 0)),
            pl.BlockSpec((1, 1, hid), lambda n: (n, 0, 0)),
        ),
        compiler_params=_cparams(),
    )(x_nmc,
      p_conv1["w"].astype(jnp.bfloat16), p_conv1["scale"], p_conv1["bias"],
      p_conv_1["w"].astype(jnp.bfloat16), p_conv_1["scale"], p_conv_1["bias"])


# ----------------------------------------------------------------------------
# Kernel B: 3x3 dilated conv; previous layer's ECA attention applied to the
# input, taps folded into one contraction, pooled-mean side output, output
# optionally pre-padded for the next dilated conv.
# ----------------------------------------------------------------------------
def _dilated_conv_kernel(xp_ref, attn_ref, w_ref, s_ref, b_ref,
                         yp_ref, pool_ref, *, H, W, dia, out_pad):
    hid = pool_ref.shape[-1]
    # Apply the previous layer's ECA attention (zero halo stays zero).
    xs = xp_ref[0].astype(jnp.float32) * attn_ref[...]            # (Hp, Wp, hid) f32
    # 9 dilated taps as in-VMEM slices, folded into one (HW, 9*hid) matrix.
    taps = []
    for ky in range(3):
        for kx in range(3):
            taps.append(xs[ky * dia:ky * dia + H, kx * dia:kx * dia + W, :]
                        .reshape(H * W, hid))
    patches = jnp.concatenate(taps, axis=-1).astype(w_ref.dtype)  # (HW, 9*hid) bf16
    y = _bn_silu(jnp.dot(patches, w_ref[...], preferred_element_type=jnp.float32),
                 s_ref[...], b_ref[...])                          # (HW, hid) f32
    pool_ref[0] = jnp.mean(y, axis=0, keepdims=True)
    y_im = y.reshape(H, W, hid).astype(yp_ref.dtype)
    if out_pad:
        yp_ref[...] = jnp.zeros_like(yp_ref)
        yp_ref[0, pl.ds(out_pad, H), pl.ds(out_pad, W), :] = y_im
    else:
        yp_ref[0] = y_im


def dilated_conv(xp, attn, p, *, H, W, dia, out_pad):
    N, Hpi, Wpi, hid = xp.shape
    Hpo, Wpo = H + 2 * out_pad, W + 2 * out_pad
    kernel = functools.partial(_dilated_conv_kernel, H=H, W=W, dia=dia,
                               out_pad=out_pad)
    return pl.pallas_call(
        kernel,
        out_shape=(
            jax.ShapeDtypeStruct((N, Hpo, Wpo, hid), jnp.bfloat16),
            jax.ShapeDtypeStruct((N, 1, hid), jnp.float32),
        ),
        grid=(N,),
        in_specs=[
            pl.BlockSpec((1, Hpi, Wpi, hid), lambda n: (n, 0, 0, 0)),
            pl.BlockSpec((1, 1, hid), lambda n: (n, 0, 0)),
            pl.BlockSpec((9 * hid, hid), lambda n: (0, 0)),
            pl.BlockSpec((1, hid), lambda n: (0, 0)),
            pl.BlockSpec((1, hid), lambda n: (0, 0)),
        ],
        out_specs=(
            pl.BlockSpec((1, Hpo, Wpo, hid), lambda n: (n, 0, 0, 0)),
            pl.BlockSpec((1, 1, hid), lambda n: (n, 0, 0)),
        ),
        compiler_params=_cparams(),
    )(xp, attn, p["w"].astype(jnp.bfloat16), p["scale"], p["bias"])


# ----------------------------------------------------------------------------
# Kernel C: final 1x1 conv over the (never materialized) channel concat of
# [h0, eca_1(h1), eca_2(h2), eca_3(h3)] -- four accumulating weight-slab dots.
# ----------------------------------------------------------------------------
def _concat_conv2_kernel(h0_ref, h1p_ref, h2p_ref, h3_ref,
                         a1_ref, a2_ref, a3_ref, w_ref, s_ref, b_ref,
                         o_ref, *, H, W, pad1, pad2):
    hid = h0_ref.shape[-1]
    HW = H * W
    f0 = h0_ref[0]                                                        # bf16
    f1 = (h1p_ref[0, pl.ds(pad1, H), pl.ds(pad1, W), :]
          .astype(jnp.float32).reshape(HW, hid) * a1_ref[0]).astype(jnp.bfloat16)
    f2 = (h2p_ref[0, pl.ds(pad2, H), pl.ds(pad2, W), :]
          .astype(jnp.float32).reshape(HW, hid) * a2_ref[0]).astype(jnp.bfloat16)
    f3 = (h3_ref[0].astype(jnp.float32).reshape(HW, hid)
          * a3_ref[0]).astype(jnp.bfloat16)
    acc = jnp.zeros((HW, o_ref.shape[-1]), jnp.float32)
    for t, f in enumerate((f0, f1, f2, f3)):
        acc = acc + jnp.dot(f, w_ref[pl.ds(t * hid, hid), :],
                            preferred_element_type=jnp.float32)
    y = _bn_silu(acc, s_ref[...], b_ref[...])
    o_ref[0] = y.astype(o_ref.dtype)


def concat_conv2(h0, h1p, h2p, h3, a1, a2, a3, p, *, H, W, pad1, pad2):
    N, HW, hid = h0.shape
    cout = p["w"].shape[-1]
    kernel = functools.partial(_concat_conv2_kernel, H=H, W=W, pad1=pad1, pad2=pad2)
    return pl.pallas_call(
        kernel,
        out_shape=jax.ShapeDtypeStruct((N, HW, cout), jnp.float32),
        grid=(N,),
        in_specs=[
            pl.BlockSpec((1, HW, hid), lambda n: (n, 0, 0)),
            pl.BlockSpec((1, H + 2 * pad1, W + 2 * pad1, hid), lambda n: (n, 0, 0, 0)),
            pl.BlockSpec((1, H + 2 * pad2, W + 2 * pad2, hid), lambda n: (n, 0, 0, 0)),
            pl.BlockSpec((1, H, W, hid), lambda n: (n, 0, 0, 0)),
            pl.BlockSpec((1, 1, hid), lambda n: (n, 0, 0)),
            pl.BlockSpec((1, 1, hid), lambda n: (n, 0, 0)),
            pl.BlockSpec((1, 1, hid), lambda n: (n, 0, 0)),
            pl.BlockSpec((4 * hid, cout), lambda n: (0, 0)),
            pl.BlockSpec((1, cout), lambda n: (0, 0)),
            pl.BlockSpec((1, cout), lambda n: (0, 0)),
        ],
        out_specs=pl.BlockSpec((1, HW, cout), lambda n: (n, 0, 0)),
        compiler_params=_cparams(),
    )(h0, h1p, h2p, h3, a1, a2, a3,
      p["w"].astype(jnp.bfloat16), p["scale"], p["bias"])


# ----------------------------------------------------------------------------
# Plain-JAX glue: ECA attention on pooled vectors, BN folding, parameters.
# ----------------------------------------------------------------------------
def eca_attention(pooled, w1d):
    # pooled: (N, 1, C) f32 per-image channel means of the raw conv output.
    # Tiny k-tap 1-D conv + sigmoid: computed in plain JAX (no Toeplitz matmul).
    N, _, C = pooled.shape
    p = pooled.reshape(N, C)
    k = w1d.shape[0]
    pad = (k - 1) // 2
    pp = jnp.pad(p, ((0, 0), (pad, pad)))
    z = jnp.zeros_like(p)
    for t in range(k):
        z = z + w1d[t] * pp[:, t:t + C]
    return jax.nn.sigmoid(z).reshape(N, 1, C)


def fold_bn(gamma, beta, mean, var, eps=1e-3):
    scale = gamma / jnp.sqrt(var + eps)
    bias = beta - mean * scale
    return scale[None, :], bias[None, :]


def make_params(key, in_channels, out_channels):
    hidden = in_channels // 2
    keys = iter(jax.random.split(key, 40))

    def bn(cout):
        gamma = 1.0 + 0.1 * jax.random.normal(next(keys), (cout,), jnp.float32)
        beta = 0.1 * jax.random.normal(next(keys), (cout,), jnp.float32)
        mean = 0.1 * jax.random.normal(next(keys), (cout,), jnp.float32)
        var = 0.5 + 0.5 * jnp.abs(jax.random.normal(next(keys), (cout,), jnp.float32))
        return fold_bn(gamma, beta, mean, var, eps=1e-3)   # BatchNorm2d eps=0.001

    def pw_p(cin, cout):
        w = 0.3 * jax.random.normal(next(keys), (cin, cout), jnp.float32)
        scale, bias = bn(cout)
        return {"w": w, "scale": scale, "bias": bias}

    def dconv_p(cin, cout):
        w_torch = 0.2 * jax.random.normal(next(keys), (cout, cin, 3, 3), jnp.float32)
        # (ky, kx, cin, cout) flattened so row (ky*3+kx)*cin + ci matches the
        # tap-concat order built inside the dilated conv kernel.
        w_taps = jnp.transpose(w_torch, (2, 3, 1, 0)).reshape(9 * cin, cout)
        scale, bias = bn(cout)
        return {"w": w_taps, "scale": scale, "bias": bias}

    def eca_p(channel):
        k = int(abs((math.log(channel, 2) + 1) / 2))
        k = k if k % 2 else k + 1
        w1d = 0.5 * jax.random.normal(next(keys), (k,), jnp.float32)
        return {"w1d": w1d}

    return {
        "conv1": pw_p(in_channels, hidden),
        "conv_1": pw_p(hidden, hidden),
        "conv_2": dconv_p(hidden, hidden),
        "conv_3": dconv_p(hidden, hidden),
        "conv2": pw_p(4 * hidden, out_channels),
        "eca_1": eca_p(hidden),
        "eca_2": eca_p(hidden),
        "eca_3": eca_p(hidden),
    }


# ----------------------------------------------------------------------------
# SPPBottleneck forward using the Pallas kernels
# ----------------------------------------------------------------------------
def spp_bottleneck_pallas(x_nchw, params):
    N, Cin, H, W = x_nchw.shape
    HW = H * W
    x = jnp.transpose(x_nchw, (0, 2, 3, 1)).reshape(N, HW, Cin).astype(jnp.bfloat16)

    # conv1 -> conv_1 fused; h1 comes out pre-padded for the dilation-2 conv.
    h0, h1p, pool1 = fused_conv1_conv_1(x, params["conv1"], params["conv_1"],
                                        H=H, W=W, out_pad=2)
    attn1 = eca_attention(pool1, params["eca_1"]["w1d"])             # eca_1

    # conv_2 (3x3, dia=2): eca_1 applied to its input; output padded for conv_3.
    h2p, pool2 = dilated_conv(h1p, attn1, params["conv_2"], H=H, W=W,
                              dia=2, out_pad=3)
    attn2 = eca_attention(pool2, params["eca_2"]["w1d"])             # eca_2

    # conv_3 (3x3, dia=3): eca_2 applied to its input.
    h3, pool3 = dilated_conv(h2p, attn2, params["conv_3"], H=H, W=W,
                             dia=3, out_pad=0)
    attn3 = eca_attention(pool3, params["eca_3"]["w1d"])             # eca_3

    # Final 1x1 conv over [h0, eca_1(h1), eca_2(h2), eca_3(h3)] (never concatenated).
    out = concat_conv2(h0, h1p, h2p, h3, attn1, attn2, attn3, params["conv2"],
                       H=H, W=W, pad1=2, pad2=3)
    out = out.reshape(N, H, W, -1)
    return jnp.transpose(out, (0, 3, 1, 2))                          # NCHW, f32


# ----------------------------------------------------------------------------
# Pure-JAX f32 reference (for validation)
# ----------------------------------------------------------------------------
def spp_bottleneck_ref(x_nchw, params):
    x = jnp.transpose(x_nchw, (0, 2, 3, 1))

    def silu(v):
        return v * (1.0 / (1.0 + jnp.exp(-v)))

    def pw_ref(h, p):
        y = jnp.einsum("nhwc,co->nhwo", h, p["w"])
        return silu(y * p["scale"][0] + p["bias"][0])

    def dconv_ref(h, p, dia):
        cin = h.shape[-1]
        cout = p["scale"].shape[-1]
        w = p["w"].reshape(3, 3, cin, cout)            # HWIO
        y = lax.conv_general_dilated(h, w, (1, 1), [(dia, dia), (dia, dia)],
                                     rhs_dilation=(dia, dia),
                                     dimension_numbers=("NHWC", "HWIO", "NHWC"))
        return silu(y * p["scale"][0] + p["bias"][0])

    def eca_ref(h, w1d):
        N, H, W, C = h.shape
        pooled = jnp.mean(h, axis=(1, 2))
        k = w1d.shape[0]
        pad = (k - 1) // 2
        pp = jnp.pad(pooled, ((0, 0), (pad, pad)))
        out = jnp.zeros_like(pooled)
        for t in range(k):
            out = out + w1d[t] * pp[:, t:t + C]
        attn = 1.0 / (1.0 + jnp.exp(-out))
        return h * attn[:, None, None, :]

    h0 = pw_ref(x, params["conv1"])
    h1 = eca_ref(pw_ref(h0, params["conv_1"]), params["eca_1"]["w1d"])
    h2 = eca_ref(dconv_ref(h1, params["conv_2"], 2), params["eca_2"]["w1d"])
    h3 = eca_ref(dconv_ref(h2, params["conv_3"], 3), params["eca_3"]["w1d"])
    cat = jnp.concatenate([h0, h1, h2, h3], axis=-1)
    out = pw_ref(cat, params["conv2"])
    return jnp.transpose(out, (0, 3, 1, 2))


if __name__ == "__main__":
    key = jax.random.PRNGKey(0)
    kx, kp = jax.random.split(key)

    N, C_IN, H, W = 2, 16, 16, 16      # hidden = 8 -> ECA kernel size 3
    C_OUT = 16
    x = jax.random.normal(kx, (N, C_IN, H, W), jnp.float32)
    params = make_params(kp, C_IN, C_OUT)

    out = jax.block_until_ready(jax.jit(spp_bottleneck_pallas)(x, params))
    ref = spp_bottleneck_ref(x, params)

    assert out.shape == (N, C_OUT, H, W), out.shape
    assert bool(jnp.all(jnp.isfinite(out)))
    max_err = float(jnp.max(jnp.abs(out - ref)))
    # bf16 activations/weights in the Pallas path vs an f32 reference.
    assert jnp.allclose(out, ref, rtol=5e-2, atol=5e-2), f"max abs err {max_err}"
    print("KERNEL_OK")
</pallas_src>

<mosaic_0001>
module attributes {stable_mosaic.version = 11 : i64} {
  func.func @_conv1_conv_1_kernel(%arg0: i32, %arg1: memref<1x256x16xbf16, #tpu.memory_space<vmem>>, %arg2: memref<16x8xbf16, #tpu.memory_space<vmem>>, %arg3: memref<1x8xf32, #tpu.memory_space<vmem>>, %arg4: memref<1x8xf32, #tpu.memory_space<vmem>>, %arg5: memref<8x8xbf16, #tpu.memory_space<vmem>>, %arg6: memref<1x8xf32, #tpu.memory_space<vmem>>, %arg7: memref<1x8xf32, #tpu.memory_space<vmem>>, %arg8: memref<1x256x8xbf16, #tpu.memory_space<vmem>>, %arg9: memref<1x20x20x8xbf16, #tpu.memory_space<vmem>>, %arg10: memref<1x1x8xf32, #tpu.memory_space<vmem>>) attributes {dimension_semantics = [#tpu.dimension_semantics<parallel>], iteration_bounds = array<i64: 2>, scalar_prefetch = 0 : i64, scratch_operands = 0 : i64, tpu.core_type = #tpu.core_type<tc>, window_params = [{transform_indices = @transform_0, window_bounds = array<i64: 1, 256, 16>}, {pipeline_mode = #tpu.pipeline_mode<synchronous>, transform_indices = @transform_1, window_bounds = array<i64: 16, 8>}, {pipeline_mode = #tpu.pipeline_mode<synchronous>, transform_indices = @transform_2, window_bounds = array<i64: 1, 8>}, {pipeline_mode = #tpu.pipeline_mode<synchronous>, transform_indices = @transform_3, window_bounds = array<i64: 1, 8>}, {pipeline_mode = #tpu.pipeline_mode<synchronous>, transform_indices = @transform_4, window_bounds = array<i64: 8, 8>}, {pipeline_mode = #tpu.pipeline_mode<synchronous>, transform_indices = @transform_5, window_bounds = array<i64: 1, 8>}, {pipeline_mode = #tpu.pipeline_mode<synchronous>, transform_indices = @transform_6, window_bounds = array<i64: 1, 8>}, {transform_indices = @transform_7, window_bounds = array<i64: 1, 256, 8>}, {transform_indices = @transform_8, window_bounds = array<i64: 1, 20, 20, 8>}, {transform_indices = @transform_9, window_bounds = array<i64: 1, 1, 8>}]} {
    %c0 = arith.constant 0 : index
    %c0_0 = arith.constant 0 : index
    %c0_1 = arith.constant 0 : index
    %0 = vector.load %arg1[%c0, %c0_0, %c0_1] : memref<1x256x16xbf16, #tpu.memory_space<vmem>>, vector<1x256x16xbf16>
    %1 = vector.shape_cast %0 : vector<1x256x16xbf16> to vector<256x16xbf16>
    %c0_2 = arith.constant 0 : index
    %c0_3 = arith.constant 0 : index
    %2 = vector.load %arg2[%c0_2, %c0_3] : memref<16x8xbf16, #tpu.memory_space<vmem>>, vector<16x8xbf16>
    %cst = arith.constant dense<0.000000e+00> : vector<256x8xf32>
    %3 = tpu.matmul %1, %2, %cst {dimension_numbers = #tpu.dot_dimension_numbers<[1], [0], [0], [1], [0, 0, 1, 1], [], []>} : vector<256x16xbf16>, vector<16x8xbf16>, vector<256x8xf32> -> vector<256x8xf32>
    %c0_4 = arith.constant 0 : index
    %c0_5 = arith.constant 0 : index
    %4 = vector.load %arg3[%c0_4, %c0_5] : memref<1x8xf32, #tpu.memory_space<vmem>>, vector<1x8xf32>
    %c0_6 = arith.constant 0 : index
    %c0_7 = arith.constant 0 : index
    %5 = vector.load %arg4[%c0_6, %c0_7] : memref<1x8xf32, #tpu.memory_space<vmem>>, vector<1x8xf32>
    %6 = vector.broadcast %4 : vector<1x8xf32> to vector<256x8xf32>
    %7 = arith.mulf %3, %6 : vector<256x8xf32>
    %8 = vector.broadcast %5 : vector<1x8xf32> to vector<256x8xf32>
    %9 = arith.addf %7, %8 : vector<256x8xf32>
    %cst_8 = arith.constant 0.000000e+00 : f32
    %10 = vector.broadcast %cst_8 : f32 to vector<256x8xf32>
    %11 = arith.subf %10, %9 : vector<256x8xf32>
    %12 = math.exp %11 : vector<256x8xf32>
    %cst_9 = arith.constant 1.000000e+00 : f32
    %13 = vector.broadcast %cst_9 : f32 to vector<256x8xf32>
    %14 = arith.addf %13, %12 : vector<256x8xf32>
    %15 = tpu.reciprocal %14 {approx = true} : vector<256x8xf32> -> vector<256x8xf32>
    %16 = arith.mulf %9, %15 : vector<256x8xf32>
    %17 = arith.truncf %16 : vector<256x8xf32> to vector<256x8xbf16>
    %c0_10 = arith.constant 0 : index
    %c0_11 = arith.constant 0 : index
    %c0_12 = arith.constant 0 : index
    %18 = vector.load %arg8[%c0_10, %c0_11, %c0_12] : memref<1x256x8xbf16, #tpu.memory_space<vmem>>, vector<1x256x8xbf16>
    %19 = vector.shape_cast %18 : vector<1x256x8xbf16> to vector<256x8xbf16>
    %20 = vector.shape_cast %17 : vector<256x8xbf16> to vector<1x256x8xbf16>
    tpu.vector_store %arg8[%c0_10, %c0_11, %c0_12], %20 {strides = array<i32>} : memref<1x256x8xbf16, #tpu.memory_space<vmem>>, vector<1x256x8xbf16>,
    %c0_13 = arith.constant 0 : index
    %c0_14 = arith.constant 0 : index
    %21 = vector.load %arg5[%c0_13, %c0_14] : memref<8x8xbf16, #tpu.memory_space<vmem>>, vector<8x8xbf16>
    %cst_15 = arith.constant dense<0.000000e+00> : vector<256x8xf32>
    %22 = tpu.matmul %17, %21, %cst_15 {dimension_numbers = #tpu.dot_dimension_numbers<[1], [0], [0], [1], [0, 0, 1, 1], [], []>} : vector<256x8xbf16>, vector<8x8xbf16>, vector<256x8xf32> -> vector<256x8xf32>
    %c0_16 = arith.constant 0 : index
    %c0_17 = arith.constant 0 : index
    %23 = vector.load %arg6[%c0_16, %c0_17] : memref<1x8xf32, #tpu.memory_space<vmem>>, vector<1x8xf32>
    %c0_18 = arith.constant 0 : index
    %c0_19 = arith.constant 0 : index
    %24 = vector.load %arg7[%c0_18, %c0_19] : memref<1x8xf32, #tpu.memory_space<vmem>>, vector<1x8xf32>
    %25 = vector.broadcast %23 : vector<1x8xf32> to vector<256x8xf32>
    %26 = arith.mulf %22, %25 : vector<256x8xf32>
    %27 = vector.broadcast %24 : vector<1x8xf32> to vector<256x8xf32>
    %28 = arith.addf %26, %27 : vector<256x8xf32>
    %cst_20 = arith.constant 0.000000e+00 : f32
    %29 = vector.broadcast %cst_20 : f32 to vector<256x8xf32>
    %30 = arith.subf %29, %28 : vector<256x8xf32>
    %31 = math.exp %30 : vector<256x8xf32>
    %cst_21 = arith.constant 1.000000e+00 : f32
    %32 = vector.broadcast %cst_21 : f32 to vector<256x8xf32>
    %33 = arith.addf %32, %31 : vector<256x8xf32>
    %34 = tpu.reciprocal %33 {approx = true} : vector<256x8xf32> -> vector<256x8xf32>
    %35 = arith.mulf %28, %34 : vector<256x8xf32>
    %cst_22 = arith.constant dense<0.000000e+00> : vector<8xf32>
    %36 = vector.multi_reduction <add>, %35, %cst_22 [0] : vector<256x8xf32> to vector<8xf32>
    %37 = vector.shape_cast %36 : vector<8xf32> to vector<1x8xf32>
    %cst_23 = arith.constant 2.560000e+02 : f32
    %38 = vector.broadcast %cst_23 : f32 to vector<1x8xf32>
    %39 = arith.divf %37, %38 : vector<1x8xf32>
    %c0_24 = arith.constant 0 : index
    %c0_25 = arith.constant 0 : index
    %c0_26 = arith.constant 0 : index
    %40 = vector.load %arg10[%c0_24, %c0_25, %c0_26] : memref<1x1x8xf32, #tpu.memory_space<vmem>>, vector<1x1x8xf32>
    %41 = vector.shape_cast %40 : vector<1x1x8xf32> to vector<1x8xf32>
    %42 = vector.shape_cast %39 : vector<1x8xf32> to vector<1x1x8xf32>
    tpu.vector_store %arg10[%c0_24, %c0_25, %c0_26], %42 {strides = array<i32>} : memref<1x1x8xf32, #tpu.memory_space<vmem>>, vector<1x1x8xf32>,
    %cst_27 = arith.constant 0.000000e+00 : bf16
    %43 = vector.broadcast %cst_27 : bf16 to vector<1x20x20x8xbf16>
    %c0_28 = arith.constant 0 : index
    %c0_29 = arith.constant 0 : index
    %c0_30 = arith.constant 0 : index
    %c0_31 = arith.constant 0 : index
    %44 = vector.load %arg9[%c0_28, %c0_29, %c0_30, %c0_31] : memref<1x20x20x8xbf16, #tpu.memory_space<vmem>>, vector<1x20x20x8xbf16>
    tpu.vector_store %arg9[%c0_28, %c0_29, %c0_30, %c0_31], %43 {strides = array<i32>} : memref<1x20x20x8xbf16, #tpu.memory_space<vmem>>, vector<1x20x20x8xbf16>,
    %45 = vector.shape_cast %35 : vector<256x8xf32> to vector<16x16x8xf32>
    %46 = arith.truncf %45 : vector<16x16x8xf32> to vector<16x16x8xbf16>
    %c0_32 = arith.constant 0 : index
    %c2 = arith.constant 2 : index
    %c2_33 = arith.constant 2 : index
    %c0_34 = arith.constant 0 : index
    %47 = vector.load %arg9[%c0_32, %c2, %c2_33, %c0_34] : memref<1x20x20x8xbf16, #tpu.memory_space<vmem>>, vector<1x16x16x8xbf16>
    %48 = vector.shape_cast %47 : vector<1x16x16x8xbf16> to vector<16x16x8xbf16>
    %49 = vector.shape_cast %46 : vector<16x16x8xbf16> to vector<1x16x16x8xbf16>
    tpu.vector_store %arg9[%c0_32, %c2, %c2_33, %c0_34], %49 {strides = array<i32>} : memref<1x20x20x8xbf16, #tpu.memory_space<vmem>>, vector<1x16x16x8xbf16>,
    return
  }
  func.func @transform_0(%arg0: i32) -> (i32, i32, i32) {
    %c0_i32 = arith.constant 0 : i32
    %c0_i32_0 = arith.constant 0 : i32
    %c0_i32_1 = arith.constant 0 : i32
    return %arg0, %c0_i32, %c0_i32_0 : i32, i32, i32
  }
  func.func @transform_1(%arg0: i32) -> (i32, i32) {
    %c0_i32 = arith.constant 0 : i32
    %c0_i32_0 = arith.constant 0 : i32
    %c0_i32_1 = arith.constant 0 : i32
    return %c0_i32, %c0_i32_0 : i32, i32
  }
  func.func @transform_2(%arg0: i32) -> (i32, i32) {
    %c0_i32 = arith.constant 0 : i32
    %c0_i32_0 = arith.constant 0 : i32
    %c0_i32_1 = arith.constant 0 : i32
    return %c0_i32, %c0_i32_0 : i32, i32
  }
  func.func @transform_3(%arg0: i32) -> (i32, i32) {
    %c0_i32 = arith.constant 0 : i32
    %c0_i32_0 = arith.constant 0 : i32
    %c0_i32_1 = arith.constant 0 : i32
    return %c0_i32, %c0_i32_0 : i32, i32
  }
  func.func @transform_4(%arg0: i32) -> (i32, i32) {
    %c0_i32 = arith.constant 0 : i32
    %c0_i32_0 = arith.constant 0 : i32
    %c0_i32_1 = arith.constant 0 : i32
    return %c0_i32, %c0_i32_0 : i32, i32
  }
  func.func @transform_5(%arg0: i32) -> (i32, i32) {
    %c0_i32 = arith.constant 0 : i32
    %c0_i32_0 = arith.constant 0 : i32
    %c0_i32_1 = arith.constant 0 : i32
    return %c0_i32, %c0_i32_0 : i32, i32
  }
  func.func @transform_6(%arg0: i32) -> (i32, i32) {
    %c0_i32 = arith.constant 0 : i32
    %c0_i32_0 = arith.constant 0 : i32
    %c0_i32_1 = arith.constant 0 : i32
    return %c0_i32, %c0_i32_0 : i32, i32
  }
  func.func @transform_7(%arg0: i32) -> (i32, i32, i32) {
    %c0_i32 = arith.constant 0 : i32
    %c0_i32_0 = arith.constant 0 : i32
    %c0_i32_1 = arith.constant 0 : i32
    return %arg0, %c0_i32, %c0_i32_0 : i32, i32, i32
  }
  func.func @transform_8(%arg0: i32) -> (i32, i32, i32, i32) {
    %c0_i32 = arith.constant 0 : i32
    %c0_i32_0 = arith.constant 0 : i32
    %c0_i32_1 = arith.constant 0 : i32
    %c0_i32_2 = arith.constant 0 : i32
    return %arg0, %c0_i32, %c0_i32_0, %c0_i32_1 : i32, i32, i32, i32
  }
  func.func @transform_9(%arg0: i32) -> (i32, i32, i32) {
    %c0_i32 = arith.constant 0 : i32
    %c0_i32_0 = arith.constant 0 : i32
    %c0_i32_1 = arith.constant 0 : i32
    return %arg0, %c0_i32, %c0_i32_0 : i32, i32, i32
  }
}

module attributes {stable_mosaic.version = 11 : i64} {
  func.func @_dilated_conv_kernel(%arg0: i32, %arg1: memref<1x20x20x8xbf16, #tpu.memory_space<vmem>>, %arg2: memref<1x1x8xf32, #tpu.memory_space<vmem>>, %arg3: memref<72x8xbf16, #tpu.memory_space<vmem>>, %arg4: memref<1x8xf32, #tpu.memory_space<vmem>>, %arg5: memref<1x8xf32, #tpu.memory_space<vmem>>, %arg6: memref<1x22x22x8xbf16, #tpu.memory_space<vmem>>, %arg7: memref<1x1x8xf32, #tpu.memory_space<vmem>>) attributes {dimension_semantics = [#tpu.dimension_semantics<parallel>], iteration_bounds = array<i64: 2>, scalar_prefetch = 0 : i64, scratch_operands = 0 : i64, tpu.core_type = #tpu.core_type<tc>, window_params = [{transform_indices = @transform_0, window_bounds = array<i64: 1, 20, 20, 8>}, {transform_indices = @transform_1, window_bounds = array<i64: 1, 1, 8>}, {pipeline_mode = #tpu.pipeline_mode<synchronous>, transform_indices = @transform_2, window_bounds = array<i64: 72, 8>}, {pipeline_mode = #tpu.pipeline_mode<synchronous>, transform_indices = @transform_3, window_bounds = array<i64: 1, 8>}, {pipeline_mode = #tpu.pipeline_mode<synchronous>, transform_indices = @transform_4, window_bounds = array<i64: 1, 8>}, {transform_indices = @transform_5, window_bounds = array<i64: 1, 22, 22, 8>}, {transform_indices = @transform_6, window_bounds = array<i64: 1, 1, 8>}]} {
    %c0 = arith.constant 0 : index
    %c0_0 = arith.constant 0 : index
    %c0_1 = arith.constant 0 : index
    %c0_2 = arith.constant 0 : index
    %0 = vector.load %arg1[%c0, %c0_0, %c0_1, %c0_2] : memref<1x20x20x8xbf16, #tpu.memory_space<vmem>>, vector<1x20x20x8xbf16>
    %1 = vector.shape_cast %0 : vector<1x20x20x8xbf16> to vector<20x20x8xbf16>
    %2 = arith.extf %1 : vector<20x20x8xbf16> to vector<20x20x8xf32>
    %c0_3 = arith.constant 0 : index
    %c0_4 = arith.constant 0 : index
    %c0_5 = arith.constant 0 : index
    %3 = vector.load %arg2[%c0_3, %c0_4, %c0_5] : memref<1x1x8xf32, #tpu.memory_space<vmem>>, vector<1x1x8xf32>
    %4 = vector.broadcast %3 : vector<1x1x8xf32> to vector<20x20x8xf32>
    %5 = arith.mulf %2, %4 : vector<20x20x8xf32>
    %6 = vector.extract_strided_slice %5 {offsets = [0, 0, 0], sizes = [16, 16, 8], strides = [1, 1, 1]} : vector<20x20x8xf32> to vector<16x16x8xf32>
    %7 = vector.shape_cast %6 : vector<16x16x8xf32> to vector<256x8xf32>
    %8 = vector.extract_strided_slice %5 {offsets = [0, 2, 0], sizes = [16, 16, 8], strides = [1, 1, 1]} : vector<20x20x8xf32> to vector<16x16x8xf32>
    %9 = vector.shape_cast %8 : vector<16x16x8xf32> to vector<256x8xf32>
    %10 = vector.extract_strided_slice %5 {offsets = [0, 4, 0], sizes = [16, 16, 8], strides = [1, 1, 1]} : vector<20x20x8xf32> to vector<16x16x8xf32>
    %11 = vector.shape_cast %10 : vector<16x16x8xf32> to vector<256x8xf32>
    %12 = vector.extract_strided_slice %5 {offsets = [2, 0, 0], sizes = [16, 16, 8], strides = [1, 1, 1]} : vector<20x20x8xf32> to vector<16x16x8xf32>
    %13 = vector.shape_cast %12 : vector<16x16x8xf32> to vector<256x8xf32>
    %14 = vector.extract_strided_slice %5 {offsets = [2, 2, 0], sizes = [16, 16, 8], strides = [1, 1, 1]} : vector<20x20x8xf32> to vector<16x16x8xf32>
    %15 = vector.shape_cast %14 : vector<16x16x8xf32> to vector<256x8xf32>
    %16 = vector.extract_strided_slice %5 {offsets = [2, 4, 0], sizes = [16, 16, 8], strides = [1, 1, 1]} : vector<20x20x8xf32> to vector<16x16x8xf32>
    %17 = vector.shape_cast %16 : vector<16x16x8xf32> to vector<256x8xf32>
    %18 = vector.extract_strided_slice %5 {offsets = [4, 0, 0], sizes = [16, 16, 8], strides = [1, 1, 1]} : vector<20x20x8xf32> to vector<16x16x8xf32>
    %19 = vector.shape_cast %18 : vector<16x16x8xf32> to vector<256x8xf32>
    %20 = vector.extract_strided_slice %5 {offsets = [4, 2, 0], sizes = [16, 16, 8], strides = [1, 1, 1]} : vector<20x20x8xf32> to vector<16x16x8xf32>
    %21 = vector.shape_cast %20 : vector<16x16x8xf32> to vector<256x8xf32>
    %22 = vector.extract_strided_slice %5 {offsets = [4, 4, 0], sizes = [16, 16, 8], strides = [1, 1, 1]} : vector<20x20x8xf32> to vector<16x16x8xf32>
    %23 = vector.shape_cast %22 : vector<16x16x8xf32> to vector<256x8xf32>
    %24 = tpu.concatenate %7, %9, %11, %13, %15, %17, %19, %21, %23 in 1 : vector<256x8xf32>, vector<256x8xf32>, vector<256x8xf32>, vector<256x8xf32>, vector<256x8xf32>, vector<256x8xf32>, vector<256x8xf32>, vector<256x8xf32>, vector<256x8xf32> -> vector<256x72xf32>
    %25 = arith.truncf %24 : vector<256x72xf32> to vector<256x72xbf16>
    %c0_6 = arith.constant 0 : index
    %c0_7 = arith.constant 0 : index
    %26 = vector.load %arg3[%c0_6, %c0_7] : memref<72x8xbf16, #tpu.memory_space<vmem>>, vector<72x8xbf16>
    %cst = arith.constant dense<0.000000e+00> : vector<256x8xf32>
    %27 = tpu.matmul %25, %26, %cst {dimension_numbers = #tpu.dot_dimension_numbers<[1], [0], [0], [1], [0, 0, 1, 1], [], []>} : vector<256x72xbf16>, vector<72x8xbf16>, vector<256x8xf32> -> vector<256x8xf32>
    %c0_8 = arith.constant 0 : index
    %c0_9 = arith.constant 0 : index
    %28 = vector.load %arg4[%c0_8, %c0_9] : memref<1x8xf32, #tpu.memory_space<vmem>>, vector<1x8xf32>
    %c0_10 = arith.constant 0 : index
    %c0_11 = arith.constant 0 : index
    %29 = vector.load %arg5[%c0_10, %c0_11] : memref<1x8xf32, #tpu.memory_space<vmem>>, vector<1x8xf32>
    %30 = vector.broadcast %28 : vector<1x8xf32> to vector<256x8xf32>
    %31 = arith.mulf %27, %30 : vector<256x8xf32>
    %32 = vector.broadcast %29 : vector<1x8xf32> to vector<256x8xf32>
    %33 = arith.addf %31, %32 : vector<256x8xf32>
    %cst_12 = arith.constant 0.000000e+00 : f32
    %34 = vector.broadcast %cst_12 : f32 to vector<256x8xf32>
    %35 = arith.subf %34, %33 : vector<256x8xf32>
    %36 = math.exp %35 : vector<256x8xf32>
    %cst_13 = arith.constant 1.000000e+00 : f32
    %37 = vector.broadcast %cst_13 : f32 to vector<256x8xf32>
    %38 = arith.addf %37, %36 : vector<256x8xf32>
    %39 = tpu.reciprocal %38 {approx = true} : vector<256x8xf32> -> vector<256x8xf32>
    %40 = arith.mulf %33, %39 : vector<256x8xf32>
    %cst_14 = arith.constant dense<0.000000e+00> : vector<8xf32>
    %41 = vector.multi_reduction <add>, %40, %cst_14 [0] : vector<256x8xf32> to vector<8xf32>
    %42 = vector.shape_cast %41 : vector<8xf32> to vector<1x8xf32>
    %cst_15 = arith.constant 2.560000e+02 : f32
    %43 = vector.broadcast %cst_15 : f32 to vector<1x8xf32>
    %44 = arith.divf %42, %43 : vector<1x8xf32>
    %c0_16 = arith.constant 0 : index
    %c0_17 = arith.constant 0 : index
    %c0_18 = arith.constant 0 : index
    %45 = vector.load %arg7[%c0_16, %c0_17, %c0_18] : memref<1x1x8xf32, #tpu.memory_space<vmem>>, vector<1x1x8xf32>
    %46 = vector.shape_cast %45 : vector<1x1x8xf32> to vector<1x8xf32>
    %47 = vector.shape_cast %44 : vector<1x8xf32> to vector<1x1x8xf32>
    tpu.vector_store %arg7[%c0_16, %c0_17, %c0_18], %47 {strides = array<i32>} : memref<1x1x8xf32, #tpu.memory_space<vmem>>, vector<1x1x8xf32>,
    %48 = vector.shape_cast %40 : vector<256x8xf32> to vector<16x16x8xf32>
    %49 = arith.truncf %48 : vector<16x16x8xf32> to vector<16x16x8xbf16>
    %cst_19 = arith.constant 0.000000e+00 : bf16
    %50 = vector.broadcast %cst_19 : bf16 to vector<1x22x22x8xbf16>
    %c0_20 = arith.constant 0 : index
    %c0_21 = arith.constant 0 : index
    %c0_22 = arith.constant 0 : index
    %c0_23 = arith.constant 0 : index
    %51 = vector.load %arg6[%c0_20, %c0_21, %c0_22, %c0_23] : memref<1x22x22x8xbf16, #tpu.memory_space<vmem>>, vector<1x22x22x8xbf16>
    tpu.vector_store %arg6[%c0_20, %c0_21, %c0_22, %c0_23], %50 {strides = array<i32>} : memref<1x22x22x8xbf16, #tpu.memory_space<vmem>>, vector<1x22x22x8xbf16>,
    %c0_24 = arith.constant 0 : index
    %c3 = arith.constant 3 : index
    %c3_25 = arith.constant 3 : index
    %c0_26 = arith.constant 0 : index
    %52 = vector.load %arg6[%c0_24, %c3, %c3_25, %c0_26] : memref<1x22x22x8xbf16, #tpu.memory_space<vmem>>, vector<1x16x16x8xbf16>
    %53 = vector.shape_cast %52 : vector<1x16x16x8xbf16> to vector<16x16x8xbf16>
    %54 = vector.shape_cast %49 : vector<16x16x8xbf16> to vector<1x16x16x8xbf16>
    tpu.vector_store %arg6[%c0_24, %c3, %c3_25, %c0_26], %54 {strides = array<i32>} : memref<1x22x22x8xbf16, #tpu.memory_space<vmem>>, vector<1x16x16x8xbf16>,
    return
  }
  func.func @transform_0(%arg0: i32) -> (i32, i32, i32, i32) {
    %c0_i32 = arith.constant 0 : i32
    %c0_i32_0 = arith.constant 0 : i32
    %c0_i32_1 = arith.constant 0 : i32
    %c0_i32_2 = arith.constant 0 : i32
    return %arg0, %c0_i32, %c0_i32_0, %c0_i32_1 : i32, i32, i32, i32
  }
  func.func @transform_1(%arg0: i32) -> (i32, i32, i32) {
    %c0_i32 = arith.constant 0 : i32
    %c0_i32_0 = arith.constant 0 : i32
    %c0_i32_1 = arith.constant 0 : i32
    return %arg0, %c0_i32, %c0_i32_0 : i32, i32, i32
  }
  func.func @transform_2(%arg0: i32) -> (i32, i32) {
    %c0_i32 = arith.constant 0 : i32
    %c0_i32_0 = arith.constant 0 : i32
    %c0_i32_1 = arith.constant 0 : i32
    return %c0_i32, %c0_i32_0 : i32, i32
  }
  func.func @transform_3(%arg0: i32) -> (i32, i32) {
    %c0_i32 = arith.constant 0 : i32
    %c0_i32_0 = arith.constant 0 : i32
    %c0_i32_1 = arith.constant 0 : i32
    return %c0_i32, %c0_i32_0 : i32, i32
  }
  func.func @transform_4(%arg0: i32) -> (i32, i32) {
    %c0_i32 = arith.constant 0 : i32
    %c0_i32_0 = arith.constant 0 : i32
    %c0_i32_1 = arith.constant 0 : i32
    return %c0_i32, %c0_i32_0 : i32, i32
  }
  func.func @transform_5(%arg0: i32) -> (i32, i32, i32, i32) {
    %c0_i32 = arith.constant 0 : i32
    %c0_i32_0 = arith.constant 0 : i32
    %c0_i32_1 = arith.constant 0 : i32
    %c0_i32_2 = arith.constant 0 : i32
    return %arg0, %c0_i32, %c0_i32_0, %c0_i32_1 : i32, i32, i32, i32
  }
  func.func @transform_6(%arg0: i32) -> (i32, i32, i32) {
    %c0_i32 = arith.constant 0 : i32
    %c0_i32_0 = arith.constant 0 : i32
    %c0_i32_1 = arith.constant 0 : i32
    return %arg0, %c0_i32, %c0_i32_0 : i32, i32, i32
  }
}

module attributes {stable_mosaic.version = 11 : i64} {
  func.func @_dilated_conv_kernel(%arg0: i32, %arg1: memref<1x22x22x8xbf16, #tpu.memory_space<vmem>>, %arg2: memref<1x1x8xf32, #tpu.memory_space<vmem>>, %arg3: memref<72x8xbf16, #tpu.memory_space<vmem>>, %arg4: memref<1x8xf32, #tpu.memory_space<vmem>>, %arg5: memref<1x8xf32, #tpu.memory_space<vmem>>, %arg6: memref<1x16x16x8xbf16, #tpu.memory_space<vmem>>, %arg7: memref<1x1x8xf32, #tpu.memory_space<vmem>>) attributes {dimension_semantics = [#tpu.dimension_semantics<parallel>], iteration_bounds = array<i64: 2>, scalar_prefetch = 0 : i64, scratch_operands = 0 : i64, tpu.core_type = #tpu.core_type<tc>, window_params = [{transform_indices = @transform_0, window_bounds = array<i64: 1, 22, 22, 8>}, {transform_indices = @transform_1, window_bounds = array<i64: 1, 1, 8>}, {pipeline_mode = #tpu.pipeline_mode<synchronous>, transform_indices = @transform_2, window_bounds = array<i64: 72, 8>}, {pipeline_mode = #tpu.pipeline_mode<synchronous>, transform_indices = @transform_3, window_bounds = array<i64: 1, 8>}, {pipeline_mode = #tpu.pipeline_mode<synchronous>, transform_indices = @transform_4, window_bounds = array<i64: 1, 8>}, {transform_indices = @transform_5, window_bounds = array<i64: 1, 16, 16, 8>}, {transform_indices = @transform_6, window_bounds = array<i64: 1, 1, 8>}]} {
    %c0 = arith.constant 0 : index
    %c0_0 = arith.constant 0 : index
    %c0_1 = arith.constant 0 : index
    %c0_2 = arith.constant 0 : index
    %0 = vector.load %arg1[%c0, %c0_0, %c0_1, %c0_2] : memref<1x22x22x8xbf16, #tpu.memory_space<vmem>>, vector<1x22x22x8xbf16>
    %1 = vector.shape_cast %0 : vector<1x22x22x8xbf16> to vector<22x22x8xbf16>
    %2 = arith.extf %1 : vector<22x22x8xbf16> to vector<22x22x8xf32>
    %c0_3 = arith.constant 0 : index
    %c0_4 = arith.constant 0 : index
    %c0_5 = arith.constant 0 : index
    %3 = vector.load %arg2[%c0_3, %c0_4, %c0_5] : memref<1x1x8xf32, #tpu.memory_space<vmem>>, vector<1x1x8xf32>
    %4 = vector.broadcast %3 : vector<1x1x8xf32> to vector<22x22x8xf32>
    %5 = arith.mulf %2, %4 : vector<22x22x8xf32>
    %6 = vector.extract_strided_slice %5 {offsets = [0, 0, 0], sizes = [16, 16, 8], strides = [1, 1, 1]} : vector<22x22x8xf32> to vector<16x16x8xf32>
    %7 = vector.shape_cast %6 : vector<16x16x8xf32> to vector<256x8xf32>
    %8 = vector.extract_strided_slice %5 {offsets = [0, 3, 0], sizes = [16, 16, 8], strides = [1, 1, 1]} : vector<22x22x8xf32> to vector<16x16x8xf32>
    %9 = vector.shape_cast %8 : vector<16x16x8xf32> to vector<256x8xf32>
    %10 = vector.extract_strided_slice %5 {offsets = [0, 6, 0], sizes = [16, 16, 8], strides = [1, 1, 1]} : vector<22x22x8xf32> to vector<16x16x8xf32>
    %11 = vector.shape_cast %10 : vector<16x16x8xf32> to vector<256x8xf32>
    %12 = vector.extract_strided_slice %5 {offsets = [3, 0, 0], sizes = [16, 16, 8], strides = [1, 1, 1]} : vector<22x22x8xf32> to vector<16x16x8xf32>
    %13 = vector.shape_cast %12 : vector<16x16x8xf32> to vector<256x8xf32>
    %14 = vector.extract_strided_slice %5 {offsets = [3, 3, 0], sizes = [16, 16, 8], strides = [1, 1, 1]} : vector<22x22x8xf32> to vector<16x16x8xf32>
    %15 = vector.shape_cast %14 : vector<16x16x8xf32> to vector<256x8xf32>
    %16 = vector.extract_strided_slice %5 {offsets = [3, 6, 0], sizes = [16, 16, 8], strides = [1, 1, 1]} : vector<22x22x8xf32> to vector<16x16x8xf32>
    %17 = vector.shape_cast %16 : vector<16x16x8xf32> to vector<256x8xf32>
    %18 = vector.extract_strided_slice %5 {offsets = [6, 0, 0], sizes = [16, 16, 8], strides = [1, 1, 1]} : vector<22x22x8xf32> to vector<16x16x8xf32>
    %19 = vector.shape_cast %18 : vector<16x16x8xf32> to vector<256x8xf32>
    %20 = vector.extract_strided_slice %5 {offsets = [6, 3, 0], sizes = [16, 16, 8], strides = [1, 1, 1]} : vector<22x22x8xf32> to vector<16x16x8xf32>
    %21 = vector.shape_cast %20 : vector<16x16x8xf32> to vector<256x8xf32>
    %22 = vector.extract_strided_slice %5 {offsets = [6, 6, 0], sizes = [16, 16, 8], strides = [1, 1, 1]} : vector<22x22x8xf32> to vector<16x16x8xf32>
    %23 = vector.shape_cast %22 : vector<16x16x8xf32> to vector<256x8xf32>
    %24 = tpu.concatenate %7, %9, %11, %13, %15, %17, %19, %21, %23 in 1 : vector<256x8xf32>, vector<256x8xf32>, vector<256x8xf32>, vector<256x8xf32>, vector<256x8xf32>, vector<256x8xf32>, vector<256x8xf32>, vector<256x8xf32>, vector<256x8xf32> -> vector<256x72xf32>
    %25 = arith.truncf %24 : vector<256x72xf32> to vector<256x72xbf16>
    %c0_6 = arith.constant 0 : index
    %c0_7 = arith.constant 0 : index
    %26 = vector.load %arg3[%c0_6, %c0_7] : memref<72x8xbf16, #tpu.memory_space<vmem>>, vector<72x8xbf16>
    %cst = arith.constant dense<0.000000e+00> : vector<256x8xf32>
    %27 = tpu.matmul %25, %26, %cst {dimension_numbers = #tpu.dot_dimension_numbers<[1], [0], [0], [1], [0, 0, 1, 1], [], []>} : vector<256x72xbf16>, vector<72x8xbf16>, vector<256x8xf32> -> vector<256x8xf32>
    %c0_8 = arith.constant 0 : index
    %c0_9 = arith.constant 0 : index
    %28 = vector.load %arg4[%c0_8, %c0_9] : memref<1x8xf32, #tpu.memory_space<vmem>>, vector<1x8xf32>
    %c0_10 = arith.constant 0 : index
    %c0_11 = arith.constant 0 : index
    %29 = vector.load %arg5[%c0_10, %c0_11] : memref<1x8xf32, #tpu.memory_space<vmem>>, vector<1x8xf32>
    %30 = vector.broadcast %28 : vector<1x8xf32> to vector<256x8xf32>
    %31 = arith.mulf %27, %30 : vector<256x8xf32>
    %32 = vector.broadcast %29 : vector<1x8xf32> to vector<256x8xf32>
    %33 = arith.addf %31, %32 : vector<256x8xf32>
    %cst_12 = arith.constant 0.000000e+00 : f32
    %34 = vector.broadcast %cst_12 : f32 to vector<256x8xf32>
    %35 = arith.subf %34, %33 : vector<256x8xf32>
    %36 = math.exp %35 : vector<256x8xf32>
    %cst_13 = arith.constant 1.000000e+00 : f32
    %37 = vector.broadcast %cst_13 : f32 to vector<256x8xf32>
    %38 = arith.addf %37, %36 : vector<256x8xf32>
    %39 = tpu.reciprocal %38 {approx = true} : vector<256x8xf32> -> vector<256x8xf32>
    %40 = arith.mulf %33, %39 : vector<256x8xf32>
    %cst_14 = arith.constant dense<0.000000e+00> : vector<8xf32>
    %41 = vector.multi_reduction <add>, %40, %cst_14 [0] : vector<256x8xf32> to vector<8xf32>
    %42 = vector.shape_cast %41 : vector<8xf32> to vector<1x8xf32>
    %cst_15 = arith.constant 2.560000e+02 : f32
    %43 = vector.broadcast %cst_15 : f32 to vector<1x8xf32>
    %44 = arith.divf %42, %43 : vector<1x8xf32>
    %c0_16 = arith.constant 0 : index
    %c0_17 = arith.constant 0 : index
    %c0_18 = arith.constant 0 : index
    %45 = vector.load %arg7[%c0_16, %c0_17, %c0_18] : memref<1x1x8xf32, #tpu.memory_space<vmem>>, vector<1x1x8xf32>
    %46 = vector.shape_cast %45 : vector<1x1x8xf32> to vector<1x8xf32>
    %47 = vector.shape_cast %44 : vector<1x8xf32> to vector<1x1x8xf32>
    tpu.vector_store %arg7[%c0_16, %c0_17, %c0_18], %47 {strides = array<i32>} : memref<1x1x8xf32, #tpu.memory_space<vmem>>, vector<1x1x8xf32>,
    %48 = vector.shape_cast %40 : vector<256x8xf32> to vector<16x16x8xf32>
    %49 = arith.truncf %48 : vector<16x16x8xf32> to vector<16x16x8xbf16>
    %c0_19 = arith.constant 0 : index
    %c0_20 = arith.constant 0 : index
    %c0_21 = arith.constant 0 : index
    %c0_22 = arith.constant 0 : index
    %50 = vector.load %arg6[%c0_19, %c0_20, %c0_21, %c0_22] : memref<1x16x16x8xbf16, #tpu.memory_space<vmem>>, vector<1x16x16x8xbf16>
    %51 = vector.shape_cast %50 : vector<1x16x16x8xbf16> to vector<16x16x8xbf16>
    %52 = vector.shape_cast %49 : vector<16x16x8xbf16> to vector<1x16x16x8xbf16>
    tpu.vector_store %arg6[%c0_19, %c0_20, %c0_21, %c0_22], %52 {strides = array<i32>} : memref<1x16x16x8xbf16, #tpu.memory_space<vmem>>, vector<1x16x16x8xbf16>,
    return
  }
  func.func @transform_0(%arg0: i32) -> (i32, i32, i32, i32) {
    %c0_i32 = arith.constant 0 : i32
    %c0_i32_0 = arith.constant 0 : i32
    %c0_i32_1 = arith.constant 0 : i32
    %c0_i32_2 = arith.constant 0 : i32
    return %arg0, %c0_i32, %c0_i32_0, %c0_i32_1 : i32, i32, i32, i32
  }
  func.func @transform_1(%arg0: i32) -> (i32, i32, i32) {
    %c0_i32 = arith.constant 0 : i32
    %c0_i32_0 = arith.constant 0 : i32
    %c0_i32_1 = arith.constant 0 : i32
    return %arg0, %c0_i32, %c0_i32_0 : i32, i32, i32
  }
  func.func @transform_2(%arg0: i32) -> (i32, i32) {
    %c0_i32 = arith.constant 0 : i32
    %c0_i32_0 = arith.constant 0 : i32
    %c0_i32_1 = arith.constant 0 : i32
    return %c0_i32, %c0_i32_0 : i32, i32
  }
  func.func @transform_3(%arg0: i32) -> (i32, i32) {
    %c0_i32 = arith.constant 0 : i32
    %c0_i32_0 = arith.constant 0 : i32
    %c0_i32_1 = arith.constant 0 : i32
    return %c0_i32, %c0_i32_0 : i32, i32
  }
  func.func @transform_4(%arg0: i32) -> (i32, i32) {
    %c0_i32 = arith.constant 0 : i32
    %c0_i32_0 = arith.constant 0 : i32
    %c0_i32_1 = arith.constant 0 : i32
    return %c0_i32, %c0_i32_0 : i32, i32
  }
  func.func @transform_5(%arg0: i32) -> (i32, i32, i32, i32) {
    %c0_i32 = arith.constant 0 : i32
    %c0_i32_0 = arith.constant 0 : i32
    %c0_i32_1 = arith.constant 0 : i32
    %c0_i32_2 = arith.constant 0 : i32
    return %arg0, %c0_i32, %c0_i32_0, %c0_i32_1 : i32, i32, i32, i32
  }
  func.func @transform_6(%arg0: i32) -> (i32, i32, i32) {
    %c0_i32 = arith.constant 0 : i32
    %c0_i32_0 = arith.constant 0 : i32
    %c0_i32_1 = arith.constant 0 : i32
    return %arg0, %c0_i32, %c0_i32_0 : i32, i32, i32
  }
}

module attributes {stable_mosaic.version = 11 : i64} {
  func.func @_concat_conv2_kernel(%arg0: i32, %arg1: memref<1x256x8xbf16, #tpu.memory_space<vmem>>, %arg2: memref<1x20x20x8xbf16, #tpu.memory_space<vmem>>, %arg3: memref<1x22x22x8xbf16, #tpu.memory_space<vmem>>, %arg4: memref<1x16x16x8xbf16, #tpu.memory_space<vmem>>, %arg5: memref<1x1x8xf32, #tpu.memory_space<vmem>>, %arg6: memref<1x1x8xf32, #tpu.memory_space<vmem>>, %arg7: memref<1x1x8xf32, #tpu.memory_space<vmem>>, %arg8: memref<32x16xbf16, #tpu.memory_space<vmem>>, %arg9: memref<1x16xf32, #tpu.memory_space<vmem>>, %arg10: memref<1x16xf32, #tpu.memory_space<vmem>>, %arg11: memref<1x256x16xf32, #tpu.memory_space<vmem>>) attributes {dimension_semantics = [#tpu.dimension_semantics<parallel>], iteration_bounds = array<i64: 2>, scalar_prefetch = 0 : i64, scratch_operands = 0 : i64, tpu.core_type = #tpu.core_type<tc>, window_params = [{transform_indices = @transform_0, window_bounds = array<i64: 1, 256, 8>}, {transform_indices = @transform_1, window_bounds = array<i64: 1, 20, 20, 8>}, {transform_indices = @transform_2, window_bounds = array<i64: 1, 22, 22, 8>}, {transform_indices = @transform_3, window_bounds = array<i64: 1, 16, 16, 8>}, {transform_indices = @transform_4, window_bounds = array<i64: 1, 1, 8>}, {transform_indices = @transform_5, window_bounds = array<i64: 1, 1, 8>}, {transform_indices = @transform_6, window_bounds = array<i64: 1, 1, 8>}, {pipeline_mode = #tpu.pipeline_mode<synchronous>, transform_indices = @transform_7, window_bounds = array<i64: 32, 16>}, {pipeline_mode = #tpu.pipeline_mode<synchronous>, transform_indices = @transform_8, window_bounds = array<i64: 1, 16>}, {pipeline_mode = #tpu.pipeline_mode<synchronous>, transform_indices = @transform_9, window_bounds = array<i64: 1, 16>}, {transform_indices = @transform_10, window_bounds = array<i64: 1, 256, 16>}]} {
    %c0 = arith.constant 0 : index
    %c0_0 = arith.constant 0 : index
    %c0_1 = arith.constant 0 : index
    %0 = vector.load %arg1[%c0, %c0_0, %c0_1] : memref<1x256x8xbf16, #tpu.memory_space<vmem>>, vector<1x256x8xbf16>
    %1 = vector.shape_cast %0 : vector<1x256x8xbf16> to vector<256x8xbf16>
    %c0_2 = arith.constant 0 : index
    %c2 = arith.constant 2 : index
    %c2_3 = arith.constant 2 : index
    %c0_4 = arith.constant 0 : index
    %2 = vector.load %arg2[%c0_2, %c2, %c2_3, %c0_4] : memref<1x20x20x8xbf16, #tpu.memory_space<vmem>>, vector<1x16x16x8xbf16>
    %3 = vector.shape_cast %2 : vector<1x16x16x8xbf16> to vector<16x16x8xbf16>
    %4 = arith.extf %3 : vector<16x16x8xbf16> to vector<16x16x8xf32>
    %5 = vector.shape_cast %4 : vector<16x16x8xf32> to vector<256x8xf32>
    %c0_5 = arith.constant 0 : index
    %c0_6 = arith.constant 0 : index
    %c0_7 = arith.constant 0 : index
    %6 = vector.load %arg5[%c0_5, %c0_6, %c0_7] : memref<1x1x8xf32, #tpu.memory_space<vmem>>, vector<1x1x8xf32>
    %7 = vector.shape_cast %6 : vector<1x1x8xf32> to vector<1x8xf32>
    %8 = vector.broadcast %7 : vector<1x8xf32> to vector<256x8xf32>
    %9 = arith.mulf %5, %8 : vector<256x8xf32>
    %10 = arith.truncf %9 : vector<256x8xf32> to vector<256x8xbf16>
    %c0_8 = arith.constant 0 : index
    %c3 = arith.constant 3 : index
    %c3_9 = arith.constant 3 : index
    %c0_10 = arith.constant 0 : index
    %11 = vector.load %arg3[%c0_8, %c3, %c3_9, %c0_10] : memref<1x22x22x8xbf16, #tpu.memory_space<vmem>>, vector<1x16x16x8xbf16>
    %12 = vector.shape_cast %11 : vector<1x16x16x8xbf16> to vector<16x16x8xbf16>
    %13 = arith.extf %12 : vector<16x16x8xbf16> to vector<16x16x8xf32>
    %14 = vector.shape_cast %13 : vector<16x16x8xf32> to vector<256x8xf32>
    %c0_11 = arith.constant 0 : index
    %c0_12 = arith.constant 0 : index
    %c0_13 = arith.constant 0 : index
    %15 = vector.load %arg6[%c0_11, %c0_12, %c0_13] : memref<1x1x8xf32, #tpu.memory_space<vmem>>, vector<1x1x8xf32>
    %16 = vector.shape_cast %15 : vector<1x1x8xf32> to vector<1x8xf32>
    %17 = vector.broadcast %16 : vector<1x8xf32> to vector<256x8xf32>
    %18 = arith.mulf %14, %17 : vector<256x8xf32>
    %19 = arith.truncf %18 : vector<256x8xf32> to vector<256x8xbf16>
    %c0_14 = arith.constant 0 : index
    %c0_15 = arith.constant 0 : index
    %c0_16 = arith.constant 0 : index
    %c0_17 = arith.constant 0 : index
    %20 = vector.load %arg4[%c0_14, %c0_15, %c0_16, %c0_17] : memref<1x16x16x8xbf16, #tpu.memory_space<vmem>>, vector<1x16x16x8xbf16>
    %21 = vector.shape_cast %20 : vector<1x16x16x8xbf16> to vector<16x16x8xbf16>
    %22 = arith.extf %21 : vector<16x16x8xbf16> to vector<16x16x8xf32>
    %23 = vector.shape_cast %22 : vector<16x16x8xf32> to vector<256x8xf32>
    %c0_18 = arith.constant 0 : index
    %c0_19 = arith.constant 0 : index
    %c0_20 = arith.constant 0 : index
    %24 = vector.load %arg7[%c0_18, %c0_19, %c0_20] : memref<1x1x8xf32, #tpu.memory_space<vmem>>, vector<1x1x8xf32>
    %25 = vector.shape_cast %24 : vector<1x1x8xf32> to vector<1x8xf32>
    %26 = vector.broadcast %25 : vector<1x8xf32> to vector<256x8xf32>
    %27 = arith.mulf %23, %26 : vector<256x8xf32>
    %28 = arith.truncf %27 : vector<256x8xf32> to vector<256x8xbf16>
    %cst = arith.constant 0.000000e+00 : f32
    %29 = vector.broadcast %cst : f32 to vector<256x16xf32>
    %c0_21 = arith.constant 0 : index
    %c0_22 = arith.constant 0 : index
    %30 = vector.load %arg8[%c0_21, %c0_22] : memref<32x16xbf16, #tpu.memory_space<vmem>>, vector<8x16xbf16>
    %cst_23 = arith.constant dense<0.000000e+00> : vector<256x16xf32>
    %31 = tpu.matmul %1, %30, %cst_23 {dimension_numbers = #tpu.dot_dimension_numbers<[1], [0], [0], [1], [0, 0, 1, 1], [], []>} : vector<256x8xbf16>, vector<8x16xbf16>, vector<256x16xf32> -> vector<256x16xf32>
    %32 = arith.addf %29, %31 : vector<256x16xf32>
    %c8 = arith.constant 8 : index
    %c0_24 = arith.constant 0 : index
    %33 = vector.load %arg8[%c8, %c0_24] : memref<32x16xbf16, #tpu.memory_space<vmem>>, vector<8x16xbf16>
    %cst_25 = arith.constant dense<0.000000e+00> : vector<256x16xf32>
    %34 = tpu.matmul %10, %33, %cst_25 {dimension_numbers = #tpu.dot_dimension_numbers<[1], [0], [0], [1], [0, 0, 1, 1], [], []>} : vector<256x8xbf16>, vector<8x16xbf16>, vector<256x16xf32> -> vector<256x16xf32>
    %35 = arith.addf %32, %34 : vector<256x16xf32>
    %c16 = arith.constant 16 : index
    %c0_26 = arith.constant 0 : index
    %36 = vector.load %arg8[%c16, %c0_26] : memref<32x16xbf16, #tpu.memory_space<vmem>>, vector<8x16xbf16>
    %cst_27 = arith.constant dense<0.000000e+00> : vector<256x16xf32>
    %37 = tpu.matmul %19, %36, %cst_27 {dimension_numbers = #tpu.dot_dimension_numbers<[1], [0], [0], [1], [0, 0, 1, 1], [], []>} : vector<256x8xbf16>, vector<8x16xbf16>, vector<256x16xf32> -> vector<256x16xf32>
    %38 = arith.addf %35, %37 : vector<256x16xf32>
    %c24 = arith.constant 24 : index
    %c0_28 = arith.constant 0 : index
    %39 = vector.load %arg8[%c24, %c0_28] : memref<32x16xbf16, #tpu.memory_space<vmem>>, vector<8x16xbf16>
    %cst_29 = arith.constant dense<0.000000e+00> : vector<256x16xf32>
    %40 = tpu.matmul %28, %39, %cst_29 {dimension_numbers = #tpu.dot_dimension_numbers<[1], [0], [0], [1], [0, 0, 1, 1], [], []>} : vector<256x8xbf16>, vector<8x16xbf16>, vector<256x16xf32> -> vector<256x16xf32>
    %41 = arith.addf %38, %40 : vector<256x16xf32>
    %c0_30 = arith.constant 0 : index
    %c0_31 = arith.constant 0 : index
    %42 = vector.load %arg9[%c0_30, %c0_31] : memref<1x16xf32, #tpu.memory_space<vmem>>, vector<1x16xf32>
    %c0_32 = arith.constant 0 : index
    %c0_33 = arith.constant 0 : index
    %43 = vector.load %arg10[%c0_32, %c0_33] : memref<1x16xf32, #tpu.memory_space<vmem>>, vector<1x16xf32>
    %44 = vector.broadcast %42 : vector<1x16xf32> to vector<256x16xf32>
    %45 = arith.mulf %41, %44 : vector<256x16xf32>
    %46 = vector.broadcast %43 : vector<1x16xf32> to vector<256x16xf32>
    %47 = arith.addf %45, %46 : vector<256x16xf32>
    %cst_34 = arith.constant 0.000000e+00 : f32
    %48 = vector.broadcast %cst_34 : f32 to vector<256x16xf32>
    %49 = arith.subf %48, %47 : vector<256x16xf32>
    %50 = math.exp %49 : vector<256x16xf32>
    %cst_35 = arith.constant 1.000000e+00 : f32
    %51 = vector.broadcast %cst_35 : f32 to vector<256x16xf32>
    %52 = arith.addf %51, %50 : vector<256x16xf32>
    %53 = tpu.reciprocal %52 {approx = true} : vector<256x16xf32> -> vector<256x16xf32>
    %54 = arith.mulf %47, %53 : vector<256x16xf32>
    %c0_36 = arith.constant 0 : index
    %c0_37 = arith.constant 0 : index
    %c0_38 = arith.constant 0 : index
    %55 = vector.load %arg11[%c0_36, %c0_37, %c0_38] : memref<1x256x16xf32, #tpu.memory_space<vmem>>, vector<1x256x16xf32>
    %56 = vector.shape_cast %55 : vector<1x256x16xf32> to vector<256x16xf32>
    %57 = vector.shape_cast %54 : vector<256x16xf32> to vector<1x256x16xf32>
    tpu.vector_store %arg11[%c0_36, %c0_37, %c0_38], %57 {strides = array<i32>} : memref<1x256x16xf32, #tpu.memory_space<vmem>>, vector<1x256x16xf32>,
    return
  }
  func.func @transform_0(%arg0: i32) -> (i32, i32, i32) {
    %c0_i32 = arith.constant 0 : i32
    %c0_i32_0 = arith.constant 0 : i32
    %c0_i32_1 = arith.constant 0 : i32
    return %arg0, %c0_i32, %c0_i32_0 : i32, i32, i32
  }
  func.func @transform_1(%arg0: i32) -> (i32, i32, i32, i32) {
    %c0_i32 = arith.constant 0 : i32
    %c0_i32_0 = arith.constant 0 : i32
    %c0_i32_1 = arith.constant 0 : i32
    %c0_i32_2 = arith.constant 0 : i32
    return %arg0, %c0_i32, %c0_i32_0, %c0_i32_1 : i32, i32, i32, i32
  }
  func.func @transform_2(%arg0: i32) -> (i32, i32, i32, i32) {
    %c0_i32 = arith.constant 0 : i32
    %c0_i32_0 = arith.constant 0 : i32
    %c0_i32_1 = arith.constant 0 : i32
    %c0_i32_2 = arith.constant 0 : i32
    return %arg0, %c0_i32, %c0_i32_0, %c0_i32_1 : i32, i32, i32, i32
  }
  func.func @transform_3(%arg0: i32) -> (i32, i32, i32, i32) {
    %c0_i32 = arith.constant 0 : i32
    %c0_i32_0 = arith.constant 0 : i32
    %c0_i32_1 = arith.constant 0 : i32
    %c0_i32_2 = arith.constant 0 : i32
    return %arg0, %c0_i32, %c0_i32_0, %c0_i32_1 : i32, i32, i32, i32
  }
  func.func @transform_4(%arg0: i32) -> (i32, i32, i32) {
    %c0_i32 = arith.constant 0 : i32
    %c0_i32_0 = arith.constant 0 : i32
    %c0_i32_1 = arith.constant 0 : i32
    return %arg0, %c0_i32, %c0_i32_0 : i32, i32, i32
  }
  func.func @transform_5(%arg0: i32) -> (i32, i32, i32) {
    %c0_i32 = arith.constant 0 : i32
    %c0_i32_0 = arith.constant 0 : i32
    %c0_i32_1 = arith.constant 0 : i32
    return %arg0, %c0_i32, %c0_i32_0 : i32, i32, i32
  }
  func.func @transform_6(%arg0: i32) -> (i32, i32, i32) {
    %c0_i32 = arith.constant 0 : i32
    %c0_i32_0 = arith.constant 0 : i32
    %c0_i32_1 = arith.constant 0 : i32
    return %arg0, %c0_i32, %c0_i32_0 : i32, i32, i32
  }
  func.func @transform_7(%arg0: i32) -> (i32, i32) {
    %c0_i32 = arith.constant 0 : i32
    %c0_i32_0 = arith.constant 0 : i32
    %c0_i32_1 = arith.constant 0 : i32
    return %c0_i32, %c0_i32_0 : i32, i32
  }
  func.func @transform_8(%arg0: i32) -> (i32, i32) {
    %c0_i32 = arith.constant 0 : i32
    %c0_i32_0 = arith.constant 0 : i32
    %c0_i32_1 = arith.constant 0 : i32
    return %c0_i32, %c0_i32_0 : i32, i32
  }
  func.func @transform_9(%arg0: i32) -> (i32, i32) {
    %c0_i32 = arith.constant 0 : i32
    %c0_i32_0 = arith.constant 0 : i32
    %c0_i32_1 = arith.constant 0 : i32
    return %c0_i32, %c0_i32_0 : i32, i32
  }
  func.func @transform_10(%arg0: i32) -> (i32, i32, i32) {
    %c0_i32 = arith.constant 0 : i32
    %c0_i32_0 = arith.constant 0 : i32
    %c0_i32_1 = arith.constant 0 : i32
    return %arg0, %c0_i32, %c0_i32_0 : i32, i32, i32
  }
}

</mosaic_0001>

<llo_original>
// kernel: spp_bottleneck_pallas.4
$region0: #{spp_bottleneck_pallas.4}
  #allocation0 [shape = 'u32[]', space=smem, size = 0x4, offset = 0x4, fixed_abs, tag = 'smem constant byte address 0x4 - core index']
  #allocation1 [shape = 'u32[144,128]{1,0:T(1,128)}', space=vmem, size = 0x12000, scoped, tag = 'internal scratch']
  %s0 = inlined_call_operand.vmem [shape: bf16[2,256,16], index: 0, kind: input, shape index: {}]
  %s1 = inlined_call_operand.vmem [shape: bf16[16,8], index: 1, kind: input, shape index: {}]
  %s2 = inlined_call_operand.vmem [shape: f32[1,8], index: 2, kind: input, shape index: {}]
  %s3 = inlined_call_operand.vmem [shape: f32[1,8], index: 3, kind: input, shape index: {}]
  %s4 = inlined_call_operand.vmem [shape: bf16[8,8], index: 4, kind: input, shape index: {}]
  %s5 = inlined_call_operand.vmem [shape: f32[1,8], index: 5, kind: input, shape index: {}]
  %s6 = inlined_call_operand.vmem [shape: f32[1,8], index: 6, kind: input, shape index: {}]
  %s7 = inlined_call_operand.vmem [shape: bf16[2,256,8], index: 7, kind: output, shape index: {0}]
  %s8 = inlined_call_operand.vmem [shape: bf16[2,20,20,8], index: 8, kind: output, shape index: {1}]
  %s9 = inlined_call_operand.vmem [shape: f32[2,1,8], index: 9, kind: output, shape index: {2}]
  %10 = xla_tuple %s7, %s8, %s9
  %s11 = sld [smem:[#allocation0]]
  $region77: #{spp_bottleneck_pallas.4} parent=0
    _
  %s13 = ssub.s32 1, %s11
  %s14 = scalar_select 0, %s13, %s11
  loop: start=0, step=1, limit=4
  $region2: #{spp_bottleneck_pallas.4} parent=0 // loop_pre_header
    _
  $region3: #{spp_bottleneck_pallas.4} parent=0 // loop_header
    %s16 = sphi 0, %s20
    %p17 = scmp.ge.s32.totalorder %s16, 4
    %s26 = sphi 0, %s28
    %s29 = sphi 0, %s26
    %s30 = sphi 0, %s29
    %s46 = sphi 0, %s30
    %s50 = sphi 0, %s50
    %s52 = sphi 0, %s50
    %s53 = sphi 0, %s52
    %s67 = sphi 0, %s53
    %s71 = sphi 0, %s71
    %s73 = sphi 0, %s71
    %s74 = sphi 0, %s73
    %s88 = sphi 0, %s74
    %s92 = sphi 0, %s92
    %s94 = sphi 0, %s92
    %s95 = sphi 0, %s94
    %s109 = sphi 0, %s95
    %s113 = sphi 0, %s113
    %s115 = sphi 0, %s113
    %s116 = sphi 0, %s115
    %s130 = sphi 0, %s116
    %s134 = sphi 0, %s134
    %s136 = sphi 0, %s134
    %s137 = sphi 0, %s136
    %s151 = sphi 0, %s137
    %s155 = sphi 0, %s155
    %s157 = sphi 0, %s155
    %s158 = sphi 0, %s157
    %s172 = sphi 0, %s158
    %s178 = sphi 0, %s180
    %s181 = sphi 0, %s178
    %s182 = sphi 0, %s181
    %s198 = sphi 0, %s182
    %s204 = sphi 0, %s206
    %s207 = sphi 0, %s204
    %s208 = sphi 0, %s207
    %s224 = sphi 0, %s208
    %s230 = sphi 0, %s232
    %s233 = sphi 0, %s230
    %s234 = sphi 0, %s233
    %s250 = sphi 0, %s234
  $region4: #{spp_bottleneck_pallas.4} parent=0 // loop_header_branch
    %19 = sbr.rel (%p17) target = $region8
  $region5: #{spp_bottleneck_pallas.4} parent=0 // loop_body
    %s21 = ssub.s32 %s16, 1
    %s22 = ssub.s32 %s16, 2
    %s23 = sadd.s32 %s16, 1
    %s24 = ssub.s32 %s16, %s23
    %p25 = scmp.eq.s32.totalorder %s24, 0
    %s27 = sadd.s32 %s26, 1
    %s28 = scalar_select %p25, %s26, %s27
    %p31 = pneg %p25
    %p32 = scmp.eq.s32.totalorder %s16, 1
    %p33 = por %p31, %p32
    %p34 = scmp.ne.s32.totalorder %s26, %s29
    %p35 = scmp.eq.s32.totalorder %s16, 0
    %p36 = por %p34, %p35
    %p37 = scmp.ne.s32.totalorder %s26, %s29
    %p38 = scmp.eq.s32.totalorder %s21, 1
    %p39 = por %p37, %p38
    %p40 = scmp.ne.s32.totalorder %s29, %s30
    %p41 = scmp.eq.s32.totalorder %s21, 0
    %p42 = por %p40, %p41
    %p43 = scmp.ne.s32.totalorder %s29, %s30
    %p44 = scmp.eq.s32.totalorder %s22, 1
    %p45 = por %p43, %p44
    %p47 = scmp.ne.s32.totalorder %s30, %s46
    %p48 = scmp.eq.s32.totalorder %s22, 0
    %p49 = por %p47, %p48
    %s51 = sadd.s32 %s50, 1
    %p54 = scmp.eq.s32.totalorder %s16, 1
    %p55 = scmp.ne.s32.totalorder %s50, %s52
    %p56 = scmp.eq.s32.totalorder %s16, 0
    %p57 = por %p55, %p56
    %p58 = scmp.ne.s32.totalorder %s50, %s52
    %p59 = scmp.eq.s32.totalorder %s21, 1
    %p60 = por %p58, %p59
    %p61 = scmp.ne.s32.totalorder %s52, %s53
    %p62 = scmp.eq.s32.totalorder %s21, 0
    %p63 = por %p61, %p62
    %p64 = scmp.ne.s32.totalorder %s52, %s53
    %p65 = scmp.eq.s32.totalorder %s22, 1
    %p66 = por %p64, %p65
    %p68 = scmp.ne.s32.totalorder %s53, %s67
    %p69 = scmp.eq.s32.totalorder %s22, 0
    %p70 = por %p68, %p69
    %s72 = sadd.s32 %s71, 1
    %p75 = scmp.eq.s32.totalorder %s16, 1
    %p76 = scmp.ne.s32.totalorder %s71, %s73
    %p77 = scmp.eq.s32.totalorder %s16, 0
    %p78 = por %p76, %p77
    %p79 = scmp.ne.s32.totalorder %s71, %s73
    %p80 = scmp.eq.s32.totalorder %s21, 1
    %p81 = por %p79, %p80
    %p82 = scmp.ne.s32.totalorder %s73, %s74
    %p83 = scmp.eq.s32.totalorder %s21, 0
    %p84 = por %p82, %p83
    %p85 = scmp.ne.s32.totalorder %s73, %s74
    %p86 = scmp.eq.s32.totalorder %s22, 1
    %p87 = por %p85, %p86
    %p89 = scmp.ne.s32.totalorder %s74, %s88
    %p90 = scmp.eq.s32.totalorder %s22, 0
    %p91 = por %p89, %p90
    %s93 = sadd.s32 %s92, 1
    %p96 = scmp.eq.s32.totalorder %s16, 1
    %p97 = scmp.ne.s32.totalorder %s92, %s94
    %p98 = scmp.eq.s32.totalorder %s16, 0
    %p99 = por %p97, %p98
    %p100 = scmp.ne.s32.totalorder %s92, %s94
    %p101 = scmp.eq.s32.totalorder %s21, 1
    %p102 = por %p100, %p101
    %p103 = scmp.ne.s32.totalorder %s94, %s95
    %p104 = scmp.eq.s32.totalorder %s21, 0
    %p105 = por %p103, %p104
    %p106 = scmp.ne.s32.totalorder %s94, %s95
    %p107 = scmp.eq.s32.totalorder %s22, 1
    %p108 = por %p106, %p107
    %p110 = scmp.ne.s32.totalorder %s95, %s109
    %p111 = scmp.eq.s32.totalorder %s22, 0
    %p112 = por %p110, %p111
    %s114 = sadd.s32 %s113, 1
    %p117 = scmp.eq.s32.totalorder %s16, 1
    %p118 = scmp.ne.s32.totalorder %s113, %s115
    %p119 = scmp.eq.s32.totalorder %s16, 0
    %p120 = por %p118, %p119
    %p121 = scmp.ne.s32.totalorder %s113, %s115
    %p122 = scmp.eq.s32.totalorder %s21, 1
    %p123 = por %p121, %p122
    %p124 = scmp.ne.s32.totalorder %s115, %s116
    %p125 = scmp.eq.s32.totalorder %s21, 0
    %p126 = por %p124, %p125
    %p127 = scmp.ne.s32.totalorder %s115, %s116
    %p128 = scmp.eq.s32.totalorder %s22, 1
    %p129 = por %p127, %p128
    %p131 = scmp.ne.s32.totalorder %s116, %s130
    %p132 = scmp.eq.s32.totalorder %s22, 0
    %p133 = por %p131, %p132
    %s135 = sadd.s32 %s134, 1
    %p138 = scmp.eq.s32.totalorder %s16, 1
    %p139 = scmp.ne.s32.totalorder %s134, %s136
    %p140 = scmp.eq.s32.totalorder %s16, 0
    %p141 = por %p139, %p140
    %p142 = scmp.ne.s32.totalorder %s134, %s136
    %p143 = scmp.eq.s32.totalorder %s21, 1
    %p144 = por %p142, %p143
    %p145 = scmp.ne.s32.totalorder %s136, %s137
    %p146 = scmp.eq.s32.totalorder %s21, 0
    %p147 = por %p145, %p146
    %p148 = scmp.ne.s32.totalorder %s136, %s137
    %p149 = scmp.eq.s32.totalorder %s22, 1
    %p150 = por %p148, %p149
    %p152 = scmp.ne.s32.totalorder %s137, %s151
    %p153 = scmp.eq.s32.totalorder %s22, 0
    %p154 = por %p152, %p153
    %s156 = sadd.s32 %s155, 1
    %p159 = scmp.eq.s32.totalorder %s16, 1
    %p160 = scmp.ne.s32.totalorder %s155, %s157
    %p161 = scmp.eq.s32.totalorder %s16, 0
    %p162 = por %p160, %p161
    %p163 = scmp.ne.s32.totalorder %s155, %s157
    %p164 = scmp.eq.s32.totalorder %s21, 1
    %p165 = por %p163, %p164
    %p166 = scmp.ne.s32.totalorder %s157, %s158
    %p167 = scmp.eq.s32.totalorder %s21, 0
    %p168 = por %p166, %p167
    %p169 = scmp.ne.s32.totalorder %s157, %s158
    %p170 = scmp.eq.s32.totalorder %s22, 1
    %p171 = por %p169, %p170
    %p173 = scmp.ne.s32.totalorder %s158, %s172
    %p174 = scmp.eq.s32.totalorder %s22, 0
    %p175 = por %p173, %p174
    %s176 = ssub.s32 %s16, %s23
    %p177 = scmp.eq.s32.totalorder %s176, 0
    %s179 = sadd.s32 %s178, 1
    %s180 = scalar_select %p177, %s178, %s179
    %p183 = pneg %p177
    %p184 = scmp.eq.s32.totalorder %s16, 1
    %p185 = por %p183, %p184
    %p186 = scmp.ne.s32.totalorder %s178, %s181
    %p187 = scmp.eq.s32.totalorder %s16, 0
    %p188 = por %p186, %p187
    %p189 = scmp.ne.s32.totalorder %s178, %s181
    %p190 = scmp.eq.s32.totalorder %s21, 1
    %p191 = por %p189, %p190
    %p192 = scmp.ne.s32.totalorder %s181, %s182
    %p193 = scmp.eq.s32.totalorder %s21, 0
    %p194 = por %p192, %p193
    %p195 = scmp.ne.s32.totalorder %s181, %s182
    %p196 = scmp.eq.s32.totalorder %s22, 1
    %p197 = por %p195, %p196
    %p199 = scmp.ne.s32.totalorder %s182, %s198
    %p200 = scmp.eq.s32.totalorder %s22, 0
    %p201 = por %p199, %p200
    %s202 = ssub.s32 %s16, %s23
    %p203 = scmp.eq.s32.totalorder %s202, 0
    %s205 = sadd.s32 %s204, 1
    %s206 = scalar_select %p203, %s204, %s205
    %p209 = pneg %p203
    %p210 = scmp.eq.s32.totalorder %s16, 1
    %p211 = por %p209, %p210
    %p212 = scmp.ne.s32.totalorder %s204, %s207
    %p213 = scmp.eq.s32.totalorder %s16, 0
    %p214 = por %p212, %p213
    %p215 = scmp.ne.s32.totalorder %s204, %s207
    %p216 = scmp.eq.s32.totalorder %s21, 1
    %p217 = por %p215, %p216
    %p218 = scmp.ne.s32.totalorder %s207, %s208
    %p219 = scmp.eq.s32.totalorder %s21, 0
    %p220 = por %p218, %p219
    %p221 = scmp.ne.s32.totalorder %s207, %s208
    %p222 = scmp.eq.s32.totalorder %s22, 1
    %p223 = por %p221, %p222
    %p225 = scmp.ne.s32.totalorder %s208, %s224
    %p226 = scmp.eq.s32.totalorder %s22, 0
    %p227 = por %p225, %p226
    %s228 = ssub.s32 %s16, %s23
    %p229 = scmp.eq.s32.totalorder %s228, 0
    %s231 = sadd.s32 %s230, 1
    %s232 = scalar_select %p229, %s230, %s231
    %p235 = pneg %p229
    %p236 = scmp.eq.s32.totalorder %s16, 1
    %p237 = por %p235, %p236
    %p238 = scmp.ne.s32.totalorder %s230, %s233
    %p239 = scmp.eq.s32.totalorder %s16, 0
    %p240 = por %p238, %p239
    %p241 = scmp.ne.s32.totalorder %s230, %s233
    %p242 = scmp.eq.s32.totalorder %s21, 1
    %p243 = por %p241, %p242
    %p244 = scmp.ne.s32.totalorder %s233, %s234
    %p245 = scmp.eq.s32.totalorder %s21, 0
    %p246 = por %p244, %p245
    %p247 = scmp.ne.s32.totalorder %s233, %s234
    %p248 = scmp.eq.s32.totalorder %s22, 1
    %p249 = por %p247, %p248
    %p251 = scmp.ne.s32.totalorder %s234, %s250
    %p252 = scmp.eq.s32.totalorder %s22, 0
    %p253 = por %p251, %p252
    %p254 = scmp.le.s32.totalorder 1, %s16
    %p255 = scmp.lt.s32.totalorder %s16, 3
    %p256 = pnand %p254, %p255
    %p257 = pneg %p256
    // Predicated region
    $region9: #{spp_bottleneck_pallas.4} parent=5 // pred_check
      _
    $region10: #{spp_bottleneck_pallas.4} parent=5 // pred_check_branch
      %259 = sbr.rel (%p256) target = $region12
    $region11: #{spp_bottleneck_pallas.4} parent=5 // pred_region
      %s260 = ssub.s32 %s16, 1
      // Predicated region
      $region13: #{spp_bottleneck_pallas.4} parent=11 // pred_check
        %p261 = pneg %p63
      $region14: #{spp_bottleneck_pallas.4} parent=11 // pred_check_branch
        %263 = sbr.rel (%p261) target = $region16
      $region15: #{spp_bottleneck_pallas.4} parent=11 // pred_region
        _
      $region16: #{spp_bottleneck_pallas.4} parent=11 // pred_fallthru
        _
      // Predicated region
      $region17: #{spp_bottleneck_pallas.4} parent=11 // pred_check
        %p264 = pneg %p84
      $region18: #{spp_bottleneck_pallas.4} parent=11 // pred_check_branch
        %266 = sbr.rel (%p264) target = $region20
      $region19: #{spp_bottleneck_pallas.4} parent=11 // pred_region
        _
      $region20: #{spp_bottleneck_pallas.4} parent=11 // pred_fallthru
        _
      // Predicated region
      $region21: #{spp_bottleneck_pallas.4} parent=11 // pred_check
        %p267 = pneg %p105
      $region22: #{spp_bottleneck_pallas.4} parent=11 // pred_check_branch
        %269 = sbr.rel (%p267) target = $region24
      $region23: #{spp_bottleneck_pallas.4} parent=11 // pred_region
        _
      $region24: #{spp_bottleneck_pallas.4} parent=11 // pred_fallthru
        _
      // Predicated region
      $region25: #{spp_bottleneck_pallas.4} parent=11 // pred_check
        %p270 = pneg %p126
      $region26: #{spp_bottleneck_pallas.4} parent=11 // pred_check_branch
        %272 = sbr.rel (%p270) target = $region28
      $region27: #{spp_bottleneck_pallas.4} parent=11 // pred_region
        _
      $region28: #{spp_bottleneck_pallas.4} parent=11 // pred_fallthru
        _
      // Predicated region
      $region29: #{spp_bottleneck_pallas.4} parent=11 // pred_check
        %p273 = pneg %p147
      $region30: #{spp_bottleneck_pallas.4} parent=11 // pred_check_branch
        %275 = sbr.rel (%p273) target = $region32
      $region31: #{spp_bottleneck_pallas.4} parent=11 // pred_region
        _
      $region32: #{spp_bottleneck_pallas.4} parent=11 // pred_fallthru
        _
      // Predicated region
      $region33: #{spp_bottleneck_pallas.4} parent=11 // pred_check
        %p276 = pneg %p168
      $region34: #{spp_bottleneck_pallas.4} parent=11 // pred_check_branch
        %278 = sbr.rel (%p276) target = $region36
      $region35: #{spp_bottleneck_pallas.4} parent=11 // pred_region
        _
      $region36: #{spp_bottleneck_pallas.4} parent=11 // pred_fallthru
        _
    $region12: #{spp_bottleneck_pallas.4} parent=5 // pred_fallthru
      _
    %p279 = scmp.lt.s32.totalorder %s16, 2
    // Predicated region
    $region37: #{spp_bottleneck_pallas.4} parent=5 // pred_check
      %p280 = pneg %p279
    $region38: #{spp_bottleneck_pallas.4} parent=5 // pred_check_branch
      %282 = sbr.rel (%p280) target = $region40
    $region39: #{spp_bottleneck_pallas.4} parent=5 // pred_region
      // Predicated region
      $region41: #{spp_bottleneck_pallas.4} parent=39 // pred_check
        %p283 = pneg %p36
      $region42: #{spp_bottleneck_pallas.4} parent=39 // pred_check_branch
        %285 = sbr.rel (%p283) target = $region44
      $region43: #{spp_bottleneck_pallas.4} parent=39 // pred_region
        %p286 = scmp.lt.s32.totalorder %s16, 1
        %s287 = scalar_select %p286, %s16, 1
        %s288 = smul.addr %s287, 32
        %s289 = smul.addr %s288, 4
        %s290 = scalar_lea.vmem %s0, %s289
      $region44: #{spp_bottleneck_pallas.4} parent=39 // pred_fallthru
        _
    $region40: #{spp_bottleneck_pallas.4} parent=5 // pred_fallthru
      _
    %p291 = scmp.le.s32.totalorder 1, %s16
    %p292 = scmp.lt.s32.totalorder %s16, 3
    %p293 = pnand %p291, %p292
    %p294 = pneg %p293
    // Predicated region
    $region45: #{spp_bottleneck_pallas.4} parent=5 // pred_check
      _
    $region46: #{spp_bottleneck_pallas.4} parent=5 // pred_check_branch
      %296 = sbr.rel (%p293) target = $region48
    $region47: #{spp_bottleneck_pallas.4} parent=5 // pred_region
      %s297 = ssub.s32 %s16, 1
      %p298 = scmp.lt.s32.totalorder %s21, 1
      %s299 = scalar_select %p298, %s21, 1
      %s300 = smul.addr %s299, 32
      %s301 = smul.addr %s300, 4
      %s302 = scalar_lea.vmem %s0, %s301
      %p303 = pneg %p42
      %p304 = pneg %p39
      %p305 = pneg %p63
      %p306 = pneg %p60
      %p307 = pneg %p84
      %p308 = pneg %p81
      %p309 = pneg %p105
      %p310 = pneg %p102
      %p311 = pneg %p126
      %p312 = pneg %p123
      %p313 = pneg %p147
      %p314 = pneg %p144
      %p315 = pneg %p168
      %p316 = pneg %p165
      %p317 = pneg %p194
      %p318 = pneg %p191
      %p319 = scmp.lt.s32.totalorder %s21, 1
      %s320 = scalar_select %p319, %s21, 1
      %s321 = smul.addr %s320, 32
      %s322 = smul.addr %s321, 4
      %s323 = scalar_lea.vmem %s7, %s322
      %p324 = pneg %p220
      %p325 = pneg %p217
      %p326 = scmp.lt.s32.totalorder %s21, 1
      %s327 = scalar_select %p326, %s21, 1
      %s328 = smul.addr %s327, 60
      %s329 = smul.addr %s328, 4
      %s330 = scalar_lea.vmem %s8, %s329
      %p331 = pneg %p246
      %p332 = pneg %p243
      %p333 = scmp.lt.s32.totalorder %s21, 1
      %s334 = scalar_select %p333, %s21, 1
      %s335 = scalar_lea.vmem %s9, %s334
      %p336 = scmp.lt.s32.totalorder %s21, 1
      %s337 = scalar_select %p336, %s21, 1
      %s338 = smul.addr %s337, 32
      %s339 = smul.addr %s338, 4
      %s340 = scalar_lea.vmem %s0, %s339
      %p341 = scmp.lt.s32.totalorder %s21, 1
      %s342 = scalar_select %p341, %s21, 1
      %s343 = smul.addr %s342, 32
      %s344 = smul.addr %s343, 4
      %s345 = scalar_lea.vmem %s7, %s344
      %p346 = scmp.lt.s32.totalorder %s21, 1
      %s347 = scalar_select %p346, %s21, 1
      %s348 = smul.addr %s347, 60
      %s349 = smul.addr %s348, 4
      %s350 = scalar_lea.vmem %s8, %s349
      %p351 = scmp.lt.s32.totalorder %s21, 1
      %s352 = scalar_select %p351, %s21, 1
      %s353 = scalar_lea.vmem %s9, %s352
      %v355 = vld [vmem:[%s340] sm:$0xf]
      %v356 = vld [vmem:[%s340 + $0x4] sm:$0xf]
      %v357 = vld [vmem:[%s340 + $0x8] sm:$0xf]
      %v358 = vld [vmem:[%s340 + $0xc] sm:$0xf]
      %v359 = vld [vmem:[%s340 + $0x10] sm:$0xf]
      %v360 = vld [vmem:[%s340 + $0x14] sm:$0xf]
      %v361 = vld [vmem:[%s340 + $0x18] sm:$0xf]
      %v362 = vld [vmem:[%s340 + $0x1c] sm:$0xf]
      %v363 = vld [vmem:[%s340 + $0x20] sm:$0xf]
      %v364 = vld [vmem:[%s340 + $0x24] sm:$0xf]
      %v365 = vld [vmem:[%s340 + $0x28] sm:$0xf]
      %v366 = vld [vmem:[%s340 + $0x2c] sm:$0xf]
      %v367 = vld [vmem:[%s340 + $0x30] sm:$0xf]
      %v368 = vld [vmem:[%s340 + $0x34] sm:$0xf]
      %v369 = vld [vmem:[%s340 + $0x38] sm:$0xf]
      %v370 = vld [vmem:[%s340 + $0x3c] sm:$0xf]
      %v371 = vld [vmem:[%s340 + $0x40] sm:$0xf]
      %v372 = vld [vmem:[%s340 + $0x44] sm:$0xf]
      %v373 = vld [vmem:[%s340 + $0x48] sm:$0xf]
      %v374 = vld [vmem:[%s340 + $0x4c] sm:$0xf]
      %v375 = vld [vmem:[%s340 + $0x50] sm:$0xf]
      %v376 = vld [vmem:[%s340 + $0x54] sm:$0xf]
      %v377 = vld [vmem:[%s340 + $0x58] sm:$0xf]
      %v378 = vld [vmem:[%s340 + $0x5c] sm:$0xf]
      %v379 = vld [vmem:[%s340 + $0x60] sm:$0xf]
      %v380 = vld [vmem:[%s340 + $0x64] sm:$0xf]
      %v381 = vld [vmem:[%s340 + $0x68] sm:$0xf]
      %v382 = vld [vmem:[%s340 + $0x6c] sm:$0xf]
      %v383 = vld [vmem:[%s340 + $0x70] sm:$0xf]
      %v384 = vld [vmem:[%s340 + $0x74] sm:$0xf]
      %v385 = vld [vmem:[%s340 + $0x78] sm:$0xf]
      %v386 = vld [vmem:[%s340 + $0x7c] sm:$0xf]
      %v387 = vld [vmem:[%s1] sm:$0xf]
      %v388 = vld [vmem:[%s1 + $0x4] sm:$0xf]
      %v421 = vunpack.c.l.b16 %v355
      %v422 = vunpack.c.l.b16 %v356
      %v423 = vunpack.c.l.b16 %v357
      %v424 = vunpack.c.l.b16 %v358
      %v425 = vunpack.c.l.b16 %v359
      %v426 = vunpack.c.l.b16 %v360
      %v427 = vunpack.c.l.b16 %v361
      %v428 = vunpack.c.l.b16 %v362
      %v429 = vunpack.c.l.b16 %v363
      %v430 = vunpack.c.l.b16 %v364
      %v431 = vunpack.c.l.b16 %v365
      %v432 = vunpack.c.l.b16 %v366
      %v433 = vunpack.c.l.b16 %v367
      %v434 = vunpack.c.l.b16 %v368
      %v435 = vunpack.c.l.b16 %v369
      %v436 = vunpack.c.l.b16 %v370
      %v437 = vunpack.c.l.b16 %v371
      %v438 = vunpack.c.l.b16 %v372
      %v439 = vunpack.c.l.b16 %v373
      %v440 = vunpack.c.l.b16 %v374
      %v441 = vunpack.c.l.b16 %v375
      %v442 = vunpack.c.l.b16 %v376
      %v443 = vunpack.c.l.b16 %v377
      %v444 = vunpack.c.l.b16 %v378
      %v445 = vunpack.c.l.b16 %v379
      %v446 = vunpack.c.l.b16 %v380
      %v447 = vunpack.c.l.b16 %v381
      %v448 = vunpack.c.l.b16 %v382
      %v449 = vunpack.c.l.b16 %v383
      %v450 = vunpack.c.l.b16 %v384
      %v451 = vunpack.c.l.b16 %v385
      %v452 = vunpack.c.l.b16 %v386
      %v453 = vpack.c.b16 %v422, %v421
      %v454 = vpack.c.b16 %v424, %v423
      %v455 = vpack.c.b16 %v426, %v425
      %v456 = vpack.c.b16 %v428, %v427
      %v457 = vpack.c.b16 %v430, %v429
      %v458 = vpack.c.b16 %v432, %v431
      %v459 = vpack.c.b16 %v434, %v433
      %v460 = vpack.c.b16 %v436, %v435
      %v461 = vpack.c.b16 %v438, %v437
      %v462 = vpack.c.b16 %v440, %v439
      %v463 = vpack.c.b16 %v442, %v441
      %v464 = vpack.c.b16 %v444, %v443
      %v465 = vpack.c.b16 %v446, %v445
      %v466 = vpack.c.b16 %v448, %v447
      %v467 = vpack.c.b16 %v450, %v449
      %v468 = vpack.c.b16 %v452, %v451
      %v471 = vunpack.c.l.b16 %v387
      %v472 = vunpack.c.l.b16 %v388
      %v473 = vpack.c.b16 %v472, %v471
      %vm475 = vcmask 130048
      %v477 = vsel %vm475, %v453, 0
      %v480 = vsel %vm475, %v454, 0
      %v483 = vsel %vm475, %v455, 0
      %v486 = vsel %vm475, %v456, 0
      %v489 = vsel %vm475, %v457, 0
      %v492 = vsel %vm475, %v458, 0
      %v495 = vsel %vm475, %v459, 0
      %v498 = vsel %vm475, %v460, 0
      %v501 = vsel %vm475, %v461, 0
      %v504 = vsel %vm475, %v462, 0
      %v507 = vsel %vm475, %v463, 0
      %v510 = vsel %vm475, %v464, 0
      %v513 = vsel %vm475, %v465, 0
      %v516 = vsel %vm475, %v466, 0
      %v519 = vsel %vm475, %v467, 0
      %v522 = vsel %vm475, %v468, 0
      %524 = vmatprep.subr.bf16.mxu0 0
      %525 = vmatpush1.bf16.msra.mxu0 %v473
      %526 = vmatprep.subr.bf16.mxu0 0
      %527 = vmatpush1.bf16.msra.mxu0 0
      %528 = vmatprep.subr.bf16.mxu0 0
      %529 = vmatpush1.bf16.msra.mxu0 0
      %530 = vmatprep.subr.bf16.mxu0 0
      %531 = vmatpush1.bf16.msra.mxu0 0
      %532 = vmatprep.subr.bf16.mxu0 0
      %533 = vmatpush1.bf16.msra.mxu0 0
      %534 = vmatprep.subr.bf16.mxu0 0
      %535 = vmatpush1.bf16.msra.mxu0 0
      %536 = vmatprep.subr.bf16.mxu0 0
      %537 = vmatpush1.bf16.msra.mxu0 0
      %538 = vmatprep.subr.bf16.mxu0 0
      %539 = vmatpush1.bf16.msra.mxu0 0
      %540 = vmatprep.subr.bf16.mxu0 0
      %541 = vmatpush1.bf16.msra.mxu0 0
      %542 = vmatprep.subr.bf16.mxu0 0
      %543 = vmatpush1.bf16.msra.mxu0 0
      %544 = vmatprep.subr.bf16.mxu0 0
      %545 = vmatpush1.bf16.msra.mxu0 0
      %546 = vmatprep.subr.bf16.mxu0 0
      %547 = vmatpush1.bf16.msra.mxu0 0
      %548 = vmatprep.subr.bf16.mxu0 0
      %549 = vmatpush1.bf16.msra.mxu0 0
      %550 = vmatprep.subr.bf16.mxu0 0
      %551 = vmatpush1.bf16.msra.mxu0 0
      %552 = vmatprep.subr.bf16.mxu0 0
      %553 = vmatpush1.bf16.msra.mxu0 0
      %554 = vmatprep.subr.bf16.mxu0 0
      %555 = vmatpush1.bf16.msra.mxu0 0
      %556 = vmatprep.mubr.bf16.mxu0 0
      %557 = vmatmul.mubr.bf16.gmra.mrb[0].mxu0 %v477
      %v558 = vpop.f32.mrb[0].mxu0
      %v559 = vadd.f32 0.0, %v558
      %v560 = vpop.f32.mrb[0].mxu0
      %v561 = vpop.f32.mrb[0].mxu0
      %v562 = vadd.f32 0.0, %v561
      %v563 = vpop.f32.mrb[0].mxu0
      %564 = vmatprep.mubr.bf16.mxu0 0
      %565 = vmatmul.mubr.bf16.gmra.mrb[0].mxu0 %v480
      %v566 = vpop.f32.mrb[0].mxu0
      %v567 = vadd.f32 0.0, %v566
      %v568 = vpop.f32.mrb[0].mxu0
      %v569 = vpop.f32.mrb[0].mxu0
      %v570 = vadd.f32 0.0, %v569
      %v571 = vpop.f32.mrb[0].mxu0
      %572 = vmatprep.mubr.bf16.mxu0 0
      %573 = vmatmul.mubr.bf16.gmra.mrb[0].mxu0 %v483
      %v574 = vpop.f32.mrb[0].mxu0
      %v575 = vadd.f32 0.0, %v574
      %v576 = vpop.f32.mrb[0].mxu0
      %v577 = vpop.f32.mrb[0].mxu0
      %v578 = vadd.f32 0.0, %v577
      %v579 = vpop.f32.mrb[0].mxu0
      %580 = vmatprep.mubr.bf16.mxu0 0
      %581 = vmatmul.mubr.bf16.gmra.mrb[0].mxu0 %v486
      %v582 = vpop.f32.mrb[0].mxu0
      %v583 = vadd.f32 0.0, %v582
      %v584 = vpop.f32.mrb[0].mxu0
      %v585 = vpop.f32.mrb[0].mxu0
      %v586 = vadd.f32 0.0, %v585
      %v587 = vpop.f32.mrb[0].mxu0
      %588 = vmatprep.mubr.bf16.mxu0 0
      %589 = vmatmul.mubr.bf16.gmra.mrb[0].mxu0 %v489
      %v590 = vpop.f32.mrb[0].mxu0
      %v591 = vadd.f32 0.0, %v590
      %v592 = vpop.f32.mrb[0].mxu0
      %v593 = vpop.f32.mrb[0].mxu0
      %v594 = vadd.f32 0.0, %v593
      %v595 = vpop.f32.mrb[0].mxu0
      %596 = vmatprep.mubr.bf16.mxu0 0
      %597 = vmatmul.mubr.bf16.gmra.mrb[0].mxu0 %v492
      %v598 = vpop.f32.mrb[0].mxu0
      %v599 = vadd.f32 0.0, %v598
      %v600 = vpop.f32.mrb[0].mxu0
      %v601 = vpop.f32.mrb[0].mxu0
      %v602 = vadd.f32 0.0, %v601
      %v603 = vpop.f32.mrb[0].mxu0
      %604 = vmatprep.mubr.bf16.mxu0 0
      %605 = vmatmul.mubr.bf16.gmra.mrb[0].mxu0 %v495
      %v606 = vpop.f32.mrb[0].mxu0
      %v607 = vadd.f32 0.0, %v606
      %v608 = vpop.f32.mrb[0].mxu0
      %v609 = vpop.f32.mrb[0].mxu0
      %v610 = vadd.f32 0.0, %v609
      %v611 = vpop.f32.mrb[0].mxu0
      %612 = vmatprep.mubr.bf16.mxu0 0
      %613 = vmatmul.mubr.bf16.gmra.mrb[0].mxu0 %v498
      %v614 = vpop.f32.mrb[0].mxu0
      %v615 = vadd.f32 0.0, %v614
      %v616 = vpop.f32.mrb[0].mxu0
      %v617 = vpop.f32.mrb[0].mxu0
      %v618 = vadd.f32 0.0, %v617
      %v619 = vpop.f32.mrb[0].mxu0
      %620 = vmatprep.mubr.bf16.mxu0 0
      %621 = vmatmul.mubr.bf16.gmra.mrb[0].mxu0 %v501
      %v622 = vpop.f32.mrb[0].mxu0
      %v623 = vadd.f32 0.0, %v622
      %v624 = vpop.f32.mrb[0].mxu0
      %v625 = vpop.f32.mrb[0].mxu0
      %v626 = vadd.f32 0.0, %v625
      %v627 = vpop.f32.mrb[0].mxu0
      %628 = vmatprep.mubr.bf16.mxu0 0
      %629 = vmatmul.mubr.bf16.gmra.mrb[0].mxu0 %v504
      %v630 = vpop.f32.mrb[0].mxu0
      %v631 = vadd.f32 0.0, %v630
      %v632 = vpop.f32.mrb[0].mxu0
      %v633 = vpop.f32.mrb[0].mxu0
      %v634 = vadd.f32 0.0, %v633
      %v635 = vpop.f32.mrb[0].mxu0
      %636 = vmatprep.mubr.bf16.mxu0 0
      %637 = vmatmul.mubr.bf16.gmra.mrb[0].mxu0 %v507
      %v638 = vpop.f32.mrb[0].mxu0
      %v639 = vadd.f32 0.0, %v638
      %v640 = vpop.f32.mrb[0].mxu0
      %v641 = vpop.f32.mrb[0].mxu0
      %v642 = vadd.f32 0.0, %v641
      %v643 = vpop.f32.mrb[0].mxu0
      %644 = vmatprep.mubr.bf16.mxu0 0
      %645 = vmatmul.mubr.bf16.gmra.mrb[0].mxu0 %v510
      %v646 = vpop.f32.mrb[0].mxu0
      %v647 = vadd.f32 0.0, %v646
      %v648 = vpop.f32.mrb[0].mxu0
      %v649 = vpop.f32.mrb[0].mxu0
      %v650 = vadd.f32 0.0, %v649
      %v651 = vpop.f32.mrb[0].mxu0
      %652 = vmatprep.mubr.bf16.mxu0 0
      %653 = vmatmul.mubr.bf16.gmra.mrb[0].mxu0 %v513
      %v654 = vpop.f32.mrb[0].mxu0
      %v655 = vadd.f32 0.0, %v654
      %v656 = vpop.f32.mrb[0].mxu0
      %v657 = vpop.f32.mrb[0].mxu0
      %v658 = vadd.f32 0.0, %v657
      %v659 = vpop.f32.mrb[0].mxu0
      %660 = vmatprep.mubr.bf16.mxu0 0
      %661 = vmatmul.mubr.bf16.gmra.mrb[0].mxu0 %v516
      %v662 = vpop.f32.mrb[0].mxu0
      %v663 = vadd.f32 0.0, %v662
      %v664 = vpop.f32.mrb[0].mxu0
      %v665 = vpop.f32.mrb[0].mxu0
      %v666 = vadd.f32 0.0, %v665
      %v667 = vpop.f32.mrb[0].mxu0
      %668 = vmatprep.mubr.bf16.mxu0 0
      %669 = vmatmul.mubr.bf16.gmra.mrb[0].mxu0 %v519
      %v670 = vpop.f32.mrb[0].mxu0
      %v671 = vadd.f32 0.0, %v670
      %v672 = vpop.f32.mrb[0].mxu0
      %v673 = vpop.f32.mrb[0].mxu0
      %v674 = vadd.f32 0.0, %v673
      %v675 = vpop.f32.mrb[0].mxu0
      %676 = vmatprep.mubr.bf16.mxu0 0
      %677 = vmatmul.mubr.bf16.gmra.mrb[0].mxu0 %v522
      %v678 = vpop.f32.mrb[0].mxu0
      %v679 = vadd.f32 0.0, %v678
      %v680 = vpop.f32.mrb[0].mxu0
      %v681 = vpop.f32.mrb[0].mxu0
      %v682 = vadd.f32 0.0, %v681
      %v683 = vpop.f32.mrb[0].mxu0
      %684 = vdwg.mxu0
      %v685 = vld [vmem:[%s2] sm:$0x1]
      %v686 = vld [vmem:[%s3] sm:$0x1]
      %v688 = vlaneseq
      %v689 = vshrl.u32 %v688, 7
      %v690 = vsub.s32 0, %v689
      %v691 = vrot.slane %v685, %v690
      %v693 = vmul.f32 %v559, %v691
      %v694 = vmul.f32 %v562, %v691
      %v695 = vmul.f32 %v567, %v691
      %v696 = vmul.f32 %v570, %v691
      %v697 = vmul.f32 %v575, %v691
      %v698 = vmul.f32 %v578, %v691
      %v699 = vmul.f32 %v583, %v691
      %v700 = vmul.f32 %v586, %v691
      %v701 = vmul.f32 %v591, %v691
      %v702 = vmul.f32 %v594, %v691
      %v703 = vmul.f32 %v599, %v691
      %v704 = vmul.f32 %v602, %v691
      %v705 = vmul.f32 %v607, %v691
      %v706 = vmul.f32 %v610, %v691
      %v707 = vmul.f32 %v615, %v691
      %v708 = vmul.f32 %v618, %v691
      %v709 = vmul.f32 %v623, %v691
      %v710 = vmul.f32 %v626, %v691
      %v711 = vmul.f32 %v631, %v691
      %v712 = vmul.f32 %v634, %v691
      %v713 = vmul.f32 %v639, %v691
      %v714 = vmul.f32 %v642, %v691
      %v715 = vmul.f32 %v647, %v691
      %v716 = vmul.f32 %v650, %v691
      %v717 = vmul.f32 %v655, %v691
      %v718 = vmul.f32 %v658, %v691
      %v719 = vmul.f32 %v663, %v691
      %v720 = vmul.f32 %v666, %v691
      %v721 = vmul.f32 %v671, %v691
      %v722 = vmul.f32 %v674, %v691
      %v723 = vmul.f32 %v679, %v691
      %v724 = vmul.f32 %v682, %v691
      %v726 = vlaneseq
      %v727 = vshrl.u32 %v726, 7
      %v728 = vsub.s32 0, %v727
      %v729 = vrot.slane %v686, %v728
      %v731 = vadd.f32 %v693, %v729
      %v732 = vadd.f32 %v694, %v729
      %v733 = vadd.f32 %v695, %v729
      %v734 = vadd.f32 %v696, %v729
      %v735 = vadd.f32 %v697, %v729
      %v736 = vadd.f32 %v698, %v729
      %v737 = vadd.f32 %v699, %v729
      %v738 = vadd.f32 %v700, %v729
      %v739 = vadd.f32 %v701, %v729
      %v740 = vadd.f32 %v702, %v729
      %v741 = vadd.f32 %v703, %v729
      %v742 = vadd.f32 %v704, %v729
      %v743 = vadd.f32 %v705, %v729
      %v744 = vadd.f32 %v706, %v729
      %v745 = vadd.f32 %v707, %v729
      %v746 = vadd.f32 %v708, %v729
      %v747 = vadd.f32 %v709, %v729
      %v748 = vadd.f32 %v710, %v729
      %v749 = vadd.f32 %v711, %v729
      %v750 = vadd.f32 %v712, %v729
      %v751 = vadd.f32 %v713, %v729
      %v752 = vadd.f32 %v714, %v729
      %v753 = vadd.f32 %v715, %v729
      %v754 = vadd.f32 %v716, %v729
      %v755 = vadd.f32 %v717, %v729
      %v756 = vadd.f32 %v718, %v729
      %v757 = vadd.f32 %v719, %v729
      %v758 = vadd.f32 %v720, %v729
      %v759 = vadd.f32 %v721, %v729
      %v760 = vadd.f32 %v722, %v729
      %v761 = vadd.f32 %v723, %v729
      %v762 = vadd.f32 %v724, %v729
      %v763 = vsub.f32 0.0, %v731
      %v764 = vsub.f32 0.0, %v732
      %v765 = vsub.f32 0.0, %v733
      %v766 = vsub.f32 0.0, %v734
      %v767 = vsub.f32 0.0, %v735
      %v768 = vsub.f32 0.0, %v736
      %v769 = vsub.f32 0.0, %v737
      %v770 = vsub.f32 0.0, %v738
      %v771 = vsub.f32 0.0, %v739
      %v772 = vsub.f32 0.0, %v740
      %v773 = vsub.f32 0.0, %v741
      %v774 = vsub.f32 0.0, %v742
      %v775 = vsub.f32 0.0, %v743
      %v776 = vsub.f32 0.0, %v744
      %v777 = vsub.f32 0.0, %v745
      %v778 = vsub.f32 0.0, %v746
      %v779 = vsub.f32 0.0, %v747
      %v780 = vsub.f32 0.0, %v748
      %v781 = vsub.f32 0.0, %v749
      %v782 = vsub.f32 0.0, %v750
      %v783 = vsub.f32 0.0, %v751
      %v784 = vsub.f32 0.0, %v752
      %v785 = vsub.f32 0.0, %v753
      %v786 = vsub.f32 0.0, %v754
      %v787 = vsub.f32 0.0, %v755
      %v788 = vsub.f32 0.0, %v756
      %v789 = vsub.f32 0.0, %v757
      %v790 = vsub.f32 0.0, %v758
      %v791 = vsub.f32 0.0, %v759
      %v792 = vsub.f32 0.0, %v760
      %v793 = vsub.f32 0.0, %v761
      %v794 = vsub.f32 0.0, %v762
      %v795 = vmul.f32 %v763, 1.442695
      %v796 = vpow.pop %v795
      %v797 = vmul.f32 %v764, 1.442695
      %v798 = vpow.pop %v797
      %v799 = vmul.f32 %v765, 1.442695
      %v800 = vpow.pop %v799
      %v801 = vmul.f32 %v766, 1.442695
      %v802 = vpow.pop %v801
      %v803 = vmul.f32 %v767, 1.442695
      %v804 = vpow.pop %v803
      %v805 = vmul.f32 %v768, 1.442695
      %v806 = vpow.pop %v805
      %v807 = vmul.f32 %v769, 1.442695
      %v808 = vpow.pop %v807
      %v809 = vmul.f32 %v770, 1.442695
      %v810 = vpow.pop %v809
      %v811 = vmul.f32 %v771, 1.442695
      %v812 = vpow.pop %v811
      %v813 = vmul.f32 %v772, 1.442695
      %v814 = vpow.pop %v813
      %v815 = vmul.f32 %v773, 1.442695
      %v816 = vpow.pop %v815
      %v817 = vmul.f32 %v774, 1.442695
      %v818 = vpow.pop %v817
      %v819 = vmul.f32 %v775, 1.442695
      %v820 = vpow.pop %v819
      %v821 = vmul.f32 %v776, 1.442695
      %v822 = vpow.pop %v821
      %v823 = vmul.f32 %v777, 1.442695
      %v824 = vpow.pop %v823
      %v825 = vmul.f32 %v778, 1.442695
      %v826 = vpow.pop %v825
      %v827 = vmul.f32 %v779, 1.442695
      %v828 = vpow.pop %v827
      %v829 = vmul.f32 %v780, 1.442695
      %v830 = vpow.pop %v829
      %v831 = vmul.f32 %v781, 1.442695
      %v832 = vpow.pop %v831
      %v833 = vmul.f32 %v782, 1.442695
      %v834 = vpow.pop %v833
      %v835 = vmul.f32 %v783, 1.442695
      %v836 = vpow.pop %v835
      %v837 = vmul.f32 %v784, 1.442695
      %v838 = vpow.pop %v837
      %v839 = vmul.f32 %v785, 1.442695
      %v840 = vpow.pop %v839
      %v841 = vmul.f32 %v786, 1.442695
      %v842 = vpow.pop %v841
      %v843 = vmul.f32 %v787, 1.442695
      %v844 = vpow.pop %v843
      %v845 = vmul.f32 %v788, 1.442695
      %v846 = vpow.pop %v845
      %v847 = vmul.f32 %v789, 1.442695
      %v848 = vpow.pop %v847
      %v849 = vmul.f32 %v790, 1.442695
      %v850 = vpow.pop %v849
      %v851 = vmul.f32 %v791, 1.442695
      %v852 = vpow.pop %v851
      %v853 = vmul.f32 %v792, 1.442695
      %v854 = vpow.pop %v853
      %v855 = vmul.f32 %v793, 1.442695
      %v856 = vpow.pop %v855
      %v857 = vmul.f32 %v794, 1.442695
      %v858 = vpow.pop %v857
      %v859 = vadd.f32 %v796, 1.0
      %v860 = vadd.f32 %v798, 1.0
      %v861 = vadd.f32 %v800, 1.0
      %v862 = vadd.f32 %v802, 1.0
      %v863 = vadd.f32 %v804, 1.0
      %v864 = vadd.f32 %v806, 1.0
      %v865 = vadd.f32 %v808, 1.0
      %v866 = vadd.f32 %v810, 1.0
      %v867 = vadd.f32 %v812, 1.0
      %v868 = vadd.f32 %v814, 1.0
      %v869 = vadd.f32 %v816, 1.0
      %v870 = vadd.f32 %v818, 1.0
      %v871 = vadd.f32 %v820, 1.0
      %v872 = vadd.f32 %v822, 1.0
      %v873 = vadd.f32 %v824, 1.0
      %v874 = vadd.f32 %v826, 1.0
      %v875 = vadd.f32 %v828, 1.0
      %v876 = vadd.f32 %v830, 1.0
      %v877 = vadd.f32 %v832, 1.0
      %v878 = vadd.f32 %v834, 1.0
      %v879 = vadd.f32 %v836, 1.0
      %v880 = vadd.f32 %v838, 1.0
      %v881 = vadd.f32 %v840, 1.0
      %v882 = vadd.f32 %v842, 1.0
      %v883 = vadd.f32 %v844, 1.0
      %v884 = vadd.f32 %v846, 1.0
      %v885 = vadd.f32 %v848, 1.0
      %v886 = vadd.f32 %v850, 1.0
      %v887 = vadd.f32 %v852, 1.0
      %v888 = vadd.f32 %v854, 1.0
      %v889 = vadd.f32 %v856, 1.0
      %v890 = vadd.f32 %v858, 1.0
      %v891 = vrcp.pop %v859
      %v892 = vrcp.pop %v860
      %v893 = vrcp.pop %v861
      %v894 = vrcp.pop %v862
      %v895 = vrcp.pop %v863
      %v896 = vrcp.pop %v864
      %v897 = vrcp.pop %v865
      %v898 = vrcp.pop %v866
      %v899 = vrcp.pop %v867
      %v900 = vrcp.pop %v868
      %v901 = vrcp.pop %v869
      %v902 = vrcp.pop %v870
      %v903 = vrcp.pop %v871
      %v904 = vrcp.pop %v872
      %v905 = vrcp.pop %v873
      %v906 = vrcp.pop %v874
      %v907 = vrcp.pop %v875
      %v908 = vrcp.pop %v876
      %v909 = vrcp.pop %v877
      %v910 = vrcp.pop %v878
      %v911 = vrcp.pop %v879
      %v912 = vrcp.pop %v880
      %v913 = vrcp.pop %v881
      %v914 = vrcp.pop %v882
      %v915 = vrcp.pop %v883
      %v916 = vrcp.pop %v884
      %v917 = vrcp.pop %v885
      %v918 = vrcp.pop %v886
      %v919 = vrcp.pop %v887
      %v920 = vrcp.pop %v888
      %v921 = vrcp.pop %v889
      %v922 = vrcp.pop %v890
      %v923 = vmul.f32 %v731, %v891
      %v924 = vmul.f32 %v732, %v892
      %v925 = vmul.f32 %v733, %v893
      %v926 = vmul.f32 %v734, %v894
      %v927 = vmul.f32 %v735, %v895
      %v928 = vmul.f32 %v736, %v896
      %v929 = vmul.f32 %v737, %v897
      %v930 = vmul.f32 %v738, %v898
      %v931 = vmul.f32 %v739, %v899
      %v932 = vmul.f32 %v740, %v900
      %v933 = vmul.f32 %v741, %v901
      %v934 = vmul.f32 %v742, %v902
      %v935 = vmul.f32 %v743, %v903
      %v936 = vmul.f32 %v744, %v904
      %v937 = vmul.f32 %v745, %v905
      %v938 = vmul.f32 %v746, %v906
      %v939 = vmul.f32 %v747, %v907
      %v940 = vmul.f32 %v748, %v908
      %v941 = vmul.f32 %v749, %v909
      %v942 = vmul.f32 %v750, %v910
      %v943 = vmul.f32 %v751, %v911
      %v944 = vmul.f32 %v752, %v912
      %v945 = vmul.f32 %v753, %v913
      %v946 = vmul.f32 %v754, %v914
      %v947 = vmul.f32 %v755, %v915
      %v948 = vmul.f32 %v756, %v916
      %v949 = vmul.f32 %v757, %v917
      %v950 = vmul.f32 %v758, %v918
      %v951 = vmul.f32 %v759, %v919
      %v952 = vmul.f32 %v760, %v920
      %v953 = vmul.f32 %v761, %v921
      %v954 = vmul.f32 %v762, %v922
      %v955 = vpack.c.bf16 %v924, %v923
      %v956 = vpack.c.bf16 %v926, %v925
      %v957 = vpack.c.bf16 %v928, %v927
      %v958 = vpack.c.bf16 %v930, %v929
      %v959 = vpack.c.bf16 %v932, %v931
      %v960 = vpack.c.bf16 %v934, %v933
      %v961 = vpack.c.bf16 %v936, %v935
      %v962 = vpack.c.bf16 %v938, %v937
      %v963 = vpack.c.bf16 %v940, %v939
      %v964 = vpack.c.bf16 %v942, %v941
      %v965 = vpack.c.bf16 %v944, %v943
      %v966 = vpack.c.bf16 %v946, %v945
      %v967 = vpack.c.bf16 %v948, %v947
      %v968 = vpack.c.bf16 %v950, %v949
      %v969 = vpack.c.bf16 %v952, %v951
      %v970 = vpack.c.bf16 %v954, %v953
      %v987 = vunpack.c.l.b16 %v955
      %v988 = vunpack.c.h.b16 %v955
      %v989 = vunpack.c.l.b16 %v956
      %v990 = vunpack.c.h.b16 %v956
      %v991 = vunpack.c.l.b16 %v957
      %v992 = vunpack.c.h.b16 %v957
      %v993 = vunpack.c.l.b16 %v958
      %v994 = vunpack.c.h.b16 %v958
      %v995 = vunpack.c.l.b16 %v959
      %v996 = vunpack.c.h.b16 %v959
      %v997 = vunpack.c.l.b16 %v960
      %v998 = vunpack.c.h.b16 %v960
      %v999 = vunpack.c.l.b16 %v961
      %v1000 = vunpack.c.h.b16 %v961
      %v1001 = vunpack.c.l.b16 %v962
      %v1002 = vunpack.c.h.b16 %v962
      %v1003 = vunpack.c.l.b16 %v963
      %v1004 = vunpack.c.h.b16 %v963
      %v1005 = vunpack.c.l.b16 %v964
      %v1006 = vunpack.c.h.b16 %v964
      %v1007 = vunpack.c.l.b16 %v965
      %v1008 = vunpack.c.h.b16 %v965
      %v1009 = vunpack.c.l.b16 %v966
      %v1010 = vunpack.c.h.b16 %v966
      %v1011 = vunpack.c.l.b16 %v967
      %v1012 = vunpack.c.h.b16 %v967
      %v1013 = vunpack.c.l.b16 %v968
      %v1014 = vunpack.c.h.b16 %v968
      %v1015 = vunpack.c.l.b16 %v969
      %v1016 = vunpack.c.h.b16 %v969
      %v1017 = vunpack.c.l.b16 %v970
      %v1018 = vunpack.c.h.b16 %v970
      %v1019 = vpack.c.b16 %v987, %v987
      %v1020 = vpack.c.b16 %v988, %v988
      %v1021 = vpack.c.b16 %v989, %v989
      %v1022 = vpack.c.b16 %v990, %v990
      %v1023 = vpack.c.b16 %v991, %v991
      %v1024 = vpack.c.b16 %v992, %v992
      %v1025 = vpack.c.b16 %v993, %v993
      %v1026 = vpack.c.b16 %v994, %v994
      %v1027 = vpack.c.b16 %v995, %v995
      %v1028 = vpack.c.b16 %v996, %v996
      %v1029 = vpack.c.b16 %v997, %v997
      %v1030 = vpack.c.b16 %v998, %v998
      %v1031 = vpack.c.b16 %v999, %v999
      %v1032 = vpack.c.b16 %v1000, %v1000
      %v1033 = vpack.c.b16 %v1001, %v1001
      %v1034 = vpack.c.b16 %v1002, %v1002
      %v1035 = vpack.c.b16 %v1003, %v1003
      %v1036 = vpack.c.b16 %v1004, %v1004
      %v1037 = vpack.c.b16 %v1005, %v1005
      %v1038 = vpack.c.b16 %v1006, %v1006
      %v1039 = vpack.c.b16 %v1007, %v1007
      %v1040 = vpack.c.b16 %v1008, %v1008
      %v1041 = vpack.c.b16 %v1009, %v1009
      %v1042 = vpack.c.b16 %v1010, %v1010
      %v1043 = vpack.c.b16 %v1011, %v1011
      %v1044 = vpack.c.b16 %v1012, %v1012
      %v1045 = vpack.c.b16 %v1013, %v1013
      %v1046 = vpack.c.b16 %v1014, %v1014
      %v1047 = vpack.c.b16 %v1015, %v1015
      %v1048 = vpack.c.b16 %v1016, %v1016
      %v1049 = vpack.c.b16 %v1017, %v1017
      %v1050 = vpack.c.b16 %v1018, %v1018
      %vm1083 = vcmask 60416
      %1084 = vst.msk [vmem:[%s345] sm:$0xf] %vm1083, %v1019
      %1085 = vst.msk [vmem:[%s345 + $0x4] sm:$0xf] %vm1083, %v1020
      %1086 = vst.msk [vmem:[%s345 + $0x8] sm:$0xf] %vm1083, %v1021
      %1087 = vst.msk [vmem:[%s345 + $0xc] sm:$0xf] %vm1083, %v1022
      %1088 = vst.msk [vmem:[%s345 + $0x10] sm:$0xf] %vm1083, %v1023
      %1089 = vst.msk [vmem:[%s345 + $0x14] sm:$0xf] %vm1083, %v1024
      %1090 = vst.msk [vmem:[%s345 + $0x18] sm:$0xf] %vm1083, %v1025
      %1091 = vst.msk [vmem:[%s345 + $0x1c] sm:$0xf] %vm1083, %v1026
      %1092 = vst.msk [vmem:[%s345 + $0x20] sm:$0xf] %vm1083, %v1027
      %1093 = vst.msk [vmem:[%s345 + $0x24] sm:$0xf] %vm1083, %v1028
      %1094 = vst.msk [vmem:[%s345 + $0x28] sm:$0xf] %vm1083, %v1029
      %1095 = vst.msk [vmem:[%s345 + $0x2c] sm:$0xf] %vm1083, %v1030
      %1096 = vst.msk [vmem:[%s345 + $0x30] sm:$0xf] %vm1083, %v1031
      %1097 = vst.msk [vmem:[%s345 + $0x34] sm:$0xf] %vm1083, %v1032
      %1098 = vst.msk [vmem:[%s345 + $0x38] sm:$0xf] %vm1083, %v1033
      %1099 = vst.msk [vmem:[%s345 + $0x3c] sm:$0xf] %vm1083, %v1034
      %1100 = vst.msk [vmem:[%s345 + $0x40] sm:$0xf] %vm1083, %v1035
      %1101 = vst.msk [vmem:[%s345 + $0x44] sm:$0xf] %vm1083, %v1036
      %1102 = vst.msk [vmem:[%s345 + $0x48] sm:$0xf] %vm1083, %v1037
      %1103 = vst.msk [vmem:[%s345 + $0x4c] sm:$0xf] %vm1083, %v1038
      %1104 = vst.msk [vmem:[%s345 + $0x50] sm:$0xf] %vm1083, %v1039
      %1105 = vst.msk [vmem:[%s345 + $0x54] sm:$0xf] %vm1083, %v1040
      %1106 = vst.msk [vmem:[%s345 + $0x58] sm:$0xf] %vm1083, %v1041
      %1107 = vst.msk [vmem:[%s345 + $0x5c] sm:$0xf] %vm1083, %v1042
      %1108 = vst.msk [vmem:[%s345 + $0x60] sm:$0xf] %vm1083, %v1043
      %1109 = vst.msk [vmem:[%s345 + $0x64] sm:$0xf] %vm1083, %v1044
      %1110 = vst.msk [vmem:[%s345 + $0x68] sm:$0xf] %vm1083, %v1045
      %1111 = vst.msk [vmem:[%s345 + $0x6c] sm:$0xf] %vm1083, %v1046
      %1112 = vst.msk [vmem:[%s345 + $0x70] sm:$0xf] %vm1083, %v1047
      %1113 = vst.msk [vmem:[%s345 + $0x74] sm:$0xf] %vm1083, %v1048
      %1114 = vst.msk [vmem:[%s345 + $0x78] sm:$0xf] %vm1083, %v1049
      %1115 = vst.msk [vmem:[%s345 + $0x7c] sm:$0xf] %vm1083, %v1050
      %v1116 = vld [vmem:[%s4] sm:$0xf]
      %vm1117 = vcmask 64512
      %v1119 = vsel %vm1117, %v955, 0
      %v1122 = vsel %vm1117, %v956, 0
      %v1125 = vsel %vm1117, %v957, 0
      %v1128 = vsel %vm1117, %v958, 0
      %v1131 = vsel %vm1117, %v959, 0
      %v1134 = vsel %vm1117, %v960, 0
      %v1137 = vsel %vm1117, %v961, 0
      %v1140 = vsel %vm1117, %v962, 0
      %v1143 = vsel %vm1117, %v963, 0
      %v1146 = vsel %vm1117, %v964, 0
      %v1149 = vsel %vm1117, %v965, 0
      %v1152 = vsel %vm1117, %v966, 0
      %v1155 = vsel %vm1117, %v967, 0
      %v1158 = vsel %vm1117, %v968, 0
      %v1161 = vsel %vm1117, %v969, 0
      %v1164 = vsel %vm1117, %v970, 0
      %vm1166 = vcmask 1043456
      %v1168 = vsel %vm1166, %v1116, 0
      %1170 = vmatprep.subr.bf16.mxu0 0
      %1171 = vmatpush1.bf16.msra.mxu0 %v1168
      %1172 = vmatprep.subr.bf16.mxu0 0
      %1173 = vmatpush1.bf16.msra.mxu0 0
      %1174 = vmatprep.subr.bf16.mxu0 0
      %1175 = vmatpush1.bf16.msra.mxu0 0
      %1176 = vmatprep.subr.bf16.mxu0 0
      %1177 = vmatpush1.bf16.msra.mxu0 0
      %1178 = vmatprep.subr.bf16.mxu0 0
      %1179 = vmatpush1.bf16.msra.mxu0 0
      %1180 = vmatprep.subr.bf16.mxu0 0
      %1181 = vmatpush1.bf16.msra.mxu0 0
      %1182 = vmatprep.subr.bf16.mxu0 0
      %1183 = vmatpush1.bf16.msra.mxu0 0
      %1184 = vmatprep.subr.bf16.mxu0 0
      %1185 = vmatpush1.bf16.msra.mxu0 0
      %1186 = vmatprep.subr.bf16.mxu0 0
      %1187 = vmatpush1.bf16.msra.mxu0 0
      %1188 = vmatprep.subr.bf16.mxu0 0
      %1189 = vmatpush1.bf16.msra.mxu0 0
      %1190 = vmatprep.subr.bf16.mxu0 0
      %1191 = vmatpush1.bf16.msra.mxu0 0
      %1192 = vmatprep.subr.bf16.mxu0 0
      %1193 = vmatpush1.bf16.msra.mxu0 0
      %1194 = vmatprep.subr.bf16.mxu0 0
      %1195 = vmatpush1.bf16.msra.mxu0 0
      %1196 = vmatprep.subr.bf16.mxu0 0
      %1197 = vmatpush1.bf16.msra.mxu0 0
      %1198 = vmatprep.subr.bf16.mxu0 0
      %1199 = vmatpush1.bf16.msra.mxu0 0
      %1200 = vmatprep.subr.bf16.mxu0 0
      %1201 = vmatpush1.bf16.msra.mxu0 0
      %1202 = vmatprep.mubr.bf16.mxu0 0
      %1203 = vmatmul.mubr.bf16.gmra.mrb[0].mxu0 %v1119
      %v1204 = vpop.f32.mrb[0].mxu0
      %v1205 = vadd.f32 0.0, %v1204
      %v1206 = vpop.f32.mrb[0].mxu0
      %v1207 = vpop.f32.mrb[0].mxu0
      %v1208 = vadd.f32 0.0, %v1207
      %v1209 = vpop.f32.mrb[0].mxu0
      %1210 = vmatprep.mubr.bf16.mxu0 0
      %1211 = vmatmul.mubr.bf16.gmra.mrb[0].mxu0 %v1122
      %v1212 = vpop.f32.mrb[0].mxu0
      %v1213 = vadd.f32 0.0, %v1212
      %v1214 = vpop.f32.mrb[0].mxu0
      %v1215 = vpop.f32.mrb[0].mxu0
      %v1216 = vadd.f32 0.0, %v1215
      %v1217 = vpop.f32.mrb[0].mxu0
      %1218 = vmatprep.mubr.bf16.mxu0 0
      %1219 = vmatmul.mubr.bf16.gmra.mrb[0].mxu0 %v1125
      %v1220 = vpop.f32.mrb[0].mxu0
      %v1221 = vadd.f32 0.0, %v1220
      %v1222 = vpop.f32.mrb[0].mxu0
      %v1223 = vpop.f32.mrb[0].mxu0
      %v1224 = vadd.f32 0.0, %v1223
      %v1225 = vpop.f32.mrb[0].mxu0
      %1226 = vmatprep.mubr.bf16.mxu0 0
      %1227 = vmatmul.mubr.bf16.gmra.mrb[0].mxu0 %v1128
      %v1228 = vpop.f32.mrb[0].mxu0
      %v1229 = vadd.f32 0.0, %v1228
      %v1230 = vpop.f32.mrb[0].mxu0
      %v1231 = vpop.f32.mrb[0].mxu0
      %v1232 = vadd.f32 0.0, %v1231
      %v1233 = vpop.f32.mrb[0].mxu0
      %1234 = vmatprep.mubr.bf16.mxu0 0
      %1235 = vmatmul.mubr.bf16.gmra.mrb[0].mxu0 %v1131
      %v1236 = vpop.f32.mrb[0].mxu0
      %v1237 = vadd.f32 0.0, %v1236
      %v1238 = vpop.f32.mrb[0].mxu0
      %v1239 = vpop.f32.mrb[0].mxu0
      %v1240 = vadd.f32 0.0, %v1239
      %v1241 = vpop.f32.mrb[0].mxu0
      %1242 = vmatprep.mubr.bf16.mxu0 0
      %1243 = vmatmul.mubr.bf16.gmra.mrb[0].mxu0 %v1134
      %v1244 = vpop.f32.mrb[0].mxu0
      %v1245 = vadd.f32 0.0, %v1244
      %v1246 = vpop.f32.mrb[0].mxu0
      %v1247 = vpop.f32.mrb[0].mxu0
      %v1248 = vadd.f32 0.0, %v1247
      %v1249 = vpop.f32.mrb[0].mxu0
      %1250 = vmatprep.mubr.bf16.mxu0 0
      %1251 = vmatmul.mubr.bf16.gmra.mrb[0].mxu0 %v1137
      %v1252 = vpop.f32.mrb[0].mxu0
      %v1253 = vadd.f32 0.0, %v1252
      %v1254 = vpop.f32.mrb[0].mxu0
      %v1255 = vpop.f32.mrb[0].mxu0
      %v1256 = vadd.f32 0.0, %v1255
      %v1257 = vpop.f32.mrb[0].mxu0
      %1258 = vmatprep.mubr.bf16.mxu0 0
      %1259 = vmatmul.mubr.bf16.gmra.mrb[0].mxu0 %v1140
      %v1260 = vpop.f32.mrb[0].mxu0
      %v1261 = vadd.f32 0.0, %v1260
      %v1262 = vpop.f32.mrb[0].mxu0
      %v1263 = vpop.f32.mrb[0].mxu0
      %v1264 = vadd.f32 0.0, %v1263
      %v1265 = vpop.f32.mrb[0].mxu0
      %1266 = vmatprep.mubr.bf16.mxu0 0
      %1267 = vmatmul.mubr.bf16.gmra.mrb[0].mxu0 %v1143
      %v1268 = vpop.f32.mrb[0].mxu0
      %v1269 = vadd.f32 0.0, %v1268
      %v1270 = vpop.f32.mrb[0].mxu0
      %v1271 = vpop.f32.mrb[0].mxu0
      %v1272 = vadd.f32 0.0, %v1271
      %v1273 = vpop.f32.mrb[0].mxu0
      %1274 = vmatprep.mubr.bf16.mxu0 0
      %1275 = vmatmul.mubr.bf16.gmra.mrb[0].mxu0 %v1146
      %v1276 = vpop.f32.mrb[0].mxu0
      %v1277 = vadd.f32 0.0, %v1276
      %v1278 = vpop.f32.mrb[0].mxu0
      %v1279 = vpop.f32.mrb[0].mxu0
      %v1280 = vadd.f32 0.0, %v1279
      %v1281 = vpop.f32.mrb[0].mxu0
      %1282 = vmatprep.mubr.bf16.mxu0 0
      %1283 = vmatmul.mubr.bf16.gmra.mrb[0].mxu0 %v1149
      %v1284 = vpop.f32.mrb[0].mxu0
      %v1285 = vadd.f32 0.0, %v1284
      %v1286 = vpop.f32.mrb[0].mxu0
      %v1287 = vpop.f32.mrb[0].mxu0
      %v1288 = vadd.f32 0.0, %v1287
      %v1289 = vpop.f32.mrb[0].mxu0
      %1290 = vmatprep.mubr.bf16.mxu0 0
      %1291 = vmatmul.mubr.bf16.gmra.mrb[0].mxu0 %v1152
      %v1292 = vpop.f32.mrb[0].mxu0
      %v1293 = vadd.f32 0.0, %v1292
      %v1294 = vpop.f32.mrb[0].mxu0
      %v1295 = vpop.f32.mrb[0].mxu0
      %v1296 = vadd.f32 0.0, %v1295
      %v1297 = vpop.f32.mrb[0].mxu0
      %1298 = vmatprep.mubr.bf16.mxu0 0
      %1299 = vmatmul.mubr.bf16.gmra.mrb[0].mxu0 %v1155
      %v1300 = vpop.f32.mrb[0].mxu0
      %v1301 = vadd.f32 0.0, %v1300
      %v1302 = vpop.f32.mrb[0].mxu0
      %v1303 = vpop.f32.mrb[0].mxu0
      %v1304 = vadd.f32 0.0, %v1303
      %v1305 = vpop.f32.mrb[0].mxu0
      %1306 = vmatprep.mubr.bf16.mxu0 0
      %1307 = vmatmul.mubr.bf16.gmra.mrb[0].mxu0 %v1158
      %v1308 = vpop.f32.mrb[0].mxu0
      %v1309 = vadd.f32 0.0, %v1308
      %v1310 = vpop.f32.mrb[0].mxu0
      %v1311 = vpop.f32.mrb[0].mxu0
      %v1312 = vadd.f32 0.0, %v1311
      %v1313 = vpop.f32.mrb[0].mxu0
      %1314 = vmatprep.mubr.bf16.mxu0 0
      %1315 = vmatmul.mubr.bf16.gmra.mrb[0].mxu0 %v1161
      %v1316 = vpop.f32.mrb[0].mxu0
      %v1317 = vadd.f32 0.0, %v1316
      %v1318 = vpop.f32.mrb[0].mxu0
      %v1319 = vpop.f32.mrb[0].mxu0
      %v1320 = vadd.f32 0.0, %v1319
      %v1321 = vpop.f32.mrb[0].mxu0
      %1322 = vmatprep.mubr.bf16.mxu0 0
      %1323 = vmatmul.mubr.bf16.gmra.mrb[0].mxu0 %v1164
      %v1324 = vpop.f32.mrb[0].mxu0
      %v1325 = vadd.f32 0.0, %v1324
      %v1326 = vpop.f32.mrb[0].mxu0
      %v1327 = vpop.f32.mrb[0].mxu0
      %v1328 = vadd.f32 0.0, %v1327
      %v1329 = vpop.f32.mrb[0].mxu0
      %1330 = vdwg.mxu0
      %v1331 = vld [vmem:[%s5] sm:$0x1]
      %v1332 = vld [vmem:[%s6] sm:$0x1]
      %v1334 = vlaneseq
      %v1335 = vshrl.u32 %v1334, 7
      %v1336 = vsub.s32 0, %v1335
      %v1337 = vrot.slane %v1331, %v1336
      %v1339 = vmul.f32 %v1205, %v1337
      %v1340 = vmul.f32 %v1208, %v1337
      %v1341 = vmul.f32 %v1213, %v1337
      %v1342 = vmul.f32 %v1216, %v1337
      %v1343 = vmul.f32 %v1221, %v1337
      %v1344 = vmul.f32 %v1224, %v1337
      %v1345 = vmul.f32 %v1229, %v1337
      %v1346 = vmul.f32 %v1232, %v1337
      %v1347 = vmul.f32 %v1237, %v1337
      %v1348 = vmul.f32 %v1240, %v1337
      %v1349 = vmul.f32 %v1245, %v1337
      %v1350 = vmul.f32 %v1248, %v1337
      %v1351 = vmul.f32 %v1253, %v1337
      %v1352 = vmul.f32 %v1256, %v1337
      %v1353 = vmul.f32 %v1261, %v1337
      %v1354 = vmul.f32 %v1264, %v1337
      %v1355 = vmul.f32 %v1269, %v1337
      %v1356 = vmul.f32 %v1272, %v1337
      %v1357 = vmul.f32 %v1277, %v1337
      %v1358 = vmul.f32 %v1280, %v1337
      %v1359 = vmul.f32 %v1285, %v1337
      %v1360 = vmul.f32 %v1288, %v1337
      %v1361 = vmul.f32 %v1293, %v1337
      %v1362 = vmul.f32 %v1296, %v1337
      %v1363 = vmul.f32 %v1301, %v1337
      %v1364 = vmul.f32 %v1304, %v1337
      %v1365 = vmul.f32 %v1309, %v1337
      %v1366 = vmul.f32 %v1312, %v1337
      %v1367 = vmul.f32 %v1317, %v1337
      %v1368 = vmul.f32 %v1320, %v1337
      %v1369 = vmul.f32 %v1325, %v1337
      %v1370 = vmul.f32 %v1328, %v1337
      %v1372 = vlaneseq
      %v1373 = vshrl.u32 %v1372, 7
      %v1374 = vsub.s32 0, %v1373
      %v1375 = vrot.slane %v1332, %v1374
      %v1377 = vadd.f32 %v1339, %v1375
      %v1378 = vadd.f32 %v1340, %v1375
      %v1379 = vadd.f32 %v1341, %v1375
      %v1380 = vadd.f32 %v1342, %v1375
      %v1381 = vadd.f32 %v1343, %v1375
      %v1382 = vadd.f32 %v1344, %v1375
      %v1383 = vadd.f32 %v1345, %v1375
      %v1384 = vadd.f32 %v1346, %v1375
      %v1385 = vadd.f32 %v1347, %v1375
      %v1386 = vadd.f32 %v1348, %v1375
      %v1387 = vadd.f32 %v1349, %v1375
      %v1388 = vadd.f32 %v1350, %v1375
      %v1389 = vadd.f32 %v1351, %v1375
      %v1390 = vadd.f32 %v1352, %v1375
      %v1391 = vadd.f32 %v1353, %v1375
      %v1392 = vadd.f32 %v1354, %v1375
      %v1393 = vadd.f32 %v1355, %v1375
      %v1394 = vadd.f32 %v1356, %v1375
      %v1395 = vadd.f32 %v1357, %v1375
      %v1396 = vadd.f32 %v1358, %v1375
      %v1397 = vadd.f32 %v1359, %v1375
      %v1398 = vadd.f32 %v1360, %v1375
      %v1399 = vadd.f32 %v1361, %v1375
      %v1400 = vadd.f32 %v1362, %v1375
      %v1401 = vadd.f32 %v1363, %v1375
      %v1402 = vadd.f32 %v1364, %v1375
      %v1403 = vadd.f32 %v1365, %v1375
      %v1404 = vadd.f32 %v1366, %v1375
      %v1405 = vadd.f32 %v1367, %v1375
      %v1406 = vadd.f32 %v1368, %v1375
      %v1407 = vadd.f32 %v1369, %v1375
      %v1408 = vadd.f32 %v1370, %v1375
      %v1409 = vsub.f32 0.0, %v1377
      %v1410 = vsub.f32 0.0, %v1378
      %v1411 = vsub.f32 0.0, %v1379
      %v1412 = vsub.f32 0.0, %v1380
      %v1413 = vsub.f32 0.0, %v1381
      %v1414 = vsub.f32 0.0, %v1382
      %v1415 = vsub.f32 0.0, %v1383
      %v1416 = vsub.f32 0.0, %v1384
      %v1417 = vsub.f32 0.0, %v1385
      %v1418 = vsub.f32 0.0, %v1386
      %v1419 = vsub.f32 0.0, %v1387
      %v1420 = vsub.f32 0.0, %v1388
      %v1421 = vsub.f32 0.0, %v1389
      %v1422 = vsub.f32 0.0, %v1390
      %v1423 = vsub.f32 0.0, %v1391
      %v1424 = vsub.f32 0.0, %v1392
      %v1425 = vsub.f32 0.0, %v1393
      %v1426 = vsub.f32 0.0, %v1394
      %v1427 = vsub.f32 0.0, %v1395
      %v1428 = vsub.f32 0.0, %v1396
      %v1429 = vsub.f32 0.0, %v1397
      %v1430 = vsub.f32 0.0, %v1398
      %v1431 = vsub.f32 0.0, %v1399
      %v1432 = vsub.f32 0.0, %v1400
      %v1433 = vsub.f32 0.0, %v1401
      %v1434 = vsub.f32 0.0, %v1402
      %v1435 = vsub.f32 0.0, %v1403
      %v1436 = vsub.f32 0.0, %v1404
      %v1437 = vsub.f32 0.0, %v1405
      %v1438 = vsub.f32 0.0, %v1406
      %v1439 = vsub.f32 0.0, %v1407
      %v1440 = vsub.f32 0.0, %v1408
      %v1441 = vmul.f32 %v1409, 1.442695
      %v1442 = vpow.pop %v1441
      %v1443 = vmul.f32 %v1410, 1.442695
      %v1444 = vpow.pop %v1443
      %v1445 = vmul.f32 %v1411, 1.442695
      %v1446 = vpow.pop %v1445
      %v1447 = vmul.f32 %v1412, 1.442695
      %v1448 = vpow.pop %v1447
      %v1449 = vmul.f32 %v1413, 1.442695
      %v1450 = vpow.pop %v1449
      %v1451 = vmul.f32 %v1414, 1.442695
      %v1452 = vpow.pop %v1451
      %v1453 = vmul.f32 %v1415, 1.442695
      %v1454 = vpow.pop %v1453
      %v1455 = vmul.f32 %v1416, 1.442695
      %v1456 = vpow.pop %v1455
      %v1457 = vmul.f32 %v1417, 1.442695
      %v1458 = vpow.pop %v1457
      %v1459 = vmul.f32 %v1418, 1.442695
      %v1460 = vpow.pop %v1459
      %v1461 = vmul.f32 %v1419, 1.442695
      %v1462 = vpow.pop %v1461
      %v1463 = vmul.f32 %v1420, 1.442695
      %v1464 = vpow.pop %v1463
      %v1465 = vmul.f32 %v1421, 1.442695
      %v1466 = vpow.pop %v1465
      %v1467 = vmul.f32 %v1422, 1.442695
      %v1468 = vpow.pop %v1467
      %v1469 = vmul.f32 %v1423, 1.442695
      %v1470 = vpow.pop %v1469
      %v1471 = vmul.f32 %v1424, 1.442695
      %v1472 = vpow.pop %v1471
      %v1473 = vmul.f32 %v1425, 1.442695
      %v1474 = vpow.pop %v1473
      %v1475 = vmul.f32 %v1426, 1.442695
      %v1476 = vpow.pop %v1475
      %v1477 = vmul.f32 %v1427, 1.442695
      %v1478 = vpow.pop %v1477
      %v1479 = vmul.f32 %v1428, 1.442695
      %v1480 = vpow.pop %v1479
      %v1481 = vmul.f32 %v1429, 1.442695
      %v1482 = vpow.pop %v1481
      %v1483 = vmul.f32 %v1430, 1.442695
      %v1484 = vpow.pop %v1483
      %v1485 = vmul.f32 %v1431, 1.442695
      %v1486 = vpow.pop %v1485
      %v1487 = vmul.f32 %v1432, 1.442695
      %v1488 = vpow.pop %v1487
      %v1489 = vmul.f32 %v1433, 1.442695
      %v1490 = vpow.pop %v1489
      %v1491 = vmul.f32 %v1434, 1.442695
      %v1492 = vpow.pop %v1491
      %v1493 = vmul.f32 %v1435, 1.442695
      %v1494 = vpow.pop %v1493
      %v1495 = vmul.f32 %v1436, 1.442695
      %v1496 = vpow.pop %v1495
      %v1497 = vmul.f32 %v1437, 1.442695
      %v1498 = vpow.pop %v1497
      %v1499 = vmul.f32 %v1438, 1.442695
      %v1500 = vpow.pop %v1499
      %v1501 = vmul.f32 %v1439, 1.442695
      %v1502 = vpow.pop %v1501
      %v1503 = vmul.f32 %v1440, 1.442695
      %v1504 = vpow.pop %v1503
      %v1505 = vadd.f32 %v1442, 1.0
      %v1506 = vadd.f32 %v1444, 1.0
      %v1507 = vadd.f32 %v1446, 1.0
      %v1508 = vadd.f32 %v1448, 1.0
      %v1509 = vadd.f32 %v1450, 1.0
      %v1510 = vadd.f32 %v1452, 1.0
      %v1511 = vadd.f32 %v1454, 1.0
      %v1512 = vadd.f32 %v1456, 1.0
      %v1513 = vadd.f32 %v1458, 1.0
      %v1514 = vadd.f32 %v1460, 1.0
      %v1515 = vadd.f32 %v1462, 1.0
      %v1516 = vadd.f32 %v1464, 1.0
      %v1517 = vadd.f32 %v1466, 1.0
      %v1518 = vadd.f32 %v1468, 1.0
      %v1519 = vadd.f32 %v1470, 1.0
      %v1520 = vadd.f32 %v1472, 1.0
      %v1521 = vadd.f32 %v1474, 1.0
      %v1522 = vadd.f32 %v1476, 1.0
      %v1523 = vadd.f32 %v1478, 1.0
      %v1524 = vadd.f32 %v1480, 1.0
      %v1525 = vadd.f32 %v1482, 1.0
      %v1526 = vadd.f32 %v1484, 1.0
      %v1527 = vadd.f32 %v1486, 1.0
      %v1528 = vadd.f32 %v1488, 1.0
      %v1529 = vadd.f32 %v1490, 1.0
      %v1530 = vadd.f32 %v1492, 1.0
      %v1531 = vadd.f32 %v1494, 1.0
      %v1532 = vadd.f32 %v1496, 1.0
      %v1533 = vadd.f32 %v1498, 1.0
      %v1534 = vadd.f32 %v1500, 1.0
      %v1535 = vadd.f32 %v1502, 1.0
      %v1536 = vadd.f32 %v1504, 1.0
      %v1537 = vrcp.pop %v1505
      %v1538 = vrcp.pop %v1506
      %v1539 = vrcp.pop %v1507
      %v1540 = vrcp.pop %v1508
      %v1541 = vrcp.pop %v1509
      %v1542 = vrcp.pop %v1510
      %v1543 = vrcp.pop %v1511
      %v1544 = vrcp.pop %v1512
      %v1545 = vrcp.pop %v1513
      %v1546 = vrcp.pop %v1514
      %v1547 = vrcp.pop %v1515
      %v1548 = vrcp.pop %v1516
      %v1549 = vrcp.pop %v1517
      %v1550 = vrcp.pop %v1518
      %v1551 = vrcp.pop %v1519
      %v1552 = vrcp.pop %v1520
      %v1553 = vrcp.pop %v1521
      %v1554 = vrcp.pop %v1522
      %v1555 = vrcp.pop %v1523
      %v1556 = vrcp.pop %v1524
      %v1557 = vrcp.pop %v1525
      %v1558 = vrcp.pop %v1526
      %v1559 = vrcp.pop %v1527
      %v1560 = vrcp.pop %v1528
      %v1561 = vrcp.pop %v1529
      %v1562 = vrcp.pop %v1530
      %v1563 = vrcp.pop %v1531
      %v1564 = vrcp.pop %v1532
      %v1565 = vrcp.pop %v1533
      %v1566 = vrcp.pop %v1534
      %v1567 = vrcp.pop %v1535
      %v1568 = vrcp.pop %v1536
      %v1569 = vmul.f32 %v1377, %v1537
      %v1570 = vmul.f32 %v1378, %v1538
      %v1571 = vmul.f32 %v1379, %v1539
      %v1572 = vmul.f32 %v1380, %v1540
      %v1573 = vmul.f32 %v1381, %v1541
      %v1574 = vmul.f32 %v1382, %v1542
      %v1575 = vmul.f32 %v1383, %v1543
      %v1576 = vmul.f32 %v1384, %v1544
      %v1577 = vmul.f32 %v1385, %v1545
      %v1578 = vmul.f32 %v1386, %v1546
      %v1579 = vmul.f32 %v1387, %v1547
      %v1580 = vmul.f32 %v1388, %v1548
      %v1581 = vmul.f32 %v1389, %v1549
      %v1582 = vmul.f32 %v1390, %v1550
      %v1583 = vmul.f32 %v1391, %v1551
      %v1584 = vmul.f32 %v1392, %v1552
      %v1585 = vmul.f32 %v1393, %v1553
      %v1586 = vmul.f32 %v1394, %v1554
      %v1587 = vmul.f32 %v1395, %v1555
      %v1588 = vmul.f32 %v1396, %v1556
      %v1589 = vmul.f32 %v1397, %v1557
      %v1590 = vmul.f32 %v1398, %v1558
      %v1591 = vmul.f32 %v1399, %v1559
      %v1592 = vmul.f32 %v1400, %v1560
      %v1593 = vmul.f32 %v1401, %v1561
      %v1594 = vmul.f32 %v1402, %v1562
      %v1595 = vmul.f32 %v1403, %v1563
      %v1596 = vmul.f32 %v1404, %v1564
      %v1597 = vmul.f32 %v1405, %v1565
      %v1598 = vmul.f32 %v1406, %v1566
      %v1599 = vmul.f32 %v1407, %v1567
      %v1600 = vmul.f32 %v1408, %v1568
      %v1601 = vsel %vm1117, %v1569, 0.0
      %v1602 = vsel %vm1117, %v1570, 0.0
      %v1603 = vadd.f32 %v1601, %v1602
      %v1604 = vsel %vm1117, %v1571, 0.0
      %v1605 = vadd.f32 %v1603, %v1604
      %v1606 = vsel %vm1117, %v1572, 0.0
      %v1607 = vadd.f32 %v1605, %v1606
      %v1608 = vsel %vm1117, %v1573, 0.0
      %v1609 = vadd.f32 %v1607, %v1608
      %v1610 = vsel %vm1117, %v1574, 0.0
      %v1611 = vadd.f32 %v1609, %v1610
      %v1612 = vsel %vm1117, %v1575, 0.0
      %v1613 = vadd.f32 %v1611, %v1612
      %v1614 = vsel %vm1117, %v1576, 0.0
      %v1615 = vadd.f32 %v1613, %v1614
      %v1616 = vsel %vm1117, %v1577, 0.0
      %v1617 = vadd.f32 %v1615, %v1616
      %v1618 = vsel %vm1117, %v1578, 0.0
      %v1619 = vadd.f32 %v1617, %v1618
      %v1620 = vsel %vm1117, %v1579, 0.0
      %v1621 = vadd.f32 %v1619, %v1620
      %v1622 = vsel %vm1117, %v1580, 0.0
      %v1623 = vadd.f32 %v1621, %v1622
      %v1624 = vsel %vm1117, %v1581, 0.0
      %v1625 = vadd.f32 %v1623, %v1624
      %v1626 = vsel %vm1117, %v1582, 0.0
      %v1627 = vadd.f32 %v1625, %v1626
      %v1628 = vsel %vm1117, %v1583, 0.0
      %v1629 = vadd.f32 %v1627, %v1628
      %v1630 = vsel %vm1117, %v1584, 0.0
      %v1631 = vadd.f32 %v1629, %v1630
      %v1632 = vsel %vm1117, %v1585, 0.0
      %v1633 = vadd.f32 %v1631, %v1632
      %v1634 = vsel %vm1117, %v1586, 0.0
      %v1635 = vadd.f32 %v1633, %v1634
      %v1636 = vsel %vm1117, %v1587, 0.0
      %v1637 = vadd.f32 %v1635, %v1636
      %v1638 = vsel %vm1117, %v1588, 0.0
      %v1639 = vadd.f32 %v1637, %v1638
      %v1640 = vsel %vm1117, %v1589, 0.0
      %v1641 = vadd.f32 %v1639, %v1640
      %v1642 = vsel %vm1117, %v1590, 0.0
      %v1643 = vadd.f32 %v1641, %v1642
      %v1644 = vsel %vm1117, %v1591, 0.0
      %v1645 = vadd.f32 %v1643, %v1644
      %v1646 = vsel %vm1117, %v1592, 0.0
      %v1647 = vadd.f32 %v1645, %v1646
      %v1648 = vsel %vm1117, %v1593, 0.0
      %v1649 = vadd.f32 %v1647, %v1648
      %v1650 = vsel %vm1117, %v1594, 0.0
      %v1651 = vadd.f32 %v1649, %v1650
      %v1652 = vsel %vm1117, %v1595, 0.0
      %v1653 = vadd.f32 %v1651, %v1652
      %v1654 = vsel %vm1117, %v1596, 0.0
      %v1655 = vadd.f32 %v1653, %v1654
      %v1656 = vsel %vm1117, %v1597, 0.0
      %v1657 = vadd.f32 %v1655, %v1656
      %v1658 = vsel %vm1117, %v1598, 0.0
      %v1659 = vadd.f32 %v1657, %v1658
      %v1660 = vsel %vm1117, %v1599, 0.0
      %v1661 = vadd.f32 %v1659, %v1660
      %v1662 = vsel %vm1117, %v1600, 0.0
      %v1663 = vadd.f32 %v1661, %v1662
      %v1664 = vrot.slane %v1663, 4
      %v1665 = vadd.f32 %v1663, %v1664
      %v1666 = vrot.slane %v1665, 2
      %v1667 = vadd.f32 %v1665, %v1666
      %v1668 = vrot.slane %v1667, 1
      %v1669 = vadd.f32 %v1667, %v1668
      %v1670 = vrcp.pop 256.0
      %v1671 = vmul.f32 %v1669, %v1670
      %vm1672 = vcmask 57344
      %1673 = vst.msk [vmem:[%s353] sm:$0x1] %vm1672, %v1671
      %1674 = vst.msk [vmem:[%s350] sm:$0xf] %vm1083, 0
      %1675 = vst.msk [vmem:[%s350 + $0x4] sm:$0xf] %vm1083, 0
      %vm1676 = vcmask 58368
      %1677 = vst.msk [vmem:[%s350 + $0x8] sm:$0x3] %vm1676, 0
      %1678 = vst.msk [vmem:[%s350 + $0xc] sm:$0xf] %vm1083, 0
      %1679 = vst.msk [vmem:[%s350 + $0x10] sm:$0xf] %vm1083, 0
      %1680 = vst.msk [vmem:[%s350 + $0x14] sm:$0x3] %vm1676, 0
      %1681 = vst.msk [vmem:[%s350 + $0x18] sm:$0xf] %vm1083, 0
      %1682 = vst.msk [vmem:[%s350 + $0x1c] sm:$0xf] %vm1083, 0
      %1683 = vst.msk [vmem:[%s350 + $0x20] sm:$0x3] %vm1676, 0
      %1684 = vst.msk [vmem:[%s350 + $0x24] sm:$0xf] %vm1083, 0
      %1685 = vst.msk [vmem:[%s350 + $0x28] sm:$0xf] %vm1083, 0
      %1686 = vst.msk [vmem:[%s350 + $0x2c] sm:$0x3] %vm1676, 0
      %1687 = vst.msk [vmem:[%s350 + $0x30] sm:$0xf] %vm1083, 0
      %1688 = vst.msk [vmem:[%s350 + $0x34] sm:$0xf] %vm1083, 0
      %1689 = vst.msk [vmem:[%s350 + $0x38] sm:$0x3] %vm1676, 0
      %1690 = vst.msk [vmem:[%s350 + $0x3c] sm:$0xf] %vm1083, 0
      %1691 = vst.msk [vmem:[%s350 + $0x40] sm:$0xf] %vm1083, 0
      %1692 = vst.msk [vmem:[%s350 + $0x44] sm:$0x3] %vm1676, 0
      %1693 = vst.msk [vmem:[%s350 + $0x48] sm:$0xf] %vm1083, 0
      %1694 = vst.msk [vmem:[%s350 + $0x4c] sm:$0xf] %vm1083, 0
      %1695 = vst.msk [vmem:[%s350 + $0x50] sm:$0x3] %vm1676, 0
      %1696 = vst.msk [vmem:[%s350 + $0x54] sm:$0xf] %vm1083, 0
      %1697 = vst.msk [vmem:[%s350 + $0x58] sm:$0xf] %vm1083, 0
      %1698 = vst.msk [vmem:[%s350 + $0x5c] sm:$0x3] %vm1676, 0
      %1699 = vst.msk [vmem:[%s350 + $0x60] sm:$0xf] %vm1083, 0
      %1700 = vst.msk [vmem:[%s350 + $0x64] sm:$0xf] %vm1083, 0
      %1701 = vst.msk [vmem:[%s350 + $0x68] sm:$0x3] %vm1676, 0
      %1702 = vst.msk [vmem:[%s350 + $0x6c] sm:$0xf] %vm1083, 0
      %1703 = vst.msk [vmem:[%s350 + $0x70] sm:$0xf] %vm1083, 0
      %1704 = vst.msk [vmem:[%s350 + $0x74] sm:$0x3] %vm1676, 0
      %1705 = vst.msk [vmem:[%s350 + $0x78] sm:$0xf] %vm1083, 0
      %1706 = vst.msk [vmem:[%s350 + $0x7c] sm:$0xf] %vm1083, 0
      %1707 = vst.msk [vmem:[%s350 + $0x80] sm:$0x3] %vm1676, 0
      %1708 = vst.msk [vmem:[%s350 + $0x84] sm:$0xf] %vm1083, 0
      %1709 = vst.msk [vmem:[%s350 + $0x88] sm:$0xf] %vm1083, 0
      %1710 = vst.msk [vmem:[%s350 + $0x8c] sm:$0x3] %vm1676, 0
      %1711 = vst.msk [vmem:[%s350 + $0x90] sm:$0xf] %vm1083, 0
      %1712 = vst.msk [vmem:[%s350 + $0x94] sm:$0xf] %vm1083, 0
      %1713 = vst.msk [vmem:[%s350 + $0x98] sm:$0x3] %vm1676, 0
      %1714 = vst.msk [vmem:[%s350 + $0x9c] sm:$0xf] %vm1083, 0
      %1715 = vst.msk [vmem:[%s350 + $0xa0] sm:$0xf] %vm1083, 0
      %1716 = vst.msk [vmem:[%s350 + $0xa4] sm:$0x3] %vm1676, 0
      %1717 = vst.msk [vmem:[%s350 + $0xa8] sm:$0xf] %vm1083, 0
      %1718 = vst.msk [vmem:[%s350 + $0xac] sm:$0xf] %vm1083, 0
      %1719 = vst.msk [vmem:[%s350 + $0xb0] sm:$0x3] %vm1676, 0
      %1720 = vst.msk [vmem:[%s350 + $0xb4] sm:$0xf] %vm1083, 0
      %1721 = vst.msk [vmem:[%s350 + $0xb8] sm:$0xf] %vm1083, 0
      %1722 = vst.msk [vmem:[%s350 + $0xbc] sm:$0x3] %vm1676, 0
      %1723 = vst.msk [vmem:[%s350 + $0xc0] sm:$0xf] %vm1083, 0
      %1724 = vst.msk [vmem:[%s350 + $0xc4] sm:$0xf] %vm1083, 0
      %1725 = vst.msk [vmem:[%s350 + $0xc8] sm:$0x3] %vm1676, 0
      %1726 = vst.msk [vmem:[%s350 + $0xcc] sm:$0xf] %vm1083, 0
      %1727 = vst.msk [vmem:[%s350 + $0xd0] sm:$0xf] %vm1083, 0
      %1728 = vst.msk [vmem:[%s350 + $0xd4] sm:$0x3] %vm1676, 0
      %1729 = vst.msk [vmem:[%s350 + $0xd8] sm:$0xf] %vm1083, 0
      %1730 = vst.msk [vmem:[%s350 + $0xdc] sm:$0xf] %vm1083, 0
      %1731 = vst.msk [vmem:[%s350 + $0xe0] sm:$0x3] %vm1676, 0
      %1732 = vst.msk [vmem:[%s350 + $0xe4] sm:$0xf] %vm1083, 0
      %1733 = vst.msk [vmem:[%s350 + $0xe8] sm:$0xf] %vm1083, 0
      %1734 = vst.msk [vmem:[%s350 + $0xec] sm:$0x3] %vm1676, 0
      %v1735 = vpack.c.bf16 %v1570, %v1569
      %v1736 = vpack.c.bf16 %v1572, %v1571
      %v1737 = vpack.c.bf16 %v1574, %v1573
      %v1738 = vpack.c.bf16 %v1576, %v1575
      %v1739 = vpack.c.bf16 %v1578, %v1577
      %v1740 = vpack.c.bf16 %v1580, %v1579
      %v1741 = vpack.c.bf16 %v1582, %v1581
      %v1742 = vpack.c.bf16 %v1584, %v1583
      %v1743 = vpack.c.bf16 %v1586, %v1585
      %v1744 = vpack.c.bf16 %v1588, %v1587
      %v1745 = vpack.c.bf16 %v1590, %v1589
      %v1746 = vpack.c.bf16 %v1592, %v1591
      %v1747 = vpack.c.bf16 %v1594, %v1593
      %v1748 = vpack.c.bf16 %v1596, %v1595
      %v1749 = vpack.c.bf16 %v1598, %v1597
      %v1750 = vpack.c.bf16 %v1600, %v1599
      %v1767 = vunpack.c.l.b16 %v1735
      %v1768 = vunpack.c.h.b16 %v1735
      %v1769 = vunpack.c.l.b16 %v1736
      %v1770 = vunpack.c.h.b16 %v1736
      %v1771 = vunpack.c.l.b16 %v1737
      %v1772 = vunpack.c.h.b16 %v1737
      %v1773 = vunpack.c.l.b16 %v1738
      %v1774 = vunpack.c.h.b16 %v1738
      %v1775 = vunpack.c.l.b16 %v1739
      %v1776 = vunpack.c.h.b16 %v1739
      %v1777 = vunpack.c.l.b16 %v1740
      %v1778 = vunpack.c.h.b16 %v1740
      %v1779 = vunpack.c.l.b16 %v1741
      %v1780 = vunpack.c.h.b16 %v1741
      %v1781 = vunpack.c.l.b16 %v1742
      %v1782 = vunpack.c.h.b16 %v1742
      %v1783 = vunpack.c.l.b16 %v1743
      %v1784 = vunpack.c.h.b16 %v1743
      %v1785 = vunpack.c.l.b16 %v1744
      %v1786 = vunpack.c.h.b16 %v1744
      %v1787 = vunpack.c.l.b16 %v1745
      %v1788 = vunpack.c.h.b16 %v1745
      %v1789 = vunpack.c.l.b16 %v1746
      %v1790 = vunpack.c.h.b16 %v1746
      %v1791 = vunpack.c.l.b16 %v1747
      %v1792 = vunpack.c.h.b16 %v1747
      %v1793 = vunpack.c.l.b16 %v1748
      %v1794 = vunpack.c.h.b16 %v1748
      %v1795 = vunpack.c.l.b16 %v1749
      %v1796 = vunpack.c.h.b16 %v1749
      %v1797 = vunpack.c.l.b16 %v1750
      %v1798 = vunpack.c.h.b16 %v1750
      %v1799 = vpack.c.b16 %v1767, %v1767
      %v1800 = vpack.c.b16 %v1768, %v1768
      %v1801 = vpack.c.b16 %v1769, %v1769
      %v1802 = vpack.c.b16 %v1770, %v1770
      %v1803 = vpack.c.b16 %v1771, %v1771
      %v1804 = vpack.c.b16 %v1772, %v1772
      %v1805 = vpack.c.b16 %v1773, %v1773
      %v1806 = vpack.c.b16 %v1774, %v1774
      %v1807 = vpack.c.b16 %v1775, %v1775
      %v1808 = vpack.c.b16 %v1776, %v1776
      %v1809 = vpack.c.b16 %v1777, %v1777
      %v1810 = vpack.c.b16 %v1778, %v1778
      %v1811 = vpack.c.b16 %v1779, %v1779
      %v1812 = vpack.c.b16 %v1780, %v1780
      %v1813 = vpack.c.b16 %v1781, %v1781
      %v1814 = vpack.c.b16 %v1782, %v1782
      %v1815 = vpack.c.b16 %v1783, %v1783
      %v1816 = vpack.c.b16 %v1784, %v1784
      %v1817 = vpack.c.b16 %v1785, %v1785
      %v1818 = vpack.c.b16 %v1786, %v1786
      %v1819 = vpack.c.b16 %v1787, %v1787
      %v1820 = vpack.c.b16 %v1788, %v1788
      %v1821 = vpack.c.b16 %v1789, %v1789
      %v1822 = vpack.c.b16 %v1790, %v1790
      %v1823 = vpack.c.b16 %v1791, %v1791
      %v1824 = vpack.c.b16 %v1792, %v1792
      %v1825 = vpack.c.b16 %v1793, %v1793
      %v1826 = vpack.c.b16 %v1794, %v1794
      %v1827 = vpack.c.b16 %v1795, %v1795
      %v1828 = vpack.c.b16 %v1796, %v1796
      %v1829 = vpack.c.b16 %v1797, %v1797
      %v1830 = vpack.c.b16 %v1798, %v1798
      %vm1831 = vcmask 1040384
      %vm1832 = vcmask 1044484
      %vm1833 = vmor %vm1831, %vm1832
      %v1834 = vrot.slane %v1799, 7
      %v1835 = vrot.slane %v1834, 4
      %v1836 = vrot.slane %v1800, 7
      %v1837 = vsel %vm1833, %v1835, %v1836
      %v1838 = vrot.slane %v1836, 4
      %v1839 = vrot.slane %v1801, 7
      %v1840 = vrot.slane %v1839, 4
      %v1841 = vrot.slane %v1802, 7
      %v1842 = vsel %vm1833, %v1840, %v1841
      %v1843 = vrot.slane %v1841, 4
      %v1844 = vrot.slane %v1803, 7
      %v1845 = vrot.slane %v1844, 4
      %v1846 = vrot.slane %v1804, 7
      %v1847 = vsel %vm1833, %v1845, %v1846
      %v1848 = vrot.slane %v1846, 4
      %v1849 = vrot.slane %v1805, 7
      %v1850 = vrot.slane %v1849, 4
      %v1851 = vrot.slane %v1806, 7
      %v1852 = vsel %vm1833, %v1850, %v1851
      %v1853 = vrot.slane %v1851, 4
      %v1854 = vrot.slane %v1807, 7
      %v1855 = vrot.slane %v1854, 4
      %v1856 = vrot.slane %v1808, 7
      %v1857 = vsel %vm1833, %v1855, %v1856
      %v1858 = vrot.slane %v1856, 4
      %v1859 = vrot.slane %v1809, 7
      %v1860 = vrot.slane %v1859, 4
      %v1861 = vrot.slane %v1810, 7
      %v1862 = vsel %vm1833, %v1860, %v1861
      %v1863 = vrot.slane %v1861, 4
      %v1864 = vrot.slane %v1811, 7
      %v1865 = vrot.slane %v1864, 4
      %v1866 = vrot.slane %v1812, 7
      %v1867 = vsel %vm1833, %v1865, %v1866
      %v1868 = vrot.slane %v1866, 4
      %v1869 = vrot.slane %v1813, 7
      %v1870 = vrot.slane %v1869, 4
      %v1871 = vrot.slane %v1814, 7
      %v1872 = vsel %vm1833, %v1870, %v1871
      %v1873 = vrot.slane %v1871, 4
      %v1874 = vrot.slane %v1815, 7
      %v1875 = vrot.slane %v1874, 4
      %v1876 = vrot.slane %v1816, 7
      %v1877 = vsel %vm1833, %v1875, %v1876
      %v1878 = vrot.slane %v1876, 4
      %v1879 = vrot.slane %v1817, 7
      %v1880 = vrot.slane %v1879, 4
      %v1881 = vrot.slane %v1818, 7
      %v1882 = vsel %vm1833, %v1880, %v1881
      %v1883 = vrot.slane %v1881, 4
      %v1884 = vrot.slane %v1819, 7
      %v1885 = vrot.slane %v1884, 4
      %v1886 = vrot.slane %v1820, 7
      %v1887 = vsel %vm1833, %v1885, %v1886
      %v1888 = vrot.slane %v1886, 4
      %v1889 = vrot.slane %v1821, 7
      %v1890 = vrot.slane %v1889, 4
      %v1891 = vrot.slane %v1822, 7
      %v1892 = vsel %vm1833, %v1890, %v1891
      %v1893 = vrot.slane %v1891, 4
      %v1894 = vrot.slane %v1823, 7
      %v1895 = vrot.slane %v1894, 4
      %v1896 = vrot.slane %v1824, 7
      %v1897 = vsel %vm1833, %v1895, %v1896
      %v1898 = vrot.slane %v1896, 4
      %v1899 = vrot.slane %v1825, 7
      %v1900 = vrot.slane %v1899, 4
      %v1901 = vrot.slane %v1826, 7
      %v1902 = vsel %vm1833, %v1900, %v1901
      %v1903 = vrot.slane %v1901, 4
      %v1904 = vrot.slane %v1827, 7
      %v1905 = vrot.slane %v1904, 4
      %v1906 = vrot.slane %v1828, 7
      %v1907 = vsel %vm1833, %v1905, %v1906
      %v1908 = vrot.slane %v1906, 4
      %v1909 = vrot.slane %v1829, 7
      %v1910 = vrot.slane %v1909, 4
      %v1911 = vrot.slane %v1830, 7
      %v1912 = vsel %vm1833, %v1910, %v1911
      %v1913 = vrot.slane %v1911, 4
      %s1962 = scalar_lea.vmem %s350, 24
      %vm1963 = vcmask 60417
      %1964 = vst.msk [vmem:[%s1962] sm:$0xe] %vm1963, %v1834
      %1965 = vst.msk [vmem:[%s1962 + $0x4] sm:$0xf] %vm1083, %v1837
      %1966 = vst.msk [vmem:[%s1962 + $0x8] sm:$0x1] %vm1672, %v1838
      %1967 = vst.msk [vmem:[%s1962 + $0xc] sm:$0xe] %vm1963, %v1839
      %1968 = vst.msk [vmem:[%s1962 + $0x10] sm:$0xf] %vm1083, %v1842
      %1969 = vst.msk [vmem:[%s1962 + $0x14] sm:$0x1] %vm1672, %v1843
      %1970 = vst.msk [vmem:[%s1962 + $0x18] sm:$0xe] %vm1963, %v1844
      %1971 = vst.msk [vmem:[%s1962 + $0x1c] sm:$0xf] %vm1083, %v1847
      %1972 = vst.msk [vmem:[%s1962 + $0x20] sm:$0x1] %vm1672, %v1848
      %1973 = vst.msk [vmem:[%s1962 + $0x24] sm:$0xe] %vm1963, %v1849
      %1974 = vst.msk [vmem:[%s1962 + $0x28] sm:$0xf] %vm1083, %v1852
      %1975 = vst.msk [vmem:[%s1962 + $0x2c] sm:$0x1] %vm1672, %v1853
      %1976 = vst.msk [vmem:[%s1962 + $0x30] sm:$0xe] %vm1963, %v1854
      %1977 = vst.msk [vmem:[%s1962 + $0x34] sm:$0xf] %vm1083, %v1857
      %1978 = vst.msk [vmem:[%s1962 + $0x38] sm:$0x1] %vm1672, %v1858
      %1979 = vst.msk [vmem:[%s1962 + $0x3c] sm:$0xe] %vm1963, %v1859
      %1980 = vst.msk [vmem:[%s1962 + $0x40] sm:$0xf] %vm1083, %v1862
      %1981 = vst.msk [vmem:[%s1962 + $0x44] sm:$0x1] %vm1672, %v1863
      %1982 = vst.msk [vmem:[%s1962 + $0x48] sm:$0xe] %vm1963, %v1864
      %1983 = vst.msk [vmem:[%s1962 + $0x4c] sm:$0xf] %vm1083, %v1867
      %1984 = vst.msk [vmem:[%s1962 + $0x50] sm:$0x1] %vm1672, %v1868
      %1985 = vst.msk [vmem:[%s1962 + $0x54] sm:$0xe] %vm1963, %v1869
      %1986 = vst.msk [vmem:[%s1962 + $0x58] sm:$0xf] %vm1083, %v1872
      %1987 = vst.msk [vmem:[%s1962 + $0x5c] sm:$0x1] %vm1672, %v1873
      %1988 = vst.msk [vmem:[%s1962 + $0x60] sm:$0xe] %vm1963, %v1874
      %1989 = vst.msk [vmem:[%s1962 + $0x64] sm:$0xf] %vm1083, %v1877
      %1990 = vst.msk [vmem:[%s1962 + $0x68] sm:$0x1] %vm1672, %v1878
      %1991 = vst.msk [vmem:[%s1962 + $0x6c] sm:$0xe] %vm1963, %v1879
      %1992 = vst.msk [vmem:[%s1962 + $0x70] sm:$0xf] %vm1083, %v1882
      %1993 = vst.msk [vmem:[%s1962 + $0x74] sm:$0x1] %vm1672, %v1883
      %1994 = vst.msk [vmem:[%s1962 + $0x78] sm:$0xe] %vm1963, %v1884
      %1995 = vst.msk [vmem:[%s1962 + $0x7c] sm:$0xf] %vm1083, %v1887
      %1996 = vst.msk [vmem:[%s1962 + $0x80] sm:$0x1] %vm1672, %v1888
      %1997 = vst.msk [vmem:[%s1962 + $0x84] sm:$0xe] %vm1963, %v1889
      %1998 = vst.msk [vmem:[%s1962 + $0x88] sm:$0xf] %vm1083, %v1892
      %1999 = vst.msk [vmem:[%s1962 + $0x8c] sm:$0x1] %vm1672, %v1893
      %2000 = vst.msk [vmem:[%s1962 + $0x90] sm:$0xe] %vm1963, %v1894
      %2001 = vst.msk [vmem:[%s1962 + $0x94] sm:$0xf] %vm1083, %v1897
      %2002 = vst.msk [vmem:[%s1962 + $0x98] sm:$0x1] %vm1672, %v1898
      %2003 = vst.msk [vmem:[%s1962 + $0x9c] sm:$0xe] %vm1963, %v1899
      %2004 = vst.msk [vmem:[%s1962 + $0xa0] sm:$0xf] %vm1083, %v1902
      %2005 = vst.msk [vmem:[%s1962 + $0xa4] sm:$0x1] %vm1672, %v1903
      %2006 = vst.msk [vmem:[%s1962 + $0xa8] sm:$0xe] %vm1963, %v1904
      %2007 = vst.msk [vmem:[%s1962 + $0xac] sm:$0xf] %vm1083, %v1907
      %2008 = vst.msk [vmem:[%s1962 + $0xb0] sm:$0x1] %vm1672, %v1908
      %2009 = vst.msk [vmem:[%s1962 + $0xb4] sm:$0xe] %vm1963, %v1909
      %2010 = vst.msk [vmem:[%s1962 + $0xb8] sm:$0xf] %vm1083, %v1912
      %2011 = vst.msk [vmem:[%s1962 + $0xbc] sm:$0x1] %vm1672, %v1913
      %p2012 = scmp.lt.s32.totalorder %s21, 1
      %s2013 = scalar_select %p2012, %s21, 1
      %s2014 = smul.addr %s2013, 32
      %s2015 = smul.addr %s2014, 4
      %s2016 = scalar_lea.vmem %s7, %s2015
      %p2017 = scmp.lt.s32.totalorder %s21, 1
      %s2018 = scalar_select %p2017, %s21, 1
      %s2019 = smul.addr %s2018, 60
      %s2020 = smul.addr %s2019, 4
      %s2021 = scalar_lea.vmem %s8, %s2020
      %p2022 = scmp.lt.s32.totalorder %s21, 1
      %s2023 = scalar_select %p2022, %s21, 1
      %s2024 = scalar_lea.vmem %s9, %s2023
      // Predicated region
      $region49: #{spp_bottleneck_pallas.4} parent=47 // pred_check
        %p2025 = pneg %p191
      $region50: #{spp_bottleneck_pallas.4} parent=47 // pred_check_branch
        %2027 = sbr.rel (%p2025) target = $region52
      $region51: #{spp_bottleneck_pallas.4} parent=47 // pred_region
        _
      $region52: #{spp_bottleneck_pallas.4} parent=47 // pred_fallthru
        _
      // Predicated region
      $region53: #{spp_bottleneck_pallas.4} parent=47 // pred_check
        %p2028 = pneg %p217
      $region54: #{spp_bottleneck_pallas.4} parent=47 // pred_check_branch
        %2030 = sbr.rel (%p2028) target = $region56
      $region55: #{spp_bottleneck_pallas.4} parent=47 // pred_region
        _
      $region56: #{spp_bottleneck_pallas.4} parent=47 // pred_fallthru
        _
      // Predicated region
      $region57: #{spp_bottleneck_pallas.4} parent=47 // pred_check
        %p2031 = pneg %p243
      $region58: #{spp_bottleneck_pallas.4} parent=47 // pred_check_branch
        %2033 = sbr.rel (%p2031) target = $region60
      $region59: #{spp_bottleneck_pallas.4} parent=47 // pred_region
        _
      $region60: #{spp_bottleneck_pallas.4} parent=47 // pred_fallthru
        _
    $region48: #{spp_bottleneck_pallas.4} parent=5 // pred_fallthru
      _
    %p2034 = scmp.le.s32.totalorder 2, %s16
    // Predicated region
    $region61: #{spp_bottleneck_pallas.4} parent=5 // pred_check
      %p2035 = pneg %p2034
    $region62: #{spp_bottleneck_pallas.4} parent=5 // pred_check_branch
      %2037 = sbr.rel (%p2035) target = $region64
    $region63: #{spp_bottleneck_pallas.4} parent=5 // pred_region
      %s2038 = ssub.s32 %s16, 2
      // Predicated region
      $region65: #{spp_bottleneck_pallas.4} parent=63 // pred_check
        %p2039 = pneg %p197
      $region66: #{spp_bottleneck_pallas.4} parent=63 // pred_check_branch
        %2041 = sbr.rel (%p2039) target = $region68
      $region67: #{spp_bottleneck_pallas.4} parent=63 // pred_region
        %p2042 = scmp.lt.s32.totalorder %s22, 1
        %s2043 = scalar_select %p2042, %s22, 1
        %s2044 = smul.addr %s2043, 32
        %s2045 = smul.addr %s2044, 4
        %s2046 = scalar_lea.vmem %s7, %s2045
      $region68: #{spp_bottleneck_pallas.4} parent=63 // pred_fallthru
        _
      // Predicated region
      $region69: #{spp_bottleneck_pallas.4} parent=63 // pred_check
        %p2047 = pneg %p223
      $region70: #{spp_bottleneck_pallas.4} parent=63 // pred_check_branch
        %2049 = sbr.rel (%p2047) target = $region72
      $region71: #{spp_bottleneck_pallas.4} parent=63 // pred_region
        %p2050 = scmp.lt.s32.totalorder %s22, 1
        %s2051 = scalar_select %p2050, %s22, 1
        %s2052 = smul.addr %s2051, 60
        %s2053 = smul.addr %s2052, 4
        %s2054 = scalar_lea.vmem %s8, %s2053
      $region72: #{spp_bottleneck_pallas.4} parent=63 // pred_fallthru
        _
      // Predicated region
      $region73: #{spp_bottleneck_pallas.4} parent=63 // pred_check
        %p2055 = pneg %p249
      $region74: #{spp_bottleneck_pallas.4} parent=63 // pred_check_branch
        %2057 = sbr.rel (%p2055) target = $region76
      $region75: #{spp_bottleneck_pallas.4} parent=63 // pred_region
        %p2058 = scmp.lt.s32.totalorder %s22, 1
        %s2059 = scalar_select %p2058, %s22, 1
        %s2060 = scalar_lea.vmem %s9, %s2059
      $region76: #{spp_bottleneck_pallas.4} parent=63 // pred_fallthru
        _
    $region64: #{spp_bottleneck_pallas.4} parent=5 // pred_fallthru
      _
  $region6: #{spp_bottleneck_pallas.4} parent=0 // loop_footer
    %s20 = sadd.s32 1, %s16
  $region7: #{spp_bottleneck_pallas.4} parent=0 // loop_footer_branch
    %15 = sbr.rel target = $region3
  $region8: #{spp_bottleneck_pallas.4} parent=0 // loop_exit
    _

// kernel: spp_bottleneck_pallas.6
$region0: #{spp_bottleneck_pallas.6}
  #allocation0 [shape = 'u32[]', space=smem, size = 0x4, offset = 0x4, fixed_abs, tag = 'smem constant byte address 0x4 - core index']
  #allocation1 [shape = 'u32[144,128]{1,0:T(1,128)}', space=vmem, size = 0x12000, scoped, tag = 'internal scratch']
  %s0 = inlined_call_operand.vmem [shape: bf16[2,22,22,8], index: 0, kind: input, shape index: {}]
  %s1 = inlined_call_operand.vmem [shape: f32[2,1,8], index: 1, kind: input, shape index: {}]
  %s2 = inlined_call_operand.vmem [shape: bf16[72,8], index: 2, kind: input, shape index: {}]
  %s3 = inlined_call_operand.vmem [shape: f32[1,8], index: 3, kind: input, shape index: {}]
  %s4 = inlined_call_operand.vmem [shape: f32[1,8], index: 4, kind: input, shape index: {}]
  %s5 = inlined_call_operand.vmem [shape: bf16[2,16,16,8], index: 5, kind: output, shape index: {0}]
  %s6 = inlined_call_operand.vmem [shape: f32[2,1,8], index: 6, kind: output, shape index: {1}]
  %7 = xla_tuple %s5, %s6
  %s8 = sld [smem:[#allocation0]]
  $region61: #{spp_bottleneck_pallas.6} parent=0
    _
  %s10 = ssub.s32 1, %s8
  %s11 = scalar_select 0, %s10, %s8
  loop: start=0, step=1, limit=4
  $region2: #{spp_bottleneck_pallas.6} parent=0 // loop_pre_header
    _
  $region3: #{spp_bottleneck_pallas.6} parent=0 // loop_header
    %s13 = sphi 0, %s17
    %p14 = scmp.ge.s32.totalorder %s13, 4
    %s23 = sphi 0, %s25
    %s26 = sphi 0, %s23
    %s27 = sphi 0, %s26
    %s43 = sphi 0, %s27
    %s49 = sphi 0, %s51
    %s52 = sphi 0, %s49
    %s53 = sphi 0, %s52
    %s69 = sphi 0, %s53
    %s73 = sphi 0, %s73
    %s75 = sphi 0, %s73
    %s76 = sphi 0, %s75
    %s90 = sphi 0, %s76
    %s94 = sphi 0, %s94
    %s96 = sphi 0, %s94
    %s97 = sphi 0, %s96
    %s111 = sphi 0, %s97
    %s115 = sphi 0, %s115
    %s117 = sphi 0, %s115
    %s118 = sphi 0, %s117
    %s132 = sphi 0, %s118
    %s138 = sphi 0, %s140
    %s141 = sphi 0, %s138
    %s142 = sphi 0, %s141
    %s158 = sphi 0, %s142
    %s164 = sphi 0, %s166
    %s167 = sphi 0, %s164
    %s168 = sphi 0, %s167
    %s184 = sphi 0, %s168
  $region4: #{spp_bottleneck_pallas.6} parent=0 // loop_header_branch
    %16 = sbr.rel (%p14) target = $region8
  $region5: #{spp_bottleneck_pallas.6} parent=0 // loop_body
    %s18 = ssub.s32 %s13, 1
    %s19 = ssub.s32 %s13, 2
    %s20 = sadd.s32 %s13, 1
    %s21 = ssub.s32 %s13, %s20
    %p22 = scmp.eq.s32.totalorder %s21, 0
    %s24 = sadd.s32 %s23, 1
    %s25 = scalar_select %p22, %s23, %s24
    %p28 = pneg %p22
    %p29 = scmp.eq.s32.totalorder %s13, 1
    %p30 = por %p28, %p29
    %p31 = scmp.ne.s32.totalorder %s23, %s26
    %p32 = scmp.eq.s32.totalorder %s13, 0
    %p33 = por %p31, %p32
    %p34 = scmp.ne.s32.totalorder %s23, %s26
    %p35 = scmp.eq.s32.totalorder %s18, 1
    %p36 = por %p34, %p35
    %p37 = scmp.ne.s32.totalorder %s26, %s27
    %p38 = scmp.eq.s32.totalorder %s18, 0
    %p39 = por %p37, %p38
    %p40 = scmp.ne.s32.totalorder %s26, %s27
    %p41 = scmp.eq.s32.totalorder %s19, 1
    %p42 = por %p40, %p41
    %p44 = scmp.ne.s32.totalorder %s27, %s43
    %p45 = scmp.eq.s32.totalorder %s19, 0
    %p46 = por %p44, %p45
    %s47 = ssub.s32 %s13, %s20
    %p48 = scmp.eq.s32.totalorder %s47, 0
    %s50 = sadd.s32 %s49, 1
    %s51 = scalar_select %p48, %s49, %s50
    %p54 = pneg %p48
    %p55 = scmp.eq.s32.totalorder %s13, 1
    %p56 = por %p54, %p55
    %p57 = scmp.ne.s32.totalorder %s49, %s52
    %p58 = scmp.eq.s32.totalorder %s13, 0
    %p59 = por %p57, %p58
    %p60 = scmp.ne.s32.totalorder %s49, %s52
    %p61 = scmp.eq.s32.totalorder %s18, 1
    %p62 = por %p60, %p61
    %p63 = scmp.ne.s32.totalorder %s52, %s53
    %p64 = scmp.eq.s32.totalorder %s18, 0
    %p65 = por %p63, %p64
    %p66 = scmp.ne.s32.totalorder %s52, %s53
    %p67 = scmp.eq.s32.totalorder %s19, 1
    %p68 = por %p66, %p67
    %p70 = scmp.ne.s32.totalorder %s53, %s69
    %p71 = scmp.eq.s32.totalorder %s19, 0
    %p72 = por %p70, %p71
    %s74 = sadd.s32 %s73, 1
    %p77 = scmp.eq.s32.totalorder %s13, 1
    %p78 = scmp.ne.s32.totalorder %s73, %s75
    %p79 = scmp.eq.s32.totalorder %s13, 0
    %p80 = por %p78, %p79
    %p81 = scmp.ne.s32.totalorder %s73, %s75
    %p82 = scmp.eq.s32.totalorder %s18, 1
    %p83 = por %p81, %p82
    %p84 = scmp.ne.s32.totalorder %s75, %s76
    %p85 = scmp.eq.s32.totalorder %s18, 0
    %p86 = por %p84, %p85
    %p87 = scmp.ne.s32.totalorder %s75, %s76
    %p88 = scmp.eq.s32.totalorder %s19, 1
    %p89 = por %p87, %p88
    %p91 = scmp.ne.s32.totalorder %s76, %s90
    %p92 = scmp.eq.s32.totalorder %s19, 0
    %p93 = por %p91, %p92
    %s95 = sadd.s32 %s94, 1
    %p98 = scmp.eq.s32.totalorder %s13, 1
    %p99 = scmp.ne.s32.totalorder %s94, %s96
    %p100 = scmp.eq.s32.totalorder %s13, 0
    %p101 = por %p99, %p100
    %p102 = scmp.ne.s32.totalorder %s94, %s96
    %p103 = scmp.eq.s32.totalorder %s18, 1
    %p104 = por %p102, %p103
    %p105 = scmp.ne.s32.totalorder %s96, %s97
    %p106 = scmp.eq.s32.totalorder %s18, 0
    %p107 = por %p105, %p106
    %p108 = scmp.ne.s32.totalorder %s96, %s97
    %p109 = scmp.eq.s32.totalorder %s19, 1
    %p110 = por %p108, %p109
    %p112 = scmp.ne.s32.totalorder %s97, %s111
    %p113 = scmp.eq.s32.totalorder %s19, 0
    %p114 = por %p112, %p113
    %s116 = sadd.s32 %s115, 1
    %p119 = scmp.eq.s32.totalorder %s13, 1
    %p120 = scmp.ne.s32.totalorder %s115, %s117
    %p121 = scmp.eq.s32.totalorder %s13, 0
    %p122 = por %p120, %p121
    %p123 = scmp.ne.s32.totalorder %s115, %s117
    %p124 = scmp.eq.s32.totalorder %s18, 1
    %p125 = por %p123, %p124
    %p126 = scmp.ne.s32.totalorder %s117, %s118
    %p127 = scmp.eq.s32.totalorder %s18, 0
    %p128 = por %p126, %p127
    %p129 = scmp.ne.s32.totalorder %s117, %s118
    %p130 = scmp.eq.s32.totalorder %s19, 1
    %p131 = por %p129, %p130
    %p133 = scmp.ne.s32.totalorder %s118, %s132
    %p134 = scmp.eq.s32.totalorder %s19, 0
    %p135 = por %p133, %p134
    %s136 = ssub.s32 %s13, %s20
    %p137 = scmp.eq.s32.totalorder %s136, 0
    %s139 = sadd.s32 %s138, 1
    %s140 = scalar_select %p137, %s138, %s139
    %p143 = pneg %p137
    %p144 = scmp.eq.s32.totalorder %s13, 1
    %p145 = por %p143, %p144
    %p146 = scmp.ne.s32.totalorder %s138, %s141
    %p147 = scmp.eq.s32.totalorder %s13, 0
    %p148 = por %p146, %p147
    %p149 = scmp.ne.s32.totalorder %s138, %s141
    %p150 = scmp.eq.s32.totalorder %s18, 1
    %p151 = por %p149, %p150
    %p152 = scmp.ne.s32.totalorder %s141, %s142
    %p153 = scmp.eq.s32.totalorder %s18, 0
    %p154 = por %p152, %p153
    %p155 = scmp.ne.s32.totalorder %s141, %s142
    %p156 = scmp.eq.s32.totalorder %s19, 1
    %p157 = por %p155, %p156
    %p159 = scmp.ne.s32.totalorder %s142, %s158
    %p160 = scmp.eq.s32.totalorder %s19, 0
    %p161 = por %p159, %p160
    %s162 = ssub.s32 %s13, %s20
    %p163 = scmp.eq.s32.totalorder %s162, 0
    %s165 = sadd.s32 %s164, 1
    %s166 = scalar_select %p163, %s164, %s165
    %p169 = pneg %p163
    %p170 = scmp.eq.s32.totalorder %s13, 1
    %p171 = por %p169, %p170
    %p172 = scmp.ne.s32.totalorder %s164, %s167
    %p173 = scmp.eq.s32.totalorder %s13, 0
    %p174 = por %p172, %p173
    %p175 = scmp.ne.s32.totalorder %s164, %s167
    %p176 = scmp.eq.s32.totalorder %s18, 1
    %p177 = por %p175, %p176
    %p178 = scmp.ne.s32.totalorder %s167, %s168
    %p179 = scmp.eq.s32.totalorder %s18, 0
    %p180 = por %p178, %p179
    %p181 = scmp.ne.s32.totalorder %s167, %s168
    %p182 = scmp.eq.s32.totalorder %s19, 1
    %p183 = por %p181, %p182
    %p185 = scmp.ne.s32.totalorder %s168, %s184
    %p186 = scmp.eq.s32.totalorder %s19, 0
    %p187 = por %p185, %p186
    %p188 = scmp.le.s32.totalorder 1, %s13
    %p189 = scmp.lt.s32.totalorder %s13, 3
    %p190 = pnand %p188, %p189
    %p191 = pneg %p190
    // Predicated region
    $region9: #{spp_bottleneck_pallas.6} parent=5 // pred_check
      _
    $region10: #{spp_bottleneck_pallas.6} parent=5 // pred_check_branch
      %193 = sbr.rel (%p190) target = $region12
    $region11: #{spp_bottleneck_pallas.6} parent=5 // pred_region
      %s194 = ssub.s32 %s13, 1
      // Predicated region
      $region13: #{spp_bottleneck_pallas.6} parent=11 // pred_check
        %p195 = pneg %p86
      $region14: #{spp_bottleneck_pallas.6} parent=11 // pred_check_branch
        %197 = sbr.rel (%p195) target = $region16
      $region15: #{spp_bottleneck_pallas.6} parent=11 // pred_region
        _
      $region16: #{spp_bottleneck_pallas.6} parent=11 // pred_fallthru
        _
      // Predicated region
      $region17: #{spp_bottleneck_pallas.6} parent=11 // pred_check
        %p198 = pneg %p107
      $region18: #{spp_bottleneck_pallas.6} parent=11 // pred_check_branch
        %200 = sbr.rel (%p198) target = $region20
      $region19: #{spp_bottleneck_pallas.6} parent=11 // pred_region
        _
      $region20: #{spp_bottleneck_pallas.6} parent=11 // pred_fallthru
        _
      // Predicated region
      $region21: #{spp_bottleneck_pallas.6} parent=11 // pred_check
        %p201 = pneg %p128
      $region22: #{spp_bottleneck_pallas.6} parent=11 // pred_check_branch
        %203 = sbr.rel (%p201) target = $region24
      $region23: #{spp_bottleneck_pallas.6} parent=11 // pred_region
        _
      $region24: #{spp_bottleneck_pallas.6} parent=11 // pred_fallthru
        _
    $region12: #{spp_bottleneck_pallas.6} parent=5 // pred_fallthru
      _
    %p204 = scmp.lt.s32.totalorder %s13, 2
    // Predicated region
    $region25: #{spp_bottleneck_pallas.6} parent=5 // pred_check
      %p205 = pneg %p204
    $region26: #{spp_bottleneck_pallas.6} parent=5 // pred_check_branch
      %207 = sbr.rel (%p205) target = $region28
    $region27: #{spp_bottleneck_pallas.6} parent=5 // pred_region
      // Predicated region
      $region29: #{spp_bottleneck_pallas.6} parent=27 // pred_check
        %p208 = pneg %p33
      $region30: #{spp_bottleneck_pallas.6} parent=27 // pred_check_branch
        %210 = sbr.rel (%p208) target = $region32
      $region31: #{spp_bottleneck_pallas.6} parent=27 // pred_region
        %p211 = scmp.lt.s32.totalorder %s13, 1
        %s212 = scalar_select %p211, %s13, 1
        %s213 = smul.addr %s212, 66
        %s214 = smul.addr %s213, 4
        %s215 = scalar_lea.vmem %s0, %s214
      $region32: #{spp_bottleneck_pallas.6} parent=27 // pred_fallthru
        _
      // Predicated region
      $region33: #{spp_bottleneck_pallas.6} parent=27 // pred_check
        %p216 = pneg %p59
      $region34: #{spp_bottleneck_pallas.6} parent=27 // pred_check_branch
        %218 = sbr.rel (%p216) target = $region36
      $region35: #{spp_bottleneck_pallas.6} parent=27 // pred_region
        %p219 = scmp.lt.s32.totalorder %s13, 1
        %s220 = scalar_select %p219, %s13, 1
        %s221 = scalar_lea.vmem %s1, %s220
      $region36: #{spp_bottleneck_pallas.6} parent=27 // pred_fallthru
        _
    $region28: #{spp_bottleneck_pallas.6} parent=5 // pred_fallthru
      _
    %p222 = scmp.le.s32.totalorder 1, %s13
    %p223 = scmp.lt.s32.totalorder %s13, 3
    %p224 = pnand %p222, %p223
    %p225 = pneg %p224
    // Predicated region
    $region37: #{spp_bottleneck_pallas.6} parent=5 // pred_check
      _
    $region38: #{spp_bottleneck_pallas.6} parent=5 // pred_check_branch
      %227 = sbr.rel (%p224) target = $region40
    $region39: #{spp_bottleneck_pallas.6} parent=5 // pred_region
      %s228 = ssub.s32 %s13, 1
      %p229 = scmp.lt.s32.totalorder %s18, 1
      %s230 = scalar_select %p229, %s18, 1
      %s231 = smul.addr %s230, 66
      %s232 = smul.addr %s231, 4
      %s233 = scalar_lea.vmem %s0, %s232
      %p234 = pneg %p39
      %p235 = pneg %p36
      %p236 = scmp.lt.s32.totalorder %s18, 1
      %s237 = scalar_select %p236, %s18, 1
      %s238 = scalar_lea.vmem %s1, %s237
      %p239 = pneg %p65
      %p240 = pneg %p62
      %p241 = pneg %p86
      %p242 = pneg %p83
      %p243 = pneg %p107
      %p244 = pneg %p104
      %p245 = pneg %p128
      %p246 = pneg %p125
      %p247 = pneg %p154
      %p248 = pneg %p151
      %p249 = scmp.lt.s32.totalorder %s18, 1
      %s250 = scalar_select %p249, %s18, 1
      %s251 = smul.addr %s250, 32
      %s252 = smul.addr %s251, 4
      %s253 = scalar_lea.vmem %s5, %s252
      %p254 = pneg %p180
      %p255 = pneg %p177
      %p256 = scmp.lt.s32.totalorder %s18, 1
      %s257 = scalar_select %p256, %s18, 1
      %s258 = scalar_lea.vmem %s6, %s257
      %p259 = scmp.lt.s32.totalorder %s18, 1
      %s260 = scalar_select %p259, %s18, 1
      %s261 = smul.addr %s260, 66
      %s262 = smul.addr %s261, 4
      %s263 = scalar_lea.vmem %s0, %s262
      %p264 = scmp.lt.s32.totalorder %s18, 1
      %s265 = scalar_select %p264, %s18, 1
      %s266 = scalar_lea.vmem %s1, %s265
      %p267 = scmp.lt.s32.totalorder %s18, 1
      %s268 = scalar_select %p267, %s18, 1
      %s269 = smul.addr %s268, 32
      %s270 = smul.addr %s269, 4
      %s271 = scalar_lea.vmem %s5, %s270
      %p272 = scmp.lt.s32.totalorder %s18, 1
      %s273 = scalar_select %p272, %s18, 1
      %s274 = scalar_lea.vmem %s6, %s273
      %v276 = vld [vmem:[%s263] sm:$0xf]
      %v277 = vld [vmem:[%s263 + $0x4] sm:$0xf]
      %v278 = vld [vmem:[%s263 + $0x8] sm:$0x7]
      %v279 = vld [vmem:[%s263 + $0xc] sm:$0xf]
      %v280 = vld [vmem:[%s263 + $0x10] sm:$0xf]
      %v281 = vld [vmem:[%s263 + $0x14] sm:$0x7]
      %v282 = vld [vmem:[%s263 + $0x18] sm:$0xf]
      %v283 = vld [vmem:[%s263 + $0x1c] sm:$0xf]
      %v284 = vld [vmem:[%s263 + $0x20] sm:$0x7]
      %v285 = vld [vmem:[%s263 + $0x24] sm:$0xf]
      %v286 = vld [vmem:[%s263 + $0x28] sm:$0xf]
      %v287 = vld [vmem:[%s263 + $0x2c] sm:$0x7]
      %v288 = vld [vmem:[%s263 + $0x30] sm:$0xf]
      %v289 = vld [vmem:[%s263 + $0x34] sm:$0xf]
      %v290 = vld [vmem:[%s263 + $0x38] sm:$0x7]
      %v291 = vld [vmem:[%s263 + $0x3c] sm:$0xf]
      %v292 = vld [vmem:[%s263 + $0x40] sm:$0xf]
      %v293 = vld [vmem:[%s263 + $0x44] sm:$0x7]
      %v294 = vld [vmem:[%s263 + $0x48] sm:$0xf]
      %v295 = vld [vmem:[%s263 + $0x4c] sm:$0xf]
      %v296 = vld [vmem:[%s263 + $0x50] sm:$0x7]
      %v297 = vld [vmem:[%s263 + $0x54] sm:$0xf]
      %v298 = vld [vmem:[%s263 + $0x58] sm:$0xf]
      %v299 = vld [vmem:[%s263 + $0x5c] sm:$0x7]
      %v300 = vld [vmem:[%s263 + $0x60] sm:$0xf]
      %v301 = vld [vmem:[%s263 + $0x64] sm:$0xf]
      %v302 = vld [vmem:[%s263 + $0x68] sm:$0x7]
      %v303 = vld [vmem:[%s263 + $0x6c] sm:$0xf]
      %v304 = vld [vmem:[%s263 + $0x70] sm:$0xf]
      %v305 = vld [vmem:[%s263 + $0x74] sm:$0x7]
      %v306 = vld [vmem:[%s263 + $0x78] sm:$0xf]
      %v307 = vld [vmem:[%s263 + $0x7c] sm:$0xf]
      %v308 = vld [vmem:[%s263 + $0x80] sm:$0x7]
      %v309 = vld [vmem:[%s263 + $0x84] sm:$0xf]
      %v310 = vld [vmem:[%s263 + $0x88] sm:$0xf]
      %v311 = vld [vmem:[%s263 + $0x8c] sm:$0x7]
      %v312 = vld [vmem:[%s263 + $0x90] sm:$0xf]
      %v313 = vld [vmem:[%s263 + $0x94] sm:$0xf]
      %v314 = vld [vmem:[%s263 + $0x98] sm:$0x7]
      %v315 = vld [vmem:[%s263 + $0x9c] sm:$0xf]
      %v316 = vld [vmem:[%s263 + $0xa0] sm:$0xf]
      %v317 = vld [vmem:[%s263 + $0xa4] sm:$0x7]
      %v318 = vld [vmem:[%s263 + $0xa8] sm:$0xf]
      %v319 = vld [vmem:[%s263 + $0xac] sm:$0xf]
      %v320 = vld [vmem:[%s263 + $0xb0] sm:$0x7]
      %v321 = vld [vmem:[%s263 + $0xb4] sm:$0xf]
      %v322 = vld [vmem:[%s263 + $0xb8] sm:$0xf]
      %v323 = vld [vmem:[%s263 + $0xbc] sm:$0x7]
      %v324 = vld [vmem:[%s263 + $0xc0] sm:$0xf]
      %v325 = vld [vmem:[%s263 + $0xc4] sm:$0xf]
      %v326 = vld [vmem:[%s263 + $0xc8] sm:$0x7]
      %v327 = vld [vmem:[%s263 + $0xcc] sm:$0xf]
      %v328 = vld [vmem:[%s263 + $0xd0] sm:$0xf]
      %v329 = vld [vmem:[%s263 + $0xd4] sm:$0x7]
      %v330 = vld [vmem:[%s263 + $0xd8] sm:$0xf]
      %v331 = vld [vmem:[%s263 + $0xdc] sm:$0xf]
      %v332 = vld [vmem:[%s263 + $0xe0] sm:$0x7]
      %v333 = vld [vmem:[%s263 + $0xe4] sm:$0xf]
      %v334 = vld [vmem:[%s263 + $0xe8] sm:$0xf]
      %v335 = vld [vmem:[%s263 + $0xec] sm:$0x7]
      %v336 = vld [vmem:[%s263 + $0xf0] sm:$0xf]
      %v337 = vld [vmem:[%s263 + $0xf4] sm:$0xf]
      %v338 = vld [vmem:[%s263 + $0xf8] sm:$0x7]
      %v339 = vld [vmem:[%s263 + $0xfc] sm:$0xf]
      %v340 = vld [vmem:[%s263 + $0x100] sm:$0xf]
      %v341 = vld [vmem:[%s263 + $0x104] sm:$0x7]
      %v342 = vunpack.c.l.bf16 %v276
      %v343 = vunpack.c.l.bf16 %v277
      %v344 = vunpack.c.l.bf16 %v278
      %v345 = vunpack.c.l.bf16 %v279
      %v346 = vunpack.c.l.bf16 %v280
      %v347 = vunpack.c.l.bf16 %v281
      %v348 = vunpack.c.l.bf16 %v282
      %v349 = vunpack.c.l.bf16 %v283
      %v350 = vunpack.c.l.bf16 %v284
      %v351 = vunpack.c.l.bf16 %v285
      %v352 = vunpack.c.l.bf16 %v286
      %v353 = vunpack.c.l.bf16 %v287
      %v354 = vunpack.c.l.bf16 %v288
      %v355 = vunpack.c.l.bf16 %v289
      %v356 = vunpack.c.l.bf16 %v290
      %v357 = vunpack.c.l.bf16 %v291
      %v358 = vunpack.c.l.bf16 %v292
      %v359 = vunpack.c.l.bf16 %v293
      %v360 = vunpack.c.l.bf16 %v294
      %v361 = vunpack.c.l.bf16 %v295
      %v362 = vunpack.c.l.bf16 %v296
      %v363 = vunpack.c.l.bf16 %v297
      %v364 = vunpack.c.l.bf16 %v298
      %v365 = vunpack.c.l.bf16 %v299
      %v366 = vunpack.c.l.bf16 %v300
      %v367 = vunpack.c.l.bf16 %v301
      %v368 = vunpack.c.l.bf16 %v302
      %v369 = vunpack.c.l.bf16 %v303
      %v370 = vunpack.c.l.bf16 %v304
      %v371 = vunpack.c.l.bf16 %v305
      %v372 = vunpack.c.l.bf16 %v306
      %v373 = vunpack.c.l.bf16 %v307
      %v374 = vunpack.c.l.bf16 %v308
      %v375 = vunpack.c.l.bf16 %v309
      %v376 = vunpack.c.l.bf16 %v310
      %v377 = vunpack.c.l.bf16 %v311
      %v378 = vunpack.c.l.bf16 %v312
      %v379 = vunpack.c.l.bf16 %v313
      %v380 = vunpack.c.l.bf16 %v314
      %v381 = vunpack.c.l.bf16 %v315
      %v382 = vunpack.c.l.bf16 %v316
      %v383 = vunpack.c.l.bf16 %v317
      %v384 = vunpack.c.l.bf16 %v318
      %v385 = vunpack.c.l.bf16 %v319
      %v386 = vunpack.c.l.bf16 %v320
      %v387 = vunpack.c.l.bf16 %v321
      %v388 = vunpack.c.l.bf16 %v322
      %v389 = vunpack.c.l.bf16 %v323
      %v390 = vunpack.c.l.bf16 %v324
      %v391 = vunpack.c.l.bf16 %v325
      %v392 = vunpack.c.l.bf16 %v326
      %v393 = vunpack.c.l.bf16 %v327
      %v394 = vunpack.c.l.bf16 %v328
      %v395 = vunpack.c.l.bf16 %v329
      %v396 = vunpack.c.l.bf16 %v330
      %v397 = vunpack.c.l.bf16 %v331
      %v398 = vunpack.c.l.bf16 %v332
      %v399 = vunpack.c.l.bf16 %v333
      %v400 = vunpack.c.l.bf16 %v334
      %v401 = vunpack.c.l.bf16 %v335
      %v402 = vunpack.c.l.bf16 %v336
      %v403 = vunpack.c.l.bf16 %v337
      %v404 = vunpack.c.l.bf16 %v338
      %v405 = vunpack.c.l.bf16 %v339
      %v406 = vunpack.c.l.bf16 %v340
      %v407 = vunpack.c.l.bf16 %v341
      %v408 = vld [vmem:[%s266] sm:$0x1]
      %v410 = vlaneseq
      %v411 = vshrl.u32 %v410, 7
      %v412 = vsub.s32 0, %v411
      %v413 = vrot.slane %v408, %v412
      %v415 = vmul.f32 %v342, %v413
      %v416 = vmul.f32 %v343, %v413
      %v417 = vmul.f32 %v344, %v413
      %v418 = vmul.f32 %v345, %v413
      %v419 = vmul.f32 %v346, %v413
      %v420 = vmul.f32 %v347, %v413
      %v421 = vmul.f32 %v348, %v413
      %v422 = vmul.f32 %v349, %v413
      %v423 = vmul.f32 %v350, %v413
      %v424 = vmul.f32 %v351, %v413
      %v425 = vmul.f32 %v352, %v413
      %v426 = vmul.f32 %v353, %v413
      %v427 = vmul.f32 %v354, %v413
      %v428 = vmul.f32 %v355, %v413
      %v429 = vmul.f32 %v356, %v413
      %v430 = vmul.f32 %v357, %v413
      %v431 = vmul.f32 %v358, %v413
      %v432 = vmul.f32 %v359, %v413
      %v433 = vmul.f32 %v360, %v413
      %v434 = vmul.f32 %v361, %v413
      %v435 = vmul.f32 %v362, %v413
      %v436 = vmul.f32 %v363, %v413
      %v437 = vmul.f32 %v364, %v413
      %v438 = vmul.f32 %v365, %v413
      %v439 = vmul.f32 %v366, %v413
      %v440 = vmul.f32 %v367, %v413
      %v441 = vmul.f32 %v368, %v413
      %v442 = vmul.f32 %v369, %v413
      %v443 = vmul.f32 %v370, %v413
      %v444 = vmul.f32 %v371, %v413
      %v445 = vmul.f32 %v372, %v413
      %v446 = vmul.f32 %v373, %v413
      %v447 = vmul.f32 %v374, %v413
      %v448 = vmul.f32 %v375, %v413
      %v449 = vmul.f32 %v376, %v413
      %v450 = vmul.f32 %v377, %v413
      %v451 = vmul.f32 %v378, %v413
      %v452 = vmul.f32 %v379, %v413
      %v453 = vmul.f32 %v380, %v413
      %v454 = vmul.f32 %v381, %v413
      %v455 = vmul.f32 %v382, %v413
      %v456 = vmul.f32 %v383, %v413
      %v457 = vmul.f32 %v384, %v413
      %v458 = vmul.f32 %v385, %v413
      %v459 = vmul.f32 %v386, %v413
      %v460 = vmul.f32 %v387, %v413
      %v461 = vmul.f32 %v388, %v413
      %v462 = vmul.f32 %v389, %v413
      %v463 = vmul.f32 %v390, %v413
      %v464 = vmul.f32 %v391, %v413
      %v465 = vmul.f32 %v392, %v413
      %v466 = vmul.f32 %v393, %v413
      %v467 = vmul.f32 %v394, %v413
      %v468 = vmul.f32 %v395, %v413
      %v469 = vmul.f32 %v396, %v413
      %v470 = vmul.f32 %v397, %v413
      %v471 = vmul.f32 %v398, %v413
      %v472 = vmul.f32 %v399, %v413
      %v473 = vmul.f32 %v400, %v413
      %v474 = vmul.f32 %v401, %v413
      %v475 = vmul.f32 %v402, %v413
      %v476 = vmul.f32 %v403, %v413
      %v477 = vmul.f32 %v404, %v413
      %v478 = vmul.f32 %v405, %v413
      %v479 = vmul.f32 %v406, %v413
      %v480 = vmul.f32 %v407, %v413
      %vm529 = vcmask 1044480
      %v530 = vrot.slane %v415, 3
      %v531 = vrot.slane %v416, 3
      %v532 = vsel %vm529, %v530, %v531
      %v533 = vrot.slane %v417, 3
      %v534 = vsel %vm529, %v531, %v533
      %v535 = vrot.slane %v418, 3
      %v536 = vrot.slane %v419, 3
      %v537 = vsel %vm529, %v535, %v536
      %v538 = vrot.slane %v420, 3
      %v539 = vsel %vm529, %v536, %v538
      %v540 = vrot.slane %v421, 3
      %v541 = vrot.slane %v422, 3
      %v542 = vsel %vm529, %v540, %v541
      %v543 = vrot.slane %v423, 3
      %v544 = vsel %vm529, %v541, %v543
      %v545 = vrot.slane %v424, 3
      %v546 = vrot.slane %v425, 3
      %v547 = vsel %vm529, %v545, %v546
      %v548 = vrot.slane %v426, 3
      %v549 = vsel %vm529, %v546, %v548
      %v550 = vrot.slane %v427, 3
      %v551 = vrot.slane %v428, 3
      %v552 = vsel %vm529, %v550, %v551
      %v553 = vrot.slane %v429, 3
      %v554 = vsel %vm529, %v551, %v553
      %v555 = vrot.slane %v430, 3
      %v556 = vrot.slane %v431, 3
      %v557 = vsel %vm529, %v555, %v556
      %v558 = vrot.slane %v432, 3
      %v559 = vsel %vm529, %v556, %v558
      %v560 = vrot.slane %v433, 3
      %v561 = vrot.slane %v434, 3
      %v562 = vsel %vm529, %v560, %v561
      %v563 = vrot.slane %v435, 3
      %v564 = vsel %vm529, %v561, %v563
      %v565 = vrot.slane %v436, 3
      %v566 = vrot.slane %v437, 3
      %v567 = vsel %vm529, %v565, %v566
      %v568 = vrot.slane %v438, 3
      %v569 = vsel %vm529, %v566, %v568
      %v570 = vrot.slane %v439, 3
      %v571 = vrot.slane %v440, 3
      %v572 = vsel %vm529, %v570, %v571
      %v573 = vrot.slane %v441, 3
      %v574 = vsel %vm529, %v571, %v573
      %v575 = vrot.slane %v442, 3
      %v576 = vrot.slane %v443, 3
      %v577 = vsel %vm529, %v575, %v576
      %v578 = vrot.slane %v444, 3
      %v579 = vsel %vm529, %v576, %v578
      %v580 = vrot.slane %v445, 3
      %v581 = vrot.slane %v446, 3
      %v582 = vsel %vm529, %v580, %v581
      %v583 = vrot.slane %v447, 3
      %v584 = vsel %vm529, %v581, %v583
      %v585 = vrot.slane %v448, 3
      %v586 = vrot.slane %v449, 3
      %v587 = vsel %vm529, %v585, %v586
      %v588 = vrot.slane %v450, 3
      %v589 = vsel %vm529, %v586, %v588
      %v590 = vrot.slane %v451, 3
      %v591 = vrot.slane %v452, 3
      %v592 = vsel %vm529, %v590, %v591
      %v593 = vrot.slane %v453, 3
      %v594 = vsel %vm529, %v591, %v593
      %v595 = vrot.slane %v454, 3
      %v596 = vrot.slane %v455, 3
      %v597 = vsel %vm529, %v595, %v596
      %v598 = vrot.slane %v456, 3
      %v599 = vsel %vm529, %v596, %v598
      %v600 = vrot.slane %v457, 3
      %v601 = vrot.slane %v458, 3
      %v602 = vsel %vm529, %v600, %v601
      %v603 = vrot.slane %v459, 3
      %v604 = vsel %vm529, %v601, %v603
      %v605 = vrot.slane %v460, 3
      %v606 = vrot.slane %v461, 3
      %v607 = vsel %vm529, %v605, %v606
      %v608 = vrot.slane %v462, 3
      %v609 = vsel %vm529, %v606, %v608
      %vm610 = vcmask 1041408
      %v611 = vrot.slane %v415, 6
      %v612 = vrot.slane %v416, 6
      %v613 = vsel %vm610, %v611, %v612
      %v614 = vrot.slane %v417, 6
      %v615 = vsel %vm610, %v612, %v614
      %v616 = vrot.slane %v418, 6
      %v617 = vrot.slane %v419, 6
      %v618 = vsel %vm610, %v616, %v617
      %v619 = vrot.slane %v420, 6
      %v620 = vsel %vm610, %v617, %v619
      %v621 = vrot.slane %v421, 6
      %v622 = vrot.slane %v422, 6
      %v623 = vsel %vm610, %v621, %v622
      %v624 = vrot.slane %v423, 6
      %v625 = vsel %vm610, %v622, %v624
      %v626 = vrot.slane %v424, 6
      %v627 = vrot.slane %v425, 6
      %v628 = vsel %vm610, %v626, %v627
      %v629 = vrot.slane %v426, 6
      %v630 = vsel %vm610, %v627, %v629
      %v631 = vrot.slane %v427, 6
      %v632 = vrot.slane %v428, 6
      %v633 = vsel %vm610, %v631, %v632
      %v634 = vrot.slane %v429, 6
      %v635 = vsel %vm610, %v632, %v634
      %v636 = vrot.slane %v430, 6
      %v637 = vrot.slane %v431, 6
      %v638 = vsel %vm610, %v636, %v637
      %v639 = vrot.slane %v432, 6
      %v640 = vsel %vm610, %v637, %v639
      %v641 = vrot.slane %v433, 6
      %v642 = vrot.slane %v434, 6
      %v643 = vsel %vm610, %v641, %v642
      %v644 = vrot.slane %v435, 6
      %v645 = vsel %vm610, %v642, %v644
      %v646 = vrot.slane %v436, 6
      %v647 = vrot.slane %v437, 6
      %v648 = vsel %vm610, %v646, %v647
      %v649 = vrot.slane %v438, 6
      %v650 = vsel %vm610, %v647, %v649
      %v651 = vrot.slane %v439, 6
      %v652 = vrot.slane %v440, 6
      %v653 = vsel %vm610, %v651, %v652
      %v654 = vrot.slane %v441, 6
      %v655 = vsel %vm610, %v652, %v654
      %v656 = vrot.slane %v442, 6
      %v657 = vrot.slane %v443, 6
      %v658 = vsel %vm610, %v656, %v657
      %v659 = vrot.slane %v444, 6
      %v660 = vsel %vm610, %v657, %v659
      %v661 = vrot.slane %v445, 6
      %v662 = vrot.slane %v446, 6
      %v663 = vsel %vm610, %v661, %v662
      %v664 = vrot.slane %v447, 6
      %v665 = vsel %vm610, %v662, %v664
      %v666 = vrot.slane %v448, 6
      %v667 = vrot.slane %v449, 6
      %v668 = vsel %vm610, %v666, %v667
      %v669 = vrot.slane %v450, 6
      %v670 = vsel %vm610, %v667, %v669
      %v671 = vrot.slane %v451, 6
      %v672 = vrot.slane %v452, 6
      %v673 = vsel %vm610, %v671, %v672
      %v674 = vrot.slane %v453, 6
      %v675 = vsel %vm610, %v672, %v674
      %v676 = vrot.slane %v454, 6
      %v677 = vrot.slane %v455, 6
      %v678 = vsel %vm610, %v676, %v677
      %v679 = vrot.slane %v456, 6
      %v680 = vsel %vm610, %v677, %v679
      %v681 = vrot.slane %v457, 6
      %v682 = vrot.slane %v458, 6
      %v683 = vsel %vm610, %v681, %v682
      %v684 = vrot.slane %v459, 6
      %v685 = vsel %vm610, %v682, %v684
      %v686 = vrot.slane %v460, 6
      %v687 = vrot.slane %v461, 6
      %v688 = vsel %vm610, %v686, %v687
      %v689 = vrot.slane %v462, 6
      %v690 = vsel %vm610, %v687, %v689
      %v700 = vrot.slane %v463, 3
      %v701 = vrot.slane %v464, 3
      %v702 = vsel %vm529, %v700, %v701
      %v703 = vrot.slane %v465, 3
      %v704 = vsel %vm529, %v701, %v703
      %v705 = vrot.slane %v466, 3
      %v706 = vrot.slane %v467, 3
      %v707 = vsel %vm529, %v705, %v706
      %v708 = vrot.slane %v468, 3
      %v709 = vsel %vm529, %v706, %v708
      %v710 = vrot.slane %v469, 3
      %v711 = vrot.slane %v470, 3
      %v712 = vsel %vm529, %v710, %v711
      %v713 = vrot.slane %v471, 3
      %v714 = vsel %vm529, %v711, %v713
      %v715 = vrot.slane %v463, 6
      %v716 = vrot.slane %v464, 6
      %v717 = vsel %vm610, %v715, %v716
      %v718 = vrot.slane %v465, 6
      %v719 = vsel %vm610, %v716, %v718
      %v720 = vrot.slane %v466, 6
      %v721 = vrot.slane %v467, 6
      %v722 = vsel %vm610, %v720, %v721
      %v723 = vrot.slane %v468, 6
      %v724 = vsel %vm610, %v721, %v723
      %v725 = vrot.slane %v469, 6
      %v726 = vrot.slane %v470, 6
      %v727 = vsel %vm610, %v725, %v726
      %v728 = vrot.slane %v471, 6
      %v729 = vsel %vm610, %v726, %v728
      %v739 = vrot.slane %v472, 3
      %v740 = vrot.slane %v473, 3
      %v741 = vsel %vm529, %v739, %v740
      %v742 = vrot.slane %v474, 3
      %v743 = vsel %vm529, %v740, %v742
      %v744 = vrot.slane %v475, 3
      %v745 = vrot.slane %v476, 3
      %v746 = vsel %vm529, %v744, %v745
      %v747 = vrot.slane %v477, 3
      %v748 = vsel %vm529, %v745, %v747
      %v749 = vrot.slane %v478, 3
      %v750 = vrot.slane %v479, 3
      %v751 = vsel %vm529, %v749, %v750
      %v752 = vrot.slane %v480, 3
      %v753 = vsel %vm529, %v750, %v752
      %v754 = vrot.slane %v472, 6
      %v755 = vrot.slane %v473, 6
      %v756 = vsel %vm610, %v754, %v755
      %v757 = vrot.slane %v474, 6
      %v758 = vsel %vm610, %v755, %v757
      %v759 = vrot.slane %v475, 6
      %v760 = vrot.slane %v476, 6
      %v761 = vsel %vm610, %v759, %v760
      %v762 = vrot.slane %v477, 6
      %v763 = vsel %vm610, %v760, %v762
      %v764 = vrot.slane %v478, 6
      %v765 = vrot.slane %v479, 6
      %v766 = vsel %vm610, %v764, %v765
      %v767 = vrot.slane %v480, 6
      %v768 = vsel %vm610, %v765, %v767
      %769 = vrot.lane.b32.xlu0 %v532, 8
      %v770 = vpop.permute.xlu0 %769
      %771 = vrot.lane.b32.xlu0 %v534, 8
      %v772 = vpop.permute.xlu0 %771
      %773 = vrot.lane.b32.xlu0 %v537, 8
      %v774 = vpop.permute.xlu0 %773
      %775 = vrot.lane.b32.xlu0 %v539, 8
      %v776 = vpop.permute.xlu0 %775
      %777 = vrot.lane.b32.xlu0 %v542, 8
      %v778 = vpop.permute.xlu0 %777
      %779 = vrot.lane.b32.xlu0 %v544, 8
      %v780 = vpop.permute.xlu0 %779
      %781 = vrot.lane.b32.xlu0 %v547, 8
      %v782 = vpop.permute.xlu0 %781
      %783 = vrot.lane.b32.xlu0 %v549, 8
      %v784 = vpop.permute.xlu0 %783
      %785 = vrot.lane.b32.xlu0 %v552, 8
      %v786 = vpop.permute.xlu0 %785
      %787 = vrot.lane.b32.xlu0 %v554, 8
      %v788 = vpop.permute.xlu0 %787
      %789 = vrot.lane.b32.xlu0 %v557, 8
      %v790 = vpop.permute.xlu0 %789
      %791 = vrot.lane.b32.xlu0 %v559, 8
      %v792 = vpop.permute.xlu0 %791
      %793 = vrot.lane.b32.xlu0 %v562, 8
      %v794 = vpop.permute.xlu0 %793
      %795 = vrot.lane.b32.xlu0 %v564, 8
      %v796 = vpop.permute.xlu0 %795
      %797 = vrot.lane.b32.xlu0 %v567, 8
      %v798 = vpop.permute.xlu0 %797
      %799 = vrot.lane.b32.xlu0 %v569, 8
      %v800 = vpop.permute.xlu0 %799
      %801 = vrot.lane.b32.xlu0 %v572, 8
      %v802 = vpop.permute.xlu0 %801
      %803 = vrot.lane.b32.xlu0 %v574, 8
      %v804 = vpop.permute.xlu0 %803
      %805 = vrot.lane.b32.xlu0 %v577, 8
      %v806 = vpop.permute.xlu0 %805
      %807 = vrot.lane.b32.xlu0 %v579, 8
      %v808 = vpop.permute.xlu0 %807
      %809 = vrot.lane.b32.xlu0 %v582, 8
      %v810 = vpop.permute.xlu0 %809
      %811 = vrot.lane.b32.xlu0 %v584, 8
      %v812 = vpop.permute.xlu0 %811
      %813 = vrot.lane.b32.xlu0 %v587, 8
      %v814 = vpop.permute.xlu0 %813
      %815 = vrot.lane.b32.xlu0 %v589, 8
      %v816 = vpop.permute.xlu0 %815
      %817 = vrot.lane.b32.xlu0 %v592, 8
      %v818 = vpop.permute.xlu0 %817
      %819 = vrot.lane.b32.xlu0 %v594, 8
      %v820 = vpop.permute.xlu0 %819
      %821 = vrot.lane.b32.xlu0 %v597, 8
      %v822 = vpop.permute.xlu0 %821
      %823 = vrot.lane.b32.xlu0 %v599, 8
      %v824 = vpop.permute.xlu0 %823
      %825 = vrot.lane.b32.xlu0 %v602, 8
      %v826 = vpop.permute.xlu0 %825
      %827 = vrot.lane.b32.xlu0 %v604, 8
      %v828 = vpop.permute.xlu0 %827
      %829 = vrot.lane.b32.xlu0 %v607, 8
      %v830 = vpop.permute.xlu0 %829
      %831 = vrot.lane.b32.xlu0 %v609, 8
      %v832 = vpop.permute.xlu0 %831
      %865 = vrot.lane.b32.xlu0 %v613, 16
      %v866 = vpop.permute.xlu0 %865
      %867 = vrot.lane.b32.xlu0 %v615, 16
      %v868 = vpop.permute.xlu0 %867
      %869 = vrot.lane.b32.xlu0 %v618, 16
      %v870 = vpop.permute.xlu0 %869
      %871 = vrot.lane.b32.xlu0 %v620, 16
      %v872 = vpop.permute.xlu0 %871
      %873 = vrot.lane.b32.xlu0 %v623, 16
      %v874 = vpop.permute.xlu0 %873
      %875 = vrot.lane.b32.xlu0 %v625, 16
      %v876 = vpop.permute.xlu0 %875
      %877 = vrot.lane.b32.xlu0 %v628, 16
      %v878 = vpop.permute.xlu0 %877
      %879 = vrot.lane.b32.xlu0 %v630, 16
      %v880 = vpop.permute.xlu0 %879
      %881 = vrot.lane.b32.xlu0 %v633, 16
      %v882 = vpop.permute.xlu0 %881
      %883 = vrot.lane.b32.xlu0 %v635, 16
      %v884 = vpop.permute.xlu0 %883
      %885 = vrot.lane.b32.xlu0 %v638, 16
      %v886 = vpop.permute.xlu0 %885
      %887 = vrot.lane.b32.xlu0 %v640, 16
      %v888 = vpop.permute.xlu0 %887
      %889 = vrot.lane.b32.xlu0 %v643, 16
      %v890 = vpop.permute.xlu0 %889
      %891 = vrot.lane.b32.xlu0 %v645, 16
      %v892 = vpop.permute.xlu0 %891
      %893 = vrot.lane.b32.xlu0 %v648, 16
      %v894 = vpop.permute.xlu0 %893
      %895 = vrot.lane.b32.xlu0 %v650, 16
      %v896 = vpop.permute.xlu0 %895
      %897 = vrot.lane.b32.xlu0 %v653, 16
      %v898 = vpop.permute.xlu0 %897
      %899 = vrot.lane.b32.xlu0 %v655, 16
      %v900 = vpop.permute.xlu0 %899
      %901 = vrot.lane.b32.xlu0 %v658, 16
      %v902 = vpop.permute.xlu0 %901
      %903 = vrot.lane.b32.xlu0 %v660, 16
      %v904 = vpop.permute.xlu0 %903
      %905 = vrot.lane.b32.xlu0 %v663, 16
      %v906 = vpop.permute.xlu0 %905
      %907 = vrot.lane.b32.xlu0 %v665, 16
      %v908 = vpop.permute.xlu0 %907
      %909 = vrot.lane.b32.xlu0 %v668, 16
      %v910 = vpop.permute.xlu0 %909
      %911 = vrot.lane.b32.xlu0 %v670, 16
      %v912 = vpop.permute.xlu0 %911
      %913 = vrot.lane.b32.xlu0 %v673, 16
      %v914 = vpop.permute.xlu0 %913
      %915 = vrot.lane.b32.xlu0 %v675, 16
      %v916 = vpop.permute.xlu0 %915
      %917 = vrot.lane.b32.xlu0 %v678, 16
      %v918 = vpop.permute.xlu0 %917
      %919 = vrot.lane.b32.xlu0 %v680, 16
      %v920 = vpop.permute.xlu0 %919
      %921 = vrot.lane.b32.xlu0 %v683, 16
      %v922 = vpop.permute.xlu0 %921
      %923 = vrot.lane.b32.xlu0 %v685, 16
      %v924 = vpop.permute.xlu0 %923
      %925 = vrot.lane.b32.xlu0 %v688, 16
      %v926 = vpop.permute.xlu0 %925
      %927 = vrot.lane.b32.xlu0 %v690, 16
      %v928 = vpop.permute.xlu0 %927
      %961 = vrot.lane.b32.xlu0 %v424, 24
      %v962 = vpop.permute.xlu0 %961
      %963 = vrot.lane.b32.xlu0 %v425, 24
      %v964 = vpop.permute.xlu0 %963
      %965 = vrot.lane.b32.xlu0 %v427, 24
      %v966 = vpop.permute.xlu0 %965
      %967 = vrot.lane.b32.xlu0 %v428, 24
      %v968 = vpop.permute.xlu0 %967
      %969 = vrot.lane.b32.xlu0 %v430, 24
      %v970 = vpop.permute.xlu0 %969
      %971 = vrot.lane.b32.xlu0 %v431, 24
      %v972 = vpop.permute.xlu0 %971
      %973 = vrot.lane.b32.xlu0 %v433, 24
      %v974 = vpop.permute.xlu0 %973
      %975 = vrot.lane.b32.xlu0 %v434, 24
      %v976 = vpop.permute.xlu0 %975
      %977 = vrot.lane.b32.xlu0 %v436, 24
      %v978 = vpop.permute.xlu0 %977
      %979 = vrot.lane.b32.xlu0 %v437, 24
      %v980 = vpop.permute.xlu0 %979
      %981 = vrot.lane.b32.xlu0 %v439, 24
      %v982 = vpop.permute.xlu0 %981
      %983 = vrot.lane.b32.xlu0 %v440, 24
      %v984 = vpop.permute.xlu0 %983
      %985 = vrot.lane.b32.xlu0 %v442, 24
      %v986 = vpop.permute.xlu0 %985
      %987 = vrot.lane.b32.xlu0 %v443, 24
      %v988 = vpop.permute.xlu0 %987
      %989 = vrot.lane.b32.xlu0 %v445, 24
      %v990 = vpop.permute.xlu0 %989
      %991 = vrot.lane.b32.xlu0 %v446, 24
      %v992 = vpop.permute.xlu0 %991
      %993 = vrot.lane.b32.xlu0 %v448, 24
      %v994 = vpop.permute.xlu0 %993
      %995 = vrot.lane.b32.xlu0 %v449, 24
      %v996 = vpop.permute.xlu0 %995
      %997 = vrot.lane.b32.xlu0 %v451, 24
      %v998 = vpop.permute.xlu0 %997
      %999 = vrot.lane.b32.xlu0 %v452, 24
      %v1000 = vpop.permute.xlu0 %999
      %1001 = vrot.lane.b32.xlu0 %v454, 24
      %v1002 = vpop.permute.xlu0 %1001
      %1003 = vrot.lane.b32.xlu0 %v455, 24
      %v1004 = vpop.permute.xlu0 %1003
      %1005 = vrot.lane.b32.xlu0 %v457, 24
      %v1006 = vpop.permute.xlu0 %1005
      %1007 = vrot.lane.b32.xlu0 %v458, 24
      %v1008 = vpop.permute.xlu0 %1007
      %1009 = vrot.lane.b32.xlu0 %v460, 24
      %v1010 = vpop.permute.xlu0 %1009
      %1011 = vrot.lane.b32.xlu0 %v461, 24
      %v1012 = vpop.permute.xlu0 %1011
      %1013 = vrot.lane.b32.xlu0 %v463, 24
      %v1014 = vpop.permute.xlu0 %1013
      %1015 = vrot.lane.b32.xlu0 %v464, 24
      %v1016 = vpop.permute.xlu0 %1015
      %1017 = vrot.lane.b32.xlu0 %v466, 24
      %v1018 = vpop.permute.xlu0 %1017
      %1019 = vrot.lane.b32.xlu0 %v467, 24
      %v1020 = vpop.permute.xlu0 %1019
      %1021 = vrot.lane.b32.xlu0 %v469, 24
      %v1022 = vpop.permute.xlu0 %1021
      %1023 = vrot.lane.b32.xlu0 %v470, 24
      %v1024 = vpop.permute.xlu0 %1023
      %1057 = vrot.lane.b32.xlu0 %v547, 32
      %v1058 = vpop.permute.xlu0 %1057
      %1059 = vrot.lane.b32.xlu0 %v549, 32
      %v1060 = vpop.permute.xlu0 %1059
      %1061 = vrot.lane.b32.xlu0 %v552, 32
      %v1062 = vpop.permute.xlu0 %1061
      %1063 = vrot.lane.b32.xlu0 %v554, 32
      %v1064 = vpop.permute.xlu0 %1063
      %1065 = vrot.lane.b32.xlu0 %v557, 32
      %v1066 = vpop.permute.xlu0 %1065
      %1067 = vrot.lane.b32.xlu0 %v559, 32
      %v1068 = vpop.permute.xlu0 %1067
      %1069 = vrot.lane.b32.xlu0 %v562, 32
      %v1070 = vpop.permute.xlu0 %1069
      %1071 = vrot.lane.b32.xlu0 %v564, 32
      %v1072 = vpop.permute.xlu0 %1071
      %1073 = vrot.lane.b32.xlu0 %v567, 32
      %v1074 = vpop.permute.xlu0 %1073
      %1075 = vrot.lane.b32.xlu0 %v569, 32
      %v1076 = vpop.permute.xlu0 %1075
      %1077 = vrot.lane.b32.xlu0 %v572, 32
      %v1078 = vpop.permute.xlu0 %1077
      %1079 = vrot.lane.b32.xlu0 %v574, 32
      %v1080 = vpop.permute.xlu0 %1079
      %1081 = vrot.lane.b32.xlu0 %v577, 32
      %v1082 = vpop.permute.xlu0 %1081
      %1083 = vrot.lane.b32.xlu0 %v579, 32
      %v1084 = vpop.permute.xlu0 %1083
      %1085 = vrot.lane.b32.xlu0 %v582, 32
      %v1086 = vpop.permute.xlu0 %1085
      %1087 = vrot.lane.b32.xlu0 %v584, 32
      %v1088 = vpop.permute.xlu0 %1087
      %1089 = vrot.lane.b32.xlu0 %v587, 32
      %v1090 = vpop.permute.xlu0 %1089
      %1091 = vrot.lane.b32.xlu0 %v589, 32
      %v1092 = vpop.permute.xlu0 %1091
      %1093 = vrot.lane.b32.xlu0 %v592, 32
      %v1094 = vpop.permute.xlu0 %1093
      %1095 = vrot.lane.b32.xlu0 %v594, 32
      %v1096 = vpop.permute.xlu0 %1095
      %1097 = vrot.lane.b32.xlu0 %v597, 32
      %v1098 = vpop.permute.xlu0 %1097
      %1099 = vrot.lane.b32.xlu0 %v599, 32
      %v1100 = vpop.permute.xlu0 %1099
      %1101 = vrot.lane.b32.xlu0 %v602, 32
      %v1102 = vpop.permute.xlu0 %1101
      %1103 = vrot.lane.b32.xlu0 %v604, 32
      %v1104 = vpop.permute.xlu0 %1103
      %1105 = vrot.lane.b32.xlu0 %v607, 32
      %v1106 = vpop.permute.xlu0 %1105
      %1107 = vrot.lane.b32.xlu0 %v609, 32
      %v1108 = vpop.permute.xlu0 %1107
      %1109 = vrot.lane.b32.xlu0 %v702, 32
      %v1110 = vpop.permute.xlu0 %1109
      %1111 = vrot.lane.b32.xlu0 %v704, 32
      %v1112 = vpop.permute.xlu0 %1111
      %1113 = vrot.lane.b32.xlu0 %v707, 32
      %v1114 = vpop.permute.xlu0 %1113
      %1115 = vrot.lane.b32.xlu0 %v709, 32
      %v1116 = vpop.permute.xlu0 %1115
      %1117 = vrot.lane.b32.xlu0 %v712, 32
      %v1118 = vpop.permute.xlu0 %1117
      %1119 = vrot.lane.b32.xlu0 %v714, 32
      %v1120 = vpop.permute.xlu0 %1119
      %1153 = vrot.lane.b32.xlu0 %v628, 40
      %v1154 = vpop.permute.xlu0 %1153
      %1155 = vrot.lane.b32.xlu0 %v630, 40
      %v1156 = vpop.permute.xlu0 %1155
      %1157 = vrot.lane.b32.xlu0 %v633, 40
      %v1158 = vpop.permute.xlu0 %1157
      %1159 = vrot.lane.b32.xlu0 %v635, 40
      %v1160 = vpop.permute.xlu0 %1159
      %1161 = vrot.lane.b32.xlu0 %v638, 40
      %v1162 = vpop.permute.xlu0 %1161
      %1163 = vrot.lane.b32.xlu0 %v640, 40
      %v1164 = vpop.permute.xlu0 %1163
      %1165 = vrot.lane.b32.xlu0 %v643, 40
      %v1166 = vpop.permute.xlu0 %1165
      %1167 = vrot.lane.b32.xlu0 %v645, 40
      %v1168 = vpop.permute.xlu0 %1167
      %1169 = vrot.lane.b32.xlu0 %v648, 40
      %v1170 = vpop.permute.xlu0 %1169
      %1171 = vrot.lane.b32.xlu0 %v650, 40
      %v1172 = vpop.permute.xlu0 %1171
      %1173 = vrot.lane.b32.xlu0 %v653, 40
      %v1174 = vpop.permute.xlu0 %1173
      %1175 = vrot.lane.b32.xlu0 %v655, 40
      %v1176 = vpop.permute.xlu0 %1175
      %1177 = vrot.lane.b32.xlu0 %v658, 40
      %v1178 = vpop.permute.xlu0 %1177
      %1179 = vrot.lane.b32.xlu0 %v660, 40
      %v1180 = vpop.permute.xlu0 %1179
      %1181 = vrot.lane.b32.xlu0 %v663, 40
      %v1182 = vpop.permute.xlu0 %1181
      %1183 = vrot.lane.b32.xlu0 %v665, 40
      %v1184 = vpop.permute.xlu0 %1183
      %1185 = vrot.lane.b32.xlu0 %v668, 40
      %v1186 = vpop.permute.xlu0 %1185
      %1187 = vrot.lane.b32.xlu0 %v670, 40
      %v1188 = vpop.permute.xlu0 %1187
      %1189 = vrot.lane.b32.xlu0 %v673, 40
      %v1190 = vpop.permute.xlu0 %1189
      %1191 = vrot.lane.b32.xlu0 %v675, 40
      %v1192 = vpop.permute.xlu0 %1191
      %1193 = vrot.lane.b32.xlu0 %v678, 40
      %v1194 = vpop.permute.xlu0 %1193
      %1195 = vrot.lane.b32.xlu0 %v680, 40
      %v1196 = vpop.permute.xlu0 %1195
      %1197 = vrot.lane.b32.xlu0 %v683, 40
      %v1198 = vpop.permute.xlu0 %1197
      %1199 = vrot.lane.b32.xlu0 %v685, 40
      %v1200 = vpop.permute.xlu0 %1199
      %1201 = vrot.lane.b32.xlu0 %v688, 40
      %v1202 = vpop.permute.xlu0 %1201
      %1203 = vrot.lane.b32.xlu0 %v690, 40
      %v1204 = vpop.permute.xlu0 %1203
      %1205 = vrot.lane.b32.xlu0 %v717, 40
      %v1206 = vpop.permute.xlu0 %1205
      %1207 = vrot.lane.b32.xlu0 %v719, 40
      %v1208 = vpop.permute.xlu0 %1207
      %1209 = vrot.lane.b32.xlu0 %v722, 40
      %v1210 = vpop.permute.xlu0 %1209
      %1211 = vrot.lane.b32.xlu0 %v724, 40
      %v1212 = vpop.permute.xlu0 %1211
      %1213 = vrot.lane.b32.xlu0 %v727, 40
      %v1214 = vpop.permute.xlu0 %1213
      %1215 = vrot.lane.b32.xlu0 %v729, 40
      %v1216 = vpop.permute.xlu0 %1215
      %1249 = vrot.lane.b32.xlu0 %v433, 48
      %v1250 = vpop.permute.xlu0 %1249
      %1251 = vrot.lane.b32.xlu0 %v434, 48
      %v1252 = vpop.permute.xlu0 %1251
      %1253 = vrot.lane.b32.xlu0 %v436, 48
      %v1254 = vpop.permute.xlu0 %1253
      %1255 = vrot.lane.b32.xlu0 %v437, 48
      %v1256 = vpop.permute.xlu0 %1255
      %1257 = vrot.lane.b32.xlu0 %v439, 48
      %v1258 = vpop.permute.xlu0 %1257
      %1259 = vrot.lane.b32.xlu0 %v440, 48
      %v1260 = vpop.permute.xlu0 %1259
      %1261 = vrot.lane.b32.xlu0 %v442, 48
      %v1262 = vpop.permute.xlu0 %1261
      %1263 = vrot.lane.b32.xlu0 %v443, 48
      %v1264 = vpop.permute.xlu0 %1263
      %1265 = vrot.lane.b32.xlu0 %v445, 48
      %v1266 = vpop.permute.xlu0 %1265
      %1267 = vrot.lane.b32.xlu0 %v446, 48
      %v1268 = vpop.permute.xlu0 %1267
      %1269 = vrot.lane.b32.xlu0 %v448, 48
      %v1270 = vpop.permute.xlu0 %1269
      %1271 = vrot.lane.b32.xlu0 %v449, 48
      %v1272 = vpop.permute.xlu0 %1271
      %1273 = vrot.lane.b32.xlu0 %v451, 48
      %v1274 = vpop.permute.xlu0 %1273
      %1275 = vrot.lane.b32.xlu0 %v452, 48
      %v1276 = vpop.permute.xlu0 %1275
      %1277 = vrot.lane.b32.xlu0 %v454, 48
      %v1278 = vpop.permute.xlu0 %1277
      %1279 = vrot.lane.b32.xlu0 %v455, 48
      %v1280 = vpop.permute.xlu0 %1279
      %1281 = vrot.lane.b32.xlu0 %v457, 48
      %v1282 = vpop.permute.xlu0 %1281
      %1283 = vrot.lane.b32.xlu0 %v458, 48
      %v1284 = vpop.permute.xlu0 %1283
      %1285 = vrot.lane.b32.xlu0 %v460, 48
      %v1286 = vpop.permute.xlu0 %1285
      %1287 = vrot.lane.b32.xlu0 %v461, 48
      %v1288 = vpop.permute.xlu0 %1287
      %1289 = vrot.lane.b32.xlu0 %v463, 48
      %v1290 = vpop.permute.xlu0 %1289
      %1291 = vrot.lane.b32.xlu0 %v464, 48
      %v1292 = vpop.permute.xlu0 %1291
      %1293 = vrot.lane.b32.xlu0 %v466, 48
      %v1294 = vpop.permute.xlu0 %1293
      %1295 = vrot.lane.b32.xlu0 %v467, 48
      %v1296 = vpop.permute.xlu0 %1295
      %1297 = vrot.lane.b32.xlu0 %v469, 48
      %v1298 = vpop.permute.xlu0 %1297
      %1299 = vrot.lane.b32.xlu0 %v470, 48
      %v1300 = vpop.permute.xlu0 %1299
      %1301 = vrot.lane.b32.xlu0 %v472, 48
      %v1302 = vpop.permute.xlu0 %1301
      %1303 = vrot.lane.b32.xlu0 %v473, 48
      %v1304 = vpop.permute.xlu0 %1303
      %1305 = vrot.lane.b32.xlu0 %v475, 48
      %v1306 = vpop.permute.xlu0 %1305
      %1307 = vrot.lane.b32.xlu0 %v476, 48
      %v1308 = vpop.permute.xlu0 %1307
      %1309 = vrot.lane.b32.xlu0 %v478, 48
      %v1310 = vpop.permute.xlu0 %1309
      %1311 = vrot.lane.b32.xlu0 %v479, 48
      %v1312 = vpop.permute.xlu0 %1311
      %1345 = vrot.lane.b32.xlu0 %v562, 56
      %v1346 = vpop.permute.xlu0 %1345
      %1347 = vrot.lane.b32.xlu0 %v564, 56
      %v1348 = vpop.permute.xlu0 %1347
      %1349 = vrot.lane.b32.xlu0 %v567, 56
      %v1350 = vpop.permute.xlu0 %1349
      %1351 = vrot.lane.b32.xlu0 %v569, 56
      %v1352 = vpop.permute.xlu0 %1351
      %1353 = vrot.lane.b32.xlu0 %v572, 56
      %v1354 = vpop.permute.xlu0 %1353
      %1355 = vrot.lane.b32.xlu0 %v574, 56
      %v1356 = vpop.permute.xlu0 %1355
      %1357 = vrot.lane.b32.xlu0 %v577, 56
      %v1358 = vpop.permute.xlu0 %1357
      %1359 = vrot.lane.b32.xlu0 %v579, 56
      %v1360 = vpop.permute.xlu0 %1359
      %1361 = vrot.lane.b32.xlu0 %v582, 56
      %v1362 = vpop.permute.xlu0 %1361
      %1363 = vrot.lane.b32.xlu0 %v584, 56
      %v1364 = vpop.permute.xlu0 %1363
      %1365 = vrot.lane.b32.xlu0 %v587, 56
      %v1366 = vpop.permute.xlu0 %1365
      %1367 = vrot.lane.b32.xlu0 %v589, 56
      %v1368 = vpop.permute.xlu0 %1367
      %1369 = vrot.lane.b32.xlu0 %v592, 56
      %v1370 = vpop.permute.xlu0 %1369
      %1371 = vrot.lane.b32.xlu0 %v594, 56
      %v1372 = vpop.permute.xlu0 %1371
      %1373 = vrot.lane.b32.xlu0 %v597, 56
      %v1374 = vpop.permute.xlu0 %1373
      %1375 = vrot.lane.b32.xlu0 %v599, 56
      %v1376 = vpop.permute.xlu0 %1375
      %1377 = vrot.lane.b32.xlu0 %v602, 56
      %v1378 = vpop.permute.xlu0 %1377
      %1379 = vrot.lane.b32.xlu0 %v604, 56
      %v1380 = vpop.permute.xlu0 %1379
      %1381 = vrot.lane.b32.xlu0 %v607, 56
      %v1382 = vpop.permute.xlu0 %1381
      %1383 = vrot.lane.b32.xlu0 %v609, 56
      %v1384 = vpop.permute.xlu0 %1383
      %1385 = vrot.lane.b32.xlu0 %v702, 56
      %v1386 = vpop.permute.xlu0 %1385
      %1387 = vrot.lane.b32.xlu0 %v704, 56
      %v1388 = vpop.permute.xlu0 %1387
      %1389 = vrot.lane.b32.xlu0 %v707, 56
      %v1390 = vpop.permute.xlu0 %1389
      %1391 = vrot.lane.b32.xlu0 %v709, 56
      %v1392 = vpop.permute.xlu0 %1391
      %1393 = vrot.lane.b32.xlu0 %v712, 56
      %v1394 = vpop.permute.xlu0 %1393
      %1395 = vrot.lane.b32.xlu0 %v714, 56
      %v1396 = vpop.permute.xlu0 %1395
      %1397 = vrot.lane.b32.xlu0 %v741, 56
      %v1398 = vpop.permute.xlu0 %1397
      %1399 = vrot.lane.b32.xlu0 %v743, 56
      %v1400 = vpop.permute.xlu0 %1399
      %1401 = vrot.lane.b32.xlu0 %v746, 56
      %v1402 = vpop.permute.xlu0 %1401
      %1403 = vrot.lane.b32.xlu0 %v748, 56
      %v1404 = vpop.permute.xlu0 %1403
      %1405 = vrot.lane.b32.xlu0 %v751, 56
      %v1406 = vpop.permute.xlu0 %1405
      %1407 = vrot.lane.b32.xlu0 %v753, 56
      %v1408 = vpop.permute.xlu0 %1407
      %1441 = vrot.lane.b32.xlu0 %v643, 64
      %v1442 = vpop.permute.xlu0 %1441
      %1443 = vrot.lane.b32.xlu0 %v645, 64
      %v1444 = vpop.permute.xlu0 %1443
      %1445 = vrot.lane.b32.xlu0 %v648, 64
      %v1446 = vpop.permute.xlu0 %1445
      %1447 = vrot.lane.b32.xlu0 %v650, 64
      %v1448 = vpop.permute.xlu0 %1447
      %1449 = vrot.lane.b32.xlu0 %v653, 64
      %v1450 = vpop.permute.xlu0 %1449
      %1451 = vrot.lane.b32.xlu0 %v655, 64
      %v1452 = vpop.permute.xlu0 %1451
      %1453 = vrot.lane.b32.xlu0 %v658, 64
      %v1454 = vpop.permute.xlu0 %1453
      %1455 = vrot.lane.b32.xlu0 %v660, 64
      %v1456 = vpop.permute.xlu0 %1455
      %1457 = vrot.lane.b32.xlu0 %v663, 64
      %v1458 = vpop.permute.xlu0 %1457
      %1459 = vrot.lane.b32.xlu0 %v665, 64
      %v1460 = vpop.permute.xlu0 %1459
      %1461 = vrot.lane.b32.xlu0 %v668, 64
      %v1462 = vpop.permute.xlu0 %1461
      %1463 = vrot.lane.b32.xlu0 %v670, 64
      %v1464 = vpop.permute.xlu0 %1463
      %1465 = vrot.lane.b32.xlu0 %v673, 64
      %v1466 = vpop.permute.xlu0 %1465
      %1467 = vrot.lane.b32.xlu0 %v675, 64
      %v1468 = vpop.permute.xlu0 %1467
      %1469 = vrot.lane.b32.xlu0 %v678, 64
      %v1470 = vpop.permute.xlu0 %1469
      %1471 = vrot.lane.b32.xlu0 %v680, 64
      %v1472 = vpop.permute.xlu0 %1471
      %1473 = vrot.lane.b32.xlu0 %v683, 64
      %v1474 = vpop.permute.xlu0 %1473
      %1475 = vrot.lane.b32.xlu0 %v685, 64
      %v1476 = vpop.permute.xlu0 %1475
      %1477 = vrot.lane.b32.xlu0 %v688, 64
      %v1478 = vpop.permute.xlu0 %1477
      %1479 = vrot.lane.b32.xlu0 %v690, 64
      %v1480 = vpop.permute.xlu0 %1479
      %1481 = vrot.lane.b32.xlu0 %v717, 64
      %v1482 = vpop.permute.xlu0 %1481
      %1483 = vrot.lane.b32.xlu0 %v719, 64
      %v1484 = vpop.permute.xlu0 %1483
      %1485 = vrot.lane.b32.xlu0 %v722, 64
      %v1486 = vpop.permute.xlu0 %1485
      %1487 = vrot.lane.b32.xlu0 %v724, 64
      %v1488 = vpop.permute.xlu0 %1487
      %1489 = vrot.lane.b32.xlu0 %v727, 64
      %v1490 = vpop.permute.xlu0 %1489
      %1491 = vrot.lane.b32.xlu0 %v729, 64
      %v1492 = vpop.permute.xlu0 %1491
      %1493 = vrot.lane.b32.xlu0 %v756, 64
      %v1494 = vpop.permute.xlu0 %1493
      %1495 = vrot.lane.b32.xlu0 %v758, 64
      %v1496 = vpop.permute.xlu0 %1495
      %1497 = vrot.lane.b32.xlu0 %v761, 64
      %v1498 = vpop.permute.xlu0 %1497
      %1499 = vrot.lane.b32.xlu0 %v763, 64
      %v1500 = vpop.permute.xlu0 %1499
      %1501 = vrot.lane.b32.xlu0 %v766, 64
      %v1502 = vpop.permute.xlu0 %1501
      %1503 = vrot.lane.b32.xlu0 %v768, 64
      %v1504 = vpop.permute.xlu0 %1503
      %vm1537 = vcmask 64512
      %v1538 = vsel %vm1537, %v415, %v770
      %v1539 = vsel %vm1537, %v416, %v772
      %v1540 = vsel %vm1537, %v418, %v774
      %v1541 = vsel %vm1537, %v419, %v776
      %v1542 = vsel %vm1537, %v421, %v778
      %v1543 = vsel %vm1537, %v422, %v780
      %v1544 = vsel %vm1537, %v424, %v782
      %v1545 = vsel %vm1537, %v425, %v784
      %v1546 = vsel %vm1537, %v427, %v786
      %v1547 = vsel %vm1537, %v428, %v788
      %v1548 = vsel %vm1537, %v430, %v790
      %v1549 = vsel %vm1537, %v431, %v792
      %v1550 = vsel %vm1537, %v433, %v794
      %v1551 = vsel %vm1537, %v434, %v796
      %v1552 = vsel %vm1537, %v436, %v798
      %v1553 = vsel %vm1537, %v437, %v800
      %v1554 = vsel %vm1537, %v439, %v802
      %v1555 = vsel %vm1537, %v440, %v804
      %v1556 = vsel %vm1537, %v442, %v806
      %v1557 = vsel %vm1537, %v443, %v808
      %v1558 = vsel %vm1537, %v445, %v810
      %v1559 = vsel %vm1537, %v446, %v812
      %v1560 = vsel %vm1537, %v448, %v814
      %v1561 = vsel %vm1537, %v449, %v816
      %v1562 = vsel %vm1537, %v451, %v818
      %v1563 = vsel %vm1537, %v452, %v820
      %v1564 = vsel %vm1537, %v454, %v822
      %v1565 = vsel %vm1537, %v455, %v824
      %v1566 = vsel %vm1537, %v457, %v826
      %v1567 = vsel %vm1537, %v458, %v828
      %v1568 = vsel %vm1537, %v460, %v830
      %v1569 = vsel %vm1537, %v461, %v832
      %vm1570 = vcmask 130048
      %v1571 = vsel %vm1570, %v1538, %v866
      %v1572 = vsel %vm1570, %v1539, %v868
      %v1573 = vsel %vm1570, %v1540, %v870
      %v1574 = vsel %vm1570, %v1541, %v872
      %v1575 = vsel %vm1570, %v1542, %v874
      %v1576 = vsel %vm1570, %v1543, %v876
      %v1577 = vsel %vm1570, %v1544, %v878
      %v1578 = vsel %vm1570, %v1545, %v880
      %v1579 = vsel %vm1570, %v1546, %v882
      %v1580 = vsel %vm1570, %v1547, %v884
      %v1581 = vsel %vm1570, %v1548, %v886
      %v1582 = vsel %vm1570, %v1549, %v888
      %v1583 = vsel %vm1570, %v1550, %v890
      %v1584 = vsel %vm1570, %v1551, %v892
      %v1585 = vsel %vm1570, %v1552, %v894
      %v1586 = vsel %vm1570, %v1553, %v896
      %v1587 = vsel %vm1570, %v1554, %v898
      %v1588 = vsel %vm1570, %v1555, %v900
      %v1589 = vsel %vm1570, %v1556, %v902
      %v1590 = vsel %vm1570, %v1557, %v904
      %v1591 = vsel %vm1570, %v1558, %v906
      %v1592 = vsel %vm1570, %v1559, %v908
      %v1593 = vsel %vm1570, %v1560, %v910
      %v1594 = vsel %vm1570, %v1561, %v912
      %v1595 = vsel %vm1570, %v1562, %v914
      %v1596 = vsel %vm1570, %v1563, %v916
      %v1597 = vsel %vm1570, %v1564, %v918
      %v1598 = vsel %vm1570, %v1565, %v920
      %v1599 = vsel %vm1570, %v1566, %v922
      %v1600 = vsel %vm1570, %v1567, %v924
      %v1601 = vsel %vm1570, %v1568, %v926
      %v1602 = vsel %vm1570, %v1569, %v928
      %vm1603 = vcmask 195584
      %v1604 = vsel %vm1603, %v1571, %v962
      %v1605 = vsel %vm1603, %v1572, %v964
      %v1606 = vsel %vm1603, %v1573, %v966
      %v1607 = vsel %vm1603, %v1574, %v968
      %v1608 = vsel %vm1603, %v1575, %v970
      %v1609 = vsel %vm1603, %v1576, %v972
      %v1610 = vsel %vm1603, %v1577, %v974
      %v1611 = vsel %vm1603, %v1578, %v976
      %v1612 = vsel %vm1603, %v1579, %v978
      %v1613 = vsel %vm1603, %v1580, %v980
      %v1614 = vsel %vm1603, %v1581, %v982
      %v1615 = vsel %vm1603, %v1582, %v984
      %v1616 = vsel %vm1603, %v1583, %v986
      %v1617 = vsel %vm1603, %v1584, %v988
      %v1618 = vsel %vm1603, %v1585, %v990
      %v1619 = vsel %vm1603, %v1586, %v992
      %v1620 = vsel %vm1603, %v1587, %v994
      %v1621 = vsel %vm1603, %v1588, %v996
      %v1622 = vsel %vm1603, %v1589, %v998
      %v1623 = vsel %vm1603, %v1590, %v1000
      %v1624 = vsel %vm1603, %v1591, %v1002
      %v1625 = vsel %vm1603, %v1592, %v1004
      %v1626 = vsel %vm1603, %v1593, %v1006
      %v1627 = vsel %vm1603, %v1594, %v1008
      %v1628 = vsel %vm1603, %v1595, %v1010
      %v1629 = vsel %vm1603, %v1596, %v1012
      %v1630 = vsel %vm1603, %v1597, %v1014
      %v1631 = vsel %vm1603, %v1598, %v1016
      %v1632 = vsel %vm1603, %v1599, %v1018
      %v1633 = vsel %vm1603, %v1600, %v1020
      %v1634 = vsel %vm1603, %v1601, %v1022
      %v1635 = vsel %vm1603, %v1602, %v1024
      %vm1636 = vcmask 261120
      %v1637 = vsel %vm1636, %v1604, %v1058
      %v1638 = vsel %vm1636, %v1605, %v1060
      %v1639 = vsel %vm1636, %v1606, %v1062
      %v1640 = vsel %vm1636, %v1607, %v1064
      %v1641 = vsel %vm1636, %v1608, %v1066
      %v1642 = vsel %vm1636, %v1609, %v1068
      %v1643 = vsel %vm1636, %v1610, %v1070
      %v1644 = vsel %vm1636, %v1611, %v1072
      %v1645 = vsel %vm1636, %v1612, %v1074
      %v1646 = vsel %vm1636, %v1613, %v1076
      %v1647 = vsel %vm1636, %v1614, %v1078
      %v1648 = vsel %vm1636, %v1615, %v1080
      %v1649 = vsel %vm1636, %v1616, %v1082
      %v1650 = vsel %vm1636, %v1617, %v1084
      %v1651 = vsel %vm1636, %v1618, %v1086
      %v1652 = vsel %vm1636, %v1619, %v1088
      %v1653 = vsel %vm1636, %v1620, %v1090
      %v1654 = vsel %vm1636, %v1621, %v1092
      %v1655 = vsel %vm1636, %v1622, %v1094
      %v1656 = vsel %vm1636, %v1623, %v1096
      %v1657 = vsel %vm1636, %v1624, %v1098
      %v1658 = vsel %vm1636, %v1625, %v1100
      %v1659 = vsel %vm1636, %v1626, %v1102
      %v1660 = vsel %vm1636, %v1627, %v1104
      %v1661 = vsel %vm1636, %v1628, %v1106
      %v1662 = vsel %vm1636, %v1629, %v1108
      %v1663 = vsel %vm1636, %v1630, %v1110
      %v1664 = vsel %vm1636, %v1631, %v1112
      %v1665 = vsel %vm1636, %v1632, %v1114
      %v1666 = vsel %vm1636, %v1633, %v1116
      %v1667 = vsel %vm1636, %v1634, %v1118
      %v1668 = vsel %vm1636, %v1635, %v1120
      %vm1669 = vcmask 326656
      %v1670 = vsel %vm1669, %v1637, %v1154
      %v1671 = vsel %vm1669, %v1638, %v1156
      %v1672 = vsel %vm1669, %v1639, %v1158
      %v1673 = vsel %vm1669, %v1640, %v1160
      %v1674 = vsel %vm1669, %v1641, %v1162
      %v1675 = vsel %vm1669, %v1642, %v1164
      %v1676 = vsel %vm1669, %v1643, %v1166
      %v1677 = vsel %vm1669, %v1644, %v1168
      %v1678 = vsel %vm1669, %v1645, %v1170
      %v1679 = vsel %vm1669, %v1646, %v1172
      %v1680 = vsel %vm1669, %v1647, %v1174
      %v1681 = vsel %vm1669, %v1648, %v1176
      %v1682 = vsel %vm1669, %v1649, %v1178
      %v1683 = vsel %vm1669, %v1650, %v1180
      %v1684 = vsel %vm1669, %v1651, %v1182
      %v1685 = vsel %vm1669, %v1652, %v1184
      %v1686 = vsel %vm1669, %v1653, %v1186
      %v1687 = vsel %vm1669, %v1654, %v1188
      %v1688 = vsel %vm1669, %v1655, %v1190
      %v1689 = vsel %vm1669, %v1656, %v1192
      %v1690 = vsel %vm1669, %v1657, %v1194
      %v1691 = vsel %vm1669, %v1658, %v1196
      %v1692 = vsel %vm1669, %v1659, %v1198
      %v1693 = vsel %vm1669, %v1660, %v1200
      %v1694 = vsel %vm1669, %v1661, %v1202
      %v1695 = vsel %vm1669, %v1662, %v1204
      %v1696 = vsel %vm1669, %v1663, %v1206
      %v1697 = vsel %vm1669, %v1664, %v1208
      %v1698 = vsel %vm1669, %v1665, %v1210
      %v1699 = vsel %vm1669, %v1666, %v1212
      %v1700 = vsel %vm1669, %v1667, %v1214
      %v1701 = vsel %vm1669, %v1668, %v1216
      %vm1702 = vcmask 392192
      %v1703 = vsel %vm1702, %v1670, %v1250
      %v1704 = vsel %vm1702, %v1671, %v1252
      %v1705 = vsel %vm1702, %v1672, %v1254
      %v1706 = vsel %vm1702, %v1673, %v1256
      %v1707 = vsel %vm1702, %v1674, %v1258
      %v1708 = vsel %vm1702, %v1675, %v1260
      %v1709 = vsel %vm1702, %v1676, %v1262
      %v1710 = vsel %vm1702, %v1677, %v1264
      %v1711 = vsel %vm1702, %v1678, %v1266
      %v1712 = vsel %vm1702, %v1679, %v1268
      %v1713 = vsel %vm1702, %v1680, %v1270
      %v1714 = vsel %vm1702, %v1681, %v1272
      %v1715 = vsel %vm1702, %v1682, %v1274
      %v1716 = vsel %vm1702, %v1683, %v1276
      %v1717 = vsel %vm1702, %v1684, %v1278
      %v1718 = vsel %vm1702, %v1685, %v1280
      %v1719 = vsel %vm1702, %v1686, %v1282
      %v1720 = vsel %vm1702, %v1687, %v1284
      %v1721 = vsel %vm1702, %v1688, %v1286
      %v1722 = vsel %vm1702, %v1689, %v1288
      %v1723 = vsel %vm1702, %v1690, %v1290
      %v1724 = vsel %vm1702, %v1691, %v1292
      %v1725 = vsel %vm1702, %v1692, %v1294
      %v1726 = vsel %vm1702, %v1693, %v1296
      %v1727 = vsel %vm1702, %v1694, %v1298
      %v1728 = vsel %vm1702, %v1695, %v1300
      %v1729 = vsel %vm1702, %v1696, %v1302
      %v1730 = vsel %vm1702, %v1697, %v1304
      %v1731 = vsel %vm1702, %v1698, %v1306
      %v1732 = vsel %vm1702, %v1699, %v1308
      %v1733 = vsel %vm1702, %v1700, %v1310
      %v1734 = vsel %vm1702, %v1701, %v1312
      %vm1735 = vcmask 457728
      %v1736 = vsel %vm1735, %v1703, %v1346
      %v1737 = vsel %vm1735, %v1704, %v1348
      %v1738 = vsel %vm1735, %v1705, %v1350
      %v1739 = vsel %vm1735, %v1706, %v1352
      %v1740 = vsel %vm1735, %v1707, %v1354
      %v1741 = vsel %vm1735, %v1708, %v1356
      %v1742 = vsel %vm1735, %v1709, %v1358
      %v1743 = vsel %vm1735, %v1710, %v1360
      %v1744 = vsel %vm1735, %v1711, %v1362
      %v1745 = vsel %vm1735, %v1712, %v1364
      %v1746 = vsel %vm1735, %v1713, %v1366
      %v1747 = vsel %vm1735, %v1714, %v1368
      %v1748 = vsel %vm1735, %v1715, %v1370
      %v1749 = vsel %vm1735, %v1716, %v1372
      %v1750 = vsel %vm1735, %v1717, %v1374
      %v1751 = vsel %vm1735, %v1718, %v1376
      %v1752 = vsel %vm1735, %v1719, %v1378
      %v1753 = vsel %vm1735, %v1720, %v1380
      %v1754 = vsel %vm1735, %v1721, %v1382
      %v1755 = vsel %vm1735, %v1722, %v1384
      %v1756 = vsel %vm1735, %v1723, %v1386
      %v1757 = vsel %vm1735, %v1724, %v1388
      %v1758 = vsel %vm1735, %v1725, %v1390
      %v1759 = vsel %vm1735, %v1726, %v1392
      %v1760 = vsel %vm1735, %v1727, %v1394
      %v1761 = vsel %vm1735, %v1728, %v1396
      %v1762 = vsel %vm1735, %v1729, %v1398
      %v1763 = vsel %vm1735, %v1730, %v1400
      %v1764 = vsel %vm1735, %v1731, %v1402
      %v1765 = vsel %vm1735, %v1732, %v1404
      %v1766 = vsel %vm1735, %v1733, %v1406
      %v1767 = vsel %vm1735, %v1734, %v1408
      %vm1768 = vcmask 523264
      %v1769 = vsel %vm1768, %v1736, %v1442
      %v1770 = vsel %vm1768, %v1737, %v1444
      %v1771 = vsel %vm1768, %v1738, %v1446
      %v1772 = vsel %vm1768, %v1739, %v1448
      %v1773 = vsel %vm1768, %v1740, %v1450
      %v1774 = vsel %vm1768, %v1741, %v1452
      %v1775 = vsel %vm1768, %v1742, %v1454
      %v1776 = vsel %vm1768, %v1743, %v1456
      %v1777 = vsel %vm1768, %v1744, %v1458
      %v1778 = vsel %vm1768, %v1745, %v1460
      %v1779 = vsel %vm1768, %v1746, %v1462
      %v1780 = vsel %vm1768, %v1747, %v1464
      %v1781 = vsel %vm1768, %v1748, %v1466
      %v1782 = vsel %vm1768, %v1749, %v1468
      %v1783 = vsel %vm1768, %v1750, %v1470
      %v1784 = vsel %vm1768, %v1751, %v1472
      %v1785 = vsel %vm1768, %v1752, %v1474
      %v1786 = vsel %vm1768, %v1753, %v1476
      %v1787 = vsel %vm1768, %v1754, %v1478
      %v1788 = vsel %vm1768, %v1755, %v1480
      %v1789 = vsel %vm1768, %v1756, %v1482
      %v1790 = vsel %vm1768, %v1757, %v1484
      %v1791 = vsel %vm1768, %v1758, %v1486
      %v1792 = vsel %vm1768, %v1759, %v1488
      %v1793 = vsel %vm1768, %v1760, %v1490
      %v1794 = vsel %vm1768, %v1761, %v1492
      %v1795 = vsel %vm1768, %v1762, %v1494
      %v1796 = vsel %vm1768, %v1763, %v1496
      %v1797 = vsel %vm1768, %v1764, %v1498
      %v1798 = vsel %vm1768, %v1765, %v1500
      %v1799 = vsel %vm1768, %v1766, %v1502
      %v1800 = vsel %vm1768, %v1767, %v1504
      %v1801 = vpack.c.bf16 %v1770, %v1769
      %v1802 = vpack.c.bf16 %v1772, %v1771
      %v1803 = vpack.c.bf16 %v1774, %v1773
      %v1804 = vpack.c.bf16 %v1776, %v1775
      %v1805 = vpack.c.bf16 %v1778, %v1777
      %v1806 = vpack.c.bf16 %v1780, %v1779
      %v1807 = vpack.c.bf16 %v1782, %v1781
      %v1808 = vpack.c.bf16 %v1784, %v1783
      %v1809 = vpack.c.bf16 %v1786, %v1785
      %v1810 = vpack.c.bf16 %v1788, %v1787
      %v1811 = vpack.c.bf16 %v1790, %v1789
      %v1812 = vpack.c.bf16 %v1792, %v1791
      %v1813 = vpack.c.bf16 %v1794, %v1793
      %v1814 = vpack.c.bf16 %v1796, %v1795
      %v1815 = vpack.c.bf16 %v1798, %v1797
      %v1816 = vpack.c.bf16 %v1800, %v1799
      %v1817 = vld [vmem:[%s2] sm:$0xf]
      %v1818 = vld [vmem:[%s2 + $0x4] sm:$0xf]
      %v1819 = vld [vmem:[%s2 + $0x8] sm:$0xf]
      %v1820 = vld [vmem:[%s2 + $0xc] sm:$0xf]
      %v1821 = vld [vmem:[%s2 + $0x10] sm:$0xf]
      %v1822 = vld [vmem:[%s2 + $0x14] sm:$0xf]
      %v1823 = vld [vmem:[%s2 + $0x18] sm:$0xf]
      %v1824 = vld [vmem:[%s2 + $0x1c] sm:$0xf]
      %v1825 = vld [vmem:[%s2 + $0x20] sm:$0xf]
      %v1835 = vunpack.c.l.b16 %v1817
      %v1836 = vunpack.c.l.b16 %v1818
      %v1837 = vunpack.c.l.b16 %v1819
      %v1838 = vunpack.c.l.b16 %v1820
      %v1839 = vunpack.c.l.b16 %v1821
      %v1840 = vunpack.c.l.b16 %v1822
      %v1841 = vunpack.c.l.b16 %v1823
      %v1842 = vunpack.c.l.b16 %v1824
      %v1843 = vunpack.c.l.b16 %v1825
      %v1844 = vpack.c.b16 %v1836, %v1835
      %v1845 = vpack.c.b16 %v1838, %v1837
      %v1846 = vpack.c.b16 %v1840, %v1839
      %v1847 = vpack.c.b16 %v1842, %v1841
      %v1848 = vpack.c.b16 %v1843, %v1843
      %vm1853 = vcmask 588800
      %v1855 = vsel %vm1853, %v1801, 0
      %v1858 = vsel %vm1853, %v1802, 0
      %v1861 = vsel %vm1853, %v1803, 0
      %v1864 = vsel %vm1853, %v1804, 0
      %v1867 = vsel %vm1853, %v1805, 0
      %v1870 = vsel %vm1853, %v1806, 0
      %v1873 = vsel %vm1853, %v1807, 0
      %v1876 = vsel %vm1853, %v1808, 0
      %v1879 = vsel %vm1853, %v1809, 0
      %v1882 = vsel %vm1853, %v1810, 0
      %v1885 = vsel %vm1853, %v1811, 0
      %v1888 = vsel %vm1853, %v1812, 0
      %v1891 = vsel %vm1853, %v1813, 0
      %v1894 = vsel %vm1853, %v1814, 0
      %v1897 = vsel %vm1853, %v1815, 0
      %v1900 = vsel %vm1853, %v1816, 0
      %vm1902 = vcmask 1043456
      %v1904 = vsel %vm1902, %v1848, 0
      %1906 = vmatprep.subr.bf16.mxu0 0
      %1907 = vmatpush1.bf16.msra.mxu0 %v1844
      %1908 = vmatprep.subr.bf16.mxu0 0
      %1909 = vmatpush1.bf16.msra.mxu0 %v1845
      %1910 = vmatprep.subr.bf16.mxu0 0
      %1911 = vmatpush1.bf16.msra.mxu0 %v1846
      %1912 = vmatprep.subr.bf16.mxu0 0
      %1913 = vmatpush1.bf16.msra.mxu0 %v1847
      %1914 = vmatprep.subr.bf16.mxu0 0
      %1915 = vmatpush1.bf16.msra.mxu0 %v1904
      %1916 = vmatprep.subr.bf16.mxu0 0
      %1917 = vmatpush1.bf16.msra.mxu0 0
      %1918 = vmatprep.subr.bf16.mxu0 0
      %1919 = vmatpush1.bf16.msra.mxu0 0
      %1920 = vmatprep.subr.bf16.mxu0 0
      %1921 = vmatpush1.bf16.msra.mxu0 0
      %1922 = vmatprep.subr.bf16.mxu0 0
      %1923 = vmatpush1.bf16.msra.mxu0 0
      %1924 = vmatprep.subr.bf16.mxu0 0
      %1925 = vmatpush1.bf16.msra.mxu0 0
      %1926 = vmatprep.subr.bf16.mxu0 0
      %1927 = vmatpush1.bf16.msra.mxu0 0
      %1928 = vmatprep.subr.bf16.mxu0 0
      %1929 = vmatpush1.bf16.msra.mxu0 0
      %1930 = vmatprep.subr.bf16.mxu0 0
      %1931 = vmatpush1.bf16.msra.mxu0 0
      %1932 = vmatprep.subr.bf16.mxu0 0
      %1933 = vmatpush1.bf16.msra.mxu0 0
      %1934 = vmatprep.subr.bf16.mxu0 0
      %1935 = vmatpush1.bf16.msra.mxu0 0
      %1936 = vmatprep.subr.bf16.mxu0 0
      %1937 = vmatpush1.bf16.msra.mxu0 0
      %1938 = vmatprep.mubr.bf16.mxu0 0
      %1939 = vmatmul.mubr.bf16.gmra.mrb[0].mxu0 %v1855
      %v1940 = vpop.f32.mrb[0].mxu0
      %v1941 = vadd.f32 0.0, %v1940
      %v1942 = vpop.f32.mrb[0].mxu0
      %v1943 = vpop.f32.mrb[0].mxu0
      %v1944 = vadd.f32 0.0, %v1943
      %v1945 = vpop.f32.mrb[0].mxu0
      %1946 = vmatprep.mubr.bf16.mxu0 0
      %1947 = vmatmul.mubr.bf16.gmra.mrb[0].mxu0 %v1858
      %v1948 = vpop.f32.mrb[0].mxu0
      %v1949 = vadd.f32 0.0, %v1948
      %v1950 = vpop.f32.mrb[0].mxu0
      %v1951 = vpop.f32.mrb[0].mxu0
      %v1952 = vadd.f32 0.0, %v1951
      %v1953 = vpop.f32.mrb[0].mxu0
      %1954 = vmatprep.mubr.bf16.mxu0 0
      %1955 = vmatmul.mubr.bf16.gmra.mrb[0].mxu0 %v1861
      %v1956 = vpop.f32.mrb[0].mxu0
      %v1957 = vadd.f32 0.0, %v1956
      %v1958 = vpop.f32.mrb[0].mxu0
      %v1959 = vpop.f32.mrb[0].mxu0
      %v1960 = vadd.f32 0.0, %v1959
      %v1961 = vpop.f32.mrb[0].mxu0
      %1962 = vmatprep.mubr.bf16.mxu0 0
      %1963 = vmatmul.mubr.bf16.gmra.mrb[0].mxu0 %v1864
      %v1964 = vpop.f32.mrb[0].mxu0
      %v1965 = vadd.f32 0.0, %v1964
      %v1966 = vpop.f32.mrb[0].mxu0
      %v1967 = vpop.f32.mrb[0].mxu0
      %v1968 = vadd.f32 0.0, %v1967
      %v1969 = vpop.f32.mrb[0].mxu0
      %1970 = vmatprep.mubr.bf16.mxu0 0
      %1971 = vmatmul.mubr.bf16.gmra.mrb[0].mxu0 %v1867
      %v1972 = vpop.f32.mrb[0].mxu0
      %v1973 = vadd.f32 0.0, %v1972
      %v1974 = vpop.f32.mrb[0].mxu0
      %v1975 = vpop.f32.mrb[0].mxu0
      %v1976 = vadd.f32 0.0, %v1975
      %v1977 = vpop.f32.mrb[0].mxu0
      %1978 = vmatprep.mubr.bf16.mxu0 0
      %1979 = vmatmul.mubr.bf16.gmra.mrb[0].mxu0 %v1870
      %v1980 = vpop.f32.mrb[0].mxu0
      %v1981 = vadd.f32 0.0, %v1980
      %v1982 = vpop.f32.mrb[0].mxu0
      %v1983 = vpop.f32.mrb[0].mxu0
      %v1984 = vadd.f32 0.0, %v1983
      %v1985 = vpop.f32.mrb[0].mxu0
      %1986 = vmatprep.mubr.bf16.mxu0 0
      %1987 = vmatmul.mubr.bf16.gmra.mrb[0].mxu0 %v1873
      %v1988 = vpop.f32.mrb[0].mxu0
      %v1989 = vadd.f32 0.0, %v1988
      %v1990 = vpop.f32.mrb[0].mxu0
      %v1991 = vpop.f32.mrb[0].mxu0
      %v1992 = vadd.f32 0.0, %v1991
      %v1993 = vpop.f32.mrb[0].mxu0
      %1994 = vmatprep.mubr.bf16.mxu0 0
      %1995 = vmatmul.mubr.bf16.gmra.mrb[0].mxu0 %v1876
      %v1996 = vpop.f32.mrb[0].mxu0
      %v1997 = vadd.f32 0.0, %v1996
      %v1998 = vpop.f32.mrb[0].mxu0
      %v1999 = vpop.f32.mrb[0].mxu0
      %v2000 = vadd.f32 0.0, %v1999
      %v2001 = vpop.f32.mrb[0].mxu0
      %2002 = vmatprep.mubr.bf16.mxu0 0
      %2003 = vmatmul.mubr.bf16.gmra.mrb[0].mxu0 %v1879
      %v2004 = vpop.f32.mrb[0].mxu0
      %v2005 = vadd.f32 0.0, %v2004
      %v2006 = vpop.f32.mrb[0].mxu0
      %v2007 = vpop.f32.mrb[0].mxu0
      %v2008 = vadd.f32 0.0, %v2007
      %v2009 = vpop.f32.mrb[0].mxu0
      %2010 = vmatprep.mubr.bf16.mxu0 0
      %2011 = vmatmul.mubr.bf16.gmra.mrb[0].mxu0 %v1882
      %v2012 = vpop.f32.mrb[0].mxu0
      %v2013 = vadd.f32 0.0, %v2012
      %v2014 = vpop.f32.mrb[0].mxu0
      %v2015 = vpop.f32.mrb[0].mxu0
      %v2016 = vadd.f32 0.0, %v2015
      %v2017 = vpop.f32.mrb[0].mxu0
      %2018 = vmatprep.mubr.bf16.mxu0 0
      %2019 = vmatmul.mubr.bf16.gmra.mrb[0].mxu0 %v1885
      %v2020 = vpop.f32.mrb[0].mxu0
      %v2021 = vadd.f32 0.0, %v2020
      %v2022 = vpop.f32.mrb[0].mxu0
      %v2023 = vpop.f32.mrb[0].mxu0
      %v2024 = vadd.f32 0.0, %v2023
      %v2025 = vpop.f32.mrb[0].mxu0
      %2026 = vmatprep.mubr.bf16.mxu0 0
      %2027 = vmatmul.mubr.bf16.gmra.mrb[0].mxu0 %v1888
      %v2028 = vpop.f32.mrb[0].mxu0
      %v2029 = vadd.f32 0.0, %v2028
      %v2030 = vpop.f32.mrb[0].mxu0
      %v2031 = vpop.f32.mrb[0].mxu0
      %v2032 = vadd.f32 0.0, %v2031
      %v2033 = vpop.f32.mrb[0].mxu0
      %2034 = vmatprep.mubr.bf16.mxu0 0
      %2035 = vmatmul.mubr.bf16.gmra.mrb[0].mxu0 %v1891
      %v2036 = vpop.f32.mrb[0].mxu0
      %v2037 = vadd.f32 0.0, %v2036
      %v2038 = vpop.f32.mrb[0].mxu0
      %v2039 = vpop.f32.mrb[0].mxu0
      %v2040 = vadd.f32 0.0, %v2039
      %v2041 = vpop.f32.mrb[0].mxu0
      %2042 = vmatprep.mubr.bf16.mxu0 0
      %2043 = vmatmul.mubr.bf16.gmra.mrb[0].mxu0 %v1894
      %v2044 = vpop.f32.mrb[0].mxu0
      %v2045 = vadd.f32 0.0, %v2044
      %v2046 = vpop.f32.mrb[0].mxu0
      %v2047 = vpop.f32.mrb[0].mxu0
      %v2048 = vadd.f32 0.0, %v2047
      %v2049 = vpop.f32.mrb[0].mxu0
      %2050 = vmatprep.mubr.bf16.mxu0 0
      %2051 = vmatmul.mubr.bf16.gmra.mrb[0].mxu0 %v1897
      %v2052 = vpop.f32.mrb[0].mxu0
      %v2053 = vadd.f32 0.0, %v2052
      %v2054 = vpop.f32.mrb[0].mxu0
      %v2055 = vpop.f32.mrb[0].mxu0
      %v2056 = vadd.f32 0.0, %v2055
      %v2057 = vpop.f32.mrb[0].mxu0
      %2058 = vmatprep.mubr.bf16.mxu0 0
      %2059 = vmatmul.mubr.bf16.gmra.mrb[0].mxu0 %v1900
      %v2060 = vpop.f32.mrb[0].mxu0
      %v2061 = vadd.f32 0.0, %v2060
      %v2062 = vpop.f32.mrb[0].mxu0
      %v2063 = vpop.f32.mrb[0].mxu0
      %v2064 = vadd.f32 0.0, %v2063
      %v2065 = vpop.f32.mrb[0].mxu0
      %2066 = vdwg.mxu0
      %v2067 = vld [vmem:[%s3] sm:$0x1]
      %v2068 = vld [vmem:[%s4] sm:$0x1]
      %v2070 = vlaneseq
      %v2071 = vshrl.u32 %v2070, 7
      %v2072 = vsub.s32 0, %v2071
      %v2073 = vrot.slane %v2067, %v2072
      %v2075 = vmul.f32 %v1941, %v2073
      %v2076 = vmul.f32 %v1944, %v2073
      %v2077 = vmul.f32 %v1949, %v2073
      %v2078 = vmul.f32 %v1952, %v2073
      %v2079 = vmul.f32 %v1957, %v2073
      %v2080 = vmul.f32 %v1960, %v2073
      %v2081 = vmul.f32 %v1965, %v2073
      %v2082 = vmul.f32 %v1968, %v2073
      %v2083 = vmul.f32 %v1973, %v2073
      %v2084 = vmul.f32 %v1976, %v2073
      %v2085 = vmul.f32 %v1981, %v2073
      %v2086 = vmul.f32 %v1984, %v2073
      %v2087 = vmul.f32 %v1989, %v2073
      %v2088 = vmul.f32 %v1992, %v2073
      %v2089 = vmul.f32 %v1997, %v2073
      %v2090 = vmul.f32 %v2000, %v2073
      %v2091 = vmul.f32 %v2005, %v2073
      %v2092 = vmul.f32 %v2008, %v2073
      %v2093 = vmul.f32 %v2013, %v2073
      %v2094 = vmul.f32 %v2016, %v2073
      %v2095 = vmul.f32 %v2021, %v2073
      %v2096 = vmul.f32 %v2024, %v2073
      %v2097 = vmul.f32 %v2029, %v2073
      %v2098 = vmul.f32 %v2032, %v2073
      %v2099 = vmul.f32 %v2037, %v2073
      %v2100 = vmul.f32 %v2040, %v2073
      %v2101 = vmul.f32 %v2045, %v2073
      %v2102 = vmul.f32 %v2048, %v2073
      %v2103 = vmul.f32 %v2053, %v2073
      %v2104 = vmul.f32 %v2056, %v2073
      %v2105 = vmul.f32 %v2061, %v2073
      %v2106 = vmul.f32 %v2064, %v2073
      %v2108 = vlaneseq
      %v2109 = vshrl.u32 %v2108, 7
      %v2110 = vsub.s32 0, %v2109
      %v2111 = vrot.slane %v2068, %v2110
      %v2113 = vadd.f32 %v2075, %v2111
      %v2114 = vadd.f32 %v2076, %v2111
      %v2115 = vadd.f32 %v2077, %v2111
      %v2116 = vadd.f32 %v2078, %v2111
      %v2117 = vadd.f32 %v2079, %v2111
      %v2118 = vadd.f32 %v2080, %v2111
      %v2119 = vadd.f32 %v2081, %v2111
      %v2120 = vadd.f32 %v2082, %v2111
      %v2121 = vadd.f32 %v2083, %v2111
      %v2122 = vadd.f32 %v2084, %v2111
      %v2123 = vadd.f32 %v2085, %v2111
      %v2124 = vadd.f32 %v2086, %v2111
      %v2125 = vadd.f32 %v2087, %v2111
      %v2126 = vadd.f32 %v2088, %v2111
      %v2127 = vadd.f32 %v2089, %v2111
      %v2128 = vadd.f32 %v2090, %v2111
      %v2129 = vadd.f32 %v2091, %v2111
      %v2130 = vadd.f32 %v2092, %v2111
      %v2131 = vadd.f32 %v2093, %v2111
      %v2132 = vadd.f32 %v2094, %v2111
      %v2133 = vadd.f32 %v2095, %v2111
      %v2134 = vadd.f32 %v2096, %v2111
      %v2135 = vadd.f32 %v2097, %v2111
      %v2136 = vadd.f32 %v2098, %v2111
      %v2137 = vadd.f32 %v2099, %v2111
      %v2138 = vadd.f32 %v2100, %v2111
      %v2139 = vadd.f32 %v2101, %v2111
      %v2140 = vadd.f32 %v2102, %v2111
      %v2141 = vadd.f32 %v2103, %v2111
      %v2142 = vadd.f32 %v2104, %v2111
      %v2143 = vadd.f32 %v2105, %v2111
      %v2144 = vadd.f32 %v2106, %v2111
      %v2145 = vsub.f32 0.0, %v2113
      %v2146 = vsub.f32 0.0, %v2114
      %v2147 = vsub.f32 0.0, %v2115
      %v2148 = vsub.f32 0.0, %v2116
      %v2149 = vsub.f32 0.0, %v2117
      %v2150 = vsub.f32 0.0, %v2118
      %v2151 = vsub.f32 0.0, %v2119
      %v2152 = vsub.f32 0.0, %v2120
      %v2153 = vsub.f32 0.0, %v2121
      %v2154 = vsub.f32 0.0, %v2122
      %v2155 = vsub.f32 0.0, %v2123
      %v2156 = vsub.f32 0.0, %v2124
      %v2157 = vsub.f32 0.0, %v2125
      %v2158 = vsub.f32 0.0, %v2126
      %v2159 = vsub.f32 0.0, %v2127
      %v2160 = vsub.f32 0.0, %v2128
      %v2161 = vsub.f32 0.0, %v2129
      %v2162 = vsub.f32 0.0, %v2130
      %v2163 = vsub.f32 0.0, %v2131
      %v2164 = vsub.f32 0.0, %v2132
      %v2165 = vsub.f32 0.0, %v2133
      %v2166 = vsub.f32 0.0, %v2134
      %v2167 = vsub.f32 0.0, %v2135
      %v2168 = vsub.f32 0.0, %v2136
      %v2169 = vsub.f32 0.0, %v2137
      %v2170 = vsub.f32 0.0, %v2138
      %v2171 = vsub.f32 0.0, %v2139
      %v2172 = vsub.f32 0.0, %v2140
      %v2173 = vsub.f32 0.0, %v2141
      %v2174 = vsub.f32 0.0, %v2142
      %v2175 = vsub.f32 0.0, %v2143
      %v2176 = vsub.f32 0.0, %v2144
      %v2177 = vmul.f32 %v2145, 1.442695
      %v2178 = vpow.pop %v2177
      %v2179 = vmul.f32 %v2146, 1.442695
      %v2180 = vpow.pop %v2179
      %v2181 = vmul.f32 %v2147, 1.442695
      %v2182 = vpow.pop %v2181
      %v2183 = vmul.f32 %v2148, 1.442695
      %v2184 = vpow.pop %v2183
      %v2185 = vmul.f32 %v2149, 1.442695
      %v2186 = vpow.pop %v2185
      %v2187 = vmul.f32 %v2150, 1.442695
      %v2188 = vpow.pop %v2187
      %v2189 = vmul.f32 %v2151, 1.442695
      %v2190 = vpow.pop %v2189
      %v2191 = vmul.f32 %v2152, 1.442695
      %v2192 = vpow.pop %v2191
      %v2193 = vmul.f32 %v2153, 1.442695
      %v2194 = vpow.pop %v2193
      %v2195 = vmul.f32 %v2154, 1.442695
      %v2196 = vpow.pop %v2195
      %v2197 = vmul.f32 %v2155, 1.442695
      %v2198 = vpow.pop %v2197
      %v2199 = vmul.f32 %v2156, 1.442695
      %v2200 = vpow.pop %v2199
      %v2201 = vmul.f32 %v2157, 1.442695
      %v2202 = vpow.pop %v2201
      %v2203 = vmul.f32 %v2158, 1.442695
      %v2204 = vpow.pop %v2203
      %v2205 = vmul.f32 %v2159, 1.442695
      %v2206 = vpow.pop %v2205
      %v2207 = vmul.f32 %v2160, 1.442695
      %v2208 = vpow.pop %v2207
      %v2209 = vmul.f32 %v2161, 1.442695
      %v2210 = vpow.pop %v2209
      %v2211 = vmul.f32 %v2162, 1.442695
      %v2212 = vpow.pop %v2211
      %v2213 = vmul.f32 %v2163, 1.442695
      %v2214 = vpow.pop %v2213
      %v2215 = vmul.f32 %v2164, 1.442695
      %v2216 = vpow.pop %v2215
      %v2217 = vmul.f32 %v2165, 1.442695
      %v2218 = vpow.pop %v2217
      %v2219 = vmul.f32 %v2166, 1.442695
      %v2220 = vpow.pop %v2219
      %v2221 = vmul.f32 %v2167, 1.442695
      %v2222 = vpow.pop %v2221
      %v2223 = vmul.f32 %v2168, 1.442695
      %v2224 = vpow.pop %v2223
      %v2225 = vmul.f32 %v2169, 1.442695
      %v2226 = vpow.pop %v2225
      %v2227 = vmul.f32 %v2170, 1.442695
      %v2228 = vpow.pop %v2227
      %v2229 = vmul.f32 %v2171, 1.442695
      %v2230 = vpow.pop %v2229
      %v2231 = vmul.f32 %v2172, 1.442695
      %v2232 = vpow.pop %v2231
      %v2233 = vmul.f32 %v2173, 1.442695
      %v2234 = vpow.pop %v2233
      %v2235 = vmul.f32 %v2174, 1.442695
      %v2236 = vpow.pop %v2235
      %v2237 = vmul.f32 %v2175, 1.442695
      %v2238 = vpow.pop %v2237
      %v2239 = vmul.f32 %v2176, 1.442695
      %v2240 = vpow.pop %v2239
      %v2241 = vadd.f32 %v2178, 1.0
      %v2242 = vadd.f32 %v2180, 1.0
      %v2243 = vadd.f32 %v2182, 1.0
      %v2244 = vadd.f32 %v2184, 1.0
      %v2245 = vadd.f32 %v2186, 1.0
      %v2246 = vadd.f32 %v2188, 1.0
      %v2247 = vadd.f32 %v2190, 1.0
      %v2248 = vadd.f32 %v2192, 1.0
      %v2249 = vadd.f32 %v2194, 1.0
      %v2250 = vadd.f32 %v2196, 1.0
      %v2251 = vadd.f32 %v2198, 1.0
      %v2252 = vadd.f32 %v2200, 1.0
      %v2253 = vadd.f32 %v2202, 1.0
      %v2254 = vadd.f32 %v2204, 1.0
      %v2255 = vadd.f32 %v2206, 1.0
      %v2256 = vadd.f32 %v2208, 1.0
      %v2257 = vadd.f32 %v2210, 1.0
      %v2258 = vadd.f32 %v2212, 1.0
      %v2259 = vadd.f32 %v2214, 1.0
      %v2260 = vadd.f32 %v2216, 1.0
      %v2261 = vadd.f32 %v2218, 1.0
      %v2262 = vadd.f32 %v2220, 1.0
      %v2263 = vadd.f32 %v2222, 1.0
      %v2264 = vadd.f32 %v2224, 1.0
      %v2265 = vadd.f32 %v2226, 1.0
      %v2266 = vadd.f32 %v2228, 1.0
      %v2267 = vadd.f32 %v2230, 1.0
      %v2268 = vadd.f32 %v2232, 1.0
      %v2269 = vadd.f32 %v2234, 1.0
      %v2270 = vadd.f32 %v2236, 1.0
      %v2271 = vadd.f32 %v2238, 1.0
      %v2272 = vadd.f32 %v2240, 1.0
      %v2273 = vrcp.pop %v2241
      %v2274 = vrcp.pop %v2242
      %v2275 = vrcp.pop %v2243
      %v2276 = vrcp.pop %v2244
      %v2277 = vrcp.pop %v2245
      %v2278 = vrcp.pop %v2246
      %v2279 = vrcp.pop %v2247
      %v2280 = vrcp.pop %v2248
      %v2281 = vrcp.pop %v2249
      %v2282 = vrcp.pop %v2250
      %v2283 = vrcp.pop %v2251
      %v2284 = vrcp.pop %v2252
      %v2285 = vrcp.pop %v2253
      %v2286 = vrcp.pop %v2254
      %v2287 = vrcp.pop %v2255
      %v2288 = vrcp.pop %v2256
      %v2289 = vrcp.pop %v2257
      %v2290 = vrcp.pop %v2258
      %v2291 = vrcp.pop %v2259
      %v2292 = vrcp.pop %v2260
      %v2293 = vrcp.pop %v2261
      %v2294 = vrcp.pop %v2262
      %v2295 = vrcp.pop %v2263
      %v2296 = vrcp.pop %v2264
      %v2297 = vrcp.pop %v2265
      %v2298 = vrcp.pop %v2266
      %v2299 = vrcp.pop %v2267
      %v2300 = vrcp.pop %v2268
      %v2301 = vrcp.pop %v2269
      %v2302 = vrcp.pop %v2270
      %v2303 = vrcp.pop %v2271
      %v2304 = vrcp.pop %v2272
      %v2305 = vmul.f32 %v2113, %v2273
      %v2306 = vmul.f32 %v2114, %v2274
      %v2307 = vmul.f32 %v2115, %v2275
      %v2308 = vmul.f32 %v2116, %v2276
      %v2309 = vmul.f32 %v2117, %v2277
      %v2310 = vmul.f32 %v2118, %v2278
      %v2311 = vmul.f32 %v2119, %v2279
      %v2312 = vmul.f32 %v2120, %v2280
      %v2313 = vmul.f32 %v2121, %v2281
      %v2314 = vmul.f32 %v2122, %v2282
      %v2315 = vmul.f32 %v2123, %v2283
      %v2316 = vmul.f32 %v2124, %v2284
      %v2317 = vmul.f32 %v2125, %v2285
      %v2318 = vmul.f32 %v2126, %v2286
      %v2319 = vmul.f32 %v2127, %v2287
      %v2320 = vmul.f32 %v2128, %v2288
      %v2321 = vmul.f32 %v2129, %v2289
      %v2322 = vmul.f32 %v2130, %v2290
      %v2323 = vmul.f32 %v2131, %v2291
      %v2324 = vmul.f32 %v2132, %v2292
      %v2325 = vmul.f32 %v2133, %v2293
      %v2326 = vmul.f32 %v2134, %v2294
      %v2327 = vmul.f32 %v2135, %v2295
      %v2328 = vmul.f32 %v2136, %v2296
      %v2329 = vmul.f32 %v2137, %v2297
      %v2330 = vmul.f32 %v2138, %v2298
      %v2331 = vmul.f32 %v2139, %v2299
      %v2332 = vmul.f32 %v2140, %v2300
      %v2333 = vmul.f32 %v2141, %v2301
      %v2334 = vmul.f32 %v2142, %v2302
      %v2335 = vmul.f32 %v2143, %v2303
      %v2336 = vmul.f32 %v2144, %v2304
      %v2337 = vsel %vm1537, %v2305, 0.0
      %v2338 = vsel %vm1537, %v2306, 0.0
      %v2339 = vadd.f32 %v2337, %v2338
      %v2340 = vsel %vm1537, %v2307, 0.0
      %v2341 = vadd.f32 %v2339, %v2340
      %v2342 = vsel %vm1537, %v2308, 0.0
      %v2343 = vadd.f32 %v2341, %v2342
      %v2344 = vsel %vm1537, %v2309, 0.0
      %v2345 = vadd.f32 %v2343, %v2344
      %v2346 = vsel %vm1537, %v2310, 0.0
      %v2347 = vadd.f32 %v2345, %v2346
      %v2348 = vsel %vm1537, %v2311, 0.0
      %v2349 = vadd.f32 %v2347, %v2348
      %v2350 = vsel %vm1537, %v2312, 0.0
      %v2351 = vadd.f32 %v2349, %v2350
      %v2352 = vsel %vm1537, %v2313, 0.0
      %v2353 = vadd.f32 %v2351, %v2352
      %v2354 = vsel %vm1537, %v2314, 0.0
      %v2355 = vadd.f32 %v2353, %v2354
      %v2356 = vsel %vm1537, %v2315, 0.0
      %v2357 = vadd.f32 %v2355, %v2356
      %v2358 = vsel %vm1537, %v2316, 0.0
      %v2359 = vadd.f32 %v2357, %v2358
      %v2360 = vsel %vm1537, %v2317, 0.0
      %v2361 = vadd.f32 %v2359, %v2360
      %v2362 = vsel %vm1537, %v2318, 0.0
      %v2363 = vadd.f32 %v2361, %v2362
      %v2364 = vsel %vm1537, %v2319, 0.0
      %v2365 = vadd.f32 %v2363, %v2364
      %v2366 = vsel %vm1537, %v2320, 0.0
      %v2367 = vadd.f32 %v2365, %v2366
      %v2368 = vsel %vm1537, %v2321, 0.0
      %v2369 = vadd.f32 %v2367, %v2368
      %v2370 = vsel %vm1537, %v2322, 0.0
      %v2371 = vadd.f32 %v2369, %v2370
      %v2372 = vsel %vm1537, %v2323, 0.0
      %v2373 = vadd.f32 %v2371, %v2372
      %v2374 = vsel %vm1537, %v2324, 0.0
      %v2375 = vadd.f32 %v2373, %v2374
      %v2376 = vsel %vm1537, %v2325, 0.0
      %v2377 = vadd.f32 %v2375, %v2376
      %v2378 = vsel %vm1537, %v2326, 0.0
      %v2379 = vadd.f32 %v2377, %v2378
      %v2380 = vsel %vm1537, %v2327, 0.0
      %v2381 = vadd.f32 %v2379, %v2380
      %v2382 = vsel %vm1537, %v2328, 0.0
      %v2383 = vadd.f32 %v2381, %v2382
      %v2384 = vsel %vm1537, %v2329, 0.0
      %v2385 = vadd.f32 %v2383, %v2384
      %v2386 = vsel %vm1537, %v2330, 0.0
      %v2387 = vadd.f32 %v2385, %v2386
      %v2388 = vsel %vm1537, %v2331, 0.0
      %v2389 = vadd.f32 %v2387, %v2388
      %v2390 = vsel %vm1537, %v2332, 0.0
      %v2391 = vadd.f32 %v2389, %v2390
      %v2392 = vsel %vm1537, %v2333, 0.0
      %v2393 = vadd.f32 %v2391, %v2392
      %v2394 = vsel %vm1537, %v2334, 0.0
      %v2395 = vadd.f32 %v2393, %v2394
      %v2396 = vsel %vm1537, %v2335, 0.0
      %v2397 = vadd.f32 %v2395, %v2396
      %v2398 = vsel %vm1537, %v2336, 0.0
      %v2399 = vadd.f32 %v2397, %v2398
      %v2400 = vrot.slane %v2399, 4
      %v2401 = vadd.f32 %v2399, %v2400
      %v2402 = vrot.slane %v2401, 2
      %v2403 = vadd.f32 %v2401, %v2402
      %v2404 = vrot.slane %v2403, 1
      %v2405 = vadd.f32 %v2403, %v2404
      %v2406 = vrcp.pop 256.0
      %v2407 = vmul.f32 %v2405, %v2406
      %vm2408 = vcmask 57344
      %2409 = vst.msk [vmem:[%s274] sm:$0x1] %vm2408, %v2407
      %v2410 = vpack.c.bf16 %v2306, %v2305
      %v2411 = vpack.c.bf16 %v2308, %v2307
      %v2412 = vpack.c.bf16 %v2310, %v2309
      %v2413 = vpack.c.bf16 %v2312, %v2311
      %v2414 = vpack.c.bf16 %v2314, %v2313
      %v2415 = vpack.c.bf16 %v2316, %v2315
      %v2416 = vpack.c.bf16 %v2318, %v2317
      %v2417 = vpack.c.bf16 %v2320, %v2319
      %v2418 = vpack.c.bf16 %v2322, %v2321
      %v2419 = vpack.c.bf16 %v2324, %v2323
      %v2420 = vpack.c.bf16 %v2326, %v2325
      %v2421 = vpack.c.bf16 %v2328, %v2327
      %v2422 = vpack.c.bf16 %v2330, %v2329
      %v2423 = vpack.c.bf16 %v2332, %v2331
      %v2424 = vpack.c.bf16 %v2334, %v2333
      %v2425 = vpack.c.bf16 %v2336, %v2335
      %v2442 = vunpack.c.l.b16 %v2410
      %v2443 = vunpack.c.h.b16 %v2410
      %v2444 = vunpack.c.l.b16 %v2411
      %v2445 = vunpack.c.h.b16 %v2411
      %v2446 = vunpack.c.l.b16 %v2412
      %v2447 = vunpack.c.h.b16 %v2412
      %v2448 = vunpack.c.l.b16 %v2413
      %v2449 = vunpack.c.h.b16 %v2413
      %v2450 = vunpack.c.l.b16 %v2414
      %v2451 = vunpack.c.h.b16 %v2414
      %v2452 = vunpack.c.l.b16 %v2415
      %v2453 = vunpack.c.h.b16 %v2415
      %v2454 = vunpack.c.l.b16 %v2416
      %v2455 = vunpack.c.h.b16 %v2416
      %v2456 = vunpack.c.l.b16 %v2417
      %v2457 = vunpack.c.h.b16 %v2417
      %v2458 = vunpack.c.l.b16 %v2418
      %v2459 = vunpack.c.h.b16 %v2418
      %v2460 = vunpack.c.l.b16 %v2419
      %v2461 = vunpack.c.h.b16 %v2419
      %v2462 = vunpack.c.l.b16 %v2420
      %v2463 = vunpack.c.h.b16 %v2420
      %v2464 = vunpack.c.l.b16 %v2421
      %v2465 = vunpack.c.h.b16 %v2421
      %v2466 = vunpack.c.l.b16 %v2422
      %v2467 = vunpack.c.h.b16 %v2422
      %v2468 = vunpack.c.l.b16 %v2423
      %v2469 = vunpack.c.h.b16 %v2423
      %v2470 = vunpack.c.l.b16 %v2424
      %v2471 = vunpack.c.h.b16 %v2424
      %v2472 = vunpack.c.l.b16 %v2425
      %v2473 = vunpack.c.h.b16 %v2425
      %v2474 = vpack.c.b16 %v2442, %v2442
      %v2475 = vpack.c.b16 %v2443, %v2443
      %v2476 = vpack.c.b16 %v2444, %v2444
      %v2477 = vpack.c.b16 %v2445, %v2445
      %v2478 = vpack.c.b16 %v2446, %v2446
      %v2479 = vpack.c.b16 %v2447, %v2447
      %v2480 = vpack.c.b16 %v2448, %v2448
      %v2481 = vpack.c.b16 %v2449, %v2449
      %v2482 = vpack.c.b16 %v2450, %v2450
      %v2483 = vpack.c.b16 %v2451, %v2451
      %v2484 = vpack.c.b16 %v2452, %v2452
      %v2485 = vpack.c.b16 %v2453, %v2453
      %v2486 = vpack.c.b16 %v2454, %v2454
      %v2487 = vpack.c.b16 %v2455, %v2455
      %v2488 = vpack.c.b16 %v2456, %v2456
      %v2489 = vpack.c.b16 %v2457, %v2457
      %v2490 = vpack.c.b16 %v2458, %v2458
      %v2491 = vpack.c.b16 %v2459, %v2459
      %v2492 = vpack.c.b16 %v2460, %v2460
      %v2493 = vpack.c.b16 %v2461, %v2461
      %v2494 = vpack.c.b16 %v2462, %v2462
      %v2495 = vpack.c.b16 %v2463, %v2463
      %v2496 = vpack.c.b16 %v2464, %v2464
      %v2497 = vpack.c.b16 %v2465, %v2465
      %v2498 = vpack.c.b16 %v2466, %v2466
      %v2499 = vpack.c.b16 %v2467, %v2467
      %v2500 = vpack.c.b16 %v2468, %v2468
      %v2501 = vpack.c.b16 %v2469, %v2469
      %v2502 = vpack.c.b16 %v2470, %v2470
      %v2503 = vpack.c.b16 %v2471, %v2471
      %v2504 = vpack.c.b16 %v2472, %v2472
      %v2505 = vpack.c.b16 %v2473, %v2473
      %vm2538 = vcmask 60416
      %2539 = vst.msk [vmem:[%s271] sm:$0xf] %vm2538, %v2474
      %2540 = vst.msk [vmem:[%s271 + $0x4] sm:$0xf] %vm2538, %v2475
      %2541 = vst.msk [vmem:[%s271 + $0x8] sm:$0xf] %vm2538, %v2476
      %2542 = vst.msk [vmem:[%s271 + $0xc] sm:$0xf] %vm2538, %v2477
      %2543 = vst.msk [vmem:[%s271 + $0x10] sm:$0xf] %vm2538, %v2478
      %2544 = vst.msk [vmem:[%s271 + $0x14] sm:$0xf] %vm2538, %v2479
      %2545 = vst.msk [vmem:[%s271 + $0x18] sm:$0xf] %vm2538, %v2480
      %2546 = vst.msk [vmem:[%s271 + $0x1c] sm:$0xf] %vm2538, %v2481
      %2547 = vst.msk [vmem:[%s271 + $0x20] sm:$0xf] %vm2538, %v2482
      %2548 = vst.msk [vmem:[%s271 + $0x24] sm:$0xf] %vm2538, %v2483
      %2549 = vst.msk [vmem:[%s271 + $0x28] sm:$0xf] %vm2538, %v2484
      %2550 = vst.msk [vmem:[%s271 + $0x2c] sm:$0xf] %vm2538, %v2485
      %2551 = vst.msk [vmem:[%s271 + $0x30] sm:$0xf] %vm2538, %v2486
      %2552 = vst.msk [vmem:[%s271 + $0x34] sm:$0xf] %vm2538, %v2487
      %2553 = vst.msk [vmem:[%s271 + $0x38] sm:$0xf] %vm2538, %v2488
      %2554 = vst.msk [vmem:[%s271 + $0x3c] sm:$0xf] %vm2538, %v2489
      %2555 = vst.msk [vmem:[%s271 + $0x40] sm:$0xf] %vm2538, %v2490
      %2556 = vst.msk [vmem:[%s271 + $0x44] sm:$0xf] %vm2538, %v2491
      %2557 = vst.msk [vmem:[%s271 + $0x48] sm:$0xf] %vm2538, %v2492
      %2558 = vst.msk [vmem:[%s271 + $0x4c] sm:$0xf] %vm2538, %v2493
      %2559 = vst.msk [vmem:[%s271 + $0x50] sm:$0xf] %vm2538, %v2494
      %2560 = vst.msk [vmem:[%s271 + $0x54] sm:$0xf] %vm2538, %v2495
      %2561 = vst.msk [vmem:[%s271 + $0x58] sm:$0xf] %vm2538, %v2496
      %2562 = vst.msk [vmem:[%s271 + $0x5c] sm:$0xf] %vm2538, %v2497
      %2563 = vst.msk [vmem:[%s271 + $0x60] sm:$0xf] %vm2538, %v2498
      %2564 = vst.msk [vmem:[%s271 + $0x64] sm:$0xf] %vm2538, %v2499
      %2565 = vst.msk [vmem:[%s271 + $0x68] sm:$0xf] %vm2538, %v2500
      %2566 = vst.msk [vmem:[%s271 + $0x6c] sm:$0xf] %vm2538, %v2501
      %2567 = vst.msk [vmem:[%s271 + $0x70] sm:$0xf] %vm2538, %v2502
      %2568 = vst.msk [vmem:[%s271 + $0x74] sm:$0xf] %vm2538, %v2503
      %2569 = vst.msk [vmem:[%s271 + $0x78] sm:$0xf] %vm2538, %v2504
      %2570 = vst.msk [vmem:[%s271 + $0x7c] sm:$0xf] %vm2538, %v2505
      %p2571 = scmp.lt.s32.totalorder %s18, 1
      %s2572 = scalar_select %p2571, %s18, 1
      %s2573 = smul.addr %s2572, 32
      %s2574 = smul.addr %s2573, 4
      %s2575 = scalar_lea.vmem %s5, %s2574
      %p2576 = scmp.lt.s32.totalorder %s18, 1
      %s2577 = scalar_select %p2576, %s18, 1
      %s2578 = scalar_lea.vmem %s6, %s2577
      // Predicated region
      $region41: #{spp_bottleneck_pallas.6} parent=39 // pred_check
        %p2579 = pneg %p151
      $region42: #{spp_bottleneck_pallas.6} parent=39 // pred_check_branch
        %2581 = sbr.rel (%p2579) target = $region44
      $region43: #{spp_bottleneck_pallas.6} parent=39 // pred_region
        _
      $region44: #{spp_bottleneck_pallas.6} parent=39 // pred_fallthru
        _
      // Predicated region
      $region45: #{spp_bottleneck_pallas.6} parent=39 // pred_check
        %p2582 = pneg %p177
      $region46: #{spp_bottleneck_pallas.6} parent=39 // pred_check_branch
        %2584 = sbr.rel (%p2582) target = $region48
      $region47: #{spp_bottleneck_pallas.6} parent=39 // pred_region
        _
      $region48: #{spp_bottleneck_pallas.6} parent=39 // pred_fallthru
        _
    $region40: #{spp_bottleneck_pallas.6} parent=5 // pred_fallthru
      _
    %p2585 = scmp.le.s32.totalorder 2, %s13
    // Predicated region
    $region49: #{spp_bottleneck_pallas.6} parent=5 // pred_check
      %p2586 = pneg %p2585
    $region50: #{spp_bottleneck_pallas.6} parent=5 // pred_check_branch
      %2588 = sbr.rel (%p2586) target = $region52
    $region51: #{spp_bottleneck_pallas.6} parent=5 // pred_region
      %s2589 = ssub.s32 %s13, 2
      // Predicated region
      $region53: #{spp_bottleneck_pallas.6} parent=51 // pred_check
        %p2590 = pneg %p157
      $region54: #{spp_bottleneck_pallas.6} parent=51 // pred_check_branch
        %2592 = sbr.rel (%p2590) target = $region56
      $region55: #{spp_bottleneck_pallas.6} parent=51 // pred_region
        %p2593 = scmp.lt.s32.totalorder %s19, 1
        %s2594 = scalar_select %p2593, %s19, 1
        %s2595 = smul.addr %s2594, 32
        %s2596 = smul.addr %s2595, 4
        %s2597 = scalar_lea.vmem %s5, %s2596
      $region56: #{spp_bottleneck_pallas.6} parent=51 // pred_fallthru
        _
      // Predicated region
      $region57: #{spp_bottleneck_pallas.6} parent=51 // pred_check
        %p2598 = pneg %p183
      $region58: #{spp_bottleneck_pallas.6} parent=51 // pred_check_branch
        %2600 = sbr.rel (%p2598) target = $region60
      $region59: #{spp_bottleneck_pallas.6} parent=51 // pred_region
        %p2601 = scmp.lt.s32.totalorder %s19, 1
        %s2602 = scalar_select %p2601, %s19, 1
        %s2603 = scalar_lea.vmem %s6, %s2602
      $region60: #{spp_bottleneck_pallas.6} parent=51 // pred_fallthru
        _
    $region52: #{spp_bottleneck_pallas.6} parent=5 // pred_fallthru
      _
  $region6: #{spp_bottleneck_pallas.6} parent=0 // loop_footer
    %s17 = sadd.s32 1, %s13
  $region7: #{spp_bottleneck_pallas.6} parent=0 // loop_footer_branch
    %12 = sbr.rel target = $region3
  $region8: #{spp_bottleneck_pallas.6} parent=0 // loop_exit
    _

// kernel: spp_bottleneck_pallas.5
$region0: #{spp_bottleneck_pallas.5}
  #allocation0 [shape = 'u32[]', space=smem, size = 0x4, offset = 0x4, fixed_abs, tag = 'smem constant byte address 0x4 - core index']
  #allocation1 [shape = 'u32[144,128]{1,0:T(1,128)}', space=vmem, size = 0x12000, scoped, tag = 'internal scratch']
  %s0 = inlined_call_operand.vmem [shape: bf16[2,20,20,8], index: 0, kind: input, shape index: {}]
  %s1 = inlined_call_operand.vmem [shape: f32[2,1,8], index: 1, kind: input, shape index: {}]
  %s2 = inlined_call_operand.vmem [shape: bf16[72,8], index: 2, kind: input, shape index: {}]
  %s3 = inlined_call_operand.vmem [shape: f32[1,8], index: 3, kind: input, shape index: {}]
  %s4 = inlined_call_operand.vmem [shape: f32[1,8], index: 4, kind: input, shape index: {}]
  %s5 = inlined_call_operand.vmem [shape: bf16[2,22,22,8], index: 5, kind: output, shape index: {0}]
  %s6 = inlined_call_operand.vmem [shape: f32[2,1,8], index: 6, kind: output, shape index: {1}]
  %7 = xla_tuple %s5, %s6
  %s8 = sld [smem:[#allocation0]]
  $region61: #{spp_bottleneck_pallas.5} parent=0
    _
  %s10 = ssub.s32 1, %s8
  %s11 = scalar_select 0, %s10, %s8
  loop: start=0, step=1, limit=4
  $region2: #{spp_bottleneck_pallas.5} parent=0 // loop_pre_header
    _
  $region3: #{spp_bottleneck_pallas.5} parent=0 // loop_header
    %s13 = sphi 0, %s17
    %p14 = scmp.ge.s32.totalorder %s13, 4
    %s23 = sphi 0, %s25
    %s26 = sphi 0, %s23
    %s27 = sphi 0, %s26
    %s43 = sphi 0, %s27
    %s49 = sphi 0, %s51
    %s52 = sphi 0, %s49
    %s53 = sphi 0, %s52
    %s69 = sphi 0, %s53
    %s73 = sphi 0, %s73
    %s75 = sphi 0, %s73
    %s76 = sphi 0, %s75
    %s90 = sphi 0, %s76
    %s94 = sphi 0, %s94
    %s96 = sphi 0, %s94
    %s97 = sphi 0, %s96
    %s111 = sphi 0, %s97
    %s115 = sphi 0, %s115
    %s117 = sphi 0, %s115
    %s118 = sphi 0, %s117
    %s132 = sphi 0, %s118
    %s138 = sphi 0, %s140
    %s141 = sphi 0, %s138
    %s142 = sphi 0, %s141
    %s158 = sphi 0, %s142
    %s164 = sphi 0, %s166
    %s167 = sphi 0, %s164
    %s168 = sphi 0, %s167
    %s184 = sphi 0, %s168
  $region4: #{spp_bottleneck_pallas.5} parent=0 // loop_header_branch
    %16 = sbr.rel (%p14) target = $region8
  $region5: #{spp_bottleneck_pallas.5} parent=0 // loop_body
    %s18 = ssub.s32 %s13, 1
    %s19 = ssub.s32 %s13, 2
    %s20 = sadd.s32 %s13, 1
    %s21 = ssub.s32 %s13, %s20
    %p22 = scmp.eq.s32.totalorder %s21, 0
    %s24 = sadd.s32 %s23, 1
    %s25 = scalar_select %p22, %s23, %s24
    %p28 = pneg %p22
    %p29 = scmp.eq.s32.totalorder %s13, 1
    %p30 = por %p28, %p29
    %p31 = scmp.ne.s32.totalorder %s23, %s26
    %p32 = scmp.eq.s32.totalorder %s13, 0
    %p33 = por %p31, %p32
    %p34 = scmp.ne.s32.totalorder %s23, %s26
    %p35 = scmp.eq.s32.totalorder %s18, 1
    %p36 = por %p34, %p35
    %p37 = scmp.ne.s32.totalorder %s26, %s27
    %p38 = scmp.eq.s32.totalorder %s18, 0
    %p39 = por %p37, %p38
    %p40 = scmp.ne.s32.totalorder %s26, %s27
    %p41 = scmp.eq.s32.totalorder %s19, 1
    %p42 = por %p40, %p41
    %p44 = scmp.ne.s32.totalorder %s27, %s43
    %p45 = scmp.eq.s32.totalorder %s19, 0
    %p46 = por %p44, %p45
    %s47 = ssub.s32 %s13, %s20
    %p48 = scmp.eq.s32.totalorder %s47, 0
    %s50 = sadd.s32 %s49, 1
    %s51 = scalar_select %p48, %s49, %s50
    %p54 = pneg %p48
    %p55 = scmp.eq.s32.totalorder %s13, 1
    %p56 = por %p54, %p55
    %p57 = scmp.ne.s32.totalorder %s49, %s52
    %p58 = scmp.eq.s32.totalorder %s13, 0
    %p59 = por %p57, %p58
    %p60 = scmp.ne.s32.totalorder %s49, %s52
    %p61 = scmp.eq.s32.totalorder %s18, 1
    %p62 = por %p60, %p61
    %p63 = scmp.ne.s32.totalorder %s52, %s53
    %p64 = scmp.eq.s32.totalorder %s18, 0
    %p65 = por %p63, %p64
    %p66 = scmp.ne.s32.totalorder %s52, %s53
    %p67 = scmp.eq.s32.totalorder %s19, 1
    %p68 = por %p66, %p67
    %p70 = scmp.ne.s32.totalorder %s53, %s69
    %p71 = scmp.eq.s32.totalorder %s19, 0
    %p72 = por %p70, %p71
    %s74 = sadd.s32 %s73, 1
    %p77 = scmp.eq.s32.totalorder %s13, 1
    %p78 = scmp.ne.s32.totalorder %s73, %s75
    %p79 = scmp.eq.s32.totalorder %s13, 0
    %p80 = por %p78, %p79
    %p81 = scmp.ne.s32.totalorder %s73, %s75
    %p82 = scmp.eq.s32.totalorder %s18, 1
    %p83 = por %p81, %p82
    %p84 = scmp.ne.s32.totalorder %s75, %s76
    %p85 = scmp.eq.s32.totalorder %s18, 0
    %p86 = por %p84, %p85
    %p87 = scmp.ne.s32.totalorder %s75, %s76
    %p88 = scmp.eq.s32.totalorder %s19, 1
    %p89 = por %p87, %p88
    %p91 = scmp.ne.s32.totalorder %s76, %s90
    %p92 = scmp.eq.s32.totalorder %s19, 0
    %p93 = por %p91, %p92
    %s95 = sadd.s32 %s94, 1
    %p98 = scmp.eq.s32.totalorder %s13, 1
    %p99 = scmp.ne.s32.totalorder %s94, %s96
    %p100 = scmp.eq.s32.totalorder %s13, 0
    %p101 = por %p99, %p100
    %p102 = scmp.ne.s32.totalorder %s94, %s96
    %p103 = scmp.eq.s32.totalorder %s18, 1
    %p104 = por %p102, %p103
    %p105 = scmp.ne.s32.totalorder %s96, %s97
    %p106 = scmp.eq.s32.totalorder %s18, 0
    %p107 = por %p105, %p106
    %p108 = scmp.ne.s32.totalorder %s96, %s97
    %p109 = scmp.eq.s32.totalorder %s19, 1
    %p110 = por %p108, %p109
    %p112 = scmp.ne.s32.totalorder %s97, %s111
    %p113 = scmp.eq.s32.totalorder %s19, 0
    %p114 = por %p112, %p113
    %s116 = sadd.s32 %s115, 1
    %p119 = scmp.eq.s32.totalorder %s13, 1
    %p120 = scmp.ne.s32.totalorder %s115, %s117
    %p121 = scmp.eq.s32.totalorder %s13, 0
    %p122 = por %p120, %p121
    %p123 = scmp.ne.s32.totalorder %s115, %s117
    %p124 = scmp.eq.s32.totalorder %s18, 1
    %p125 = por %p123, %p124
    %p126 = scmp.ne.s32.totalorder %s117, %s118
    %p127 = scmp.eq.s32.totalorder %s18, 0
    %p128 = por %p126, %p127
    %p129 = scmp.ne.s32.totalorder %s117, %s118
    %p130 = scmp.eq.s32.totalorder %s19, 1
    %p131 = por %p129, %p130
    %p133 = scmp.ne.s32.totalorder %s118, %s132
    %p134 = scmp.eq.s32.totalorder %s19, 0
    %p135 = por %p133, %p134
    %s136 = ssub.s32 %s13, %s20
    %p137 = scmp.eq.s32.totalorder %s136, 0
    %s139 = sadd.s32 %s138, 1
    %s140 = scalar_select %p137, %s138, %s139
    %p143 = pneg %p137
    %p144 = scmp.eq.s32.totalorder %s13, 1
    %p145 = por %p143, %p144
    %p146 = scmp.ne.s32.totalorder %s138, %s141
    %p147 = scmp.eq.s32.totalorder %s13, 0
    %p148 = por %p146, %p147
    %p149 = scmp.ne.s32.totalorder %s138, %s141
    %p150 = scmp.eq.s32.totalorder %s18, 1
    %p151 = por %p149, %p150
    %p152 = scmp.ne.s32.totalorder %s141, %s142
    %p153 = scmp.eq.s32.totalorder %s18, 0
    %p154 = por %p152, %p153
    %p155 = scmp.ne.s32.totalorder %s141, %s142
    %p156 = scmp.eq.s32.totalorder %s19, 1
    %p157 = por %p155, %p156
    %p159 = scmp.ne.s32.totalorder %s142, %s158
    %p160 = scmp.eq.s32.totalorder %s19, 0
    %p161 = por %p159, %p160
    %s162 = ssub.s32 %s13, %s20
    %p163 = scmp.eq.s32.totalorder %s162, 0
    %s165 = sadd.s32 %s164, 1
    %s166 = scalar_select %p163, %s164, %s165
    %p169 = pneg %p163
    %p170 = scmp.eq.s32.totalorder %s13, 1
    %p171 = por %p169, %p170
    %p172 = scmp.ne.s32.totalorder %s164, %s167
    %p173 = scmp.eq.s32.totalorder %s13, 0
    %p174 = por %p172, %p173
    %p175 = scmp.ne.s32.totalorder %s164, %s167
    %p176 = scmp.eq.s32.totalorder %s18, 1
    %p177 = por %p175, %p176
    %p178 = scmp.ne.s32.totalorder %s167, %s168
    %p179 = scmp.eq.s32.totalorder %s18, 0
    %p180 = por %p178, %p179
    %p181 = scmp.ne.s32.totalorder %s167, %s168
    %p182 = scmp.eq.s32.totalorder %s19, 1
    %p183 = por %p181, %p182
    %p185 = scmp.ne.s32.totalorder %s168, %s184
    %p186 = scmp.eq.s32.totalorder %s19, 0
    %p187 = por %p185, %p186
    %p188 = scmp.le.s32.totalorder 1, %s13
    %p189 = scmp.lt.s32.totalorder %s13, 3
    %p190 = pnand %p188, %p189
    %p191 = pneg %p190
    // Predicated region
    $region9: #{spp_bottleneck_pallas.5} parent=5 // pred_check
      _
    $region10: #{spp_bottleneck_pallas.5} parent=5 // pred_check_branch
      %193 = sbr.rel (%p190) target = $region12
    $region11: #{spp_bottleneck_pallas.5} parent=5 // pred_region
      %s194 = ssub.s32 %s13, 1
      // Predicated region
      $region13: #{spp_bottleneck_pallas.5} parent=11 // pred_check
        %p195 = pneg %p86
      $region14: #{spp_bottleneck_pallas.5} parent=11 // pred_check_branch
        %197 = sbr.rel (%p195) target = $region16
      $region15: #{spp_bottleneck_pallas.5} parent=11 // pred_region
        _
      $region16: #{spp_bottleneck_pallas.5} parent=11 // pred_fallthru
        _
      // Predicated region
      $region17: #{spp_bottleneck_pallas.5} parent=11 // pred_check
        %p198 = pneg %p107
      $region18: #{spp_bottleneck_pallas.5} parent=11 // pred_check_branch
        %200 = sbr.rel (%p198) target = $region20
      $region19: #{spp_bottleneck_pallas.5} parent=11 // pred_region
        _
      $region20: #{spp_bottleneck_pallas.5} parent=11 // pred_fallthru
        _
      // Predicated region
      $region21: #{spp_bottleneck_pallas.5} parent=11 // pred_check
        %p201 = pneg %p128
      $region22: #{spp_bottleneck_pallas.5} parent=11 // pred_check_branch
        %203 = sbr.rel (%p201) target = $region24
      $region23: #{spp_bottleneck_pallas.5} parent=11 // pred_region
        _
      $region24: #{spp_bottleneck_pallas.5} parent=11 // pred_fallthru
        _
    $region12: #{spp_bottleneck_pallas.5} parent=5 // pred_fallthru
      _
    %p204 = scmp.lt.s32.totalorder %s13, 2
    // Predicated region
    $region25: #{spp_bottleneck_pallas.5} parent=5 // pred_check
      %p205 = pneg %p204
    $region26: #{spp_bottleneck_pallas.5} parent=5 // pred_check_branch
      %207 = sbr.rel (%p205) target = $region28
    $region27: #{spp_bottleneck_pallas.5} parent=5 // pred_region
      // Predicated region
      $region29: #{spp_bottleneck_pallas.5} parent=27 // pred_check
        %p208 = pneg %p33
      $region30: #{spp_bottleneck_pallas.5} parent=27 // pred_check_branch
        %210 = sbr.rel (%p208) target = $region32
      $region31: #{spp_bottleneck_pallas.5} parent=27 // pred_region
        %p211 = scmp.lt.s32.totalorder %s13, 1
        %s212 = scalar_select %p211, %s13, 1
        %s213 = smul.addr %s212, 60
        %s214 = smul.addr %s213, 4
        %s215 = scalar_lea.vmem %s0, %s214
      $region32: #{spp_bottleneck_pallas.5} parent=27 // pred_fallthru
        _
      // Predicated region
      $region33: #{spp_bottleneck_pallas.5} parent=27 // pred_check
        %p216 = pneg %p59
      $region34: #{spp_bottleneck_pallas.5} parent=27 // pred_check_branch
        %218 = sbr.rel (%p216) target = $region36
      $region35: #{spp_bottleneck_pallas.5} parent=27 // pred_region
        %p219 = scmp.lt.s32.totalorder %s13, 1
        %s220 = scalar_select %p219, %s13, 1
        %s221 = scalar_lea.vmem %s1, %s220
      $region36: #{spp_bottleneck_pallas.5} parent=27 // pred_fallthru
        _
    $region28: #{spp_bottleneck_pallas.5} parent=5 // pred_fallthru
      _
    %p222 = scmp.le.s32.totalorder 1, %s13
    %p223 = scmp.lt.s32.totalorder %s13, 3
    %p224 = pnand %p222, %p223
    %p225 = pneg %p224
    // Predicated region
    $region37: #{spp_bottleneck_pallas.5} parent=5 // pred_check
      _
    $region38: #{spp_bottleneck_pallas.5} parent=5 // pred_check_branch
      %227 = sbr.rel (%p224) target = $region40
    $region39: #{spp_bottleneck_pallas.5} parent=5 // pred_region
      %s228 = ssub.s32 %s13, 1
      %p229 = scmp.lt.s32.totalorder %s18, 1
      %s230 = scalar_select %p229, %s18, 1
      %s231 = smul.addr %s230, 60
      %s232 = smul.addr %s231, 4
      %s233 = scalar_lea.vmem %s0, %s232
      %p234 = pneg %p39
      %p235 = pneg %p36
      %p236 = scmp.lt.s32.totalorder %s18, 1
      %s237 = scalar_select %p236, %s18, 1
      %s238 = scalar_lea.vmem %s1, %s237
      %p239 = pneg %p65
      %p240 = pneg %p62
      %p241 = pneg %p86
      %p242 = pneg %p83
      %p243 = pneg %p107
      %p244 = pneg %p104
      %p245 = pneg %p128
      %p246 = pneg %p125
      %p247 = pneg %p154
      %p248 = pneg %p151
      %p249 = scmp.lt.s32.totalorder %s18, 1
      %s250 = scalar_select %p249, %s18, 1
      %s251 = smul.addr %s250, 66
      %s252 = smul.addr %s251, 4
      %s253 = scalar_lea.vmem %s5, %s252
      %p254 = pneg %p180
      %p255 = pneg %p177
      %p256 = scmp.lt.s32.totalorder %s18, 1
      %s257 = scalar_select %p256, %s18, 1
      %s258 = scalar_lea.vmem %s6, %s257
      %p259 = scmp.lt.s32.totalorder %s18, 1
      %s260 = scalar_select %p259, %s18, 1
      %s261 = smul.addr %s260, 60
      %s262 = smul.addr %s261, 4
      %s263 = scalar_lea.vmem %s0, %s262
      %p264 = scmp.lt.s32.totalorder %s18, 1
      %s265 = scalar_select %p264, %s18, 1
      %s266 = scalar_lea.vmem %s1, %s265
      %p267 = scmp.lt.s32.totalorder %s18, 1
      %s268 = scalar_select %p267, %s18, 1
      %s269 = smul.addr %s268, 66
      %s270 = smul.addr %s269, 4
      %s271 = scalar_lea.vmem %s5, %s270
      %p272 = scmp.lt.s32.totalorder %s18, 1
      %s273 = scalar_select %p272, %s18, 1
      %s274 = scalar_lea.vmem %s6, %s273
      %v276 = vld [vmem:[%s263] sm:$0xf]
      %v277 = vld [vmem:[%s263 + $0x4] sm:$0xf]
      %v278 = vld [vmem:[%s263 + $0x8] sm:$0x3]
      %v279 = vld [vmem:[%s263 + $0xc] sm:$0xf]
      %v280 = vld [vmem:[%s263 + $0x10] sm:$0xf]
      %v281 = vld [vmem:[%s263 + $0x14] sm:$0x3]
      %v282 = vld [vmem:[%s263 + $0x18] sm:$0xf]
      %v283 = vld [vmem:[%s263 + $0x1c] sm:$0xf]
      %v284 = vld [vmem:[%s263 + $0x20] sm:$0x3]
      %v285 = vld [vmem:[%s263 + $0x24] sm:$0xf]
      %v286 = vld [vmem:[%s263 + $0x28] sm:$0xf]
      %v287 = vld [vmem:[%s263 + $0x2c] sm:$0x3]
      %v288 = vld [vmem:[%s263 + $0x30] sm:$0xf]
      %v289 = vld [vmem:[%s263 + $0x34] sm:$0xf]
      %v290 = vld [vmem:[%s263 + $0x38] sm:$0x3]
      %v291 = vld [vmem:[%s263 + $0x3c] sm:$0xf]
      %v292 = vld [vmem:[%s263 + $0x40] sm:$0xf]
      %v293 = vld [vmem:[%s263 + $0x44] sm:$0x3]
      %v294 = vld [vmem:[%s263 + $0x48] sm:$0xf]
      %v295 = vld [vmem:[%s263 + $0x4c] sm:$0xf]
      %v296 = vld [vmem:[%s263 + $0x50] sm:$0x3]
      %v297 = vld [vmem:[%s263 + $0x54] sm:$0xf]
      %v298 = vld [vmem:[%s263 + $0x58] sm:$0xf]
      %v299 = vld [vmem:[%s263 + $0x5c] sm:$0x3]
      %v300 = vld [vmem:[%s263 + $0x60] sm:$0xf]
      %v301 = vld [vmem:[%s263 + $0x64] sm:$0xf]
      %v302 = vld [vmem:[%s263 + $0x68] sm:$0x3]
      %v303 = vld [vmem:[%s263 + $0x6c] sm:$0xf]
      %v304 = vld [vmem:[%s263 + $0x70] sm:$0xf]
      %v305 = vld [vmem:[%s263 + $0x74] sm:$0x3]
      %v306 = vld [vmem:[%s263 + $0x78] sm:$0xf]
      %v307 = vld [vmem:[%s263 + $0x7c] sm:$0xf]
      %v308 = vld [vmem:[%s263 + $0x80] sm:$0x3]
      %v309 = vld [vmem:[%s263 + $0x84] sm:$0xf]
      %v310 = vld [vmem:[%s263 + $0x88] sm:$0xf]
      %v311 = vld [vmem:[%s263 + $0x8c] sm:$0x3]
      %v312 = vld [vmem:[%s263 + $0x90] sm:$0xf]
      %v313 = vld [vmem:[%s263 + $0x94] sm:$0xf]
      %v314 = vld [vmem:[%s263 + $0x98] sm:$0x3]
      %v315 = vld [vmem:[%s263 + $0x9c] sm:$0xf]
      %v316 = vld [vmem:[%s263 + $0xa0] sm:$0xf]
      %v317 = vld [vmem:[%s263 + $0xa4] sm:$0x3]
      %v318 = vld [vmem:[%s263 + $0xa8] sm:$0xf]
      %v319 = vld [vmem:[%s263 + $0xac] sm:$0xf]
      %v320 = vld [vmem:[%s263 + $0xb0] sm:$0x3]
      %v321 = vld [vmem:[%s263 + $0xb4] sm:$0xf]
      %v322 = vld [vmem:[%s263 + $0xb8] sm:$0xf]
      %v323 = vld [vmem:[%s263 + $0xbc] sm:$0x3]
      %v324 = vld [vmem:[%s263 + $0xc0] sm:$0xf]
      %v325 = vld [vmem:[%s263 + $0xc4] sm:$0xf]
      %v326 = vld [vmem:[%s263 + $0xc8] sm:$0x3]
      %v327 = vld [vmem:[%s263 + $0xcc] sm:$0xf]
      %v328 = vld [vmem:[%s263 + $0xd0] sm:$0xf]
      %v329 = vld [vmem:[%s263 + $0xd4] sm:$0x3]
      %v330 = vld [vmem:[%s263 + $0xd8] sm:$0xf]
      %v331 = vld [vmem:[%s263 + $0xdc] sm:$0xf]
      %v332 = vld [vmem:[%s263 + $0xe0] sm:$0x3]
      %v333 = vld [vmem:[%s263 + $0xe4] sm:$0xf]
      %v334 = vld [vmem:[%s263 + $0xe8] sm:$0xf]
      %v335 = vld [vmem:[%s263 + $0xec] sm:$0x3]
      %v336 = vunpack.c.l.bf16 %v276
      %v337 = vunpack.c.l.bf16 %v277
      %v338 = vunpack.c.l.bf16 %v278
      %v339 = vunpack.c.l.bf16 %v279
      %v340 = vunpack.c.l.bf16 %v280
      %v341 = vunpack.c.l.bf16 %v281
      %v342 = vunpack.c.l.bf16 %v282
      %v343 = vunpack.c.l.bf16 %v283
      %v344 = vunpack.c.l.bf16 %v284
      %v345 = vunpack.c.l.bf16 %v285
      %v346 = vunpack.c.l.bf16 %v286
      %v347 = vunpack.c.l.bf16 %v287
      %v348 = vunpack.c.l.bf16 %v288
      %v349 = vunpack.c.l.bf16 %v289
      %v350 = vunpack.c.l.bf16 %v290
      %v351 = vunpack.c.l.bf16 %v291
      %v352 = vunpack.c.l.bf16 %v292
      %v353 = vunpack.c.l.bf16 %v293
      %v354 = vunpack.c.l.bf16 %v294
      %v355 = vunpack.c.l.bf16 %v295
      %v356 = vunpack.c.l.bf16 %v296
      %v357 = vunpack.c.l.bf16 %v297
      %v358 = vunpack.c.l.bf16 %v298
      %v359 = vunpack.c.l.bf16 %v299
      %v360 = vunpack.c.l.bf16 %v300
      %v361 = vunpack.c.l.bf16 %v301
      %v362 = vunpack.c.l.bf16 %v302
      %v363 = vunpack.c.l.bf16 %v303
      %v364 = vunpack.c.l.bf16 %v304
      %v365 = vunpack.c.l.bf16 %v305
      %v366 = vunpack.c.l.bf16 %v306
      %v367 = vunpack.c.l.bf16 %v307
      %v368 = vunpack.c.l.bf16 %v308
      %v369 = vunpack.c.l.bf16 %v309
      %v370 = vunpack.c.l.bf16 %v310
      %v371 = vunpack.c.l.bf16 %v311
      %v372 = vunpack.c.l.bf16 %v312
      %v373 = vunpack.c.l.bf16 %v313
      %v374 = vunpack.c.l.bf16 %v314
      %v375 = vunpack.c.l.bf16 %v315
      %v376 = vunpack.c.l.bf16 %v316
      %v377 = vunpack.c.l.bf16 %v317
      %v378 = vunpack.c.l.bf16 %v318
      %v379 = vunpack.c.l.bf16 %v319
      %v380 = vunpack.c.l.bf16 %v320
      %v381 = vunpack.c.l.bf16 %v321
      %v382 = vunpack.c.l.bf16 %v322
      %v383 = vunpack.c.l.bf16 %v323
      %v384 = vunpack.c.l.bf16 %v324
      %v385 = vunpack.c.l.bf16 %v325
      %v386 = vunpack.c.l.bf16 %v326
      %v387 = vunpack.c.l.bf16 %v327
      %v388 = vunpack.c.l.bf16 %v328
      %v389 = vunpack.c.l.bf16 %v329
      %v390 = vunpack.c.l.bf16 %v330
      %v391 = vunpack.c.l.bf16 %v331
      %v392 = vunpack.c.l.bf16 %v332
      %v393 = vunpack.c.l.bf16 %v333
      %v394 = vunpack.c.l.bf16 %v334
      %v395 = vunpack.c.l.bf16 %v335
      %v396 = vld [vmem:[%s266] sm:$0x1]
      %v398 = vlaneseq
      %v399 = vshrl.u32 %v398, 7
      %v400 = vsub.s32 0, %v399
      %v401 = vrot.slane %v396, %v400
      %v403 = vmul.f32 %v336, %v401
      %v404 = vmul.f32 %v337, %v401
      %v405 = vmul.f32 %v338, %v401
      %v406 = vmul.f32 %v339, %v401
      %v407 = vmul.f32 %v340, %v401
      %v408 = vmul.f32 %v341, %v401
      %v409 = vmul.f32 %v342, %v401
      %v410 = vmul.f32 %v343, %v401
      %v411 = vmul.f32 %v344, %v401
      %v412 = vmul.f32 %v345, %v401
      %v413 = vmul.f32 %v346, %v401
      %v414 = vmul.f32 %v347, %v401
      %v415 = vmul.f32 %v348, %v401
      %v416 = vmul.f32 %v349, %v401
      %v417 = vmul.f32 %v350, %v401
      %v418 = vmul.f32 %v351, %v401
      %v419 = vmul.f32 %v352, %v401
      %v420 = vmul.f32 %v353, %v401
      %v421 = vmul.f32 %v354, %v401
      %v422 = vmul.f32 %v355, %v401
      %v423 = vmul.f32 %v356, %v401
      %v424 = vmul.f32 %v357, %v401
      %v425 = vmul.f32 %v358, %v401
      %v426 = vmul.f32 %v359, %v401
      %v427 = vmul.f32 %v360, %v401
      %v428 = vmul.f32 %v361, %v401
      %v429 = vmul.f32 %v362, %v401
      %v430 = vmul.f32 %v363, %v401
      %v431 = vmul.f32 %v364, %v401
      %v432 = vmul.f32 %v365, %v401
      %v433 = vmul.f32 %v366, %v401
      %v434 = vmul.f32 %v367, %v401
      %v435 = vmul.f32 %v368, %v401
      %v436 = vmul.f32 %v369, %v401
      %v437 = vmul.f32 %v370, %v401
      %v438 = vmul.f32 %v371, %v401
      %v439 = vmul.f32 %v372, %v401
      %v440 = vmul.f32 %v373, %v401
      %v441 = vmul.f32 %v374, %v401
      %v442 = vmul.f32 %v375, %v401
      %v443 = vmul.f32 %v376, %v401
      %v444 = vmul.f32 %v377, %v401
      %v445 = vmul.f32 %v378, %v401
      %v446 = vmul.f32 %v379, %v401
      %v447 = vmul.f32 %v380, %v401
      %v448 = vmul.f32 %v381, %v401
      %v449 = vmul.f32 %v382, %v401
      %v450 = vmul.f32 %v383, %v401
      %v451 = vmul.f32 %v384, %v401
      %v452 = vmul.f32 %v385, %v401
      %v453 = vmul.f32 %v386, %v401
      %v454 = vmul.f32 %v387, %v401
      %v455 = vmul.f32 %v388, %v401
      %v456 = vmul.f32 %v389, %v401
      %v457 = vmul.f32 %v390, %v401
      %v458 = vmul.f32 %v391, %v401
      %v459 = vmul.f32 %v392, %v401
      %v460 = vmul.f32 %v393, %v401
      %v461 = vmul.f32 %v394, %v401
      %v462 = vmul.f32 %v395, %v401
      %vm511 = vcmask 1045504
      %v512 = vrot.slane %v403, 2
      %v513 = vrot.slane %v404, 2
      %v514 = vsel %vm511, %v512, %v513
      %v515 = vrot.slane %v405, 2
      %v516 = vsel %vm511, %v513, %v515
      %v517 = vrot.slane %v406, 2
      %v518 = vrot.slane %v407, 2
      %v519 = vsel %vm511, %v517, %v518
      %v520 = vrot.slane %v408, 2
      %v521 = vsel %vm511, %v518, %v520
      %v522 = vrot.slane %v409, 2
      %v523 = vrot.slane %v410, 2
      %v524 = vsel %vm511, %v522, %v523
      %v525 = vrot.slane %v411, 2
      %v526 = vsel %vm511, %v523, %v525
      %v527 = vrot.slane %v412, 2
      %v528 = vrot.slane %v413, 2
      %v529 = vsel %vm511, %v527, %v528
      %v530 = vrot.slane %v414, 2
      %v531 = vsel %vm511, %v528, %v530
      %v532 = vrot.slane %v415, 2
      %v533 = vrot.slane %v416, 2
      %v534 = vsel %vm511, %v532, %v533
      %v535 = vrot.slane %v417, 2
      %v536 = vsel %vm511, %v533, %v535
      %v537 = vrot.slane %v418, 2
      %v538 = vrot.slane %v419, 2
      %v539 = vsel %vm511, %v537, %v538
      %v540 = vrot.slane %v420, 2
      %v541 = vsel %vm511, %v538, %v540
      %v542 = vrot.slane %v421, 2
      %v543 = vrot.slane %v422, 2
      %v544 = vsel %vm511, %v542, %v543
      %v545 = vrot.slane %v423, 2
      %v546 = vsel %vm511, %v543, %v545
      %v547 = vrot.slane %v424, 2
      %v548 = vrot.slane %v425, 2
      %v549 = vsel %vm511, %v547, %v548
      %v550 = vrot.slane %v426, 2
      %v551 = vsel %vm511, %v548, %v550
      %v552 = vrot.slane %v427, 2
      %v553 = vrot.slane %v428, 2
      %v554 = vsel %vm511, %v552, %v553
      %v555 = vrot.slane %v429, 2
      %v556 = vsel %vm511, %v553, %v555
      %v557 = vrot.slane %v430, 2
      %v558 = vrot.slane %v431, 2
      %v559 = vsel %vm511, %v557, %v558
      %v560 = vrot.slane %v432, 2
      %v561 = vsel %vm511, %v558, %v560
      %v562 = vrot.slane %v433, 2
      %v563 = vrot.slane %v434, 2
      %v564 = vsel %vm511, %v562, %v563
      %v565 = vrot.slane %v435, 2
      %v566 = vsel %vm511, %v563, %v565
      %v567 = vrot.slane %v436, 2
      %v568 = vrot.slane %v437, 2
      %v569 = vsel %vm511, %v567, %v568
      %v570 = vrot.slane %v438, 2
      %v571 = vsel %vm511, %v568, %v570
      %v572 = vrot.slane %v439, 2
      %v573 = vrot.slane %v440, 2
      %v574 = vsel %vm511, %v572, %v573
      %v575 = vrot.slane %v441, 2
      %v576 = vsel %vm511, %v573, %v575
      %v577 = vrot.slane %v442, 2
      %v578 = vrot.slane %v443, 2
      %v579 = vsel %vm511, %v577, %v578
      %v580 = vrot.slane %v444, 2
      %v581 = vsel %vm511, %v578, %v580
      %v582 = vrot.slane %v445, 2
      %v583 = vrot.slane %v446, 2
      %v584 = vsel %vm511, %v582, %v583
      %v585 = vrot.slane %v447, 2
      %v586 = vsel %vm511, %v583, %v585
      %v587 = vrot.slane %v448, 2
      %v588 = vrot.slane %v449, 2
      %v589 = vsel %vm511, %v587, %v588
      %v590 = vrot.slane %v450, 2
      %v591 = vsel %vm511, %v588, %v590
      %vm592 = vcmask 1043456
      %v593 = vrot.slane %v403, 4
      %v594 = vrot.slane %v404, 4
      %v595 = vsel %vm592, %v593, %v594
      %v596 = vrot.slane %v405, 4
      %v597 = vsel %vm592, %v594, %v596
      %v598 = vrot.slane %v406, 4
      %v599 = vrot.slane %v407, 4
      %v600 = vsel %vm592, %v598, %v599
      %v601 = vrot.slane %v408, 4
      %v602 = vsel %vm592, %v599, %v601
      %v603 = vrot.slane %v409, 4
      %v604 = vrot.slane %v410, 4
      %v605 = vsel %vm592, %v603, %v604
      %v606 = vrot.slane %v411, 4
      %v607 = vsel %vm592, %v604, %v606
      %v608 = vrot.slane %v412, 4
      %v609 = vrot.slane %v413, 4
      %v610 = vsel %vm592, %v608, %v609
      %v611 = vrot.slane %v414, 4
      %v612 = vsel %vm592, %v609, %v611
      %v613 = vrot.slane %v415, 4
      %v614 = vrot.slane %v416, 4
      %v615 = vsel %vm592, %v613, %v614
      %v616 = vrot.slane %v417, 4
      %v617 = vsel %vm592, %v614, %v616
      %v618 = vrot.slane %v418, 4
      %v619 = vrot.slane %v419, 4
      %v620 = vsel %vm592, %v618, %v619
      %v621 = vrot.slane %v420, 4
      %v622 = vsel %vm592, %v619, %v621
      %v623 = vrot.slane %v421, 4
      %v624 = vrot.slane %v422, 4
      %v625 = vsel %vm592, %v623, %v624
      %v626 = vrot.slane %v423, 4
      %v627 = vsel %vm592, %v624, %v626
      %v628 = vrot.slane %v424, 4
      %v629 = vrot.slane %v425, 4
      %v630 = vsel %vm592, %v628, %v629
      %v631 = vrot.slane %v426, 4
      %v632 = vsel %vm592, %v629, %v631
      %v633 = vrot.slane %v427, 4
      %v634 = vrot.slane %v428, 4
      %v635 = vsel %vm592, %v633, %v634
      %v636 = vrot.slane %v429, 4
      %v637 = vsel %vm592, %v634, %v636
      %v638 = vrot.slane %v430, 4
      %v639 = vrot.slane %v431, 4
      %v640 = vsel %vm592, %v638, %v639
      %v641 = vrot.slane %v432, 4
      %v642 = vsel %vm592, %v639, %v641
      %v643 = vrot.slane %v433, 4
      %v644 = vrot.slane %v434, 4
      %v645 = vsel %vm592, %v643, %v644
      %v646 = vrot.slane %v435, 4
      %v647 = vsel %vm592, %v644, %v646
      %v648 = vrot.slane %v436, 4
      %v649 = vrot.slane %v437, 4
      %v650 = vsel %vm592, %v648, %v649
      %v651 = vrot.slane %v438, 4
      %v652 = vsel %vm592, %v649, %v651
      %v653 = vrot.slane %v439, 4
      %v654 = vrot.slane %v440, 4
      %v655 = vsel %vm592, %v653, %v654
      %v656 = vrot.slane %v441, 4
      %v657 = vsel %vm592, %v654, %v656
      %v658 = vrot.slane %v442, 4
      %v659 = vrot.slane %v443, 4
      %v660 = vsel %vm592, %v658, %v659
      %v661 = vrot.slane %v444, 4
      %v662 = vsel %vm592, %v659, %v661
      %v663 = vrot.slane %v445, 4
      %v664 = vrot.slane %v446, 4
      %v665 = vsel %vm592, %v663, %v664
      %v666 = vrot.slane %v447, 4
      %v667 = vsel %vm592, %v664, %v666
      %v668 = vrot.slane %v448, 4
      %v669 = vrot.slane %v449, 4
      %v670 = vsel %vm592, %v668, %v669
      %v671 = vrot.slane %v450, 4
      %v672 = vsel %vm592, %v669, %v671
      %v679 = vrot.slane %v451, 2
      %v680 = vrot.slane %v452, 2
      %v681 = vsel %vm511, %v679, %v680
      %v682 = vrot.slane %v453, 2
      %v683 = vsel %vm511, %v680, %v682
      %v684 = vrot.slane %v454, 2
      %v685 = vrot.slane %v455, 2
      %v686 = vsel %vm511, %v684, %v685
      %v687 = vrot.slane %v456, 2
      %v688 = vsel %vm511, %v685, %v687
      %v689 = vrot.slane %v451, 4
      %v690 = vrot.slane %v452, 4
      %v691 = vsel %vm592, %v689, %v690
      %v692 = vrot.slane %v453, 4
      %v693 = vsel %vm592, %v690, %v692
      %v694 = vrot.slane %v454, 4
      %v695 = vrot.slane %v455, 4
      %v696 = vsel %vm592, %v694, %v695
      %v697 = vrot.slane %v456, 4
      %v698 = vsel %vm592, %v695, %v697
      %v705 = vrot.slane %v457, 2
      %v706 = vrot.slane %v458, 2
      %v707 = vsel %vm511, %v705, %v706
      %v708 = vrot.slane %v459, 2
      %v709 = vsel %vm511, %v706, %v708
      %v710 = vrot.slane %v460, 2
      %v711 = vrot.slane %v461, 2
      %v712 = vsel %vm511, %v710, %v711
      %v713 = vrot.slane %v462, 2
      %v714 = vsel %vm511, %v711, %v713
      %v715 = vrot.slane %v457, 4
      %v716 = vrot.slane %v458, 4
      %v717 = vsel %vm592, %v715, %v716
      %v718 = vrot.slane %v459, 4
      %v719 = vsel %vm592, %v716, %v718
      %v720 = vrot.slane %v460, 4
      %v721 = vrot.slane %v461, 4
      %v722 = vsel %vm592, %v720, %v721
      %v723 = vrot.slane %v462, 4
      %v724 = vsel %vm592, %v721, %v723
      %725 = vrot.lane.b32.xlu0 %v514, 8
      %v726 = vpop.permute.xlu0 %725
      %727 = vrot.lane.b32.xlu0 %v516, 8
      %v728 = vpop.permute.xlu0 %727
      %729 = vrot.lane.b32.xlu0 %v519, 8
      %v730 = vpop.permute.xlu0 %729
      %731 = vrot.lane.b32.xlu0 %v521, 8
      %v732 = vpop.permute.xlu0 %731
      %733 = vrot.lane.b32.xlu0 %v524, 8
      %v734 = vpop.permute.xlu0 %733
      %735 = vrot.lane.b32.xlu0 %v526, 8
      %v736 = vpop.permute.xlu0 %735
      %737 = vrot.lane.b32.xlu0 %v529, 8
      %v738 = vpop.permute.xlu0 %737
      %739 = vrot.lane.b32.xlu0 %v531, 8
      %v740 = vpop.permute.xlu0 %739
      %741 = vrot.lane.b32.xlu0 %v534, 8
      %v742 = vpop.permute.xlu0 %741
      %743 = vrot.lane.b32.xlu0 %v536, 8
      %v744 = vpop.permute.xlu0 %743
      %745 = vrot.lane.b32.xlu0 %v539, 8
      %v746 = vpop.permute.xlu0 %745
      %747 = vrot.lane.b32.xlu0 %v541, 8
      %v748 = vpop.permute.xlu0 %747
      %749 = vrot.lane.b32.xlu0 %v544, 8
      %v750 = vpop.permute.xlu0 %749
      %751 = vrot.lane.b32.xlu0 %v546, 8
      %v752 = vpop.permute.xlu0 %751
      %753 = vrot.lane.b32.xlu0 %v549, 8
      %v754 = vpop.permute.xlu0 %753
      %755 = vrot.lane.b32.xlu0 %v551, 8
      %v756 = vpop.permute.xlu0 %755
      %757 = vrot.lane.b32.xlu0 %v554, 8
      %v758 = vpop.permute.xlu0 %757
      %759 = vrot.lane.b32.xlu0 %v556, 8
      %v760 = vpop.permute.xlu0 %759
      %761 = vrot.lane.b32.xlu0 %v559, 8
      %v762 = vpop.permute.xlu0 %761
      %763 = vrot.lane.b32.xlu0 %v561, 8
      %v764 = vpop.permute.xlu0 %763
      %765 = vrot.lane.b32.xlu0 %v564, 8
      %v766 = vpop.permute.xlu0 %765
      %767 = vrot.lane.b32.xlu0 %v566, 8
      %v768 = vpop.permute.xlu0 %767
      %769 = vrot.lane.b32.xlu0 %v569, 8
      %v770 = vpop.permute.xlu0 %769
      %771 = vrot.lane.b32.xlu0 %v571, 8
      %v772 = vpop.permute.xlu0 %771
      %773 = vrot.lane.b32.xlu0 %v574, 8
      %v774 = vpop.permute.xlu0 %773
      %775 = vrot.lane.b32.xlu0 %v576, 8
      %v776 = vpop.permute.xlu0 %775
      %777 = vrot.lane.b32.xlu0 %v579, 8
      %v778 = vpop.permute.xlu0 %777
      %779 = vrot.lane.b32.xlu0 %v581, 8
      %v780 = vpop.permute.xlu0 %779
      %781 = vrot.lane.b32.xlu0 %v584, 8
      %v782 = vpop.permute.xlu0 %781
      %783 = vrot.lane.b32.xlu0 %v586, 8
      %v784 = vpop.permute.xlu0 %783
      %785 = vrot.lane.b32.xlu0 %v589, 8
      %v786 = vpop.permute.xlu0 %785
      %787 = vrot.lane.b32.xlu0 %v591, 8
      %v788 = vpop.permute.xlu0 %787
      %821 = vrot.lane.b32.xlu0 %v595, 16
      %v822 = vpop.permute.xlu0 %821
      %823 = vrot.lane.b32.xlu0 %v597, 16
      %v824 = vpop.permute.xlu0 %823
      %825 = vrot.lane.b32.xlu0 %v600, 16
      %v826 = vpop.permute.xlu0 %825
      %827 = vrot.lane.b32.xlu0 %v602, 16
      %v828 = vpop.permute.xlu0 %827
      %829 = vrot.lane.b32.xlu0 %v605, 16
      %v830 = vpop.permute.xlu0 %829
      %831 = vrot.lane.b32.xlu0 %v607, 16
      %v832 = vpop.permute.xlu0 %831
      %833 = vrot.lane.b32.xlu0 %v610, 16
      %v834 = vpop.permute.xlu0 %833
      %835 = vrot.lane.b32.xlu0 %v612, 16
      %v836 = vpop.permute.xlu0 %835
      %837 = vrot.lane.b32.xlu0 %v615, 16
      %v838 = vpop.permute.xlu0 %837
      %839 = vrot.lane.b32.xlu0 %v617, 16
      %v840 = vpop.permute.xlu0 %839
      %841 = vrot.lane.b32.xlu0 %v620, 16
      %v842 = vpop.permute.xlu0 %841
      %843 = vrot.lane.b32.xlu0 %v622, 16
      %v844 = vpop.permute.xlu0 %843
      %845 = vrot.lane.b32.xlu0 %v625, 16
      %v846 = vpop.permute.xlu0 %845
      %847 = vrot.lane.b32.xlu0 %v627, 16
      %v848 = vpop.permute.xlu0 %847
      %849 = vrot.lane.b32.xlu0 %v630, 16
      %v850 = vpop.permute.xlu0 %849
      %851 = vrot.lane.b32.xlu0 %v632, 16
      %v852 = vpop.permute.xlu0 %851
      %853 = vrot.lane.b32.xlu0 %v635, 16
      %v854 = vpop.permute.xlu0 %853
      %855 = vrot.lane.b32.xlu0 %v637, 16
      %v856 = vpop.permute.xlu0 %855
      %857 = vrot.lane.b32.xlu0 %v640, 16
      %v858 = vpop.permute.xlu0 %857
      %859 = vrot.lane.b32.xlu0 %v642, 16
      %v860 = vpop.permute.xlu0 %859
      %861 = vrot.lane.b32.xlu0 %v645, 16
      %v862 = vpop.permute.xlu0 %861
      %863 = vrot.lane.b32.xlu0 %v647, 16
      %v864 = vpop.permute.xlu0 %863
      %865 = vrot.lane.b32.xlu0 %v650, 16
      %v866 = vpop.permute.xlu0 %865
      %867 = vrot.lane.b32.xlu0 %v652, 16
      %v868 = vpop.permute.xlu0 %867
      %869 = vrot.lane.b32.xlu0 %v655, 16
      %v870 = vpop.permute.xlu0 %869
      %871 = vrot.lane.b32.xlu0 %v657, 16
      %v872 = vpop.permute.xlu0 %871
      %873 = vrot.lane.b32.xlu0 %v660, 16
      %v874 = vpop.permute.xlu0 %873
      %875 = vrot.lane.b32.xlu0 %v662, 16
      %v876 = vpop.permute.xlu0 %875
      %877 = vrot.lane.b32.xlu0 %v665, 16
      %v878 = vpop.permute.xlu0 %877
      %879 = vrot.lane.b32.xlu0 %v667, 16
      %v880 = vpop.permute.xlu0 %879
      %881 = vrot.lane.b32.xlu0 %v670, 16
      %v882 = vpop.permute.xlu0 %881
      %883 = vrot.lane.b32.xlu0 %v672, 16
      %v884 = vpop.permute.xlu0 %883
      %917 = vrot.lane.b32.xlu0 %v409, 24
      %v918 = vpop.permute.xlu0 %917
      %919 = vrot.lane.b32.xlu0 %v410, 24
      %v920 = vpop.permute.xlu0 %919
      %921 = vrot.lane.b32.xlu0 %v412, 24
      %v922 = vpop.permute.xlu0 %921
      %923 = vrot.lane.b32.xlu0 %v413, 24
      %v924 = vpop.permute.xlu0 %923
      %925 = vrot.lane.b32.xlu0 %v415, 24
      %v926 = vpop.permute.xlu0 %925
      %927 = vrot.lane.b32.xlu0 %v416, 24
      %v928 = vpop.permute.xlu0 %927
      %929 = vrot.lane.b32.xlu0 %v418, 24
      %v930 = vpop.permute.xlu0 %929
      %931 = vrot.lane.b32.xlu0 %v419, 24
      %v932 = vpop.permute.xlu0 %931
      %933 = vrot.lane.b32.xlu0 %v421, 24
      %v934 = vpop.permute.xlu0 %933
      %935 = vrot.lane.b32.xlu0 %v422, 24
      %v936 = vpop.permute.xlu0 %935
      %937 = vrot.lane.b32.xlu0 %v424, 24
      %v938 = vpop.permute.xlu0 %937
      %939 = vrot.lane.b32.xlu0 %v425, 24
      %v940 = vpop.permute.xlu0 %939
      %941 = vrot.lane.b32.xlu0 %v427, 24
      %v942 = vpop.permute.xlu0 %941
      %943 = vrot.lane.b32.xlu0 %v428, 24
      %v944 = vpop.permute.xlu0 %943
      %945 = vrot.lane.b32.xlu0 %v430, 24
      %v946 = vpop.permute.xlu0 %945
      %947 = vrot.lane.b32.xlu0 %v431, 24
      %v948 = vpop.permute.xlu0 %947
      %949 = vrot.lane.b32.xlu0 %v433, 24
      %v950 = vpop.permute.xlu0 %949
      %951 = vrot.lane.b32.xlu0 %v434, 24
      %v952 = vpop.permute.xlu0 %951
      %953 = vrot.lane.b32.xlu0 %v436, 24
      %v954 = vpop.permute.xlu0 %953
      %955 = vrot.lane.b32.xlu0 %v437, 24
      %v956 = vpop.permute.xlu0 %955
      %957 = vrot.lane.b32.xlu0 %v439, 24
      %v958 = vpop.permute.xlu0 %957
      %959 = vrot.lane.b32.xlu0 %v440, 24
      %v960 = vpop.permute.xlu0 %959
      %961 = vrot.lane.b32.xlu0 %v442, 24
      %v962 = vpop.permute.xlu0 %961
      %963 = vrot.lane.b32.xlu0 %v443, 24
      %v964 = vpop.permute.xlu0 %963
      %965 = vrot.lane.b32.xlu0 %v445, 24
      %v966 = vpop.permute.xlu0 %965
      %967 = vrot.lane.b32.xlu0 %v446, 24
      %v968 = vpop.permute.xlu0 %967
      %969 = vrot.lane.b32.xlu0 %v448, 24
      %v970 = vpop.permute.xlu0 %969
      %971 = vrot.lane.b32.xlu0 %v449, 24
      %v972 = vpop.permute.xlu0 %971
      %973 = vrot.lane.b32.xlu0 %v451, 24
      %v974 = vpop.permute.xlu0 %973
      %975 = vrot.lane.b32.xlu0 %v452, 24
      %v976 = vpop.permute.xlu0 %975
      %977 = vrot.lane.b32.xlu0 %v454, 24
      %v978 = vpop.permute.xlu0 %977
      %979 = vrot.lane.b32.xlu0 %v455, 24
      %v980 = vpop.permute.xlu0 %979
      %1013 = vrot.lane.b32.xlu0 %v524, 32
      %v1014 = vpop.permute.xlu0 %1013
      %1015 = vrot.lane.b32.xlu0 %v526, 32
      %v1016 = vpop.permute.xlu0 %1015
      %1017 = vrot.lane.b32.xlu0 %v529, 32
      %v1018 = vpop.permute.xlu0 %1017
      %1019 = vrot.lane.b32.xlu0 %v531, 32
      %v1020 = vpop.permute.xlu0 %1019
      %1021 = vrot.lane.b32.xlu0 %v534, 32
      %v1022 = vpop.permute.xlu0 %1021
      %1023 = vrot.lane.b32.xlu0 %v536, 32
      %v1024 = vpop.permute.xlu0 %1023
      %1025 = vrot.lane.b32.xlu0 %v539, 32
      %v1026 = vpop.permute.xlu0 %1025
      %1027 = vrot.lane.b32.xlu0 %v541, 32
      %v1028 = vpop.permute.xlu0 %1027
      %1029 = vrot.lane.b32.xlu0 %v544, 32
      %v1030 = vpop.permute.xlu0 %1029
      %1031 = vrot.lane.b32.xlu0 %v546, 32
      %v1032 = vpop.permute.xlu0 %1031
      %1033 = vrot.lane.b32.xlu0 %v549, 32
      %v1034 = vpop.permute.xlu0 %1033
      %1035 = vrot.lane.b32.xlu0 %v551, 32
      %v1036 = vpop.permute.xlu0 %1035
      %1037 = vrot.lane.b32.xlu0 %v554, 32
      %v1038 = vpop.permute.xlu0 %1037
      %1039 = vrot.lane.b32.xlu0 %v556, 32
      %v1040 = vpop.permute.xlu0 %1039
      %1041 = vrot.lane.b32.xlu0 %v559, 32
      %v1042 = vpop.permute.xlu0 %1041
      %1043 = vrot.lane.b32.xlu0 %v561, 32
      %v1044 = vpop.permute.xlu0 %1043
      %1045 = vrot.lane.b32.xlu0 %v564, 32
      %v1046 = vpop.permute.xlu0 %1045
      %1047 = vrot.lane.b32.xlu0 %v566, 32
      %v1048 = vpop.permute.xlu0 %1047
      %1049 = vrot.lane.b32.xlu0 %v569, 32
      %v1050 = vpop.permute.xlu0 %1049
      %1051 = vrot.lane.b32.xlu0 %v571, 32
      %v1052 = vpop.permute.xlu0 %1051
      %1053 = vrot.lane.b32.xlu0 %v574, 32
      %v1054 = vpop.permute.xlu0 %1053
      %1055 = vrot.lane.b32.xlu0 %v576, 32
      %v1056 = vpop.permute.xlu0 %1055
      %1057 = vrot.lane.b32.xlu0 %v579, 32
      %v1058 = vpop.permute.xlu0 %1057
      %1059 = vrot.lane.b32.xlu0 %v581, 32
      %v1060 = vpop.permute.xlu0 %1059
      %1061 = vrot.lane.b32.xlu0 %v584, 32
      %v1062 = vpop.permute.xlu0 %1061
      %1063 = vrot.lane.b32.xlu0 %v586, 32
      %v1064 = vpop.permute.xlu0 %1063
      %1065 = vrot.lane.b32.xlu0 %v589, 32
      %v1066 = vpop.permute.xlu0 %1065
      %1067 = vrot.lane.b32.xlu0 %v591, 32
      %v1068 = vpop.permute.xlu0 %1067
      %1069 = vrot.lane.b32.xlu0 %v681, 32
      %v1070 = vpop.permute.xlu0 %1069
      %1071 = vrot.lane.b32.xlu0 %v683, 32
      %v1072 = vpop.permute.xlu0 %1071
      %1073 = vrot.lane.b32.xlu0 %v686, 32
      %v1074 = vpop.permute.xlu0 %1073
      %1075 = vrot.lane.b32.xlu0 %v688, 32
      %v1076 = vpop.permute.xlu0 %1075
      %1109 = vrot.lane.b32.xlu0 %v605, 40
      %v1110 = vpop.permute.xlu0 %1109
      %1111 = vrot.lane.b32.xlu0 %v607, 40
      %v1112 = vpop.permute.xlu0 %1111
      %1113 = vrot.lane.b32.xlu0 %v610, 40
      %v1114 = vpop.permute.xlu0 %1113
      %1115 = vrot.lane.b32.xlu0 %v612, 40
      %v1116 = vpop.permute.xlu0 %1115
      %1117 = vrot.lane.b32.xlu0 %v615, 40
      %v1118 = vpop.permute.xlu0 %1117
      %1119 = vrot.lane.b32.xlu0 %v617, 40
      %v1120 = vpop.permute.xlu0 %1119
      %1121 = vrot.lane.b32.xlu0 %v620, 40
      %v1122 = vpop.permute.xlu0 %1121
      %1123 = vrot.lane.b32.xlu0 %v622, 40
      %v1124 = vpop.permute.xlu0 %1123
      %1125 = vrot.lane.b32.xlu0 %v625, 40
      %v1126 = vpop.permute.xlu0 %1125
      %1127 = vrot.lane.b32.xlu0 %v627, 40
      %v1128 = vpop.permute.xlu0 %1127
      %1129 = vrot.lane.b32.xlu0 %v630, 40
      %v1130 = vpop.permute.xlu0 %1129
      %1131 = vrot.lane.b32.xlu0 %v632, 40
      %v1132 = vpop.permute.xlu0 %1131
      %1133 = vrot.lane.b32.xlu0 %v635, 40
      %v1134 = vpop.permute.xlu0 %1133
      %1135 = vrot.lane.b32.xlu0 %v637, 40
      %v1136 = vpop.permute.xlu0 %1135
      %1137 = vrot.lane.b32.xlu0 %v640, 40
      %v1138 = vpop.permute.xlu0 %1137
      %1139 = vrot.lane.b32.xlu0 %v642, 40
      %v1140 = vpop.permute.xlu0 %1139
      %1141 = vrot.lane.b32.xlu0 %v645, 40
      %v1142 = vpop.permute.xlu0 %1141
      %1143 = vrot.lane.b32.xlu0 %v647, 40
      %v1144 = vpop.permute.xlu0 %1143
      %1145 = vrot.lane.b32.xlu0 %v650, 40
      %v1146 = vpop.permute.xlu0 %1145
      %1147 = vrot.lane.b32.xlu0 %v652, 40
      %v1148 = vpop.permute.xlu0 %1147
      %1149 = vrot.lane.b32.xlu0 %v655, 40
      %v1150 = vpop.permute.xlu0 %1149
      %1151 = vrot.lane.b32.xlu0 %v657, 40
      %v1152 = vpop.permute.xlu0 %1151
      %1153 = vrot.lane.b32.xlu0 %v660, 40
      %v1154 = vpop.permute.xlu0 %1153
      %1155 = vrot.lane.b32.xlu0 %v662, 40
      %v1156 = vpop.permute.xlu0 %1155
      %1157 = vrot.lane.b32.xlu0 %v665, 40
      %v1158 = vpop.permute.xlu0 %1157
      %1159 = vrot.lane.b32.xlu0 %v667, 40
      %v1160 = vpop.permute.xlu0 %1159
      %1161 = vrot.lane.b32.xlu0 %v670, 40
      %v1162 = vpop.permute.xlu0 %1161
      %1163 = vrot.lane.b32.xlu0 %v672, 40
      %v1164 = vpop.permute.xlu0 %1163
      %1165 = vrot.lane.b32.xlu0 %v691, 40
      %v1166 = vpop.permute.xlu0 %1165
      %1167 = vrot.lane.b32.xlu0 %v693, 40
      %v1168 = vpop.permute.xlu0 %1167
      %1169 = vrot.lane.b32.xlu0 %v696, 40
      %v1170 = vpop.permute.xlu0 %1169
      %1171 = vrot.lane.b32.xlu0 %v698, 40
      %v1172 = vpop.permute.xlu0 %1171
      %1205 = vrot.lane.b32.xlu0 %v415, 48
      %v1206 = vpop.permute.xlu0 %1205
      %1207 = vrot.lane.b32.xlu0 %v416, 48
      %v1208 = vpop.permute.xlu0 %1207
      %1209 = vrot.lane.b32.xlu0 %v418, 48
      %v1210 = vpop.permute.xlu0 %1209
      %1211 = vrot.lane.b32.xlu0 %v419, 48
      %v1212 = vpop.permute.xlu0 %1211
      %1213 = vrot.lane.b32.xlu0 %v421, 48
      %v1214 = vpop.permute.xlu0 %1213
      %1215 = vrot.lane.b32.xlu0 %v422, 48
      %v1216 = vpop.permute.xlu0 %1215
      %1217 = vrot.lane.b32.xlu0 %v424, 48
      %v1218 = vpop.permute.xlu0 %1217
      %1219 = vrot.lane.b32.xlu0 %v425, 48
      %v1220 = vpop.permute.xlu0 %1219
      %1221 = vrot.lane.b32.xlu0 %v427, 48
      %v1222 = vpop.permute.xlu0 %1221
      %1223 = vrot.lane.b32.xlu0 %v428, 48
      %v1224 = vpop.permute.xlu0 %1223
      %1225 = vrot.lane.b32.xlu0 %v430, 48
      %v1226 = vpop.permute.xlu0 %1225
      %1227 = vrot.lane.b32.xlu0 %v431, 48
      %v1228 = vpop.permute.xlu0 %1227
      %1229 = vrot.lane.b32.xlu0 %v433, 48
      %v1230 = vpop.permute.xlu0 %1229
      %1231 = vrot.lane.b32.xlu0 %v434, 48
      %v1232 = vpop.permute.xlu0 %1231
      %1233 = vrot.lane.b32.xlu0 %v436, 48
      %v1234 = vpop.permute.xlu0 %1233
      %1235 = vrot.lane.b32.xlu0 %v437, 48
      %v1236 = vpop.permute.xlu0 %1235
      %1237 = vrot.lane.b32.xlu0 %v439, 48
      %v1238 = vpop.permute.xlu0 %1237
      %1239 = vrot.lane.b32.xlu0 %v440, 48
      %v1240 = vpop.permute.xlu0 %1239
      %1241 = vrot.lane.b32.xlu0 %v442, 48
      %v1242 = vpop.permute.xlu0 %1241
      %1243 = vrot.lane.b32.xlu0 %v443, 48
      %v1244 = vpop.permute.xlu0 %1243
      %1245 = vrot.lane.b32.xlu0 %v445, 48
      %v1246 = vpop.permute.xlu0 %1245
      %1247 = vrot.lane.b32.xlu0 %v446, 48
      %v1248 = vpop.permute.xlu0 %1247
      %1249 = vrot.lane.b32.xlu0 %v448, 48
      %v1250 = vpop.permute.xlu0 %1249
      %1251 = vrot.lane.b32.xlu0 %v449, 48
      %v1252 = vpop.permute.xlu0 %1251
      %1253 = vrot.lane.b32.xlu0 %v451, 48
      %v1254 = vpop.permute.xlu0 %1253
      %1255 = vrot.lane.b32.xlu0 %v452, 48
      %v1256 = vpop.permute.xlu0 %1255
      %1257 = vrot.lane.b32.xlu0 %v454, 48
      %v1258 = vpop.permute.xlu0 %1257
      %1259 = vrot.lane.b32.xlu0 %v455, 48
      %v1260 = vpop.permute.xlu0 %1259
      %1261 = vrot.lane.b32.xlu0 %v457, 48
      %v1262 = vpop.permute.xlu0 %1261
      %1263 = vrot.lane.b32.xlu0 %v458, 48
      %v1264 = vpop.permute.xlu0 %1263
      %1265 = vrot.lane.b32.xlu0 %v460, 48
      %v1266 = vpop.permute.xlu0 %1265
      %1267 = vrot.lane.b32.xlu0 %v461, 48
      %v1268 = vpop.permute.xlu0 %1267
      %1301 = vrot.lane.b32.xlu0 %v534, 56
      %v1302 = vpop.permute.xlu0 %1301
      %1303 = vrot.lane.b32.xlu0 %v536, 56
      %v1304 = vpop.permute.xlu0 %1303
      %1305 = vrot.lane.b32.xlu0 %v539, 56
      %v1306 = vpop.permute.xlu0 %1305
      %1307 = vrot.lane.b32.xlu0 %v541, 56
      %v1308 = vpop.permute.xlu0 %1307
      %1309 = vrot.lane.b32.xlu0 %v544, 56
      %v1310 = vpop.permute.xlu0 %1309
      %1311 = vrot.lane.b32.xlu0 %v546, 56
      %v1312 = vpop.permute.xlu0 %1311
      %1313 = vrot.lane.b32.xlu0 %v549, 56
      %v1314 = vpop.permute.xlu0 %1313
      %1315 = vrot.lane.b32.xlu0 %v551, 56
      %v1316 = vpop.permute.xlu0 %1315
      %1317 = vrot.lane.b32.xlu0 %v554, 56
      %v1318 = vpop.permute.xlu0 %1317
      %1319 = vrot.lane.b32.xlu0 %v556, 56
      %v1320 = vpop.permute.xlu0 %1319
      %1321 = vrot.lane.b32.xlu0 %v559, 56
      %v1322 = vpop.permute.xlu0 %1321
      %1323 = vrot.lane.b32.xlu0 %v561, 56
      %v1324 = vpop.permute.xlu0 %1323
      %1325 = vrot.lane.b32.xlu0 %v564, 56
      %v1326 = vpop.permute.xlu0 %1325
      %1327 = vrot.lane.b32.xlu0 %v566, 56
      %v1328 = vpop.permute.xlu0 %1327
      %1329 = vrot.lane.b32.xlu0 %v569, 56
      %v1330 = vpop.permute.xlu0 %1329
      %1331 = vrot.lane.b32.xlu0 %v571, 56
      %v1332 = vpop.permute.xlu0 %1331
      %1333 = vrot.lane.b32.xlu0 %v574, 56
      %v1334 = vpop.permute.xlu0 %1333
      %1335 = vrot.lane.b32.xlu0 %v576, 56
      %v1336 = vpop.permute.xlu0 %1335
      %1337 = vrot.lane.b32.xlu0 %v579, 56
      %v1338 = vpop.permute.xlu0 %1337
      %1339 = vrot.lane.b32.xlu0 %v581, 56
      %v1340 = vpop.permute.xlu0 %1339
      %1341 = vrot.lane.b32.xlu0 %v584, 56
      %v1342 = vpop.permute.xlu0 %1341
      %1343 = vrot.lane.b32.xlu0 %v586, 56
      %v1344 = vpop.permute.xlu0 %1343
      %1345 = vrot.lane.b32.xlu0 %v589, 56
      %v1346 = vpop.permute.xlu0 %1345
      %1347 = vrot.lane.b32.xlu0 %v591, 56
      %v1348 = vpop.permute.xlu0 %1347
      %1349 = vrot.lane.b32.xlu0 %v681, 56
      %v1350 = vpop.permute.xlu0 %1349
      %1351 = vrot.lane.b32.xlu0 %v683, 56
      %v1352 = vpop.permute.xlu0 %1351
      %1353 = vrot.lane.b32.xlu0 %v686, 56
      %v1354 = vpop.permute.xlu0 %1353
      %1355 = vrot.lane.b32.xlu0 %v688, 56
      %v1356 = vpop.permute.xlu0 %1355
      %1357 = vrot.lane.b32.xlu0 %v707, 56
      %v1358 = vpop.permute.xlu0 %1357
      %1359 = vrot.lane.b32.xlu0 %v709, 56
      %v1360 = vpop.permute.xlu0 %1359
      %1361 = vrot.lane.b32.xlu0 %v712, 56
      %v1362 = vpop.permute.xlu0 %1361
      %1363 = vrot.lane.b32.xlu0 %v714, 56
      %v1364 = vpop.permute.xlu0 %1363
      %1397 = vrot.lane.b32.xlu0 %v615, 64
      %v1398 = vpop.permute.xlu0 %1397
      %1399 = vrot.lane.b32.xlu0 %v617, 64
      %v1400 = vpop.permute.xlu0 %1399
      %1401 = vrot.lane.b32.xlu0 %v620, 64
      %v1402 = vpop.permute.xlu0 %1401
      %1403 = vrot.lane.b32.xlu0 %v622, 64
      %v1404 = vpop.permute.xlu0 %1403
      %1405 = vrot.lane.b32.xlu0 %v625, 64
      %v1406 = vpop.permute.xlu0 %1405
      %1407 = vrot.lane.b32.xlu0 %v627, 64
      %v1408 = vpop.permute.xlu0 %1407
      %1409 = vrot.lane.b32.xlu0 %v630, 64
      %v1410 = vpop.permute.xlu0 %1409
      %1411 = vrot.lane.b32.xlu0 %v632, 64
      %v1412 = vpop.permute.xlu0 %1411
      %1413 = vrot.lane.b32.xlu0 %v635, 64
      %v1414 = vpop.permute.xlu0 %1413
      %1415 = vrot.lane.b32.xlu0 %v637, 64
      %v1416 = vpop.permute.xlu0 %1415
      %1417 = vrot.lane.b32.xlu0 %v640, 64
      %v1418 = vpop.permute.xlu0 %1417
      %1419 = vrot.lane.b32.xlu0 %v642, 64
      %v1420 = vpop.permute.xlu0 %1419
      %1421 = vrot.lane.b32.xlu0 %v645, 64
      %v1422 = vpop.permute.xlu0 %1421
      %1423 = vrot.lane.b32.xlu0 %v647, 64
      %v1424 = vpop.permute.xlu0 %1423
      %1425 = vrot.lane.b32.xlu0 %v650, 64
      %v1426 = vpop.permute.xlu0 %1425
      %1427 = vrot.lane.b32.xlu0 %v652, 64
      %v1428 = vpop.permute.xlu0 %1427
      %1429 = vrot.lane.b32.xlu0 %v655, 64
      %v1430 = vpop.permute.xlu0 %1429
      %1431 = vrot.lane.b32.xlu0 %v657, 64
      %v1432 = vpop.permute.xlu0 %1431
      %1433 = vrot.lane.b32.xlu0 %v660, 64
      %v1434 = vpop.permute.xlu0 %1433
      %1435 = vrot.lane.b32.xlu0 %v662, 64
      %v1436 = vpop.permute.xlu0 %1435
      %1437 = vrot.lane.b32.xlu0 %v665, 64
      %v1438 = vpop.permute.xlu0 %1437
      %1439 = vrot.lane.b32.xlu0 %v667, 64
      %v1440 = vpop.permute.xlu0 %1439
      %1441 = vrot.lane.b32.xlu0 %v670, 64
      %v1442 = vpop.permute.xlu0 %1441
      %1443 = vrot.lane.b32.xlu0 %v672, 64
      %v1444 = vpop.permute.xlu0 %1443
      %1445 = vrot.lane.b32.xlu0 %v691, 64
      %v1446 = vpop.permute.xlu0 %1445
      %1447 = vrot.lane.b32.xlu0 %v693, 64
      %v1448 = vpop.permute.xlu0 %1447
      %1449 = vrot.lane.b32.xlu0 %v696, 64
      %v1450 = vpop.permute.xlu0 %1449
      %1451 = vrot.lane.b32.xlu0 %v698, 64
      %v1452 = vpop.permute.xlu0 %1451
      %1453 = vrot.lane.b32.xlu0 %v717, 64
      %v1454 = vpop.permute.xlu0 %1453
      %1455 = vrot.lane.b32.xlu0 %v719, 64
      %v1456 = vpop.permute.xlu0 %1455
      %1457 = vrot.lane.b32.xlu0 %v722, 64
      %v1458 = vpop.permute.xlu0 %1457
      %1459 = vrot.lane.b32.xlu0 %v724, 64
      %v1460 = vpop.permute.xlu0 %1459
      %vm1493 = vcmask 64512
      %v1494 = vsel %vm1493, %v403, %v726
      %v1495 = vsel %vm1493, %v404, %v728
      %v1496 = vsel %vm1493, %v406, %v730
      %v1497 = vsel %vm1493, %v407, %v732
      %v1498 = vsel %vm1493, %v409, %v734
      %v1499 = vsel %vm1493, %v410, %v736
      %v1500 = vsel %vm1493, %v412, %v738
      %v1501 = vsel %vm1493, %v413, %v740
      %v1502 = vsel %vm1493, %v415, %v742
      %v1503 = vsel %vm1493, %v416, %v744
      %v1504 = vsel %vm1493, %v418, %v746
      %v1505 = vsel %vm1493, %v419, %v748
      %v1506 = vsel %vm1493, %v421, %v750
      %v1507 = vsel %vm1493, %v422, %v752
      %v1508 = vsel %vm1493, %v424, %v754
      %v1509 = vsel %vm1493, %v425, %v756
      %v1510 = vsel %vm1493, %v427, %v758
      %v1511 = vsel %vm1493, %v428, %v760
      %v1512 = vsel %vm1493, %v430, %v762
      %v1513 = vsel %vm1493, %v431, %v764
      %v1514 = vsel %vm1493, %v433, %v766
      %v1515 = vsel %vm1493, %v434, %v768
      %v1516 = vsel %vm1493, %v436, %v770
      %v1517 = vsel %vm1493, %v437, %v772
      %v1518 = vsel %vm1493, %v439, %v774
      %v1519 = vsel %vm1493, %v440, %v776
      %v1520 = vsel %vm1493, %v442, %v778
      %v1521 = vsel %vm1493, %v443, %v780
      %v1522 = vsel %vm1493, %v445, %v782
      %v1523 = vsel %vm1493, %v446, %v784
      %v1524 = vsel %vm1493, %v448, %v786
      %v1525 = vsel %vm1493, %v449, %v788
      %vm1526 = vcmask 130048
      %v1527 = vsel %vm1526, %v1494, %v822
      %v1528 = vsel %vm1526, %v1495, %v824
      %v1529 = vsel %vm1526, %v1496, %v826
      %v1530 = vsel %vm1526, %v1497, %v828
      %v1531 = vsel %vm1526, %v1498, %v830
      %v1532 = vsel %vm1526, %v1499, %v832
      %v1533 = vsel %vm1526, %v1500, %v834
      %v1534 = vsel %vm1526, %v1501, %v836
      %v1535 = vsel %vm1526, %v1502, %v838
      %v1536 = vsel %vm1526, %v1503, %v840
      %v1537 = vsel %vm1526, %v1504, %v842
      %v1538 = vsel %vm1526, %v1505, %v844
      %v1539 = vsel %vm1526, %v1506, %v846
      %v1540 = vsel %vm1526, %v1507, %v848
      %v1541 = vsel %vm1526, %v1508, %v850
      %v1542 = vsel %vm1526, %v1509, %v852
      %v1543 = vsel %vm1526, %v1510, %v854
      %v1544 = vsel %vm1526, %v1511, %v856
      %v1545 = vsel %vm1526, %v1512, %v858
      %v1546 = vsel %vm1526, %v1513, %v860
      %v1547 = vsel %vm1526, %v1514, %v862
      %v1548 = vsel %vm1526, %v1515, %v864
      %v1549 = vsel %vm1526, %v1516, %v866
      %v1550 = vsel %vm1526, %v1517, %v868
      %v1551 = vsel %vm1526, %v1518, %v870
      %v1552 = vsel %vm1526, %v1519, %v872
      %v1553 = vsel %vm1526, %v1520, %v874
      %v1554 = vsel %vm1526, %v1521, %v876
      %v1555 = vsel %vm1526, %v1522, %v878
      %v1556 = vsel %vm1526, %v1523, %v880
      %v1557 = vsel %vm1526, %v1524, %v882
      %v1558 = vsel %vm1526, %v1525, %v884
      %vm1559 = vcmask 195584
      %v1560 = vsel %vm1559, %v1527, %v918
      %v1561 = vsel %vm1559, %v1528, %v920
      %v1562 = vsel %vm1559, %v1529, %v922
      %v1563 = vsel %vm1559, %v1530, %v924
      %v1564 = vsel %vm1559, %v1531, %v926
      %v1565 = vsel %vm1559, %v1532, %v928
      %v1566 = vsel %vm1559, %v1533, %v930
      %v1567 = vsel %vm1559, %v1534, %v932
      %v1568 = vsel %vm1559, %v1535, %v934
      %v1569 = vsel %vm1559, %v1536, %v936
      %v1570 = vsel %vm1559, %v1537, %v938
      %v1571 = vsel %vm1559, %v1538, %v940
      %v1572 = vsel %vm1559, %v1539, %v942
      %v1573 = vsel %vm1559, %v1540, %v944
      %v1574 = vsel %vm1559, %v1541, %v946
      %v1575 = vsel %vm1559, %v1542, %v948
      %v1576 = vsel %vm1559, %v1543, %v950
      %v1577 = vsel %vm1559, %v1544, %v952
      %v1578 = vsel %vm1559, %v1545, %v954
      %v1579 = vsel %vm1559, %v1546, %v956
      %v1580 = vsel %vm1559, %v1547, %v958
      %v1581 = vsel %vm1559, %v1548, %v960
      %v1582 = vsel %vm1559, %v1549, %v962
      %v1583 = vsel %vm1559, %v1550, %v964
      %v1584 = vsel %vm1559, %v1551, %v966
      %v1585 = vsel %vm1559, %v1552, %v968
      %v1586 = vsel %vm1559, %v1553, %v970
      %v1587 = vsel %vm1559, %v1554, %v972
      %v1588 = vsel %vm1559, %v1555, %v974
      %v1589 = vsel %vm1559, %v1556, %v976
      %v1590 = vsel %vm1559, %v1557, %v978
      %v1591 = vsel %vm1559, %v1558, %v980
      %vm1592 = vcmask 261120
      %v1593 = vsel %vm1592, %v1560, %v1014
      %v1594 = vsel %vm1592, %v1561, %v1016
      %v1595 = vsel %vm1592, %v1562, %v1018
      %v1596 = vsel %vm1592, %v1563, %v1020
      %v1597 = vsel %vm1592, %v1564, %v1022
      %v1598 = vsel %vm1592, %v1565, %v1024
      %v1599 = vsel %vm1592, %v1566, %v1026
      %v1600 = vsel %vm1592, %v1567, %v1028
      %v1601 = vsel %vm1592, %v1568, %v1030
      %v1602 = vsel %vm1592, %v1569, %v1032
      %v1603 = vsel %vm1592, %v1570, %v1034
      %v1604 = vsel %vm1592, %v1571, %v1036
      %v1605 = vsel %vm1592, %v1572, %v1038
      %v1606 = vsel %vm1592, %v1573, %v1040
      %v1607 = vsel %vm1592, %v1574, %v1042
      %v1608 = vsel %vm1592, %v1575, %v1044
      %v1609 = vsel %vm1592, %v1576, %v1046
      %v1610 = vsel %vm1592, %v1577, %v1048
      %v1611 = vsel %vm1592, %v1578, %v1050
      %v1612 = vsel %vm1592, %v1579, %v1052
      %v1613 = vsel %vm1592, %v1580, %v1054
      %v1614 = vsel %vm1592, %v1581, %v1056
      %v1615 = vsel %vm1592, %v1582, %v1058
      %v1616 = vsel %vm1592, %v1583, %v1060
      %v1617 = vsel %vm1592, %v1584, %v1062
      %v1618 = vsel %vm1592, %v1585, %v1064
      %v1619 = vsel %vm1592, %v1586, %v1066
      %v1620 = vsel %vm1592, %v1587, %v1068
      %v1621 = vsel %vm1592, %v1588, %v1070
      %v1622 = vsel %vm1592, %v1589, %v1072
      %v1623 = vsel %vm1592, %v1590, %v1074
      %v1624 = vsel %vm1592, %v1591, %v1076
      %vm1625 = vcmask 326656
      %v1626 = vsel %vm1625, %v1593, %v1110
      %v1627 = vsel %vm1625, %v1594, %v1112
      %v1628 = vsel %vm1625, %v1595, %v1114
      %v1629 = vsel %vm1625, %v1596, %v1116
      %v1630 = vsel %vm1625, %v1597, %v1118
      %v1631 = vsel %vm1625, %v1598, %v1120
      %v1632 = vsel %vm1625, %v1599, %v1122
      %v1633 = vsel %vm1625, %v1600, %v1124
      %v1634 = vsel %vm1625, %v1601, %v1126
      %v1635 = vsel %vm1625, %v1602, %v1128
      %v1636 = vsel %vm1625, %v1603, %v1130
      %v1637 = vsel %vm1625, %v1604, %v1132
      %v1638 = vsel %vm1625, %v1605, %v1134
      %v1639 = vsel %vm1625, %v1606, %v1136
      %v1640 = vsel %vm1625, %v1607, %v1138
      %v1641 = vsel %vm1625, %v1608, %v1140
      %v1642 = vsel %vm1625, %v1609, %v1142
      %v1643 = vsel %vm1625, %v1610, %v1144
      %v1644 = vsel %vm1625, %v1611, %v1146
      %v1645 = vsel %vm1625, %v1612, %v1148
      %v1646 = vsel %vm1625, %v1613, %v1150
      %v1647 = vsel %vm1625, %v1614, %v1152
      %v1648 = vsel %vm1625, %v1615, %v1154
      %v1649 = vsel %vm1625, %v1616, %v1156
      %v1650 = vsel %vm1625, %v1617, %v1158
      %v1651 = vsel %vm1625, %v1618, %v1160
      %v1652 = vsel %vm1625, %v1619, %v1162
      %v1653 = vsel %vm1625, %v1620, %v1164
      %v1654 = vsel %vm1625, %v1621, %v1166
      %v1655 = vsel %vm1625, %v1622, %v1168
      %v1656 = vsel %vm1625, %v1623, %v1170
      %v1657 = vsel %vm1625, %v1624, %v1172
      %vm1658 = vcmask 392192
      %v1659 = vsel %vm1658, %v1626, %v1206
      %v1660 = vsel %vm1658, %v1627, %v1208
      %v1661 = vsel %vm1658, %v1628, %v1210
      %v1662 = vsel %vm1658, %v1629, %v1212
      %v1663 = vsel %vm1658, %v1630, %v1214
      %v1664 = vsel %vm1658, %v1631, %v1216
      %v1665 = vsel %vm1658, %v1632, %v1218
      %v1666 = vsel %vm1658, %v1633, %v1220
      %v1667 = vsel %vm1658, %v1634, %v1222
      %v1668 = vsel %vm1658, %v1635, %v1224
      %v1669 = vsel %vm1658, %v1636, %v1226
      %v1670 = vsel %vm1658, %v1637, %v1228
      %v1671 = vsel %vm1658, %v1638, %v1230
      %v1672 = vsel %vm1658, %v1639, %v1232
      %v1673 = vsel %vm1658, %v1640, %v1234
      %v1674 = vsel %vm1658, %v1641, %v1236
      %v1675 = vsel %vm1658, %v1642, %v1238
      %v1676 = vsel %vm1658, %v1643, %v1240
      %v1677 = vsel %vm1658, %v1644, %v1242
      %v1678 = vsel %vm1658, %v1645, %v1244
      %v1679 = vsel %vm1658, %v1646, %v1246
      %v1680 = vsel %vm1658, %v1647, %v1248
      %v1681 = vsel %vm1658, %v1648, %v1250
      %v1682 = vsel %vm1658, %v1649, %v1252
      %v1683 = vsel %vm1658, %v1650, %v1254
      %v1684 = vsel %vm1658, %v1651, %v1256
      %v1685 = vsel %vm1658, %v1652, %v1258
      %v1686 = vsel %vm1658, %v1653, %v1260
      %v1687 = vsel %vm1658, %v1654, %v1262
      %v1688 = vsel %vm1658, %v1655, %v1264
      %v1689 = vsel %vm1658, %v1656, %v1266
      %v1690 = vsel %vm1658, %v1657, %v1268
      %vm1691 = vcmask 457728
      %v1692 = vsel %vm1691, %v1659, %v1302
      %v1693 = vsel %vm1691, %v1660, %v1304
      %v1694 = vsel %vm1691, %v1661, %v1306
      %v1695 = vsel %vm1691, %v1662, %v1308
      %v1696 = vsel %vm1691, %v1663, %v1310
      %v1697 = vsel %vm1691, %v1664, %v1312
      %v1698 = vsel %vm1691, %v1665, %v1314
      %v1699 = vsel %vm1691, %v1666, %v1316
      %v1700 = vsel %vm1691, %v1667, %v1318
      %v1701 = vsel %vm1691, %v1668, %v1320
      %v1702 = vsel %vm1691, %v1669, %v1322
      %v1703 = vsel %vm1691, %v1670, %v1324
      %v1704 = vsel %vm1691, %v1671, %v1326
      %v1705 = vsel %vm1691, %v1672, %v1328
      %v1706 = vsel %vm1691, %v1673, %v1330
      %v1707 = vsel %vm1691, %v1674, %v1332
      %v1708 = vsel %vm1691, %v1675, %v1334
      %v1709 = vsel %vm1691, %v1676, %v1336
      %v1710 = vsel %vm1691, %v1677, %v1338
      %v1711 = vsel %vm1691, %v1678, %v1340
      %v1712 = vsel %vm1691, %v1679, %v1342
      %v1713 = vsel %vm1691, %v1680, %v1344
      %v1714 = vsel %vm1691, %v1681, %v1346
      %v1715 = vsel %vm1691, %v1682, %v1348
      %v1716 = vsel %vm1691, %v1683, %v1350
      %v1717 = vsel %vm1691, %v1684, %v1352
      %v1718 = vsel %vm1691, %v1685, %v1354
      %v1719 = vsel %vm1691, %v1686, %v1356
      %v1720 = vsel %vm1691, %v1687, %v1358
      %v1721 = vsel %vm1691, %v1688, %v1360
      %v1722 = vsel %vm1691, %v1689, %v1362
      %v1723 = vsel %vm1691, %v1690, %v1364
      %vm1724 = vcmask 523264
      %v1725 = vsel %vm1724, %v1692, %v1398
      %v1726 = vsel %vm1724, %v1693, %v1400
      %v1727 = vsel %vm1724, %v1694, %v1402
      %v1728 = vsel %vm1724, %v1695, %v1404
      %v1729 = vsel %vm1724, %v1696, %v1406
      %v1730 = vsel %vm1724, %v1697, %v1408
      %v1731 = vsel %vm1724, %v1698, %v1410
      %v1732 = vsel %vm1724, %v1699, %v1412
      %v1733 = vsel %vm1724, %v1700, %v1414
      %v1734 = vsel %vm1724, %v1701, %v1416
      %v1735 = vsel %vm1724, %v1702, %v1418
      %v1736 = vsel %vm1724, %v1703, %v1420
      %v1737 = vsel %vm1724, %v1704, %v1422
      %v1738 = vsel %vm1724, %v1705, %v1424
      %v1739 = vsel %vm1724, %v1706, %v1426
      %v1740 = vsel %vm1724, %v1707, %v1428
      %v1741 = vsel %vm1724, %v1708, %v1430
      %v1742 = vsel %vm1724, %v1709, %v1432
      %v1743 = vsel %vm1724, %v1710, %v1434
      %v1744 = vsel %vm1724, %v1711, %v1436
      %v1745 = vsel %vm1724, %v1712, %v1438
      %v1746 = vsel %vm1724, %v1713, %v1440
      %v1747 = vsel %vm1724, %v1714, %v1442
      %v1748 = vsel %vm1724, %v1715, %v1444
      %v1749 = vsel %vm1724, %v1716, %v1446
      %v1750 = vsel %vm1724, %v1717, %v1448
      %v1751 = vsel %vm1724, %v1718, %v1450
      %v1752 = vsel %vm1724, %v1719, %v1452
      %v1753 = vsel %vm1724, %v1720, %v1454
      %v1754 = vsel %vm1724, %v1721, %v1456
      %v1755 = vsel %vm1724, %v1722, %v1458
      %v1756 = vsel %vm1724, %v1723, %v1460
      %v1757 = vpack.c.bf16 %v1726, %v1725
      %v1758 = vpack.c.bf16 %v1728, %v1727
      %v1759 = vpack.c.bf16 %v1730, %v1729
      %v1760 = vpack.c.bf16 %v1732, %v1731
      %v1761 = vpack.c.bf16 %v1734, %v1733
      %v1762 = vpack.c.bf16 %v1736, %v1735
      %v1763 = vpack.c.bf16 %v1738, %v1737
      %v1764 = vpack.c.bf16 %v1740, %v1739
      %v1765 = vpack.c.bf16 %v1742, %v1741
      %v1766 = vpack.c.bf16 %v1744, %v1743
      %v1767 = vpack.c.bf16 %v1746, %v1745
      %v1768 = vpack.c.bf16 %v1748, %v1747
      %v1769 = vpack.c.bf16 %v1750, %v1749
      %v1770 = vpack.c.bf16 %v1752, %v1751
      %v1771 = vpack.c.bf16 %v1754, %v1753
      %v1772 = vpack.c.bf16 %v1756, %v1755
      %v1773 = vld [vmem:[%s2] sm:$0xf]
      %v1774 = vld [vmem:[%s2 + $0x4] sm:$0xf]
      %v1775 = vld [vmem:[%s2 + $0x8] sm:$0xf]
      %v1776 = vld [vmem:[%s2 + $0xc] sm:$0xf]
      %v1777 = vld [vmem:[%s2 + $0x10] sm:$0xf]
      %v1778 = vld [vmem:[%s2 + $0x14] sm:$0xf]
      %v1779 = vld [vmem:[%s2 + $0x18] sm:$0xf]
      %v1780 = vld [vmem:[%s2 + $0x1c] sm:$0xf]
      %v1781 = vld [vmem:[%s2 + $0x20] sm:$0xf]
      %v1791 = vunpack.c.l.b16 %v1773
      %v1792 = vunpack.c.l.b16 %v1774
      %v1793 = vunpack.c.l.b16 %v1775
      %v1794 = vunpack.c.l.b16 %v1776
      %v1795 = vunpack.c.l.b16 %v1777
      %v1796 = vunpack.c.l.b16 %v1778
      %v1797 = vunpack.c.l.b16 %v1779
      %v1798 = vunpack.c.l.b16 %v1780
      %v1799 = vunpack.c.l.b16 %v1781
      %v1800 = vpack.c.b16 %v1792, %v1791
      %v1801 = vpack.c.b16 %v1794, %v1793
      %v1802 = vpack.c.b16 %v1796, %v1795
      %v1803 = vpack.c.b16 %v1798, %v1797
      %v1804 = vpack.c.b16 %v1799, %v1799
      %vm1809 = vcmask 588800
      %v1811 = vsel %vm1809, %v1757, 0
      %v1814 = vsel %vm1809, %v1758, 0
      %v1817 = vsel %vm1809, %v1759, 0
      %v1820 = vsel %vm1809, %v1760, 0
      %v1823 = vsel %vm1809, %v1761, 0
      %v1826 = vsel %vm1809, %v1762, 0
      %v1829 = vsel %vm1809, %v1763, 0
      %v1832 = vsel %vm1809, %v1764, 0
      %v1835 = vsel %vm1809, %v1765, 0
      %v1838 = vsel %vm1809, %v1766, 0
      %v1841 = vsel %vm1809, %v1767, 0
      %v1844 = vsel %vm1809, %v1768, 0
      %v1847 = vsel %vm1809, %v1769, 0
      %v1850 = vsel %vm1809, %v1770, 0
      %v1853 = vsel %vm1809, %v1771, 0
      %v1856 = vsel %vm1809, %v1772, 0
      %v1859 = vsel %vm592, %v1804, 0
      %1861 = vmatprep.subr.bf16.mxu0 0
      %1862 = vmatpush1.bf16.msra.mxu0 %v1800
      %1863 = vmatprep.subr.bf16.mxu0 0
      %1864 = vmatpush1.bf16.msra.mxu0 %v1801
      %1865 = vmatprep.subr.bf16.mxu0 0
      %1866 = vmatpush1.bf16.msra.mxu0 %v1802
      %1867 = vmatprep.subr.bf16.mxu0 0
      %1868 = vmatpush1.bf16.msra.mxu0 %v1803
      %1869 = vmatprep.subr.bf16.mxu0 0
      %1870 = vmatpush1.bf16.msra.mxu0 %v1859
      %1871 = vmatprep.subr.bf16.mxu0 0
      %1872 = vmatpush1.bf16.msra.mxu0 0
      %1873 = vmatprep.subr.bf16.mxu0 0
      %1874 = vmatpush1.bf16.msra.mxu0 0
      %1875 = vmatprep.subr.bf16.mxu0 0
      %1876 = vmatpush1.bf16.msra.mxu0 0
      %1877 = vmatprep.subr.bf16.mxu0 0
      %1878 = vmatpush1.bf16.msra.mxu0 0
      %1879 = vmatprep.subr.bf16.mxu0 0
      %1880 = vmatpush1.bf16.msra.mxu0 0
      %1881 = vmatprep.subr.bf16.mxu0 0
      %1882 = vmatpush1.bf16.msra.mxu0 0
      %1883 = vmatprep.subr.bf16.mxu0 0
      %1884 = vmatpush1.bf16.msra.mxu0 0
      %1885 = vmatprep.subr.bf16.mxu0 0
      %1886 = vmatpush1.bf16.msra.mxu0 0
      %1887 = vmatprep.subr.bf16.mxu0 0
      %1888 = vmatpush1.bf16.msra.mxu0 0
      %1889 = vmatprep.subr.bf16.mxu0 0
      %1890 = vmatpush1.bf16.msra.mxu0 0
      %1891 = vmatprep.subr.bf16.mxu0 0
      %1892 = vmatpush1.bf16.msra.mxu0 0
      %1893 = vmatprep.mubr.bf16.mxu0 0
      %1894 = vmatmul.mubr.bf16.gmra.mrb[0].mxu0 %v1811
      %v1895 = vpop.f32.mrb[0].mxu0
      %v1896 = vadd.f32 0.0, %v1895
      %v1897 = vpop.f32.mrb[0].mxu0
      %v1898 = vpop.f32.mrb[0].mxu0
      %v1899 = vadd.f32 0.0, %v1898
      %v1900 = vpop.f32.mrb[0].mxu0
      %1901 = vmatprep.mubr.bf16.mxu0 0
      %1902 = vmatmul.mubr.bf16.gmra.mrb[0].mxu0 %v1814
      %v1903 = vpop.f32.mrb[0].mxu0
      %v1904 = vadd.f32 0.0, %v1903
      %v1905 = vpop.f32.mrb[0].mxu0
      %v1906 = vpop.f32.mrb[0].mxu0
      %v1907 = vadd.f32 0.0, %v1906
      %v1908 = vpop.f32.mrb[0].mxu0
      %1909 = vmatprep.mubr.bf16.mxu0 0
      %1910 = vmatmul.mubr.bf16.gmra.mrb[0].mxu0 %v1817
      %v1911 = vpop.f32.mrb[0].mxu0
      %v1912 = vadd.f32 0.0, %v1911
      %v1913 = vpop.f32.mrb[0].mxu0
      %v1914 = vpop.f32.mrb[0].mxu0
      %v1915 = vadd.f32 0.0, %v1914
      %v1916 = vpop.f32.mrb[0].mxu0
      %1917 = vmatprep.mubr.bf16.mxu0 0
      %1918 = vmatmul.mubr.bf16.gmra.mrb[0].mxu0 %v1820
      %v1919 = vpop.f32.mrb[0].mxu0
      %v1920 = vadd.f32 0.0, %v1919
      %v1921 = vpop.f32.mrb[0].mxu0
      %v1922 = vpop.f32.mrb[0].mxu0
      %v1923 = vadd.f32 0.0, %v1922
      %v1924 = vpop.f32.mrb[0].mxu0
      %1925 = vmatprep.mubr.bf16.mxu0 0
      %1926 = vmatmul.mubr.bf16.gmra.mrb[0].mxu0 %v1823
      %v1927 = vpop.f32.mrb[0].mxu0
      %v1928 = vadd.f32 0.0, %v1927
      %v1929 = vpop.f32.mrb[0].mxu0
      %v1930 = vpop.f32.mrb[0].mxu0
      %v1931 = vadd.f32 0.0, %v1930
      %v1932 = vpop.f32.mrb[0].mxu0
      %1933 = vmatprep.mubr.bf16.mxu0 0
      %1934 = vmatmul.mubr.bf16.gmra.mrb[0].mxu0 %v1826
      %v1935 = vpop.f32.mrb[0].mxu0
      %v1936 = vadd.f32 0.0, %v1935
      %v1937 = vpop.f32.mrb[0].mxu0
      %v1938 = vpop.f32.mrb[0].mxu0
      %v1939 = vadd.f32 0.0, %v1938
      %v1940 = vpop.f32.mrb[0].mxu0
      %1941 = vmatprep.mubr.bf16.mxu0 0
      %1942 = vmatmul.mubr.bf16.gmra.mrb[0].mxu0 %v1829
      %v1943 = vpop.f32.mrb[0].mxu0
      %v1944 = vadd.f32 0.0, %v1943
      %v1945 = vpop.f32.mrb[0].mxu0
      %v1946 = vpop.f32.mrb[0].mxu0
      %v1947 = vadd.f32 0.0, %v1946
      %v1948 = vpop.f32.mrb[0].mxu0
      %1949 = vmatprep.mubr.bf16.mxu0 0
      %1950 = vmatmul.mubr.bf16.gmra.mrb[0].mxu0 %v1832
      %v1951 = vpop.f32.mrb[0].mxu0
      %v1952 = vadd.f32 0.0, %v1951
      %v1953 = vpop.f32.mrb[0].mxu0
      %v1954 = vpop.f32.mrb[0].mxu0
      %v1955 = vadd.f32 0.0, %v1954
      %v1956 = vpop.f32.mrb[0].mxu0
      %1957 = vmatprep.mubr.bf16.mxu0 0
      %1958 = vmatmul.mubr.bf16.gmra.mrb[0].mxu0 %v1835
      %v1959 = vpop.f32.mrb[0].mxu0
      %v1960 = vadd.f32 0.0, %v1959
      %v1961 = vpop.f32.mrb[0].mxu0
      %v1962 = vpop.f32.mrb[0].mxu0
      %v1963 = vadd.f32 0.0, %v1962
      %v1964 = vpop.f32.mrb[0].mxu0
      %1965 = vmatprep.mubr.bf16.mxu0 0
      %1966 = vmatmul.mubr.bf16.gmra.mrb[0].mxu0 %v1838
      %v1967 = vpop.f32.mrb[0].mxu0
      %v1968 = vadd.f32 0.0, %v1967
      %v1969 = vpop.f32.mrb[0].mxu0
      %v1970 = vpop.f32.mrb[0].mxu0
      %v1971 = vadd.f32 0.0, %v1970
      %v1972 = vpop.f32.mrb[0].mxu0
      %1973 = vmatprep.mubr.bf16.mxu0 0
      %1974 = vmatmul.mubr.bf16.gmra.mrb[0].mxu0 %v1841
      %v1975 = vpop.f32.mrb[0].mxu0
      %v1976 = vadd.f32 0.0, %v1975
      %v1977 = vpop.f32.mrb[0].mxu0
      %v1978 = vpop.f32.mrb[0].mxu0
      %v1979 = vadd.f32 0.0, %v1978
      %v1980 = vpop.f32.mrb[0].mxu0
      %1981 = vmatprep.mubr.bf16.mxu0 0
      %1982 = vmatmul.mubr.bf16.gmra.mrb[0].mxu0 %v1844
      %v1983 = vpop.f32.mrb[0].mxu0
      %v1984 = vadd.f32 0.0, %v1983
      %v1985 = vpop.f32.mrb[0].mxu0
      %v1986 = vpop.f32.mrb[0].mxu0
      %v1987 = vadd.f32 0.0, %v1986
      %v1988 = vpop.f32.mrb[0].mxu0
      %1989 = vmatprep.mubr.bf16.mxu0 0
      %1990 = vmatmul.mubr.bf16.gmra.mrb[0].mxu0 %v1847
      %v1991 = vpop.f32.mrb[0].mxu0
      %v1992 = vadd.f32 0.0, %v1991
      %v1993 = vpop.f32.mrb[0].mxu0
      %v1994 = vpop.f32.mrb[0].mxu0
      %v1995 = vadd.f32 0.0, %v1994
      %v1996 = vpop.f32.mrb[0].mxu0
      %1997 = vmatprep.mubr.bf16.mxu0 0
      %1998 = vmatmul.mubr.bf16.gmra.mrb[0].mxu0 %v1850
      %v1999 = vpop.f32.mrb[0].mxu0
      %v2000 = vadd.f32 0.0, %v1999
      %v2001 = vpop.f32.mrb[0].mxu0
      %v2002 = vpop.f32.mrb[0].mxu0
      %v2003 = vadd.f32 0.0, %v2002
      %v2004 = vpop.f32.mrb[0].mxu0
      %2005 = vmatprep.mubr.bf16.mxu0 0
      %2006 = vmatmul.mubr.bf16.gmra.mrb[0].mxu0 %v1853
      %v2007 = vpop.f32.mrb[0].mxu0
      %v2008 = vadd.f32 0.0, %v2007
      %v2009 = vpop.f32.mrb[0].mxu0
      %v2010 = vpop.f32.mrb[0].mxu0
      %v2011 = vadd.f32 0.0, %v2010
      %v2012 = vpop.f32.mrb[0].mxu0
      %2013 = vmatprep.mubr.bf16.mxu0 0
      %2014 = vmatmul.mubr.bf16.gmra.mrb[0].mxu0 %v1856
      %v2015 = vpop.f32.mrb[0].mxu0
      %v2016 = vadd.f32 0.0, %v2015
      %v2017 = vpop.f32.mrb[0].mxu0
      %v2018 = vpop.f32.mrb[0].mxu0
      %v2019 = vadd.f32 0.0, %v2018
      %v2020 = vpop.f32.mrb[0].mxu0
      %2021 = vdwg.mxu0
      %v2022 = vld [vmem:[%s3] sm:$0x1]
      %v2023 = vld [vmem:[%s4] sm:$0x1]
      %v2025 = vlaneseq
      %v2026 = vshrl.u32 %v2025, 7
      %v2027 = vsub.s32 0, %v2026
      %v2028 = vrot.slane %v2022, %v2027
      %v2030 = vmul.f32 %v1896, %v2028
      %v2031 = vmul.f32 %v1899, %v2028
      %v2032 = vmul.f32 %v1904, %v2028
      %v2033 = vmul.f32 %v1907, %v2028
      %v2034 = vmul.f32 %v1912, %v2028
      %v2035 = vmul.f32 %v1915, %v2028
      %v2036 = vmul.f32 %v1920, %v2028
      %v2037 = vmul.f32 %v1923, %v2028
      %v2038 = vmul.f32 %v1928, %v2028
      %v2039 = vmul.f32 %v1931, %v2028
      %v2040 = vmul.f32 %v1936, %v2028
      %v2041 = vmul.f32 %v1939, %v2028
      %v2042 = vmul.f32 %v1944, %v2028
      %v2043 = vmul.f32 %v1947, %v2028
      %v2044 = vmul.f32 %v1952, %v2028
      %v2045 = vmul.f32 %v1955, %v2028
      %v2046 = vmul.f32 %v1960, %v2028
      %v2047 = vmul.f32 %v1963, %v2028
      %v2048 = vmul.f32 %v1968, %v2028
      %v2049 = vmul.f32 %v1971, %v2028
      %v2050 = vmul.f32 %v1976, %v2028
      %v2051 = vmul.f32 %v1979, %v2028
      %v2052 = vmul.f32 %v1984, %v2028
      %v2053 = vmul.f32 %v1987, %v2028
      %v2054 = vmul.f32 %v1992, %v2028
      %v2055 = vmul.f32 %v1995, %v2028
      %v2056 = vmul.f32 %v2000, %v2028
      %v2057 = vmul.f32 %v2003, %v2028
      %v2058 = vmul.f32 %v2008, %v2028
      %v2059 = vmul.f32 %v2011, %v2028
      %v2060 = vmul.f32 %v2016, %v2028
      %v2061 = vmul.f32 %v2019, %v2028
      %v2063 = vlaneseq
      %v2064 = vshrl.u32 %v2063, 7
      %v2065 = vsub.s32 0, %v2064
      %v2066 = vrot.slane %v2023, %v2065
      %v2068 = vadd.f32 %v2030, %v2066
      %v2069 = vadd.f32 %v2031, %v2066
      %v2070 = vadd.f32 %v2032, %v2066
      %v2071 = vadd.f32 %v2033, %v2066
      %v2072 = vadd.f32 %v2034, %v2066
      %v2073 = vadd.f32 %v2035, %v2066
      %v2074 = vadd.f32 %v2036, %v2066
      %v2075 = vadd.f32 %v2037, %v2066
      %v2076 = vadd.f32 %v2038, %v2066
      %v2077 = vadd.f32 %v2039, %v2066
      %v2078 = vadd.f32 %v2040, %v2066
      %v2079 = vadd.f32 %v2041, %v2066
      %v2080 = vadd.f32 %v2042, %v2066
      %v2081 = vadd.f32 %v2043, %v2066
      %v2082 = vadd.f32 %v2044, %v2066
      %v2083 = vadd.f32 %v2045, %v2066
      %v2084 = vadd.f32 %v2046, %v2066
      %v2085 = vadd.f32 %v2047, %v2066
      %v2086 = vadd.f32 %v2048, %v2066
      %v2087 = vadd.f32 %v2049, %v2066
      %v2088 = vadd.f32 %v2050, %v2066
      %v2089 = vadd.f32 %v2051, %v2066
      %v2090 = vadd.f32 %v2052, %v2066
      %v2091 = vadd.f32 %v2053, %v2066
      %v2092 = vadd.f32 %v2054, %v2066
      %v2093 = vadd.f32 %v2055, %v2066
      %v2094 = vadd.f32 %v2056, %v2066
      %v2095 = vadd.f32 %v2057, %v2066
      %v2096 = vadd.f32 %v2058, %v2066
      %v2097 = vadd.f32 %v2059, %v2066
      %v2098 = vadd.f32 %v2060, %v2066
      %v2099 = vadd.f32 %v2061, %v2066
      %v2100 = vsub.f32 0.0, %v2068
      %v2101 = vsub.f32 0.0, %v2069
      %v2102 = vsub.f32 0.0, %v2070
      %v2103 = vsub.f32 0.0, %v2071
      %v2104 = vsub.f32 0.0, %v2072
      %v2105 = vsub.f32 0.0, %v2073
      %v2106 = vsub.f32 0.0, %v2074
      %v2107 = vsub.f32 0.0, %v2075
      %v2108 = vsub.f32 0.0, %v2076
      %v2109 = vsub.f32 0.0, %v2077
      %v2110 = vsub.f32 0.0, %v2078
      %v2111 = vsub.f32 0.0, %v2079
      %v2112 = vsub.f32 0.0, %v2080
      %v2113 = vsub.f32 0.0, %v2081
      %v2114 = vsub.f32 0.0, %v2082
      %v2115 = vsub.f32 0.0, %v2083
      %v2116 = vsub.f32 0.0, %v2084
      %v2117 = vsub.f32 0.0, %v2085
      %v2118 = vsub.f32 0.0, %v2086
      %v2119 = vsub.f32 0.0, %v2087
      %v2120 = vsub.f32 0.0, %v2088
      %v2121 = vsub.f32 0.0, %v2089
      %v2122 = vsub.f32 0.0, %v2090
      %v2123 = vsub.f32 0.0, %v2091
      %v2124 = vsub.f32 0.0, %v2092
      %v2125 = vsub.f32 0.0, %v2093
      %v2126 = vsub.f32 0.0, %v2094
      %v2127 = vsub.f32 0.0, %v2095
      %v2128 = vsub.f32 0.0, %v2096
      %v2129 = vsub.f32 0.0, %v2097
      %v2130 = vsub.f32 0.0, %v2098
      %v2131 = vsub.f32 0.0, %v2099
      %v2132 = vmul.f32 %v2100, 1.442695
      %v2133 = vpow.pop %v2132
      %v2134 = vmul.f32 %v2101, 1.442695
      %v2135 = vpow.pop %v2134
      %v2136 = vmul.f32 %v2102, 1.442695
      %v2137 = vpow.pop %v2136
      %v2138 = vmul.f32 %v2103, 1.442695
      %v2139 = vpow.pop %v2138
      %v2140 = vmul.f32 %v2104, 1.442695
      %v2141 = vpow.pop %v2140
      %v2142 = vmul.f32 %v2105, 1.442695
      %v2143 = vpow.pop %v2142
      %v2144 = vmul.f32 %v2106, 1.442695
      %v2145 = vpow.pop %v2144
      %v2146 = vmul.f32 %v2107, 1.442695
      %v2147 = vpow.pop %v2146
      %v2148 = vmul.f32 %v2108, 1.442695
      %v2149 = vpow.pop %v2148
      %v2150 = vmul.f32 %v2109, 1.442695
      %v2151 = vpow.pop %v2150
      %v2152 = vmul.f32 %v2110, 1.442695
      %v2153 = vpow.pop %v2152
      %v2154 = vmul.f32 %v2111, 1.442695
      %v2155 = vpow.pop %v2154
      %v2156 = vmul.f32 %v2112, 1.442695
      %v2157 = vpow.pop %v2156
      %v2158 = vmul.f32 %v2113, 1.442695
      %v2159 = vpow.pop %v2158
      %v2160 = vmul.f32 %v2114, 1.442695
      %v2161 = vpow.pop %v2160
      %v2162 = vmul.f32 %v2115, 1.442695
      %v2163 = vpow.pop %v2162
      %v2164 = vmul.f32 %v2116, 1.442695
      %v2165 = vpow.pop %v2164
      %v2166 = vmul.f32 %v2117, 1.442695
      %v2167 = vpow.pop %v2166
      %v2168 = vmul.f32 %v2118, 1.442695
      %v2169 = vpow.pop %v2168
      %v2170 = vmul.f32 %v2119, 1.442695
      %v2171 = vpow.pop %v2170
      %v2172 = vmul.f32 %v2120, 1.442695
      %v2173 = vpow.pop %v2172
      %v2174 = vmul.f32 %v2121, 1.442695
      %v2175 = vpow.pop %v2174
      %v2176 = vmul.f32 %v2122, 1.442695
      %v2177 = vpow.pop %v2176
      %v2178 = vmul.f32 %v2123, 1.442695
      %v2179 = vpow.pop %v2178
      %v2180 = vmul.f32 %v2124, 1.442695
      %v2181 = vpow.pop %v2180
      %v2182 = vmul.f32 %v2125, 1.442695
      %v2183 = vpow.pop %v2182
      %v2184 = vmul.f32 %v2126, 1.442695
      %v2185 = vpow.pop %v2184
      %v2186 = vmul.f32 %v2127, 1.442695
      %v2187 = vpow.pop %v2186
      %v2188 = vmul.f32 %v2128, 1.442695
      %v2189 = vpow.pop %v2188
      %v2190 = vmul.f32 %v2129, 1.442695
      %v2191 = vpow.pop %v2190
      %v2192 = vmul.f32 %v2130, 1.442695
      %v2193 = vpow.pop %v2192
      %v2194 = vmul.f32 %v2131, 1.442695
      %v2195 = vpow.pop %v2194
      %v2196 = vadd.f32 %v2133, 1.0
      %v2197 = vadd.f32 %v2135, 1.0
      %v2198 = vadd.f32 %v2137, 1.0
      %v2199 = vadd.f32 %v2139, 1.0
      %v2200 = vadd.f32 %v2141, 1.0
      %v2201 = vadd.f32 %v2143, 1.0
      %v2202 = vadd.f32 %v2145, 1.0
      %v2203 = vadd.f32 %v2147, 1.0
      %v2204 = vadd.f32 %v2149, 1.0
      %v2205 = vadd.f32 %v2151, 1.0
      %v2206 = vadd.f32 %v2153, 1.0
      %v2207 = vadd.f32 %v2155, 1.0
      %v2208 = vadd.f32 %v2157, 1.0
      %v2209 = vadd.f32 %v2159, 1.0
      %v2210 = vadd.f32 %v2161, 1.0
      %v2211 = vadd.f32 %v2163, 1.0
      %v2212 = vadd.f32 %v2165, 1.0
      %v2213 = vadd.f32 %v2167, 1.0
      %v2214 = vadd.f32 %v2169, 1.0
      %v2215 = vadd.f32 %v2171, 1.0
      %v2216 = vadd.f32 %v2173, 1.0
      %v2217 = vadd.f32 %v2175, 1.0
      %v2218 = vadd.f32 %v2177, 1.0
      %v2219 = vadd.f32 %v2179, 1.0
      %v2220 = vadd.f32 %v2181, 1.0
      %v2221 = vadd.f32 %v2183, 1.0
      %v2222 = vadd.f32 %v2185, 1.0
      %v2223 = vadd.f32 %v2187, 1.0
      %v2224 = vadd.f32 %v2189, 1.0
      %v2225 = vadd.f32 %v2191, 1.0
      %v2226 = vadd.f32 %v2193, 1.0
      %v2227 = vadd.f32 %v2195, 1.0
      %v2228 = vrcp.pop %v2196
      %v2229 = vrcp.pop %v2197
      %v2230 = vrcp.pop %v2198
      %v2231 = vrcp.pop %v2199
      %v2232 = vrcp.pop %v2200
      %v2233 = vrcp.pop %v2201
      %v2234 = vrcp.pop %v2202
      %v2235 = vrcp.pop %v2203
      %v2236 = vrcp.pop %v2204
      %v2237 = vrcp.pop %v2205
      %v2238 = vrcp.pop %v2206
      %v2239 = vrcp.pop %v2207
      %v2240 = vrcp.pop %v2208
      %v2241 = vrcp.pop %v2209
      %v2242 = vrcp.pop %v2210
      %v2243 = vrcp.pop %v2211
      %v2244 = vrcp.pop %v2212
      %v2245 = vrcp.pop %v2213
      %v2246 = vrcp.pop %v2214
      %v2247 = vrcp.pop %v2215
      %v2248 = vrcp.pop %v2216
      %v2249 = vrcp.pop %v2217
      %v2250 = vrcp.pop %v2218
      %v2251 = vrcp.pop %v2219
      %v2252 = vrcp.pop %v2220
      %v2253 = vrcp.pop %v2221
      %v2254 = vrcp.pop %v2222
      %v2255 = vrcp.pop %v2223
      %v2256 = vrcp.pop %v2224
      %v2257 = vrcp.pop %v2225
      %v2258 = vrcp.pop %v2226
      %v2259 = vrcp.pop %v2227
      %v2260 = vmul.f32 %v2068, %v2228
      %v2261 = vmul.f32 %v2069, %v2229
      %v2262 = vmul.f32 %v2070, %v2230
      %v2263 = vmul.f32 %v2071, %v2231
      %v2264 = vmul.f32 %v2072, %v2232
      %v2265 = vmul.f32 %v2073, %v2233
      %v2266 = vmul.f32 %v2074, %v2234
      %v2267 = vmul.f32 %v2075, %v2235
      %v2268 = vmul.f32 %v2076, %v2236
      %v2269 = vmul.f32 %v2077, %v2237
      %v2270 = vmul.f32 %v2078, %v2238
      %v2271 = vmul.f32 %v2079, %v2239
      %v2272 = vmul.f32 %v2080, %v2240
      %v2273 = vmul.f32 %v2081, %v2241
      %v2274 = vmul.f32 %v2082, %v2242
      %v2275 = vmul.f32 %v2083, %v2243
      %v2276 = vmul.f32 %v2084, %v2244
      %v2277 = vmul.f32 %v2085, %v2245
      %v2278 = vmul.f32 %v2086, %v2246
      %v2279 = vmul.f32 %v2087, %v2247
      %v2280 = vmul.f32 %v2088, %v2248
      %v2281 = vmul.f32 %v2089, %v2249
      %v2282 = vmul.f32 %v2090, %v2250
      %v2283 = vmul.f32 %v2091, %v2251
      %v2284 = vmul.f32 %v2092, %v2252
      %v2285 = vmul.f32 %v2093, %v2253
      %v2286 = vmul.f32 %v2094, %v2254
      %v2287 = vmul.f32 %v2095, %v2255
      %v2288 = vmul.f32 %v2096, %v2256
      %v2289 = vmul.f32 %v2097, %v2257
      %v2290 = vmul.f32 %v2098, %v2258
      %v2291 = vmul.f32 %v2099, %v2259
      %v2292 = vsel %vm1493, %v2260, 0.0
      %v2293 = vsel %vm1493, %v2261, 0.0
      %v2294 = vadd.f32 %v2292, %v2293
      %v2295 = vsel %vm1493, %v2262, 0.0
      %v2296 = vadd.f32 %v2294, %v2295
      %v2297 = vsel %vm1493, %v2263, 0.0
      %v2298 = vadd.f32 %v2296, %v2297
      %v2299 = vsel %vm1493, %v2264, 0.0
      %v2300 = vadd.f32 %v2298, %v2299
      %v2301 = vsel %vm1493, %v2265, 0.0
      %v2302 = vadd.f32 %v2300, %v2301
      %v2303 = vsel %vm1493, %v2266, 0.0
      %v2304 = vadd.f32 %v2302, %v2303
      %v2305 = vsel %vm1493, %v2267, 0.0
      %v2306 = vadd.f32 %v2304, %v2305
      %v2307 = vsel %vm1493, %v2268, 0.0
      %v2308 = vadd.f32 %v2306, %v2307
      %v2309 = vsel %vm1493, %v2269, 0.0
      %v2310 = vadd.f32 %v2308, %v2309
      %v2311 = vsel %vm1493, %v2270, 0.0
      %v2312 = vadd.f32 %v2310, %v2311
      %v2313 = vsel %vm1493, %v2271, 0.0
      %v2314 = vadd.f32 %v2312, %v2313
      %v2315 = vsel %vm1493, %v2272, 0.0
      %v2316 = vadd.f32 %v2314, %v2315
      %v2317 = vsel %vm1493, %v2273, 0.0
      %v2318 = vadd.f32 %v2316, %v2317
      %v2319 = vsel %vm1493, %v2274, 0.0
      %v2320 = vadd.f32 %v2318, %v2319
      %v2321 = vsel %vm1493, %v2275, 0.0
      %v2322 = vadd.f32 %v2320, %v2321
      %v2323 = vsel %vm1493, %v2276, 0.0
      %v2324 = vadd.f32 %v2322, %v2323
      %v2325 = vsel %vm1493, %v2277, 0.0
      %v2326 = vadd.f32 %v2324, %v2325
      %v2327 = vsel %vm1493, %v2278, 0.0
      %v2328 = vadd.f32 %v2326, %v2327
      %v2329 = vsel %vm1493, %v2279, 0.0
      %v2330 = vadd.f32 %v2328, %v2329
      %v2331 = vsel %vm1493, %v2280, 0.0
      %v2332 = vadd.f32 %v2330, %v2331
      %v2333 = vsel %vm1493, %v2281, 0.0
      %v2334 = vadd.f32 %v2332, %v2333
      %v2335 = vsel %vm1493, %v2282, 0.0
      %v2336 = vadd.f32 %v2334, %v2335
      %v2337 = vsel %vm1493, %v2283, 0.0
      %v2338 = vadd.f32 %v2336, %v2337
      %v2339 = vsel %vm1493, %v2284, 0.0
      %v2340 = vadd.f32 %v2338, %v2339
      %v2341 = vsel %vm1493, %v2285, 0.0
      %v2342 = vadd.f32 %v2340, %v2341
      %v2343 = vsel %vm1493, %v2286, 0.0
      %v2344 = vadd.f32 %v2342, %v2343
      %v2345 = vsel %vm1493, %v2287, 0.0
      %v2346 = vadd.f32 %v2344, %v2345
      %v2347 = vsel %vm1493, %v2288, 0.0
      %v2348 = vadd.f32 %v2346, %v2347
      %v2349 = vsel %vm1493, %v2289, 0.0
      %v2350 = vadd.f32 %v2348, %v2349
      %v2351 = vsel %vm1493, %v2290, 0.0
      %v2352 = vadd.f32 %v2350, %v2351
      %v2353 = vsel %vm1493, %v2291, 0.0
      %v2354 = vadd.f32 %v2352, %v2353
      %v2355 = vrot.slane %v2354, 4
      %v2356 = vadd.f32 %v2354, %v2355
      %v2357 = vrot.slane %v2356, 2
      %v2358 = vadd.f32 %v2356, %v2357
      %v2359 = vrot.slane %v2358, 1
      %v2360 = vadd.f32 %v2358, %v2359
      %v2361 = vrcp.pop 256.0
      %v2362 = vmul.f32 %v2360, %v2361
      %vm2363 = vcmask 57344
      %2364 = vst.msk [vmem:[%s274] sm:$0x1] %vm2363, %v2362
      %v2365 = vpack.c.bf16 %v2261, %v2260
      %v2366 = vpack.c.bf16 %v2263, %v2262
      %v2367 = vpack.c.bf16 %v2265, %v2264
      %v2368 = vpack.c.bf16 %v2267, %v2266
      %v2369 = vpack.c.bf16 %v2269, %v2268
      %v2370 = vpack.c.bf16 %v2271, %v2270
      %v2371 = vpack.c.bf16 %v2273, %v2272
      %v2372 = vpack.c.bf16 %v2275, %v2274
      %v2373 = vpack.c.bf16 %v2277, %v2276
      %v2374 = vpack.c.bf16 %v2279, %v2278
      %v2375 = vpack.c.bf16 %v2281, %v2280
      %v2376 = vpack.c.bf16 %v2283, %v2282
      %v2377 = vpack.c.bf16 %v2285, %v2284
      %v2378 = vpack.c.bf16 %v2287, %v2286
      %v2379 = vpack.c.bf16 %v2289, %v2288
      %v2380 = vpack.c.bf16 %v2291, %v2290
      %vm2381 = vcmask 60416
      %2382 = vst.msk [vmem:[%s271] sm:$0xf] %vm2381, 0
      %2383 = vst.msk [vmem:[%s271 + $0x4] sm:$0xf] %vm2381, 0
      %vm2384 = vcmask 59392
      %2385 = vst.msk [vmem:[%s271 + $0x8] sm:$0x7] %vm2384, 0
      %2386 = vst.msk [vmem:[%s271 + $0xc] sm:$0xf] %vm2381, 0
      %2387 = vst.msk [vmem:[%s271 + $0x10] sm:$0xf] %vm2381, 0
      %2388 = vst.msk [vmem:[%s271 + $0x14] sm:$0x7] %vm2384, 0
      %2389 = vst.msk [vmem:[%s271 + $0x18] sm:$0xf] %vm2381, 0
      %2390 = vst.msk [vmem:[%s271 + $0x1c] sm:$0xf] %vm2381, 0
      %2391 = vst.msk [vmem:[%s271 + $0x20] sm:$0x7] %vm2384, 0
      %2392 = vst.msk [vmem:[%s271 + $0x24] sm:$0xf] %vm2381, 0
      %2393 = vst.msk [vmem:[%s271 + $0x28] sm:$0xf] %vm2381, 0
      %2394 = vst.msk [vmem:[%s271 + $0x2c] sm:$0x7] %vm2384, 0
      %2395 = vst.msk [vmem:[%s271 + $0x30] sm:$0xf] %vm2381, 0
      %2396 = vst.msk [vmem:[%s271 + $0x34] sm:$0xf] %vm2381, 0
      %2397 = vst.msk [vmem:[%s271 + $0x38] sm:$0x7] %vm2384, 0
      %2398 = vst.msk [vmem:[%s271 + $0x3c] sm:$0xf] %vm2381, 0
      %2399 = vst.msk [vmem:[%s271 + $0x40] sm:$0xf] %vm2381, 0
      %2400 = vst.msk [vmem:[%s271 + $0x44] sm:$0x7] %vm2384, 0
      %2401 = vst.msk [vmem:[%s271 + $0x48] sm:$0xf] %vm2381, 0
      %2402 = vst.msk [vmem:[%s271 + $0x4c] sm:$0xf] %vm2381, 0
      %2403 = vst.msk [vmem:[%s271 + $0x50] sm:$0x7] %vm2384, 0
      %2404 = vst.msk [vmem:[%s271 + $0x54] sm:$0xf] %vm2381, 0
      %2405 = vst.msk [vmem:[%s271 + $0x58] sm:$0xf] %vm2381, 0
      %2406 = vst.msk [vmem:[%s271 + $0x5c] sm:$0x7] %vm2384, 0
      %2407 = vst.msk [vmem:[%s271 + $0x60] sm:$0xf] %vm2381, 0
      %2408 = vst.msk [vmem:[%s271 + $0x64] sm:$0xf] %vm2381, 0
      %2409 = vst.msk [vmem:[%s271 + $0x68] sm:$0x7] %vm2384, 0
      %2410 = vst.msk [vmem:[%s271 + $0x6c] sm:$0xf] %vm2381, 0
      %2411 = vst.msk [vmem:[%s271 + $0x70] sm:$0xf] %vm2381, 0
      %2412 = vst.msk [vmem:[%s271 + $0x74] sm:$0x7] %vm2384, 0
      %2413 = vst.msk [vmem:[%s271 + $0x78] sm:$0xf] %vm2381, 0
      %2414 = vst.msk [vmem:[%s271 + $0x7c] sm:$0xf] %vm2381, 0
      %2415 = vst.msk [vmem:[%s271 + $0x80] sm:$0x7] %vm2384, 0
      %2416 = vst.msk [vmem:[%s271 + $0x84] sm:$0xf] %vm2381, 0
      %2417 = vst.msk [vmem:[%s271 + $0x88] sm:$0xf] %vm2381, 0
      %2418 = vst.msk [vmem:[%s271 + $0x8c] sm:$0x7] %vm2384, 0
      %2419 = vst.msk [vmem:[%s271 + $0x90] sm:$0xf] %vm2381, 0
      %2420 = vst.msk [vmem:[%s271 + $0x94] sm:$0xf] %vm2381, 0
      %2421 = vst.msk [vmem:[%s271 + $0x98] sm:$0x7] %vm2384, 0
      %2422 = vst.msk [vmem:[%s271 + $0x9c] sm:$0xf] %vm2381, 0
      %2423 = vst.msk [vmem:[%s271 + $0xa0] sm:$0xf] %vm2381, 0
      %2424 = vst.msk [vmem:[%s271 + $0xa4] sm:$0x7] %vm2384, 0
      %2425 = vst.msk [vmem:[%s271 + $0xa8] sm:$0xf] %vm2381, 0
      %2426 = vst.msk [vmem:[%s271 + $0xac] sm:$0xf] %vm2381, 0
      %2427 = vst.msk [vmem:[%s271 + $0xb0] sm:$0x7] %vm2384, 0
      %2428 = vst.msk [vmem:[%s271 + $0xb4] sm:$0xf] %vm2381, 0
      %2429 = vst.msk [vmem:[%s271 + $0xb8] sm:$0xf] %vm2381, 0
      %2430 = vst.msk [vmem:[%s271 + $0xbc] sm:$0x7] %vm2384, 0
      %2431 = vst.msk [vmem:[%s271 + $0xc0] sm:$0xf] %vm2381, 0
      %2432 = vst.msk [vmem:[%s271 + $0xc4] sm:$0xf] %vm2381, 0
      %2433 = vst.msk [vmem:[%s271 + $0xc8] sm:$0x7] %vm2384, 0
      %2434 = vst.msk [vmem:[%s271 + $0xcc] sm:$0xf] %vm2381, 0
      %2435 = vst.msk [vmem:[%s271 + $0xd0] sm:$0xf] %vm2381, 0
      %2436 = vst.msk [vmem:[%s271 + $0xd4] sm:$0x7] %vm2384, 0
      %2437 = vst.msk [vmem:[%s271 + $0xd8] sm:$0xf] %vm2381, 0
      %2438 = vst.msk [vmem:[%s271 + $0xdc] sm:$0xf] %vm2381, 0
      %2439 = vst.msk [vmem:[%s271 + $0xe0] sm:$0x7] %vm2384, 0
      %2440 = vst.msk [vmem:[%s271 + $0xe4] sm:$0xf] %vm2381, 0
      %2441 = vst.msk [vmem:[%s271 + $0xe8] sm:$0xf] %vm2381, 0
      %2442 = vst.msk [vmem:[%s271 + $0xec] sm:$0x7] %vm2384, 0
      %2443 = vst.msk [vmem:[%s271 + $0xf0] sm:$0xf] %vm2381, 0
      %2444 = vst.msk [vmem:[%s271 + $0xf4] sm:$0xf] %vm2381, 0
      %2445 = vst.msk [vmem:[%s271 + $0xf8] sm:$0x7] %vm2384, 0
      %2446 = vst.msk [vmem:[%s271 + $0xfc] sm:$0xf] %vm2381, 0
      %2447 = vst.msk [vmem:[%s271 + $0x100] sm:$0xf] %vm2381, 0
      %2448 = vst.msk [vmem:[%s271 + $0x104] sm:$0x7] %vm2384, 0
      %v2465 = vunpack.c.l.b16 %v2365
      %v2466 = vunpack.c.h.b16 %v2365
      %v2467 = vunpack.c.l.b16 %v2366
      %v2468 = vunpack.c.h.b16 %v2366
      %v2469 = vunpack.c.l.b16 %v2367
      %v2470 = vunpack.c.h.b16 %v2367
      %v2471 = vunpack.c.l.b16 %v2368
      %v2472 = vunpack.c.h.b16 %v2368
      %v2473 = vunpack.c.l.b16 %v2369
      %v2474 = vunpack.c.h.b16 %v2369
      %v2475 = vunpack.c.l.b16 %v2370
      %v2476 = vunpack.c.h.b16 %v2370
      %v2477 = vunpack.c.l.b16 %v2371
      %v2478 = vunpack.c.h.b16 %v2371
      %v2479 = vunpack.c.l.b16 %v2372
      %v2480 = vunpack.c.h.b16 %v2372
      %v2481 = vunpack.c.l.b16 %v2373
      %v2482 = vunpack.c.h.b16 %v2373
      %v2483 = vunpack.c.l.b16 %v2374
      %v2484 = vunpack.c.h.b16 %v2374
      %v2485 = vunpack.c.l.b16 %v2375
      %v2486 = vunpack.c.h.b16 %v2375
      %v2487 = vunpack.c.l.b16 %v2376
      %v2488 = vunpack.c.h.b16 %v2376
      %v2489 = vunpack.c.l.b16 %v2377
      %v2490 = vunpack.c.h.b16 %v2377
      %v2491 = vunpack.c.l.b16 %v2378
      %v2492 = vunpack.c.h.b16 %v2378
      %v2493 = vunpack.c.l.b16 %v2379
      %v2494 = vunpack.c.h.b16 %v2379
      %v2495 = vunpack.c.l.b16 %v2380
      %v2496 = vunpack.c.h.b16 %v2380
      %v2497 = vpack.c.b16 %v2465, %v2465
      %v2498 = vpack.c.b16 %v2466, %v2466
      %v2499 = vpack.c.b16 %v2467, %v2467
      %v2500 = vpack.c.b16 %v2468, %v2468
      %v2501 = vpack.c.b16 %v2469, %v2469
      %v2502 = vpack.c.b16 %v2470, %v2470
      %v2503 = vpack.c.b16 %v2471, %v2471
      %v2504 = vpack.c.b16 %v2472, %v2472
      %v2505 = vpack.c.b16 %v2473, %v2473
      %v2506 = vpack.c.b16 %v2474, %v2474
      %v2507 = vpack.c.b16 %v2475, %v2475
      %v2508 = vpack.c.b16 %v2476, %v2476
      %v2509 = vpack.c.b16 %v2477, %v2477
      %v2510 = vpack.c.b16 %v2478, %v2478
      %v2511 = vpack.c.b16 %v2479, %v2479
      %v2512 = vpack.c.b16 %v2480, %v2480
      %v2513 = vpack.c.b16 %v2481, %v2481
      %v2514 = vpack.c.b16 %v2482, %v2482
      %v2515 = vpack.c.b16 %v2483, %v2483
      %v2516 = vpack.c.b16 %v2484, %v2484
      %v2517 = vpack.c.b16 %v2485, %v2485
      %v2518 = vpack.c.b16 %v2486, %v2486
      %v2519 = vpack.c.b16 %v2487, %v2487
      %v2520 = vpack.c.b16 %v2488, %v2488
      %v2521 = vpack.c.b16 %v2489, %v2489
      %v2522 = vpack.c.b16 %v2490, %v2490
      %v2523 = vpack.c.b16 %v2491, %v2491
      %v2524 = vpack.c.b16 %v2492, %v2492
      %v2525 = vpack.c.b16 %v2493, %v2493
      %v2526 = vpack.c.b16 %v2494, %v2494
      %v2527 = vpack.c.b16 %v2495, %v2495
      %v2528 = vpack.c.b16 %v2496, %v2496
      %vm2529 = vsmask.f32 1280
      %vm2530 = vsmask.f32 5392
      %vm2531 = vmor %vm2529, %vm2530
      %v2533 = vshrl.u32 %v2497, 16
      %v2535 = vrot.slane %v2533, 6
      %v2536 = vshll.u32 %v2497, 16
      %v2538 = vrot.slane %v2536, 7
      %v2539 = vor.u32 %v2535, %v2538
      %v2540 = vrot.slane %v2539, 4
      %v2542 = vshrl.u32 %v2498, 16
      %v2544 = vrot.slane %v2542, 6
      %v2545 = vshll.u32 %v2498, 16
      %v2547 = vrot.slane %v2545, 7
      %v2548 = vor.u32 %v2544, %v2547
      %v2549 = vsel %vm2531, %v2540, %v2548
      %v2550 = vrot.slane %v2548, 4
      %v2552 = vshrl.u32 %v2499, 16
      %v2554 = vrot.slane %v2552, 6
      %v2555 = vshll.u32 %v2499, 16
      %v2557 = vrot.slane %v2555, 7
      %v2558 = vor.u32 %v2554, %v2557
      %v2559 = vrot.slane %v2558, 4
      %v2561 = vshrl.u32 %v2500, 16
      %v2563 = vrot.slane %v2561, 6
      %v2564 = vshll.u32 %v2500, 16
      %v2566 = vrot.slane %v2564, 7
      %v2567 = vor.u32 %v2563, %v2566
      %v2568 = vsel %vm2531, %v2559, %v2567
      %v2569 = vrot.slane %v2567, 4
      %v2571 = vshrl.u32 %v2501, 16
      %v2573 = vrot.slane %v2571, 6
      %v2574 = vshll.u32 %v2501, 16
      %v2576 = vrot.slane %v2574, 7
      %v2577 = vor.u32 %v2573, %v2576
      %v2578 = vrot.slane %v2577, 4
      %v2580 = vshrl.u32 %v2502, 16
      %v2582 = vrot.slane %v2580, 6
      %v2583 = vshll.u32 %v2502, 16
      %v2585 = vrot.slane %v2583, 7
      %v2586 = vor.u32 %v2582, %v2585
      %v2587 = vsel %vm2531, %v2578, %v2586
      %v2588 = vrot.slane %v2586, 4
      %v2590 = vshrl.u32 %v2503, 16
      %v2592 = vrot.slane %v2590, 6
      %v2593 = vshll.u32 %v2503, 16
      %v2595 = vrot.slane %v2593, 7
      %v2596 = vor.u32 %v2592, %v2595
      %v2597 = vrot.slane %v2596, 4
      %v2599 = vshrl.u32 %v2504, 16
      %v2601 = vrot.slane %v2599, 6
      %v2602 = vshll.u32 %v2504, 16
      %v2604 = vrot.slane %v2602, 7
      %v2605 = vor.u32 %v2601, %v2604
      %v2606 = vsel %vm2531, %v2597, %v2605
      %v2607 = vrot.slane %v2605, 4
      %v2609 = vshrl.u32 %v2505, 16
      %v2611 = vrot.slane %v2609, 6
      %v2612 = vshll.u32 %v2505, 16
      %v2614 = vrot.slane %v2612, 7
      %v2615 = vor.u32 %v2611, %v2614
      %v2616 = vrot.slane %v2615, 4
      %v2618 = vshrl.u32 %v2506, 16
      %v2620 = vrot.slane %v2618, 6
      %v2621 = vshll.u32 %v2506, 16
      %v2623 = vrot.slane %v2621, 7
      %v2624 = vor.u32 %v2620, %v2623
      %v2625 = vsel %vm2531, %v2616, %v2624
      %v2626 = vrot.slane %v2624, 4
      %v2628 = vshrl.u32 %v2507, 16
      %v2630 = vrot.slane %v2628, 6
      %v2631 = vshll.u32 %v2507, 16
      %v2633 = vrot.slane %v2631, 7
      %v2634 = vor.u32 %v2630, %v2633
      %v2635 = vrot.slane %v2634, 4
      %v2637 = vshrl.u32 %v2508, 16
      %v2639 = vrot.slane %v2637, 6
      %v2640 = vshll.u32 %v2508, 16
      %v2642 = vrot.slane %v2640, 7
      %v2643 = vor.u32 %v2639, %v2642
      %v2644 = vsel %vm2531, %v2635, %v2643
      %v2645 = vrot.slane %v2643, 4
      %v2647 = vshrl.u32 %v2509, 16
      %v2649 = vrot.slane %v2647, 6
      %v2650 = vshll.u32 %v2509, 16
      %v2652 = vrot.slane %v2650, 7
      %v2653 = vor.u32 %v2649, %v2652
      %v2654 = vrot.slane %v2653, 4
      %v2656 = vshrl.u32 %v2510, 16
      %v2658 = vrot.slane %v2656, 6
      %v2659 = vshll.u32 %v2510, 16
      %v2661 = vrot.slane %v2659, 7
      %v2662 = vor.u32 %v2658, %v2661
      %v2663 = vsel %vm2531, %v2654, %v2662
      %v2664 = vrot.slane %v2662, 4
      %v2666 = vshrl.u32 %v2511, 16
      %v2668 = vrot.slane %v2666, 6
      %v2669 = vshll.u32 %v2511, 16
      %v2671 = vrot.slane %v2669, 7
      %v2672 = vor.u32 %v2668, %v2671
      %v2673 = vrot.slane %v2672, 4
      %v2675 = vshrl.u32 %v2512, 16
      %v2677 = vrot.slane %v2675, 6
      %v2678 = vshll.u32 %v2512, 16
      %v2680 = vrot.slane %v2678, 7
      %v2681 = vor.u32 %v2677, %v2680
      %v2682 = vsel %vm2531, %v2673, %v2681
      %v2683 = vrot.slane %v2681, 4
      %v2685 = vshrl.u32 %v2513, 16
      %v2687 = vrot.slane %v2685, 6
      %v2688 = vshll.u32 %v2513, 16
      %v2690 = vrot.slane %v2688, 7
      %v2691 = vor.u32 %v2687, %v2690
      %v2692 = vrot.slane %v2691, 4
      %v2694 = vshrl.u32 %v2514, 16
      %v2696 = vrot.slane %v2694, 6
      %v2697 = vshll.u32 %v2514, 16
      %v2699 = vrot.slane %v2697, 7
      %v2700 = vor.u32 %v2696, %v2699
      %v2701 = vsel %vm2531, %v2692, %v2700
      %v2702 = vrot.slane %v2700, 4
      %v2704 = vshrl.u32 %v2515, 16
      %v2706 = vrot.slane %v2704, 6
      %v2707 = vshll.u32 %v2515, 16
      %v2709 = vrot.slane %v2707, 7
      %v2710 = vor.u32 %v2706, %v2709
      %v2711 = vrot.slane %v2710, 4
      %v2713 = vshrl.u32 %v2516, 16
      %v2715 = vrot.slane %v2713, 6
      %v2716 = vshll.u32 %v2516, 16
      %v2718 = vrot.slane %v2716, 7
      %v2719 = vor.u32 %v2715, %v2718
      %v2720 = vsel %vm2531, %v2711, %v2719
      %v2721 = vrot.slane %v2719, 4
      %v2723 = vshrl.u32 %v2517, 16
      %v2725 = vrot.slane %v2723, 6
      %v2726 = vshll.u32 %v2517, 16
      %v2728 = vrot.slane %v2726, 7
      %v2729 = vor.u32 %v2725, %v2728
      %v2730 = vrot.slane %v2729, 4
      %v2732 = vshrl.u32 %v2518, 16
      %v2734 = vrot.slane %v2732, 6
      %v2735 = vshll.u32 %v2518, 16
      %v2737 = vrot.slane %v2735, 7
      %v2738 = vor.u32 %v2734, %v2737
      %v2739 = vsel %vm2531, %v2730, %v2738
      %v2740 = vrot.slane %v2738, 4
      %v2742 = vshrl.u32 %v2519, 16
      %v2744 = vrot.slane %v2742, 6
      %v2745 = vshll.u32 %v2519, 16
      %v2747 = vrot.slane %v2745, 7
      %v2748 = vor.u32 %v2744, %v2747
      %v2749 = vrot.slane %v2748, 4
      %v2751 = vshrl.u32 %v2520, 16
      %v2753 = vrot.slane %v2751, 6
      %v2754 = vshll.u32 %v2520, 16
      %v2756 = vrot.slane %v2754, 7
      %v2757 = vor.u32 %v2753, %v2756
      %v2758 = vsel %vm2531, %v2749, %v2757
      %v2759 = vrot.slane %v2757, 4
      %v2761 = vshrl.u32 %v2521, 16
      %v2763 = vrot.slane %v2761, 6
      %v2764 = vshll.u32 %v2521, 16
      %v2766 = vrot.slane %v2764, 7
      %v2767 = vor.u32 %v2763, %v2766
      %v2768 = vrot.slane %v2767, 4
      %v2770 = vshrl.u32 %v2522, 16
      %v2772 = vrot.slane %v2770, 6
      %v2773 = vshll.u32 %v2522, 16
      %v2775 = vrot.slane %v2773, 7
      %v2776 = vor.u32 %v2772, %v2775
      %v2777 = vsel %vm2531, %v2768, %v2776
      %v2778 = vrot.slane %v2776, 4
      %v2780 = vshrl.u32 %v2523, 16
      %v2782 = vrot.slane %v2780, 6
      %v2783 = vshll.u32 %v2523, 16
      %v2785 = vrot.slane %v2783, 7
      %v2786 = vor.u32 %v2782, %v2785
      %v2787 = vrot.slane %v2786, 4
      %v2789 = vshrl.u32 %v2524, 16
      %v2791 = vrot.slane %v2789, 6
      %v2792 = vshll.u32 %v2524, 16
      %v2794 = vrot.slane %v2792, 7
      %v2795 = vor.u32 %v2791, %v2794
      %v2796 = vsel %vm2531, %v2787, %v2795
      %v2797 = vrot.slane %v2795, 4
      %v2799 = vshrl.u32 %v2525, 16
      %v2801 = vrot.slane %v2799, 6
      %v2802 = vshll.u32 %v2525, 16
      %v2804 = vrot.slane %v2802, 7
      %v2805 = vor.u32 %v2801, %v2804
      %v2806 = vrot.slane %v2805, 4
      %v2808 = vshrl.u32 %v2526, 16
      %v2810 = vrot.slane %v2808, 6
      %v2811 = vshll.u32 %v2526, 16
      %v2813 = vrot.slane %v2811, 7
      %v2814 = vor.u32 %v2810, %v2813
      %v2815 = vsel %vm2531, %v2806, %v2814
      %v2816 = vrot.slane %v2814, 4
      %v2818 = vshrl.u32 %v2527, 16
      %v2820 = vrot.slane %v2818, 6
      %v2821 = vshll.u32 %v2527, 16
      %v2823 = vrot.slane %v2821, 7
      %v2824 = vor.u32 %v2820, %v2823
      %v2825 = vrot.slane %v2824, 4
      %v2827 = vshrl.u32 %v2528, 16
      %v2829 = vrot.slane %v2827, 6
      %v2830 = vshll.u32 %v2528, 16
      %v2832 = vrot.slane %v2830, 7
      %v2833 = vor.u32 %v2829, %v2832
      %v2834 = vsel %vm2531, %v2825, %v2833
      %v2835 = vrot.slane %v2833, 4
      %s2884 = scalar_lea.vmem %s271, 36
      %vm2885 = vcmask 60417
      %vm2886 = vsmask.f32 7942
      %vm2887 = vmand %vm2885, %vm2886
      %v2888 = vld [vmem:[%s2884] sm:$0xe]
      %v2889 = vsel %vm2887, %v2539, %v2888
      %2890 = vst [vmem:[%s2884] sm:$0xe] %v2889
      %2891 = vst.msk [vmem:[%s2884 + $0x4] sm:$0xf] %vm2381, %v2549
      %vm2892 = vcmask 58368
      %vm2893 = vmand %vm2892, %vm2529
      %v2894 = vld [vmem:[%s2884 + $0x8] sm:$0x3]
      %v2895 = vsel %vm2893, %v2550, %v2894
      %2896 = vst [vmem:[%s2884 + $0x8] sm:$0x3] %v2895
      %v2897 = vld [vmem:[%s2884 + $0xc] sm:$0xe]
      %v2898 = vsel %vm2887, %v2558, %v2897
      %2899 = vst [vmem:[%s2884 + $0xc] sm:$0xe] %v2898
      %2900 = vst.msk [vmem:[%s2884 + $0x10] sm:$0xf] %vm2381, %v2568
      %v2901 = vld [vmem:[%s2884 + $0x14] sm:$0x3]
      %v2902 = vsel %vm2893, %v2569, %v2901
      %2903 = vst [vmem:[%s2884 + $0x14] sm:$0x3] %v2902
      %v2904 = vld [vmem:[%s2884 + $0x18] sm:$0xe]
      %v2905 = vsel %vm2887, %v2577, %v2904
      %2906 = vst [vmem:[%s2884 + $0x18] sm:$0xe] %v2905
      %2907 = vst.msk [vmem:[%s2884 + $0x1c] sm:$0xf] %vm2381, %v2587
      %v2908 = vld [vmem:[%s2884 + $0x20] sm:$0x3]
      %v2909 = vsel %vm2893, %v2588, %v2908
      %2910 = vst [vmem:[%s2884 + $0x20] sm:$0x3] %v2909
      %v2911 = vld [vmem:[%s2884 + $0x24] sm:$0xe]
      %v2912 = vsel %vm2887, %v2596, %v2911
      %2913 = vst [vmem:[%s2884 + $0x24] sm:$0xe] %v2912
      %2914 = vst.msk [vmem:[%s2884 + $0x28] sm:$0xf] %vm2381, %v2606
      %v2915 = vld [vmem:[%s2884 + $0x2c] sm:$0x3]
      %v2916 = vsel %vm2893, %v2607, %v2915
      %2917 = vst [vmem:[%s2884 + $0x2c] sm:$0x3] %v2916
      %v2918 = vld [vmem:[%s2884 + $0x30] sm:$0xe]
      %v2919 = vsel %vm2887, %v2615, %v2918
      %2920 = vst [vmem:[%s2884 + $0x30] sm:$0xe] %v2919
      %2921 = vst.msk [vmem:[%s2884 + $0x34] sm:$0xf] %vm2381, %v2625
      %v2922 = vld [vmem:[%s2884 + $0x38] sm:$0x3]
      %v2923 = vsel %vm2893, %v2626, %v2922
      %2924 = vst [vmem:[%s2884 + $0x38] sm:$0x3] %v2923
      %v2925 = vld [vmem:[%s2884 + $0x3c] sm:$0xe]
      %v2926 = vsel %vm2887, %v2634, %v2925
      %2927 = vst [vmem:[%s2884 + $0x3c] sm:$0xe] %v2926
      %2928 = vst.msk [vmem:[%s2884 + $0x40] sm:$0xf] %vm2381, %v2644
      %v2929 = vld [vmem:[%s2884 + $0x44] sm:$0x3]
      %v2930 = vsel %vm2893, %v2645, %v2929
      %2931 = vst [vmem:[%s2884 + $0x44] sm:$0x3] %v2930
      %v2932 = vld [vmem:[%s2884 + $0x48] sm:$0xe]
      %v2933 = vsel %vm2887, %v2653, %v2932
      %2934 = vst [vmem:[%s2884 + $0x48] sm:$0xe] %v2933
      %2935 = vst.msk [vmem:[%s2884 + $0x4c] sm:$0xf] %vm2381, %v2663
      %v2936 = vld [vmem:[%s2884 + $0x50] sm:$0x3]
      %v2937 = vsel %vm2893, %v2664, %v2936
      %2938 = vst [vmem:[%s2884 + $0x50] sm:$0x3] %v2937
      %v2939 = vld [vmem:[%s2884 + $0x54] sm:$0xe]
      %v2940 = vsel %vm2887, %v2672, %v2939
      %2941 = vst [vmem:[%s2884 + $0x54] sm:$0xe] %v2940
      %2942 = vst.msk [vmem:[%s2884 + $0x58] sm:$0xf] %vm2381, %v2682
      %v2943 = vld [vmem:[%s2884 + $0x5c] sm:$0x3]
      %v2944 = vsel %vm2893, %v2683, %v2943
      %2945 = vst [vmem:[%s2884 + $0x5c] sm:$0x3] %v2944
      %v2946 = vld [vmem:[%s2884 + $0x60] sm:$0xe]
      %v2947 = vsel %vm2887, %v2691, %v2946
      %2948 = vst [vmem:[%s2884 + $0x60] sm:$0xe] %v2947
      %2949 = vst.msk [vmem:[%s2884 + $0x64] sm:$0xf] %vm2381, %v2701
      %v2950 = vld [vmem:[%s2884 + $0x68] sm:$0x3]
      %v2951 = vsel %vm2893, %v2702, %v2950
      %2952 = vst [vmem:[%s2884 + $0x68] sm:$0x3] %v2951
      %v2953 = vld [vmem:[%s2884 + $0x6c] sm:$0xe]
      %v2954 = vsel %vm2887, %v2710, %v2953
      %2955 = vst [vmem:[%s2884 + $0x6c] sm:$0xe] %v2954
      %2956 = vst.msk [vmem:[%s2884 + $0x70] sm:$0xf] %vm2381, %v2720
      %v2957 = vld [vmem:[%s2884 + $0x74] sm:$0x3]
      %v2958 = vsel %vm2893, %v2721, %v2957
      %2959 = vst [vmem:[%s2884 + $0x74] sm:$0x3] %v2958
      %v2960 = vld [vmem:[%s2884 + $0x78] sm:$0xe]
      %v2961 = vsel %vm2887, %v2729, %v2960
      %2962 = vst [vmem:[%s2884 + $0x78] sm:$0xe] %v2961
      %2963 = vst.msk [vmem:[%s2884 + $0x7c] sm:$0xf] %vm2381, %v2739
      %v2964 = vld [vmem:[%s2884 + $0x80] sm:$0x3]
      %v2965 = vsel %vm2893, %v2740, %v2964
      %2966 = vst [vmem:[%s2884 + $0x80] sm:$0x3] %v2965
      %v2967 = vld [vmem:[%s2884 + $0x84] sm:$0xe]
      %v2968 = vsel %vm2887, %v2748, %v2967
      %2969 = vst [vmem:[%s2884 + $0x84] sm:$0xe] %v2968
      %2970 = vst.msk [vmem:[%s2884 + $0x88] sm:$0xf] %vm2381, %v2758
      %v2971 = vld [vmem:[%s2884 + $0x8c] sm:$0x3]
      %v2972 = vsel %vm2893, %v2759, %v2971
      %2973 = vst [vmem:[%s2884 + $0x8c] sm:$0x3] %v2972
      %v2974 = vld [vmem:[%s2884 + $0x90] sm:$0xe]
      %v2975 = vsel %vm2887, %v2767, %v2974
      %2976 = vst [vmem:[%s2884 + $0x90] sm:$0xe] %v2975
      %2977 = vst.msk [vmem:[%s2884 + $0x94] sm:$0xf] %vm2381, %v2777
      %v2978 = vld [vmem:[%s2884 + $0x98] sm:$0x3]
      %v2979 = vsel %vm2893, %v2778, %v2978
      %2980 = vst [vmem:[%s2884 + $0x98] sm:$0x3] %v2979
      %v2981 = vld [vmem:[%s2884 + $0x9c] sm:$0xe]
      %v2982 = vsel %vm2887, %v2786, %v2981
      %2983 = vst [vmem:[%s2884 + $0x9c] sm:$0xe] %v2982
      %2984 = vst.msk [vmem:[%s2884 + $0xa0] sm:$0xf] %vm2381, %v2796
      %v2985 = vld [vmem:[%s2884 + $0xa4] sm:$0x3]
      %v2986 = vsel %vm2893, %v2797, %v2985
      %2987 = vst [vmem:[%s2884 + $0xa4] sm:$0x3] %v2986
      %v2988 = vld [vmem:[%s2884 + $0xa8] sm:$0xe]
      %v2989 = vsel %vm2887, %v2805, %v2988
      %2990 = vst [vmem:[%s2884 + $0xa8] sm:$0xe] %v2989
      %2991 = vst.msk [vmem:[%s2884 + $0xac] sm:$0xf] %vm2381, %v2815
      %v2992 = vld [vmem:[%s2884 + $0xb0] sm:$0x3]
      %v2993 = vsel %vm2893, %v2816, %v2992
      %2994 = vst [vmem:[%s2884 + $0xb0] sm:$0x3] %v2993
      %v2995 = vld [vmem:[%s2884 + $0xb4] sm:$0xe]
      %v2996 = vsel %vm2887, %v2824, %v2995
      %2997 = vst [vmem:[%s2884 + $0xb4] sm:$0xe] %v2996
      %2998 = vst.msk [vmem:[%s2884 + $0xb8] sm:$0xf] %vm2381, %v2834
      %v2999 = vld [vmem:[%s2884 + $0xbc] sm:$0x3]
      %v3000 = vsel %vm2893, %v2835, %v2999
      %3001 = vst [vmem:[%s2884 + $0xbc] sm:$0x3] %v3000
      %p3002 = scmp.lt.s32.totalorder %s18, 1
      %s3003 = scalar_select %p3002, %s18, 1
      %s3004 = smul.addr %s3003, 66
      %s3005 = smul.addr %s3004, 4
      %s3006 = scalar_lea.vmem %s5, %s3005
      %p3007 = scmp.lt.s32.totalorder %s18, 1
      %s3008 = scalar_select %p3007, %s18, 1
      %s3009 = scalar_lea.vmem %s6, %s3008
      // Predicated region
      $region41: #{spp_bottleneck_pallas.5} parent=39 // pred_check
        %p3010 = pneg %p151
      $region42: #{spp_bottleneck_pallas.5} parent=39 // pred_check_branch
        %3012 = sbr.rel (%p3010) target = $region44
      $region43: #{spp_bottleneck_pallas.5} parent=39 // pred_region
        _
      $region44: #{spp_bottleneck_pallas.5} parent=39 // pred_fallthru
        _
      // Predicated region
      $region45: #{spp_bottleneck_pallas.5} parent=39 // pred_check
        %p3013 = pneg %p177
      $region46: #{spp_bottleneck_pallas.5} parent=39 // pred_check_branch
        %3015 = sbr.rel (%p3013) target = $region48
      $region47: #{spp_bottleneck_pallas.5} parent=39 // pred_region
        _
      $region48: #{spp_bottleneck_pallas.5} parent=39 // pred_fallthru
        _
    $region40: #{spp_bottleneck_pallas.5} parent=5 // pred_fallthru
      _
    %p3016 = scmp.le.s32.totalorder 2, %s13
    // Predicated region
    $region49: #{spp_bottleneck_pallas.5} parent=5 // pred_check
      %p3017 = pneg %p3016
    $region50: #{spp_bottleneck_pallas.5} parent=5 // pred_check_branch
      %3019 = sbr.rel (%p3017) target = $region52
    $region51: #{spp_bottleneck_pallas.5} parent=5 // pred_region
      %s3020 = ssub.s32 %s13, 2
      // Predicated region
      $region53: #{spp_bottleneck_pallas.5} parent=51 // pred_check
        %p3021 = pneg %p157
      $region54: #{spp_bottleneck_pallas.5} parent=51 // pred_check_branch
        %3023 = sbr.rel (%p3021) target = $region56
      $region55: #{spp_bottleneck_pallas.5} parent=51 // pred_region
        %p3024 = scmp.lt.s32.totalorder %s19, 1
        %s3025 = scalar_select %p3024, %s19, 1
        %s3026 = smul.addr %s3025, 66
        %s3027 = smul.addr %s3026, 4
        %s3028 = scalar_lea.vmem %s5, %s3027
      $region56: #{spp_bottleneck_pallas.5} parent=51 // pred_fallthru
        _
      // Predicated region
      $region57: #{spp_bottleneck_pallas.5} parent=51 // pred_check
        %p3029 = pneg %p183
      $region58: #{spp_bottleneck_pallas.5} parent=51 // pred_check_branch
        %3031 = sbr.rel (%p3029) target = $region60
      $region59: #{spp_bottleneck_pallas.5} parent=51 // pred_region
        %p3032 = scmp.lt.s32.totalorder %s19, 1
        %s3033 = scalar_select %p3032, %s19, 1
        %s3034 = scalar_lea.vmem %s6, %s3033
      $region60: #{spp_bottleneck_pallas.5} parent=51 // pred_fallthru
        _
    $region52: #{spp_bottleneck_pallas.5} parent=5 // pred_fallthru
      _
  $region6: #{spp_bottleneck_pallas.5} parent=0 // loop_footer
    %s17 = sadd.s32 1, %s13
  $region7: #{spp_bottleneck_pallas.5} parent=0 // loop_footer_branch
    %12 = sbr.rel target = $region3
  $region8: #{spp_bottleneck_pallas.5} parent=0 // loop_exit
    _

// kernel: spp_bottleneck_pallas.7
$region0: #{spp_bottleneck_pallas.7}
  #allocation0 [shape = 'u32[]', space=smem, size = 0x4, offset = 0x4, fixed_abs, tag = 'smem constant byte address 0x4 - core index']
  #allocation1 [shape = 'u32[144,128]{1,0:T(1,128)}', space=vmem, size = 0x12000, scoped, tag = 'internal scratch']
  %s0 = inlined_call_operand.vmem [shape: bf16[2,256,8], index: 0, kind: input, shape index: {}]
  %s1 = inlined_call_operand.vmem [shape: bf16[2,20,20,8], index: 1, kind: input, shape index: {}]
  %s2 = inlined_call_operand.vmem [shape: bf16[2,22,22,8], index: 2, kind: input, shape index: {}]
  %s3 = inlined_call_operand.vmem [shape: bf16[2,16,16,8], index: 3, kind: input, shape index: {}]
  %s4 = inlined_call_operand.vmem [shape: f32[2,1,8], index: 4, kind: input, shape index: {}]
  %s5 = inlined_call_operand.vmem [shape: f32[2,1,8], index: 5, kind: input, shape index: {}]
  %s6 = inlined_call_operand.vmem [shape: f32[2,1,8], index: 6, kind: input, shape index: {}]
  %s7 = inlined_call_operand.vmem [shape: bf16[32,16], index: 7, kind: input, shape index: {}]
  %s8 = inlined_call_operand.vmem [shape: f32[1,16], index: 8, kind: input, shape index: {}]
  %s9 = inlined_call_operand.vmem [shape: f32[1,16], index: 9, kind: input, shape index: {}]
  %s10 = inlined_call_operand.vmem [shape: f32[2,256,16], index: 10, kind: output, shape index: {}]
  %s11 = sld [smem:[#allocation0]]
  $region73: #{spp_bottleneck_pallas.7} parent=0
    _
  %s13 = ssub.s32 1, %s11
  %s14 = scalar_select 0, %s13, %s11
  loop: start=0, step=1, limit=4
  $region2: #{spp_bottleneck_pallas.7} parent=0 // loop_pre_header
    _
  $region3: #{spp_bottleneck_pallas.7} parent=0 // loop_header
    %s16 = sphi 0, %s20
    %p17 = scmp.ge.s32.totalorder %s16, 4
    %s26 = sphi 0, %s28
    %s29 = sphi 0, %s26
    %s30 = sphi 0, %s29
    %s46 = sphi 0, %s30
    %s52 = sphi 0, %s54
    %s55 = sphi 0, %s52
    %s56 = sphi 0, %s55
    %s72 = sphi 0, %s56
    %s78 = sphi 0, %s80
    %s81 = sphi 0, %s78
    %s82 = sphi 0, %s81
    %s98 = sphi 0, %s82
    %s104 = sphi 0, %s106
    %s107 = sphi 0, %s104
    %s108 = sphi 0, %s107
    %s124 = sphi 0, %s108
    %s130 = sphi 0, %s132
    %s133 = sphi 0, %s130
    %s134 = sphi 0, %s133
    %s150 = sphi 0, %s134
    %s156 = sphi 0, %s158
    %s159 = sphi 0, %s156
    %s160 = sphi 0, %s159
    %s176 = sphi 0, %s160
    %s182 = sphi 0, %s184
    %s185 = sphi 0, %s182
    %s186 = sphi 0, %s185
    %s202 = sphi 0, %s186
    %s206 = sphi 0, %s206
    %s208 = sphi 0, %s206
    %s209 = sphi 0, %s208
    %s223 = sphi 0, %s209
    %s227 = sphi 0, %s227
    %s229 = sphi 0, %s227
    %s230 = sphi 0, %s229
    %s244 = sphi 0, %s230
    %s248 = sphi 0, %s248
    %s250 = sphi 0, %s248
    %s251 = sphi 0, %s250
    %s265 = sphi 0, %s251
    %s271 = sphi 0, %s273
    %s274 = sphi 0, %s271
    %s275 = sphi 0, %s274
    %s291 = sphi 0, %s275
  $region4: #{spp_bottleneck_pallas.7} parent=0 // loop_header_branch
    %19 = sbr.rel (%p17) target = $region8
  $region5: #{spp_bottleneck_pallas.7} parent=0 // loop_body
    %s21 = ssub.s32 %s16, 1
    %s22 = ssub.s32 %s16, 2
    %s23 = sadd.s32 %s16, 1
    %s24 = ssub.s32 %s16, %s23
    %p25 = scmp.eq.s32.totalorder %s24, 0
    %s27 = sadd.s32 %s26, 1
    %s28 = scalar_select %p25, %s26, %s27
    %p31 = pneg %p25
    %p32 = scmp.eq.s32.totalorder %s16, 1
    %p33 = por %p31, %p32
    %p34 = scmp.ne.s32.totalorder %s26, %s29
    %p35 = scmp.eq.s32.totalorder %s16, 0
    %p36 = por %p34, %p35
    %p37 = scmp.ne.s32.totalorder %s26, %s29
    %p38 = scmp.eq.s32.totalorder %s21, 1
    %p39 = por %p37, %p38
    %p40 = scmp.ne.s32.totalorder %s29, %s30
    %p41 = scmp.eq.s32.totalorder %s21, 0
    %p42 = por %p40, %p41
    %p43 = scmp.ne.s32.totalorder %s29, %s30
    %p44 = scmp.eq.s32.totalorder %s22, 1
    %p45 = por %p43, %p44
    %p47 = scmp.ne.s32.totalorder %s30, %s46
    %p48 = scmp.eq.s32.totalorder %s22, 0
    %p49 = por %p47, %p48
    %s50 = ssub.s32 %s16, %s23
    %p51 = scmp.eq.s32.totalorder %s50, 0
    %s53 = sadd.s32 %s52, 1
    %s54 = scalar_select %p51, %s52, %s53
    %p57 = pneg %p51
    %p58 = scmp.eq.s32.totalorder %s16, 1
    %p59 = por %p57, %p58
    %p60 = scmp.ne.s32.totalorder %s52, %s55
    %p61 = scmp.eq.s32.totalorder %s16, 0
    %p62 = por %p60, %p61
    %p63 = scmp.ne.s32.totalorder %s52, %s55
    %p64 = scmp.eq.s32.totalorder %s21, 1
    %p65 = por %p63, %p64
    %p66 = scmp.ne.s32.totalorder %s55, %s56
    %p67 = scmp.eq.s32.totalorder %s21, 0
    %p68 = por %p66, %p67
    %p69 = scmp.ne.s32.totalorder %s55, %s56
    %p70 = scmp.eq.s32.totalorder %s22, 1
    %p71 = por %p69, %p70
    %p73 = scmp.ne.s32.totalorder %s56, %s72
    %p74 = scmp.eq.s32.totalorder %s22, 0
    %p75 = por %p73, %p74
    %s76 = ssub.s32 %s16, %s23
    %p77 = scmp.eq.s32.totalorder %s76, 0
    %s79 = sadd.s32 %s78, 1
    %s80 = scalar_select %p77, %s78, %s79
    %p83 = pneg %p77
    %p84 = scmp.eq.s32.totalorder %s16, 1
    %p85 = por %p83, %p84
    %p86 = scmp.ne.s32.totalorder %s78, %s81
    %p87 = scmp.eq.s32.totalorder %s16, 0
    %p88 = por %p86, %p87
    %p89 = scmp.ne.s32.totalorder %s78, %s81
    %p90 = scmp.eq.s32.totalorder %s21, 1
    %p91 = por %p89, %p90
    %p92 = scmp.ne.s32.totalorder %s81, %s82
    %p93 = scmp.eq.s32.totalorder %s21, 0
    %p94 = por %p92, %p93
    %p95 = scmp.ne.s32.totalorder %s81, %s82
    %p96 = scmp.eq.s32.totalorder %s22, 1
    %p97 = por %p95, %p96
    %p99 = scmp.ne.s32.totalorder %s82, %s98
    %p100 = scmp.eq.s32.totalorder %s22, 0
    %p101 = por %p99, %p100
    %s102 = ssub.s32 %s16, %s23
    %p103 = scmp.eq.s32.totalorder %s102, 0
    %s105 = sadd.s32 %s104, 1
    %s106 = scalar_select %p103, %s104, %s105
    %p109 = pneg %p103
    %p110 = scmp.eq.s32.totalorder %s16, 1
    %p111 = por %p109, %p110
    %p112 = scmp.ne.s32.totalorder %s104, %s107
    %p113 = scmp.eq.s32.totalorder %s16, 0
    %p114 = por %p112, %p113
    %p115 = scmp.ne.s32.totalorder %s104, %s107
    %p116 = scmp.eq.s32.totalorder %s21, 1
    %p117 = por %p115, %p116
    %p118 = scmp.ne.s32.totalorder %s107, %s108
    %p119 = scmp.eq.s32.totalorder %s21, 0
    %p120 = por %p118, %p119
    %p121 = scmp.ne.s32.totalorder %s107, %s108
    %p122 = scmp.eq.s32.totalorder %s22, 1
    %p123 = por %p121, %p122
    %p125 = scmp.ne.s32.totalorder %s108, %s124
    %p126 = scmp.eq.s32.totalorder %s22, 0
    %p127 = por %p125, %p126
    %s128 = ssub.s32 %s16, %s23
    %p129 = scmp.eq.s32.totalorder %s128, 0
    %s131 = sadd.s32 %s130, 1
    %s132 = scalar_select %p129, %s130, %s131
    %p135 = pneg %p129
    %p136 = scmp.eq.s32.totalorder %s16, 1
    %p137 = por %p135, %p136
    %p138 = scmp.ne.s32.totalorder %s130, %s133
    %p139 = scmp.eq.s32.totalorder %s16, 0
    %p140 = por %p138, %p139
    %p141 = scmp.ne.s32.totalorder %s130, %s133
    %p142 = scmp.eq.s32.totalorder %s21, 1
    %p143 = por %p141, %p142
    %p144 = scmp.ne.s32.totalorder %s133, %s134
    %p145 = scmp.eq.s32.totalorder %s21, 0
    %p146 = por %p144, %p145
    %p147 = scmp.ne.s32.totalorder %s133, %s134
    %p148 = scmp.eq.s32.totalorder %s22, 1
    %p149 = por %p147, %p148
    %p151 = scmp.ne.s32.totalorder %s134, %s150
    %p152 = scmp.eq.s32.totalorder %s22, 0
    %p153 = por %p151, %p152
    %s154 = ssub.s32 %s16, %s23
    %p155 = scmp.eq.s32.totalorder %s154, 0
    %s157 = sadd.s32 %s156, 1
    %s158 = scalar_select %p155, %s156, %s157
    %p161 = pneg %p155
    %p162 = scmp.eq.s32.totalorder %s16, 1
    %p163 = por %p161, %p162
    %p164 = scmp.ne.s32.totalorder %s156, %s159
    %p165 = scmp.eq.s32.totalorder %s16, 0
    %p166 = por %p164, %p165
    %p167 = scmp.ne.s32.totalorder %s156, %s159
    %p168 = scmp.eq.s32.totalorder %s21, 1
    %p169 = por %p167, %p168
    %p170 = scmp.ne.s32.totalorder %s159, %s160
    %p171 = scmp.eq.s32.totalorder %s21, 0
    %p172 = por %p170, %p171
    %p173 = scmp.ne.s32.totalorder %s159, %s160
    %p174 = scmp.eq.s32.totalorder %s22, 1
    %p175 = por %p173, %p174
    %p177 = scmp.ne.s32.totalorder %s160, %s176
    %p178 = scmp.eq.s32.totalorder %s22, 0
    %p179 = por %p177, %p178
    %s180 = ssub.s32 %s16, %s23
    %p181 = scmp.eq.s32.totalorder %s180, 0
    %s183 = sadd.s32 %s182, 1
    %s184 = scalar_select %p181, %s182, %s183
    %p187 = pneg %p181
    %p188 = scmp.eq.s32.totalorder %s16, 1
    %p189 = por %p187, %p188
    %p190 = scmp.ne.s32.totalorder %s182, %s185
    %p191 = scmp.eq.s32.totalorder %s16, 0
    %p192 = por %p190, %p191
    %p193 = scmp.ne.s32.totalorder %s182, %s185
    %p194 = scmp.eq.s32.totalorder %s21, 1
    %p195 = por %p193, %p194
    %p196 = scmp.ne.s32.totalorder %s185, %s186
    %p197 = scmp.eq.s32.totalorder %s21, 0
    %p198 = por %p196, %p197
    %p199 = scmp.ne.s32.totalorder %s185, %s186
    %p200 = scmp.eq.s32.totalorder %s22, 1
    %p201 = por %p199, %p200
    %p203 = scmp.ne.s32.totalorder %s186, %s202
    %p204 = scmp.eq.s32.totalorder %s22, 0
    %p205 = por %p203, %p204
    %s207 = sadd.s32 %s206, 1
    %p210 = scmp.eq.s32.totalorder %s16, 1
    %p211 = scmp.ne.s32.totalorder %s206, %s208
    %p212 = scmp.eq.s32.totalorder %s16, 0
    %p213 = por %p211, %p212
    %p214 = scmp.ne.s32.totalorder %s206, %s208
    %p215 = scmp.eq.s32.totalorder %s21, 1
    %p216 = por %p214, %p215
    %p217 = scmp.ne.s32.totalorder %s208, %s209
    %p218 = scmp.eq.s32.totalorder %s21, 0
    %p219 = por %p217, %p218
    %p220 = scmp.ne.s32.totalorder %s208, %s209
    %p221 = scmp.eq.s32.totalorder %s22, 1
    %p222 = por %p220, %p221
    %p224 = scmp.ne.s32.totalorder %s209, %s223
    %p225 = scmp.eq.s32.totalorder %s22, 0
    %p226 = por %p224, %p225
    %s228 = sadd.s32 %s227, 1
    %p231 = scmp.eq.s32.totalorder %s16, 1
    %p232 = scmp.ne.s32.totalorder %s227, %s229
    %p233 = scmp.eq.s32.totalorder %s16, 0
    %p234 = por %p232, %p233
    %p235 = scmp.ne.s32.totalorder %s227, %s229
    %p236 = scmp.eq.s32.totalorder %s21, 1
    %p237 = por %p235, %p236
    %p238 = scmp.ne.s32.totalorder %s229, %s230
    %p239 = scmp.eq.s32.totalorder %s21, 0
    %p240 = por %p238, %p239
    %p241 = scmp.ne.s32.totalorder %s229, %s230
    %p242 = scmp.eq.s32.totalorder %s22, 1
    %p243 = por %p241, %p242
    %p245 = scmp.ne.s32.totalorder %s230, %s244
    %p246 = scmp.eq.s32.totalorder %s22, 0
    %p247 = por %p245, %p246
    %s249 = sadd.s32 %s248, 1
    %p252 = scmp.eq.s32.totalorder %s16, 1
    %p253 = scmp.ne.s32.totalorder %s248, %s250
    %p254 = scmp.eq.s32.totalorder %s16, 0
    %p255 = por %p253, %p254
    %p256 = scmp.ne.s32.totalorder %s248, %s250
    %p257 = scmp.eq.s32.totalorder %s21, 1
    %p258 = por %p256, %p257
    %p259 = scmp.ne.s32.totalorder %s250, %s251
    %p260 = scmp.eq.s32.totalorder %s21, 0
    %p261 = por %p259, %p260
    %p262 = scmp.ne.s32.totalorder %s250, %s251
    %p263 = scmp.eq.s32.totalorder %s22, 1
    %p264 = por %p262, %p263
    %p266 = scmp.ne.s32.totalorder %s251, %s265
    %p267 = scmp.eq.s32.totalorder %s22, 0
    %p268 = por %p266, %p267
    %s269 = ssub.s32 %s16, %s23
    %p270 = scmp.eq.s32.totalorder %s269, 0
    %s272 = sadd.s32 %s271, 1
    %s273 = scalar_select %p270, %s271, %s272
    %p276 = pneg %p270
    %p277 = scmp.eq.s32.totalorder %s16, 1
    %p278 = por %p276, %p277
    %p279 = scmp.ne.s32.totalorder %s271, %s274
    %p280 = scmp.eq.s32.totalorder %s16, 0
    %p281 = por %p279, %p280
    %p282 = scmp.ne.s32.totalorder %s271, %s274
    %p283 = scmp.eq.s32.totalorder %s21, 1
    %p284 = por %p282, %p283
    %p285 = scmp.ne.s32.totalorder %s274, %s275
    %p286 = scmp.eq.s32.totalorder %s21, 0
    %p287 = por %p285, %p286
    %p288 = scmp.ne.s32.totalorder %s274, %s275
    %p289 = scmp.eq.s32.totalorder %s22, 1
    %p290 = por %p288, %p289
    %p292 = scmp.ne.s32.totalorder %s275, %s291
    %p293 = scmp.eq.s32.totalorder %s22, 0
    %p294 = por %p292, %p293
    %p295 = scmp.le.s32.totalorder 1, %s16
    %p296 = scmp.lt.s32.totalorder %s16, 3
    %p297 = pnand %p295, %p296
    %p298 = pneg %p297
    // Predicated region
    $region9: #{spp_bottleneck_pallas.7} parent=5 // pred_check
      _
    $region10: #{spp_bottleneck_pallas.7} parent=5 // pred_check_branch
      %300 = sbr.rel (%p297) target = $region12
    $region11: #{spp_bottleneck_pallas.7} parent=5 // pred_region
      %s301 = ssub.s32 %s16, 1
      // Predicated region
      $region13: #{spp_bottleneck_pallas.7} parent=11 // pred_check
        %p302 = pneg %p219
      $region14: #{spp_bottleneck_pallas.7} parent=11 // pred_check_branch
        %304 = sbr.rel (%p302) target = $region16
      $region15: #{spp_bottleneck_pallas.7} parent=11 // pred_region
        _
      $region16: #{spp_bottleneck_pallas.7} parent=11 // pred_fallthru
        _
      // Predicated region
      $region17: #{spp_bottleneck_pallas.7} parent=11 // pred_check
        %p305 = pneg %p240
      $region18: #{spp_bottleneck_pallas.7} parent=11 // pred_check_branch
        %307 = sbr.rel (%p305) target = $region20
      $region19: #{spp_bottleneck_pallas.7} parent=11 // pred_region
        _
      $region20: #{spp_bottleneck_pallas.7} parent=11 // pred_fallthru
        _
      // Predicated region
      $region21: #{spp_bottleneck_pallas.7} parent=11 // pred_check
        %p308 = pneg %p261
      $region22: #{spp_bottleneck_pallas.7} parent=11 // pred_check_branch
        %310 = sbr.rel (%p308) target = $region24
      $region23: #{spp_bottleneck_pallas.7} parent=11 // pred_region
        _
      $region24: #{spp_bottleneck_pallas.7} parent=11 // pred_fallthru
        _
    $region12: #{spp_bottleneck_pallas.7} parent=5 // pred_fallthru
      _
    %p311 = scmp.lt.s32.totalorder %s16, 2
    // Predicated region
    $region25: #{spp_bottleneck_pallas.7} parent=5 // pred_check
      %p312 = pneg %p311
    $region26: #{spp_bottleneck_pallas.7} parent=5 // pred_check_branch
      %314 = sbr.rel (%p312) target = $region28
    $region27: #{spp_bottleneck_pallas.7} parent=5 // pred_region
      // Predicated region
      $region29: #{spp_bottleneck_pallas.7} parent=27 // pred_check
        %p315 = pneg %p36
      $region30: #{spp_bottleneck_pallas.7} parent=27 // pred_check_branch
        %317 = sbr.rel (%p315) target = $region32
      $region31: #{spp_bottleneck_pallas.7} parent=27 // pred_region
        %p318 = scmp.lt.s32.totalorder %s16, 1
        %s319 = scalar_select %p318, %s16, 1
        %s320 = smul.addr %s319, 32
        %s321 = smul.addr %s320, 4
        %s322 = scalar_lea.vmem %s0, %s321
      $region32: #{spp_bottleneck_pallas.7} parent=27 // pred_fallthru
        _
      // Predicated region
      $region33: #{spp_bottleneck_pallas.7} parent=27 // pred_check
        %p323 = pneg %p62
      $region34: #{spp_bottleneck_pallas.7} parent=27 // pred_check_branch
        %325 = sbr.rel (%p323) target = $region36
      $region35: #{spp_bottleneck_pallas.7} parent=27 // pred_region
        %p326 = scmp.lt.s32.totalorder %s16, 1
        %s327 = scalar_select %p326, %s16, 1
        %s328 = smul.addr %s327, 60
        %s329 = smul.addr %s328, 4
        %s330 = scalar_lea.vmem %s1, %s329
      $region36: #{spp_bottleneck_pallas.7} parent=27 // pred_fallthru
        _
      // Predicated region
      $region37: #{spp_bottleneck_pallas.7} parent=27 // pred_check
        %p331 = pneg %p88
      $region38: #{spp_bottleneck_pallas.7} parent=27 // pred_check_branch
        %333 = sbr.rel (%p331) target = $region40
      $region39: #{spp_bottleneck_pallas.7} parent=27 // pred_region
        %p334 = scmp.lt.s32.totalorder %s16, 1
        %s335 = scalar_select %p334, %s16, 1
        %s336 = smul.addr %s335, 66
        %s337 = smul.addr %s336, 4
        %s338 = scalar_lea.vmem %s2, %s337
      $region40: #{spp_bottleneck_pallas.7} parent=27 // pred_fallthru
        _
      // Predicated region
      $region41: #{spp_bottleneck_pallas.7} parent=27 // pred_check
        %p339 = pneg %p114
      $region42: #{spp_bottleneck_pallas.7} parent=27 // pred_check_branch
        %341 = sbr.rel (%p339) target = $region44
      $region43: #{spp_bottleneck_pallas.7} parent=27 // pred_region
        %p342 = scmp.lt.s32.totalorder %s16, 1
        %s343 = scalar_select %p342, %s16, 1
        %s344 = smul.addr %s343, 32
        %s345 = smul.addr %s344, 4
        %s346 = scalar_lea.vmem %s3, %s345
      $region44: #{spp_bottleneck_pallas.7} parent=27 // pred_fallthru
        _
      // Predicated region
      $region45: #{spp_bottleneck_pallas.7} parent=27 // pred_check
        %p347 = pneg %p140
      $region46: #{spp_bottleneck_pallas.7} parent=27 // pred_check_branch
        %349 = sbr.rel (%p347) target = $region48
      $region47: #{spp_bottleneck_pallas.7} parent=27 // pred_region
        %p350 = scmp.lt.s32.totalorder %s16, 1
        %s351 = scalar_select %p350, %s16, 1
        %s352 = scalar_lea.vmem %s4, %s351
      $region48: #{spp_bottleneck_pallas.7} parent=27 // pred_fallthru
        _
      // Predicated region
      $region49: #{spp_bottleneck_pallas.7} parent=27 // pred_check
        %p353 = pneg %p166
      $region50: #{spp_bottleneck_pallas.7} parent=27 // pred_check_branch
        %355 = sbr.rel (%p353) target = $region52
      $region51: #{spp_bottleneck_pallas.7} parent=27 // pred_region
        %p356 = scmp.lt.s32.totalorder %s16, 1
        %s357 = scalar_select %p356, %s16, 1
        %s358 = scalar_lea.vmem %s5, %s357
      $region52: #{spp_bottleneck_pallas.7} parent=27 // pred_fallthru
        _
      // Predicated region
      $region53: #{spp_bottleneck_pallas.7} parent=27 // pred_check
        %p359 = pneg %p192
      $region54: #{spp_bottleneck_pallas.7} parent=27 // pred_check_branch
        %361 = sbr.rel (%p359) target = $region56
      $region55: #{spp_bottleneck_pallas.7} parent=27 // pred_region
        %p362 = scmp.lt.s32.totalorder %s16, 1
        %s363 = scalar_select %p362, %s16, 1
        %s364 = scalar_lea.vmem %s6, %s363
      $region56: #{spp_bottleneck_pallas.7} parent=27 // pred_fallthru
        _
    $region28: #{spp_bottleneck_pallas.7} parent=5 // pred_fallthru
      _
    %p365 = scmp.le.s32.totalorder 1, %s16
    %p366 = scmp.lt.s32.totalorder %s16, 3
    %p367 = pnand %p365, %p366
    %p368 = pneg %p367
    // Predicated region
    $region57: #{spp_bottleneck_pallas.7} parent=5 // pred_check
      _
    $region58: #{spp_bottleneck_pallas.7} parent=5 // pred_check_branch
      %370 = sbr.rel (%p367) target = $region60
    $region59: #{spp_bottleneck_pallas.7} parent=5 // pred_region
      %s371 = ssub.s32 %s16, 1
      %p372 = scmp.lt.s32.totalorder %s21, 1
      %s373 = scalar_select %p372, %s21, 1
      %s374 = smul.addr %s373, 32
      %s375 = smul.addr %s374, 4
      %s376 = scalar_lea.vmem %s0, %s375
      %p377 = pneg %p42
      %p378 = pneg %p39
      %p379 = scmp.lt.s32.totalorder %s21, 1
      %s380 = scalar_select %p379, %s21, 1
      %s381 = smul.addr %s380, 60
      %s382 = smul.addr %s381, 4
      %s383 = scalar_lea.vmem %s1, %s382
      %p384 = pneg %p68
      %p385 = pneg %p65
      %p386 = scmp.lt.s32.totalorder %s21, 1
      %s387 = scalar_select %p386, %s21, 1
      %s388 = smul.addr %s387, 66
      %s389 = smul.addr %s388, 4
      %s390 = scalar_lea.vmem %s2, %s389
      %p391 = pneg %p94
      %p392 = pneg %p91
      %p393 = scmp.lt.s32.totalorder %s21, 1
      %s394 = scalar_select %p393, %s21, 1
      %s395 = smul.addr %s394, 32
      %s396 = smul.addr %s395, 4
      %s397 = scalar_lea.vmem %s3, %s396
      %p398 = pneg %p120
      %p399 = pneg %p117
      %p400 = scmp.lt.s32.totalorder %s21, 1
      %s401 = scalar_select %p400, %s21, 1
      %s402 = scalar_lea.vmem %s4, %s401
      %p403 = pneg %p146
      %p404 = pneg %p143
      %p405 = scmp.lt.s32.totalorder %s21, 1
      %s406 = scalar_select %p405, %s21, 1
      %s407 = scalar_lea.vmem %s5, %s406
      %p408 = pneg %p172
      %p409 = pneg %p169
      %p410 = scmp.lt.s32.totalorder %s21, 1
      %s411 = scalar_select %p410, %s21, 1
      %s412 = scalar_lea.vmem %s6, %s411
      %p413 = pneg %p198
      %p414 = pneg %p195
      %p415 = pneg %p219
      %p416 = pneg %p216
      %p417 = pneg %p240
      %p418 = pneg %p237
      %p419 = pneg %p261
      %p420 = pneg %p258
      %p421 = pneg %p287
      %p422 = pneg %p284
      %p423 = scmp.lt.s32.totalorder %s21, 1
      %s424 = scalar_select %p423, %s21, 1
      %s425 = smul.addr %s424, 32
      %s426 = smul.addr %s425, 8
      %s427 = scalar_lea.vmem %s10, %s426
      %p428 = scmp.lt.s32.totalorder %s21, 1
      %s429 = scalar_select %p428, %s21, 1
      %s430 = smul.addr %s429, 32
      %s431 = smul.addr %s430, 4
      %s432 = scalar_lea.vmem %s0, %s431
      %p433 = scmp.lt.s32.totalorder %s21, 1
      %s434 = scalar_select %p433, %s21, 1
      %s435 = smul.addr %s434, 60
      %s436 = smul.addr %s435, 4
      %s437 = scalar_lea.vmem %s1, %s436
      %p438 = scmp.lt.s32.totalorder %s21, 1
      %s439 = scalar_select %p438, %s21, 1
      %s440 = smul.addr %s439, 66
      %s441 = smul.addr %s440, 4
      %s442 = scalar_lea.vmem %s2, %s441
      %p443 = scmp.lt.s32.totalorder %s21, 1
      %s444 = scalar_select %p443, %s21, 1
      %s445 = smul.addr %s444, 32
      %s446 = smul.addr %s445, 4
      %s447 = scalar_lea.vmem %s3, %s446
      %p448 = scmp.lt.s32.totalorder %s21, 1
      %s449 = scalar_select %p448, %s21, 1
      %s450 = scalar_lea.vmem %s4, %s449
      %p451 = scmp.lt.s32.totalorder %s21, 1
      %s452 = scalar_select %p451, %s21, 1
      %s453 = scalar_lea.vmem %s5, %s452
      %p454 = scmp.lt.s32.totalorder %s21, 1
      %s455 = scalar_select %p454, %s21, 1
      %s456 = scalar_lea.vmem %s6, %s455
      %p457 = scmp.lt.s32.totalorder %s21, 1
      %s458 = scalar_select %p457, %s21, 1
      %s459 = smul.addr %s458, 32
      %s460 = smul.addr %s459, 8
      %s461 = scalar_lea.vmem %s10, %s460
      %v463 = vld [vmem:[%s432] sm:$0xf]
      %v464 = vld [vmem:[%s432 + $0x4] sm:$0xf]
      %v465 = vld [vmem:[%s432 + $0x8] sm:$0xf]
      %v466 = vld [vmem:[%s432 + $0xc] sm:$0xf]
      %v467 = vld [vmem:[%s432 + $0x10] sm:$0xf]
      %v468 = vld [vmem:[%s432 + $0x14] sm:$0xf]
      %v469 = vld [vmem:[%s432 + $0x18] sm:$0xf]
      %v470 = vld [vmem:[%s432 + $0x1c] sm:$0xf]
      %v471 = vld [vmem:[%s432 + $0x20] sm:$0xf]
      %v472 = vld [vmem:[%s432 + $0x24] sm:$0xf]
      %v473 = vld [vmem:[%s432 + $0x28] sm:$0xf]
      %v474 = vld [vmem:[%s432 + $0x2c] sm:$0xf]
      %v475 = vld [vmem:[%s432 + $0x30] sm:$0xf]
      %v476 = vld [vmem:[%s432 + $0x34] sm:$0xf]
      %v477 = vld [vmem:[%s432 + $0x38] sm:$0xf]
      %v478 = vld [vmem:[%s432 + $0x3c] sm:$0xf]
      %v479 = vld [vmem:[%s432 + $0x40] sm:$0xf]
      %v480 = vld [vmem:[%s432 + $0x44] sm:$0xf]
      %v481 = vld [vmem:[%s432 + $0x48] sm:$0xf]
      %v482 = vld [vmem:[%s432 + $0x4c] sm:$0xf]
      %v483 = vld [vmem:[%s432 + $0x50] sm:$0xf]
      %v484 = vld [vmem:[%s432 + $0x54] sm:$0xf]
      %v485 = vld [vmem:[%s432 + $0x58] sm:$0xf]
      %v486 = vld [vmem:[%s432 + $0x5c] sm:$0xf]
      %v487 = vld [vmem:[%s432 + $0x60] sm:$0xf]
      %v488 = vld [vmem:[%s432 + $0x64] sm:$0xf]
      %v489 = vld [vmem:[%s432 + $0x68] sm:$0xf]
      %v490 = vld [vmem:[%s432 + $0x6c] sm:$0xf]
      %v491 = vld [vmem:[%s432 + $0x70] sm:$0xf]
      %v492 = vld [vmem:[%s432 + $0x74] sm:$0xf]
      %v493 = vld [vmem:[%s432 + $0x78] sm:$0xf]
      %v494 = vld [vmem:[%s432 + $0x7c] sm:$0xf]
      %s495 = scalar_lea.vmem %s437, 24
      %v496 = vld [vmem:[%s495] sm:$0xe]
      %v497 = vld [vmem:[%s495 + $0x4] sm:$0xf]
      %v498 = vld [vmem:[%s495 + $0x8] sm:$0x1]
      %v499 = vld [vmem:[%s495 + $0xc] sm:$0xe]
      %v500 = vld [vmem:[%s495 + $0x10] sm:$0xf]
      %v501 = vld [vmem:[%s495 + $0x14] sm:$0x1]
      %v502 = vld [vmem:[%s495 + $0x18] sm:$0xe]
      %v503 = vld [vmem:[%s495 + $0x1c] sm:$0xf]
      %v504 = vld [vmem:[%s495 + $0x20] sm:$0x1]
      %v505 = vld [vmem:[%s495 + $0x24] sm:$0xe]
      %v506 = vld [vmem:[%s495 + $0x28] sm:$0xf]
      %v507 = vld [vmem:[%s495 + $0x2c] sm:$0x1]
      %v508 = vld [vmem:[%s495 + $0x30] sm:$0xe]
      %v509 = vld [vmem:[%s495 + $0x34] sm:$0xf]
      %v510 = vld [vmem:[%s495 + $0x38] sm:$0x1]
      %v511 = vld [vmem:[%s495 + $0x3c] sm:$0xe]
      %v512 = vld [vmem:[%s495 + $0x40] sm:$0xf]
      %v513 = vld [vmem:[%s495 + $0x44] sm:$0x1]
      %v514 = vld [vmem:[%s495 + $0x48] sm:$0xe]
      %v515 = vld [vmem:[%s495 + $0x4c] sm:$0xf]
      %v516 = vld [vmem:[%s495 + $0x50] sm:$0x1]
      %v517 = vld [vmem:[%s495 + $0x54] sm:$0xe]
      %v518 = vld [vmem:[%s495 + $0x58] sm:$0xf]
      %v519 = vld [vmem:[%s495 + $0x5c] sm:$0x1]
      %v520 = vld [vmem:[%s495 + $0x60] sm:$0xe]
      %v521 = vld [vmem:[%s495 + $0x64] sm:$0xf]
      %v522 = vld [vmem:[%s495 + $0x68] sm:$0x1]
      %v523 = vld [vmem:[%s495 + $0x6c] sm:$0xe]
      %v524 = vld [vmem:[%s495 + $0x70] sm:$0xf]
      %v525 = vld [vmem:[%s495 + $0x74] sm:$0x1]
      %v526 = vld [vmem:[%s495 + $0x78] sm:$0xe]
      %v527 = vld [vmem:[%s495 + $0x7c] sm:$0xf]
      %v528 = vld [vmem:[%s495 + $0x80] sm:$0x1]
      %v529 = vld [vmem:[%s495 + $0x84] sm:$0xe]
      %v530 = vld [vmem:[%s495 + $0x88] sm:$0xf]
      %v531 = vld [vmem:[%s495 + $0x8c] sm:$0x1]
      %v532 = vld [vmem:[%s495 + $0x90] sm:$0xe]
      %v533 = vld [vmem:[%s495 + $0x94] sm:$0xf]
      %v534 = vld [vmem:[%s495 + $0x98] sm:$0x1]
      %v535 = vld [vmem:[%s495 + $0x9c] sm:$0xe]
      %v536 = vld [vmem:[%s495 + $0xa0] sm:$0xf]
      %v537 = vld [vmem:[%s495 + $0xa4] sm:$0x1]
      %v538 = vld [vmem:[%s495 + $0xa8] sm:$0xe]
      %v539 = vld [vmem:[%s495 + $0xac] sm:$0xf]
      %v540 = vld [vmem:[%s495 + $0xb0] sm:$0x1]
      %v541 = vld [vmem:[%s495 + $0xb4] sm:$0xe]
      %v542 = vld [vmem:[%s495 + $0xb8] sm:$0xf]
      %v543 = vld [vmem:[%s495 + $0xbc] sm:$0x1]
      %v544 = vunpack.c.l.bf16 %v496
      %v545 = vunpack.c.l.bf16 %v497
      %v546 = vunpack.c.l.bf16 %v498
      %v547 = vunpack.c.l.bf16 %v499
      %v548 = vunpack.c.l.bf16 %v500
      %v549 = vunpack.c.l.bf16 %v501
      %v550 = vunpack.c.l.bf16 %v502
      %v551 = vunpack.c.l.bf16 %v503
      %v552 = vunpack.c.l.bf16 %v504
      %v553 = vunpack.c.l.bf16 %v505
      %v554 = vunpack.c.l.bf16 %v506
      %v555 = vunpack.c.l.bf16 %v507
      %v556 = vunpack.c.l.bf16 %v508
      %v557 = vunpack.c.l.bf16 %v509
      %v558 = vunpack.c.l.bf16 %v510
      %v559 = vunpack.c.l.bf16 %v511
      %v560 = vunpack.c.l.bf16 %v512
      %v561 = vunpack.c.l.bf16 %v513
      %v562 = vunpack.c.l.bf16 %v514
      %v563 = vunpack.c.l.bf16 %v515
      %v564 = vunpack.c.l.bf16 %v516
      %v565 = vunpack.c.l.bf16 %v517
      %v566 = vunpack.c.l.bf16 %v518
      %v567 = vunpack.c.l.bf16 %v519
      %v568 = vunpack.c.l.bf16 %v520
      %v569 = vunpack.c.l.bf16 %v521
      %v570 = vunpack.c.l.bf16 %v522
      %v571 = vunpack.c.l.bf16 %v523
      %v572 = vunpack.c.l.bf16 %v524
      %v573 = vunpack.c.l.bf16 %v525
      %v574 = vunpack.c.l.bf16 %v526
      %v575 = vunpack.c.l.bf16 %v527
      %v576 = vunpack.c.l.bf16 %v528
      %v577 = vunpack.c.l.bf16 %v529
      %v578 = vunpack.c.l.bf16 %v530
      %v579 = vunpack.c.l.bf16 %v531
      %v580 = vunpack.c.l.bf16 %v532
      %v581 = vunpack.c.l.bf16 %v533
      %v582 = vunpack.c.l.bf16 %v534
      %v583 = vunpack.c.l.bf16 %v535
      %v584 = vunpack.c.l.bf16 %v536
      %v585 = vunpack.c.l.bf16 %v537
      %v586 = vunpack.c.l.bf16 %v538
      %v587 = vunpack.c.l.bf16 %v539
      %v588 = vunpack.c.l.bf16 %v540
      %v589 = vunpack.c.l.bf16 %v541
      %v590 = vunpack.c.l.bf16 %v542
      %v591 = vunpack.c.l.bf16 %v543
      %vm640 = vcmask 1045504
      %v641 = vrot.slane %v544, 2
      %v642 = vrot.slane %v545, 2
      %v643 = vsel %vm640, %v641, %v642
      %v644 = vrot.slane %v546, 2
      %v645 = vsel %vm640, %v642, %v644
      %v646 = vrot.slane %v547, 2
      %v647 = vrot.slane %v548, 2
      %v648 = vsel %vm640, %v646, %v647
      %v649 = vrot.slane %v549, 2
      %v650 = vsel %vm640, %v647, %v649
      %v651 = vrot.slane %v550, 2
      %v652 = vrot.slane %v551, 2
      %v653 = vsel %vm640, %v651, %v652
      %v654 = vrot.slane %v552, 2
      %v655 = vsel %vm640, %v652, %v654
      %v656 = vrot.slane %v553, 2
      %v657 = vrot.slane %v554, 2
      %v658 = vsel %vm640, %v656, %v657
      %v659 = vrot.slane %v555, 2
      %v660 = vsel %vm640, %v657, %v659
      %v661 = vrot.slane %v556, 2
      %v662 = vrot.slane %v557, 2
      %v663 = vsel %vm640, %v661, %v662
      %v664 = vrot.slane %v558, 2
      %v665 = vsel %vm640, %v662, %v664
      %v666 = vrot.slane %v559, 2
      %v667 = vrot.slane %v560, 2
      %v668 = vsel %vm640, %v666, %v667
      %v669 = vrot.slane %v561, 2
      %v670 = vsel %vm640, %v667, %v669
      %v671 = vrot.slane %v562, 2
      %v672 = vrot.slane %v563, 2
      %v673 = vsel %vm640, %v671, %v672
      %v674 = vrot.slane %v564, 2
      %v675 = vsel %vm640, %v672, %v674
      %v676 = vrot.slane %v565, 2
      %v677 = vrot.slane %v566, 2
      %v678 = vsel %vm640, %v676, %v677
      %v679 = vrot.slane %v567, 2
      %v680 = vsel %vm640, %v677, %v679
      %v681 = vrot.slane %v568, 2
      %v682 = vrot.slane %v569, 2
      %v683 = vsel %vm640, %v681, %v682
      %v684 = vrot.slane %v570, 2
      %v685 = vsel %vm640, %v682, %v684
      %v686 = vrot.slane %v571, 2
      %v687 = vrot.slane %v572, 2
      %v688 = vsel %vm640, %v686, %v687
      %v689 = vrot.slane %v573, 2
      %v690 = vsel %vm640, %v687, %v689
      %v691 = vrot.slane %v574, 2
      %v692 = vrot.slane %v575, 2
      %v693 = vsel %vm640, %v691, %v692
      %v694 = vrot.slane %v576, 2
      %v695 = vsel %vm640, %v692, %v694
      %v696 = vrot.slane %v577, 2
      %v697 = vrot.slane %v578, 2
      %v698 = vsel %vm640, %v696, %v697
      %v699 = vrot.slane %v579, 2
      %v700 = vsel %vm640, %v697, %v699
      %v701 = vrot.slane %v580, 2
      %v702 = vrot.slane %v581, 2
      %v703 = vsel %vm640, %v701, %v702
      %v704 = vrot.slane %v582, 2
      %v705 = vsel %vm640, %v702, %v704
      %v706 = vrot.slane %v583, 2
      %v707 = vrot.slane %v584, 2
      %v708 = vsel %vm640, %v706, %v707
      %v709 = vrot.slane %v585, 2
      %v710 = vsel %vm640, %v707, %v709
      %v711 = vrot.slane %v586, 2
      %v712 = vrot.slane %v587, 2
      %v713 = vsel %vm640, %v711, %v712
      %v714 = vrot.slane %v588, 2
      %v715 = vsel %vm640, %v712, %v714
      %v716 = vrot.slane %v589, 2
      %v717 = vrot.slane %v590, 2
      %v718 = vsel %vm640, %v716, %v717
      %v719 = vrot.slane %v591, 2
      %v720 = vsel %vm640, %v717, %v719
      %v753 = vld [vmem:[%s450] sm:$0x1]
      %v755 = vlaneseq
      %v756 = vshrl.u32 %v755, 7
      %v757 = vsub.s32 0, %v756
      %v758 = vrot.slane %v753, %v757
      %v760 = vmul.f32 %v643, %v758
      %v761 = vmul.f32 %v645, %v758
      %v762 = vmul.f32 %v648, %v758
      %v763 = vmul.f32 %v650, %v758
      %v764 = vmul.f32 %v653, %v758
      %v765 = vmul.f32 %v655, %v758
      %v766 = vmul.f32 %v658, %v758
      %v767 = vmul.f32 %v660, %v758
      %v768 = vmul.f32 %v663, %v758
      %v769 = vmul.f32 %v665, %v758
      %v770 = vmul.f32 %v668, %v758
      %v771 = vmul.f32 %v670, %v758
      %v772 = vmul.f32 %v673, %v758
      %v773 = vmul.f32 %v675, %v758
      %v774 = vmul.f32 %v678, %v758
      %v775 = vmul.f32 %v680, %v758
      %v776 = vmul.f32 %v683, %v758
      %v777 = vmul.f32 %v685, %v758
      %v778 = vmul.f32 %v688, %v758
      %v779 = vmul.f32 %v690, %v758
      %v780 = vmul.f32 %v693, %v758
      %v781 = vmul.f32 %v695, %v758
      %v782 = vmul.f32 %v698, %v758
      %v783 = vmul.f32 %v700, %v758
      %v784 = vmul.f32 %v703, %v758
      %v785 = vmul.f32 %v705, %v758
      %v786 = vmul.f32 %v708, %v758
      %v787 = vmul.f32 %v710, %v758
      %v788 = vmul.f32 %v713, %v758
      %v789 = vmul.f32 %v715, %v758
      %v790 = vmul.f32 %v718, %v758
      %v791 = vmul.f32 %v720, %v758
      %v792 = vpack.c.bf16 %v761, %v760
      %v793 = vpack.c.bf16 %v763, %v762
      %v794 = vpack.c.bf16 %v765, %v764
      %v795 = vpack.c.bf16 %v767, %v766
      %v796 = vpack.c.bf16 %v769, %v768
      %v797 = vpack.c.bf16 %v771, %v770
      %v798 = vpack.c.bf16 %v773, %v772
      %v799 = vpack.c.bf16 %v775, %v774
      %v800 = vpack.c.bf16 %v777, %v776
      %v801 = vpack.c.bf16 %v779, %v778
      %v802 = vpack.c.bf16 %v781, %v780
      %v803 = vpack.c.bf16 %v783, %v782
      %v804 = vpack.c.bf16 %v785, %v784
      %v805 = vpack.c.bf16 %v787, %v786
      %v806 = vpack.c.bf16 %v789, %v788
      %v807 = vpack.c.bf16 %v791, %v790
      %s808 = scalar_lea.vmem %s442, 36
      %v809 = vld [vmem:[%s808] sm:$0xe]
      %v810 = vld [vmem:[%s808 + $0x4] sm:$0xf]
      %v811 = vld [vmem:[%s808 + $0x8] sm:$0x3]
      %v812 = vld [vmem:[%s808 + $0xc] sm:$0xe]
      %v813 = vld [vmem:[%s808 + $0x10] sm:$0xf]
      %v814 = vld [vmem:[%s808 + $0x14] sm:$0x3]
      %v815 = vld [vmem:[%s808 + $0x18] sm:$0xe]
      %v816 = vld [vmem:[%s808 + $0x1c] sm:$0xf]
      %v817 = vld [vmem:[%s808 + $0x20] sm:$0x3]
      %v818 = vld [vmem:[%s808 + $0x24] sm:$0xe]
      %v819 = vld [vmem:[%s808 + $0x28] sm:$0xf]
      %v820 = vld [vmem:[%s808 + $0x2c] sm:$0x3]
      %v821 = vld [vmem:[%s808 + $0x30] sm:$0xe]
      %v822 = vld [vmem:[%s808 + $0x34] sm:$0xf]
      %v823 = vld [vmem:[%s808 + $0x38] sm:$0x3]
      %v824 = vld [vmem:[%s808 + $0x3c] sm:$0xe]
      %v825 = vld [vmem:[%s808 + $0x40] sm:$0xf]
      %v826 = vld [vmem:[%s808 + $0x44] sm:$0x3]
      %v827 = vld [vmem:[%s808 + $0x48] sm:$0xe]
      %v828 = vld [vmem:[%s808 + $0x4c] sm:$0xf]
      %v829 = vld [vmem:[%s808 + $0x50] sm:$0x3]
      %v830 = vld [vmem:[%s808 + $0x54] sm:$0xe]
      %v831 = vld [vmem:[%s808 + $0x58] sm:$0xf]
      %v832 = vld [vmem:[%s808 + $0x5c] sm:$0x3]
      %v833 = vld [vmem:[%s808 + $0x60] sm:$0xe]
      %v834 = vld [vmem:[%s808 + $0x64] sm:$0xf]
      %v835 = vld [vmem:[%s808 + $0x68] sm:$0x3]
      %v836 = vld [vmem:[%s808 + $0x6c] sm:$0xe]
      %v837 = vld [vmem:[%s808 + $0x70] sm:$0xf]
      %v838 = vld [vmem:[%s808 + $0x74] sm:$0x3]
      %v839 = vld [vmem:[%s808 + $0x78] sm:$0xe]
      %v840 = vld [vmem:[%s808 + $0x7c] sm:$0xf]
      %v841 = vld [vmem:[%s808 + $0x80] sm:$0x3]
      %v842 = vld [vmem:[%s808 + $0x84] sm:$0xe]
      %v843 = vld [vmem:[%s808 + $0x88] sm:$0xf]
      %v844 = vld [vmem:[%s808 + $0x8c] sm:$0x3]
      %v845 = vld [vmem:[%s808 + $0x90] sm:$0xe]
      %v846 = vld [vmem:[%s808 + $0x94] sm:$0xf]
      %v847 = vld [vmem:[%s808 + $0x98] sm:$0x3]
      %v848 = vld [vmem:[%s808 + $0x9c] sm:$0xe]
      %v849 = vld [vmem:[%s808 + $0xa0] sm:$0xf]
      %v850 = vld [vmem:[%s808 + $0xa4] sm:$0x3]
      %v851 = vld [vmem:[%s808 + $0xa8] sm:$0xe]
      %v852 = vld [vmem:[%s808 + $0xac] sm:$0xf]
      %v853 = vld [vmem:[%s808 + $0xb0] sm:$0x3]
      %v854 = vld [vmem:[%s808 + $0xb4] sm:$0xe]
      %v855 = vld [vmem:[%s808 + $0xb8] sm:$0xf]
      %v856 = vld [vmem:[%s808 + $0xbc] sm:$0x3]
      %v857 = vunpack.c.l.bf16 %v809
      %v858 = vunpack.c.l.bf16 %v810
      %v859 = vunpack.c.l.bf16 %v811
      %v860 = vunpack.c.l.bf16 %v812
      %v861 = vunpack.c.l.bf16 %v813
      %v862 = vunpack.c.l.bf16 %v814
      %v863 = vunpack.c.l.bf16 %v815
      %v864 = vunpack.c.l.bf16 %v816
      %v865 = vunpack.c.l.bf16 %v817
      %v866 = vunpack.c.l.bf16 %v818
      %v867 = vunpack.c.l.bf16 %v819
      %v868 = vunpack.c.l.bf16 %v820
      %v869 = vunpack.c.l.bf16 %v821
      %v870 = vunpack.c.l.bf16 %v822
      %v871 = vunpack.c.l.bf16 %v823
      %v872 = vunpack.c.l.bf16 %v824
      %v873 = vunpack.c.l.bf16 %v825
      %v874 = vunpack.c.l.bf16 %v826
      %v875 = vunpack.c.l.bf16 %v827
      %v876 = vunpack.c.l.bf16 %v828
      %v877 = vunpack.c.l.bf16 %v829
      %v878 = vunpack.c.l.bf16 %v830
      %v879 = vunpack.c.l.bf16 %v831
      %v880 = vunpack.c.l.bf16 %v832
      %v881 = vunpack.c.l.bf16 %v833
      %v882 = vunpack.c.l.bf16 %v834
      %v883 = vunpack.c.l.bf16 %v835
      %v884 = vunpack.c.l.bf16 %v836
      %v885 = vunpack.c.l.bf16 %v837
      %v886 = vunpack.c.l.bf16 %v838
      %v887 = vunpack.c.l.bf16 %v839
      %v888 = vunpack.c.l.bf16 %v840
      %v889 = vunpack.c.l.bf16 %v841
      %v890 = vunpack.c.l.bf16 %v842
      %v891 = vunpack.c.l.bf16 %v843
      %v892 = vunpack.c.l.bf16 %v844
      %v893 = vunpack.c.l.bf16 %v845
      %v894 = vunpack.c.l.bf16 %v846
      %v895 = vunpack.c.l.bf16 %v847
      %v896 = vunpack.c.l.bf16 %v848
      %v897 = vunpack.c.l.bf16 %v849
      %v898 = vunpack.c.l.bf16 %v850
      %v899 = vunpack.c.l.bf16 %v851
      %v900 = vunpack.c.l.bf16 %v852
      %v901 = vunpack.c.l.bf16 %v853
      %v902 = vunpack.c.l.bf16 %v854
      %v903 = vunpack.c.l.bf16 %v855
      %v904 = vunpack.c.l.bf16 %v856
      %vm953 = vcmask 1044480
      %v954 = vrot.slane %v857, 3
      %v955 = vrot.slane %v858, 3
      %v956 = vsel %vm953, %v954, %v955
      %v957 = vrot.slane %v859, 3
      %v958 = vsel %vm953, %v955, %v957
      %v959 = vrot.slane %v860, 3
      %v960 = vrot.slane %v861, 3
      %v961 = vsel %vm953, %v959, %v960
      %v962 = vrot.slane %v862, 3
      %v963 = vsel %vm953, %v960, %v962
      %v964 = vrot.slane %v863, 3
      %v965 = vrot.slane %v864, 3
      %v966 = vsel %vm953, %v964, %v965
      %v967 = vrot.slane %v865, 3
      %v968 = vsel %vm953, %v965, %v967
      %v969 = vrot.slane %v866, 3
      %v970 = vrot.slane %v867, 3
      %v971 = vsel %vm953, %v969, %v970
      %v972 = vrot.slane %v868, 3
      %v973 = vsel %vm953, %v970, %v972
      %v974 = vrot.slane %v869, 3
      %v975 = vrot.slane %v870, 3
      %v976 = vsel %vm953, %v974, %v975
      %v977 = vrot.slane %v871, 3
      %v978 = vsel %vm953, %v975, %v977
      %v979 = vrot.slane %v872, 3
      %v980 = vrot.slane %v873, 3
      %v981 = vsel %vm953, %v979, %v980
      %v982 = vrot.slane %v874, 3
      %v983 = vsel %vm953, %v980, %v982
      %v984 = vrot.slane %v875, 3
      %v985 = vrot.slane %v876, 3
      %v986 = vsel %vm953, %v984, %v985
      %v987 = vrot.slane %v877, 3
      %v988 = vsel %vm953, %v985, %v987
      %v989 = vrot.slane %v878, 3
      %v990 = vrot.slane %v879, 3
      %v991 = vsel %vm953, %v989, %v990
      %v992 = vrot.slane %v880, 3
      %v993 = vsel %vm953, %v990, %v992
      %v994 = vrot.slane %v881, 3
      %v995 = vrot.slane %v882, 3
      %v996 = vsel %vm953, %v994, %v995
      %v997 = vrot.slane %v883, 3
      %v998 = vsel %vm953, %v995, %v997
      %v999 = vrot.slane %v884, 3
      %v1000 = vrot.slane %v885, 3
      %v1001 = vsel %vm953, %v999, %v1000
      %v1002 = vrot.slane %v886, 3
      %v1003 = vsel %vm953, %v1000, %v1002
      %v1004 = vrot.slane %v887, 3
      %v1005 = vrot.slane %v888, 3
      %v1006 = vsel %vm953, %v1004, %v1005
      %v1007 = vrot.slane %v889, 3
      %v1008 = vsel %vm953, %v1005, %v1007
      %v1009 = vrot.slane %v890, 3
      %v1010 = vrot.slane %v891, 3
      %v1011 = vsel %vm953, %v1009, %v1010
      %v1012 = vrot.slane %v892, 3
      %v1013 = vsel %vm953, %v1010, %v1012
      %v1014 = vrot.slane %v893, 3
      %v1015 = vrot.slane %v894, 3
      %v1016 = vsel %vm953, %v1014, %v1015
      %v1017 = vrot.slane %v895, 3
      %v1018 = vsel %vm953, %v1015, %v1017
      %v1019 = vrot.slane %v896, 3
      %v1020 = vrot.slane %v897, 3
      %v1021 = vsel %vm953, %v1019, %v1020
      %v1022 = vrot.slane %v898, 3
      %v1023 = vsel %vm953, %v1020, %v1022
      %v1024 = vrot.slane %v899, 3
      %v1025 = vrot.slane %v900, 3
      %v1026 = vsel %vm953, %v1024, %v1025
      %v1027 = vrot.slane %v901, 3
      %v1028 = vsel %vm953, %v1025, %v1027
      %v1029 = vrot.slane %v902, 3
      %v1030 = vrot.slane %v903, 3
      %v1031 = vsel %vm953, %v1029, %v1030
      %v1032 = vrot.slane %v904, 3
      %v1033 = vsel %vm953, %v1030, %v1032
      %v1066 = vld [vmem:[%s453] sm:$0x1]
      %v1068 = vlaneseq
      %v1069 = vshrl.u32 %v1068, 7
      %v1070 = vsub.s32 0, %v1069
      %v1071 = vrot.slane %v1066, %v1070
      %v1073 = vmul.f32 %v956, %v1071
      %v1074 = vmul.f32 %v958, %v1071
      %v1075 = vmul.f32 %v961, %v1071
      %v1076 = vmul.f32 %v963, %v1071
      %v1077 = vmul.f32 %v966, %v1071
      %v1078 = vmul.f32 %v968, %v1071
      %v1079 = vmul.f32 %v971, %v1071
      %v1080 = vmul.f32 %v973, %v1071
      %v1081 = vmul.f32 %v976, %v1071
      %v1082 = vmul.f32 %v978, %v1071
      %v1083 = vmul.f32 %v981, %v1071
      %v1084 = vmul.f32 %v983, %v1071
      %v1085 = vmul.f32 %v986, %v1071
      %v1086 = vmul.f32 %v988, %v1071
      %v1087 = vmul.f32 %v991, %v1071
      %v1088 = vmul.f32 %v993, %v1071
      %v1089 = vmul.f32 %v996, %v1071
      %v1090 = vmul.f32 %v998, %v1071
      %v1091 = vmul.f32 %v1001, %v1071
      %v1092 = vmul.f32 %v1003, %v1071
      %v1093 = vmul.f32 %v1006, %v1071
      %v1094 = vmul.f32 %v1008, %v1071
      %v1095 = vmul.f32 %v1011, %v1071
      %v1096 = vmul.f32 %v1013, %v1071
      %v1097 = vmul.f32 %v1016, %v1071
      %v1098 = vmul.f32 %v1018, %v1071
      %v1099 = vmul.f32 %v1021, %v1071
      %v1100 = vmul.f32 %v1023, %v1071
      %v1101 = vmul.f32 %v1026, %v1071
      %v1102 = vmul.f32 %v1028, %v1071
      %v1103 = vmul.f32 %v1031, %v1071
      %v1104 = vmul.f32 %v1033, %v1071
      %v1105 = vpack.c.bf16 %v1074, %v1073
      %v1106 = vpack.c.bf16 %v1076, %v1075
      %v1107 = vpack.c.bf16 %v1078, %v1077
      %v1108 = vpack.c.bf16 %v1080, %v1079
      %v1109 = vpack.c.bf16 %v1082, %v1081
      %v1110 = vpack.c.bf16 %v1084, %v1083
      %v1111 = vpack.c.bf16 %v1086, %v1085
      %v1112 = vpack.c.bf16 %v1088, %v1087
      %v1113 = vpack.c.bf16 %v1090, %v1089
      %v1114 = vpack.c.bf16 %v1092, %v1091
      %v1115 = vpack.c.bf16 %v1094, %v1093
      %v1116 = vpack.c.bf16 %v1096, %v1095
      %v1117 = vpack.c.bf16 %v1098, %v1097
      %v1118 = vpack.c.bf16 %v1100, %v1099
      %v1119 = vpack.c.bf16 %v1102, %v1101
      %v1120 = vpack.c.bf16 %v1104, %v1103
      %v1121 = vld [vmem:[%s447] sm:$0xf]
      %v1122 = vld [vmem:[%s447 + $0x4] sm:$0xf]
      %v1123 = vld [vmem:[%s447 + $0x8] sm:$0xf]
      %v1124 = vld [vmem:[%s447 + $0xc] sm:$0xf]
      %v1125 = vld [vmem:[%s447 + $0x10] sm:$0xf]
      %v1126 = vld [vmem:[%s447 + $0x14] sm:$0xf]
      %v1127 = vld [vmem:[%s447 + $0x18] sm:$0xf]
      %v1128 = vld [vmem:[%s447 + $0x1c] sm:$0xf]
      %v1129 = vld [vmem:[%s447 + $0x20] sm:$0xf]
      %v1130 = vld [vmem:[%s447 + $0x24] sm:$0xf]
      %v1131 = vld [vmem:[%s447 + $0x28] sm:$0xf]
      %v1132 = vld [vmem:[%s447 + $0x2c] sm:$0xf]
      %v1133 = vld [vmem:[%s447 + $0x30] sm:$0xf]
      %v1134 = vld [vmem:[%s447 + $0x34] sm:$0xf]
      %v1135 = vld [vmem:[%s447 + $0x38] sm:$0xf]
      %v1136 = vld [vmem:[%s447 + $0x3c] sm:$0xf]
      %v1137 = vld [vmem:[%s447 + $0x40] sm:$0xf]
      %v1138 = vld [vmem:[%s447 + $0x44] sm:$0xf]
      %v1139 = vld [vmem:[%s447 + $0x48] sm:$0xf]
      %v1140 = vld [vmem:[%s447 + $0x4c] sm:$0xf]
      %v1141 = vld [vmem:[%s447 + $0x50] sm:$0xf]
      %v1142 = vld [vmem:[%s447 + $0x54] sm:$0xf]
      %v1143 = vld [vmem:[%s447 + $0x58] sm:$0xf]
      %v1144 = vld [vmem:[%s447 + $0x5c] sm:$0xf]
      %v1145 = vld [vmem:[%s447 + $0x60] sm:$0xf]
      %v1146 = vld [vmem:[%s447 + $0x64] sm:$0xf]
      %v1147 = vld [vmem:[%s447 + $0x68] sm:$0xf]
      %v1148 = vld [vmem:[%s447 + $0x6c] sm:$0xf]
      %v1149 = vld [vmem:[%s447 + $0x70] sm:$0xf]
      %v1150 = vld [vmem:[%s447 + $0x74] sm:$0xf]
      %v1151 = vld [vmem:[%s447 + $0x78] sm:$0xf]
      %v1152 = vld [vmem:[%s447 + $0x7c] sm:$0xf]
      %v1153 = vunpack.c.l.bf16 %v1121
      %v1154 = vunpack.c.l.bf16 %v1122
      %v1155 = vunpack.c.l.bf16 %v1123
      %v1156 = vunpack.c.l.bf16 %v1124
      %v1157 = vunpack.c.l.bf16 %v1125
      %v1158 = vunpack.c.l.bf16 %v1126
      %v1159 = vunpack.c.l.bf16 %v1127
      %v1160 = vunpack.c.l.bf16 %v1128
      %v1161 = vunpack.c.l.bf16 %v1129
      %v1162 = vunpack.c.l.bf16 %v1130
      %v1163 = vunpack.c.l.bf16 %v1131
      %v1164 = vunpack.c.l.bf16 %v1132
      %v1165 = vunpack.c.l.bf16 %v1133
      %v1166 = vunpack.c.l.bf16 %v1134
      %v1167 = vunpack.c.l.bf16 %v1135
      %v1168 = vunpack.c.l.bf16 %v1136
      %v1169 = vunpack.c.l.bf16 %v1137
      %v1170 = vunpack.c.l.bf16 %v1138
      %v1171 = vunpack.c.l.bf16 %v1139
      %v1172 = vunpack.c.l.bf16 %v1140
      %v1173 = vunpack.c.l.bf16 %v1141
      %v1174 = vunpack.c.l.bf16 %v1142
      %v1175 = vunpack.c.l.bf16 %v1143
      %v1176 = vunpack.c.l.bf16 %v1144
      %v1177 = vunpack.c.l.bf16 %v1145
      %v1178 = vunpack.c.l.bf16 %v1146
      %v1179 = vunpack.c.l.bf16 %v1147
      %v1180 = vunpack.c.l.bf16 %v1148
      %v1181 = vunpack.c.l.bf16 %v1149
      %v1182 = vunpack.c.l.bf16 %v1150
      %v1183 = vunpack.c.l.bf16 %v1151
      %v1184 = vunpack.c.l.bf16 %v1152
      %v1185 = vld [vmem:[%s456] sm:$0x1]
      %v1187 = vlaneseq
      %v1188 = vshrl.u32 %v1187, 7
      %v1189 = vsub.s32 0, %v1188
      %v1190 = vrot.slane %v1185, %v1189
      %v1192 = vmul.f32 %v1153, %v1190
      %v1193 = vmul.f32 %v1154, %v1190
      %v1194 = vmul.f32 %v1155, %v1190
      %v1195 = vmul.f32 %v1156, %v1190
      %v1196 = vmul.f32 %v1157, %v1190
      %v1197 = vmul.f32 %v1158, %v1190
      %v1198 = vmul.f32 %v1159, %v1190
      %v1199 = vmul.f32 %v1160, %v1190
      %v1200 = vmul.f32 %v1161, %v1190
      %v1201 = vmul.f32 %v1162, %v1190
      %v1202 = vmul.f32 %v1163, %v1190
      %v1203 = vmul.f32 %v1164, %v1190
      %v1204 = vmul.f32 %v1165, %v1190
      %v1205 = vmul.f32 %v1166, %v1190
      %v1206 = vmul.f32 %v1167, %v1190
      %v1207 = vmul.f32 %v1168, %v1190
      %v1208 = vmul.f32 %v1169, %v1190
      %v1209 = vmul.f32 %v1170, %v1190
      %v1210 = vmul.f32 %v1171, %v1190
      %v1211 = vmul.f32 %v1172, %v1190
      %v1212 = vmul.f32 %v1173, %v1190
      %v1213 = vmul.f32 %v1174, %v1190
      %v1214 = vmul.f32 %v1175, %v1190
      %v1215 = vmul.f32 %v1176, %v1190
      %v1216 = vmul.f32 %v1177, %v1190
      %v1217 = vmul.f32 %v1178, %v1190
      %v1218 = vmul.f32 %v1179, %v1190
      %v1219 = vmul.f32 %v1180, %v1190
      %v1220 = vmul.f32 %v1181, %v1190
      %v1221 = vmul.f32 %v1182, %v1190
      %v1222 = vmul.f32 %v1183, %v1190
      %v1223 = vmul.f32 %v1184, %v1190
      %v1224 = vpack.c.bf16 %v1193, %v1192
      %v1225 = vpack.c.bf16 %v1195, %v1194
      %v1226 = vpack.c.bf16 %v1197, %v1196
      %v1227 = vpack.c.bf16 %v1199, %v1198
      %v1228 = vpack.c.bf16 %v1201, %v1200
      %v1229 = vpack.c.bf16 %v1203, %v1202
      %v1230 = vpack.c.bf16 %v1205, %v1204
      %v1231 = vpack.c.bf16 %v1207, %v1206
      %v1232 = vpack.c.bf16 %v1209, %v1208
      %v1233 = vpack.c.bf16 %v1211, %v1210
      %v1234 = vpack.c.bf16 %v1213, %v1212
      %v1235 = vpack.c.bf16 %v1215, %v1214
      %v1236 = vpack.c.bf16 %v1217, %v1216
      %v1237 = vpack.c.bf16 %v1219, %v1218
      %v1238 = vpack.c.bf16 %v1221, %v1220
      %v1239 = vpack.c.bf16 %v1223, %v1222
      %v1240 = vld [vmem:[%s7] sm:$0xf]
      %v1241 = vld [vmem:[%s7 + $0x4] sm:$0xf]
      %vm1242 = vcmask 64512
      %v1244 = vsel %vm1242, %v792, 0
      %v1247 = vsel %vm1242, %v793, 0
      %v1250 = vsel %vm1242, %v794, 0
      %v1253 = vsel %vm1242, %v795, 0
      %v1256 = vsel %vm1242, %v796, 0
      %v1259 = vsel %vm1242, %v797, 0
      %v1262 = vsel %vm1242, %v798, 0
      %v1265 = vsel %vm1242, %v799, 0
      %v1268 = vsel %vm1242, %v800, 0
      %v1271 = vsel %vm1242, %v801, 0
      %v1274 = vsel %vm1242, %v802, 0
      %v1277 = vsel %vm1242, %v803, 0
      %v1280 = vsel %vm1242, %v804, 0
      %v1283 = vsel %vm1242, %v805, 0
      %v1286 = vsel %vm1242, %v806, 0
      %v1289 = vsel %vm1242, %v807, 0
      %vm1291 = vcmask 1043456
      %v1293 = vsel %vm1291, %v1241, 0
      %1295 = vmatprep.subr.bf16.mxu0 0
      %1296 = vmatpush1.bf16.msra.mxu0 %v1293
      %1297 = vmatprep.subr.bf16.mxu0 0
      %1298 = vmatpush1.bf16.msra.mxu0 0
      %1299 = vmatprep.subr.bf16.mxu0 0
      %1300 = vmatpush1.bf16.msra.mxu0 0
      %1301 = vmatprep.subr.bf16.mxu0 0
      %1302 = vmatpush1.bf16.msra.mxu0 0
      %1303 = vmatprep.subr.bf16.mxu0 0
      %1304 = vmatpush1.bf16.msra.mxu0 0
      %1305 = vmatprep.subr.bf16.mxu0 0
      %1306 = vmatpush1.bf16.msra.mxu0 0
      %1307 = vmatprep.subr.bf16.mxu0 0
      %1308 = vmatpush1.bf16.msra.mxu0 0
      %1309 = vmatprep.subr.bf16.mxu0 0
      %1310 = vmatpush1.bf16.msra.mxu0 0
      %1311 = vmatprep.subr.bf16.mxu0 0
      %1312 = vmatpush1.bf16.msra.mxu0 0
      %1313 = vmatprep.subr.bf16.mxu0 0
      %1314 = vmatpush1.bf16.msra.mxu0 0
      %1315 = vmatprep.subr.bf16.mxu0 0
      %1316 = vmatpush1.bf16.msra.mxu0 0
      %1317 = vmatprep.subr.bf16.mxu0 0
      %1318 = vmatpush1.bf16.msra.mxu0 0
      %1319 = vmatprep.subr.bf16.mxu0 0
      %1320 = vmatpush1.bf16.msra.mxu0 0
      %1321 = vmatprep.subr.bf16.mxu0 0
      %1322 = vmatpush1.bf16.msra.mxu0 0
      %1323 = vmatprep.subr.bf16.mxu0 0
      %1324 = vmatpush1.bf16.msra.mxu0 0
      %1325 = vmatprep.subr.bf16.mxu0 0
      %1326 = vmatpush1.bf16.msra.mxu0 0
      %1327 = vmatprep.mubr.bf16.mxu0 0
      %1328 = vmatmul.mubr.bf16.gmra.mrb[0].mxu0 %v1244
      %v1329 = vpop.f32.mrb[0].mxu0
      %v1330 = vadd.f32 0.0, %v1329
      %v1331 = vpop.f32.mrb[0].mxu0
      %v1332 = vpop.f32.mrb[0].mxu0
      %v1333 = vadd.f32 0.0, %v1332
      %v1334 = vpop.f32.mrb[0].mxu0
      %1335 = vmatprep.mubr.bf16.mxu0 0
      %1336 = vmatmul.mubr.bf16.gmra.mrb[0].mxu0 %v1247
      %v1337 = vpop.f32.mrb[0].mxu0
      %v1338 = vadd.f32 0.0, %v1337
      %v1339 = vpop.f32.mrb[0].mxu0
      %v1340 = vpop.f32.mrb[0].mxu0
      %v1341 = vadd.f32 0.0, %v1340
      %v1342 = vpop.f32.mrb[0].mxu0
      %1343 = vmatprep.mubr.bf16.mxu0 0
      %1344 = vmatmul.mubr.bf16.gmra.mrb[0].mxu0 %v1250
      %v1345 = vpop.f32.mrb[0].mxu0
      %v1346 = vadd.f32 0.0, %v1345
      %v1347 = vpop.f32.mrb[0].mxu0
      %v1348 = vpop.f32.mrb[0].mxu0
      %v1349 = vadd.f32 0.0, %v1348
      %v1350 = vpop.f32.mrb[0].mxu0
      %1351 = vmatprep.mubr.bf16.mxu0 0
      %1352 = vmatmul.mubr.bf16.gmra.mrb[0].mxu0 %v1253
      %v1353 = vpop.f32.mrb[0].mxu0
      %v1354 = vadd.f32 0.0, %v1353
      %v1355 = vpop.f32.mrb[0].mxu0
      %v1356 = vpop.f32.mrb[0].mxu0
      %v1357 = vadd.f32 0.0, %v1356
      %v1358 = vpop.f32.mrb[0].mxu0
      %1359 = vmatprep.mubr.bf16.mxu0 0
      %1360 = vmatmul.mubr.bf16.gmra.mrb[0].mxu0 %v1256
      %v1361 = vpop.f32.mrb[0].mxu0
      %v1362 = vadd.f32 0.0, %v1361
      %v1363 = vpop.f32.mrb[0].mxu0
      %v1364 = vpop.f32.mrb[0].mxu0
      %v1365 = vadd.f32 0.0, %v1364
      %v1366 = vpop.f32.mrb[0].mxu0
      %1367 = vmatprep.mubr.bf16.mxu0 0
      %1368 = vmatmul.mubr.bf16.gmra.mrb[0].mxu0 %v1259
      %v1369 = vpop.f32.mrb[0].mxu0
      %v1370 = vadd.f32 0.0, %v1369
      %v1371 = vpop.f32.mrb[0].mxu0
      %v1372 = vpop.f32.mrb[0].mxu0
      %v1373 = vadd.f32 0.0, %v1372
      %v1374 = vpop.f32.mrb[0].mxu0
      %1375 = vmatprep.mubr.bf16.mxu0 0
      %1376 = vmatmul.mubr.bf16.gmra.mrb[0].mxu0 %v1262
      %v1377 = vpop.f32.mrb[0].mxu0
      %v1378 = vadd.f32 0.0, %v1377
      %v1379 = vpop.f32.mrb[0].mxu0
      %v1380 = vpop.f32.mrb[0].mxu0
      %v1381 = vadd.f32 0.0, %v1380
      %v1382 = vpop.f32.mrb[0].mxu0
      %1383 = vmatprep.mubr.bf16.mxu0 0
      %1384 = vmatmul.mubr.bf16.gmra.mrb[0].mxu0 %v1265
      %v1385 = vpop.f32.mrb[0].mxu0
      %v1386 = vadd.f32 0.0, %v1385
      %v1387 = vpop.f32.mrb[0].mxu0
      %v1388 = vpop.f32.mrb[0].mxu0
      %v1389 = vadd.f32 0.0, %v1388
      %v1390 = vpop.f32.mrb[0].mxu0
      %1391 = vmatprep.mubr.bf16.mxu0 0
      %1392 = vmatmul.mubr.bf16.gmra.mrb[0].mxu0 %v1268
      %v1393 = vpop.f32.mrb[0].mxu0
      %v1394 = vadd.f32 0.0, %v1393
      %v1395 = vpop.f32.mrb[0].mxu0
      %v1396 = vpop.f32.mrb[0].mxu0
      %v1397 = vadd.f32 0.0, %v1396
      %v1398 = vpop.f32.mrb[0].mxu0
      %1399 = vmatprep.mubr.bf16.mxu0 0
      %1400 = vmatmul.mubr.bf16.gmra.mrb[0].mxu0 %v1271
      %v1401 = vpop.f32.mrb[0].mxu0
      %v1402 = vadd.f32 0.0, %v1401
      %v1403 = vpop.f32.mrb[0].mxu0
      %v1404 = vpop.f32.mrb[0].mxu0
      %v1405 = vadd.f32 0.0, %v1404
      %v1406 = vpop.f32.mrb[0].mxu0
      %1407 = vmatprep.mubr.bf16.mxu0 0
      %1408 = vmatmul.mubr.bf16.gmra.mrb[0].mxu0 %v1274
      %v1409 = vpop.f32.mrb[0].mxu0
      %v1410 = vadd.f32 0.0, %v1409
      %v1411 = vpop.f32.mrb[0].mxu0
      %v1412 = vpop.f32.mrb[0].mxu0
      %v1413 = vadd.f32 0.0, %v1412
      %v1414 = vpop.f32.mrb[0].mxu0
      %1415 = vmatprep.mubr.bf16.mxu0 0
      %1416 = vmatmul.mubr.bf16.gmra.mrb[0].mxu0 %v1277
      %v1417 = vpop.f32.mrb[0].mxu0
      %v1418 = vadd.f32 0.0, %v1417
      %v1419 = vpop.f32.mrb[0].mxu0
      %v1420 = vpop.f32.mrb[0].mxu0
      %v1421 = vadd.f32 0.0, %v1420
      %v1422 = vpop.f32.mrb[0].mxu0
      %1423 = vmatprep.mubr.bf16.mxu0 0
      %1424 = vmatmul.mubr.bf16.gmra.mrb[0].mxu0 %v1280
      %v1425 = vpop.f32.mrb[0].mxu0
      %v1426 = vadd.f32 0.0, %v1425
      %v1427 = vpop.f32.mrb[0].mxu0
      %v1428 = vpop.f32.mrb[0].mxu0
      %v1429 = vadd.f32 0.0, %v1428
      %v1430 = vpop.f32.mrb[0].mxu0
      %1431 = vmatprep.mubr.bf16.mxu0 0
      %1432 = vmatmul.mubr.bf16.gmra.mrb[0].mxu0 %v1283
      %v1433 = vpop.f32.mrb[0].mxu0
      %v1434 = vadd.f32 0.0, %v1433
      %v1435 = vpop.f32.mrb[0].mxu0
      %v1436 = vpop.f32.mrb[0].mxu0
      %v1437 = vadd.f32 0.0, %v1436
      %v1438 = vpop.f32.mrb[0].mxu0
      %1439 = vmatprep.mubr.bf16.mxu0 0
      %1440 = vmatmul.mubr.bf16.gmra.mrb[0].mxu0 %v1286
      %v1441 = vpop.f32.mrb[0].mxu0
      %v1442 = vadd.f32 0.0, %v1441
      %v1443 = vpop.f32.mrb[0].mxu0
      %v1444 = vpop.f32.mrb[0].mxu0
      %v1445 = vadd.f32 0.0, %v1444
      %v1446 = vpop.f32.mrb[0].mxu0
      %1447 = vmatprep.mubr.bf16.mxu0 0
      %1448 = vmatmul.mubr.bf16.gmra.mrb[0].mxu0 %v1289
      %v1449 = vpop.f32.mrb[0].mxu0
      %v1450 = vadd.f32 0.0, %v1449
      %v1451 = vpop.f32.mrb[0].mxu0
      %v1452 = vpop.f32.mrb[0].mxu0
      %v1453 = vadd.f32 0.0, %v1452
      %v1454 = vpop.f32.mrb[0].mxu0
      %1455 = vdwg.mxu0
      %v1488 = vunpack.c.l.b16 %v463
      %v1489 = vunpack.c.l.b16 %v464
      %v1490 = vunpack.c.l.b16 %v465
      %v1491 = vunpack.c.l.b16 %v466
      %v1492 = vunpack.c.l.b16 %v467
      %v1493 = vunpack.c.l.b16 %v468
      %v1494 = vunpack.c.l.b16 %v469
      %v1495 = vunpack.c.l.b16 %v470
      %v1496 = vunpack.c.l.b16 %v471
      %v1497 = vunpack.c.l.b16 %v472
      %v1498 = vunpack.c.l.b16 %v473
      %v1499 = vunpack.c.l.b16 %v474
      %v1500 = vunpack.c.l.b16 %v475
      %v1501 = vunpack.c.l.b16 %v476
      %v1502 = vunpack.c.l.b16 %v477
      %v1503 = vunpack.c.l.b16 %v478
      %v1504 = vunpack.c.l.b16 %v479
      %v1505 = vunpack.c.l.b16 %v480
      %v1506 = vunpack.c.l.b16 %v481
      %v1507 = vunpack.c.l.b16 %v482
      %v1508 = vunpack.c.l.b16 %v483
      %v1509 = vunpack.c.l.b16 %v484
      %v1510 = vunpack.c.l.b16 %v485
      %v1511 = vunpack.c.l.b16 %v486
      %v1512 = vunpack.c.l.b16 %v487
      %v1513 = vunpack.c.l.b16 %v488
      %v1514 = vunpack.c.l.b16 %v489
      %v1515 = vunpack.c.l.b16 %v490
      %v1516 = vunpack.c.l.b16 %v491
      %v1517 = vunpack.c.l.b16 %v492
      %v1518 = vunpack.c.l.b16 %v493
      %v1519 = vunpack.c.l.b16 %v494
      %v1520 = vpack.c.b16 %v1489, %v1488
      %v1521 = vpack.c.b16 %v1491, %v1490
      %v1522 = vpack.c.b16 %v1493, %v1492
      %v1523 = vpack.c.b16 %v1495, %v1494
      %v1524 = vpack.c.b16 %v1497, %v1496
      %v1525 = vpack.c.b16 %v1499, %v1498
      %v1526 = vpack.c.b16 %v1501, %v1500
      %v1527 = vpack.c.b16 %v1503, %v1502
      %v1528 = vpack.c.b16 %v1505, %v1504
      %v1529 = vpack.c.b16 %v1507, %v1506
      %v1530 = vpack.c.b16 %v1509, %v1508
      %v1531 = vpack.c.b16 %v1511, %v1510
      %v1532 = vpack.c.b16 %v1513, %v1512
      %v1533 = vpack.c.b16 %v1515, %v1514
      %v1534 = vpack.c.b16 %v1517, %v1516
      %v1535 = vpack.c.b16 %v1519, %v1518
      %v1537 = vsel %vm1242, %v1520, 0
      %v1540 = vsel %vm1242, %v1521, 0
      %v1543 = vsel %vm1242, %v1522, 0
      %v1546 = vsel %vm1242, %v1523, 0
      %v1549 = vsel %vm1242, %v1524, 0
      %v1552 = vsel %vm1242, %v1525, 0
      %v1555 = vsel %vm1242, %v1526, 0
      %v1558 = vsel %vm1242, %v1527, 0
      %v1561 = vsel %vm1242, %v1528, 0
      %v1564 = vsel %vm1242, %v1529, 0
      %v1567 = vsel %vm1242, %v1530, 0
      %v1570 = vsel %vm1242, %v1531, 0
      %v1573 = vsel %vm1242, %v1532, 0
      %v1576 = vsel %vm1242, %v1533, 0
      %v1579 = vsel %vm1242, %v1534, 0
      %v1582 = vsel %vm1242, %v1535, 0
      %v1585 = vsel %vm1291, %v1240, 0
      %1587 = vmatprep.subr.bf16.mxu0 0
      %1588 = vmatpush1.bf16.msra.mxu0 %v1585
      %1589 = vmatprep.subr.bf16.mxu0 0
      %1590 = vmatpush1.bf16.msra.mxu0 0
      %1591 = vmatprep.subr.bf16.mxu0 0
      %1592 = vmatpush1.bf16.msra.mxu0 0
      %1593 = vmatprep.subr.bf16.mxu0 0
      %1594 = vmatpush1.bf16.msra.mxu0 0
      %1595 = vmatprep.subr.bf16.mxu0 0
      %1596 = vmatpush1.bf16.msra.mxu0 0
      %1597 = vmatprep.subr.bf16.mxu0 0
      %1598 = vmatpush1.bf16.msra.mxu0 0
      %1599 = vmatprep.subr.bf16.mxu0 0
      %1600 = vmatpush1.bf16.msra.mxu0 0
      %1601 = vmatprep.subr.bf16.mxu0 0
      %1602 = vmatpush1.bf16.msra.mxu0 0
      %1603 = vmatprep.subr.bf16.mxu0 0
      %1604 = vmatpush1.bf16.msra.mxu0 0
      %1605 = vmatprep.subr.bf16.mxu0 0
      %1606 = vmatpush1.bf16.msra.mxu0 0
      %1607 = vmatprep.subr.bf16.mxu0 0
      %1608 = vmatpush1.bf16.msra.mxu0 0
      %1609 = vmatprep.subr.bf16.mxu0 0
      %1610 = vmatpush1.bf16.msra.mxu0 0
      %1611 = vmatprep.subr.bf16.mxu0 0
      %1612 = vmatpush1.bf16.msra.mxu0 0
      %1613 = vmatprep.subr.bf16.mxu0 0
      %1614 = vmatpush1.bf16.msra.mxu0 0
      %1615 = vmatprep.subr.bf16.mxu0 0
      %1616 = vmatpush1.bf16.msra.mxu0 0
      %1617 = vmatprep.subr.bf16.mxu0 0
      %1618 = vmatpush1.bf16.msra.mxu0 0
      %1619 = vmatprep.mubr.bf16.mxu0 0
      %1620 = vmatmul.mubr.bf16.gmra.mrb[0].mxu0 %v1537
      %v1621 = vpop.f32.mrb[0].mxu0
      %v1622 = vadd.f32 %v1330, %v1621
      %v1623 = vpop.f32.mrb[0].mxu0
      %v1624 = vpop.f32.mrb[0].mxu0
      %v1625 = vadd.f32 %v1333, %v1624
      %v1626 = vpop.f32.mrb[0].mxu0
      %1627 = vmatprep.mubr.bf16.mxu0 0
      %1628 = vmatmul.mubr.bf16.gmra.mrb[0].mxu0 %v1540
      %v1629 = vpop.f32.mrb[0].mxu0
      %v1630 = vadd.f32 %v1338, %v1629
      %v1631 = vpop.f32.mrb[0].mxu0
      %v1632 = vpop.f32.mrb[0].mxu0
      %v1633 = vadd.f32 %v1341, %v1632
      %v1634 = vpop.f32.mrb[0].mxu0
      %1635 = vmatprep.mubr.bf16.mxu0 0
      %1636 = vmatmul.mubr.bf16.gmra.mrb[0].mxu0 %v1543
      %v1637 = vpop.f32.mrb[0].mxu0
      %v1638 = vadd.f32 %v1346, %v1637
      %v1639 = vpop.f32.mrb[0].mxu0
      %v1640 = vpop.f32.mrb[0].mxu0
      %v1641 = vadd.f32 %v1349, %v1640
      %v1642 = vpop.f32.mrb[0].mxu0
      %1643 = vmatprep.mubr.bf16.mxu0 0
      %1644 = vmatmul.mubr.bf16.gmra.mrb[0].mxu0 %v1546
      %v1645 = vpop.f32.mrb[0].mxu0
      %v1646 = vadd.f32 %v1354, %v1645
      %v1647 = vpop.f32.mrb[0].mxu0
      %v1648 = vpop.f32.mrb[0].mxu0
      %v1649 = vadd.f32 %v1357, %v1648
      %v1650 = vpop.f32.mrb[0].mxu0
      %1651 = vmatprep.mubr.bf16.mxu0 0
      %1652 = vmatmul.mubr.bf16.gmra.mrb[0].mxu0 %v1549
      %v1653 = vpop.f32.mrb[0].mxu0
      %v1654 = vadd.f32 %v1362, %v1653
      %v1655 = vpop.f32.mrb[0].mxu0
      %v1656 = vpop.f32.mrb[0].mxu0
      %v1657 = vadd.f32 %v1365, %v1656
      %v1658 = vpop.f32.mrb[0].mxu0
      %1659 = vmatprep.mubr.bf16.mxu0 0
      %1660 = vmatmul.mubr.bf16.gmra.mrb[0].mxu0 %v1552
      %v1661 = vpop.f32.mrb[0].mxu0
      %v1662 = vadd.f32 %v1370, %v1661
      %v1663 = vpop.f32.mrb[0].mxu0
      %v1664 = vpop.f32.mrb[0].mxu0
      %v1665 = vadd.f32 %v1373, %v1664
      %v1666 = vpop.f32.mrb[0].mxu0
      %1667 = vmatprep.mubr.bf16.mxu0 0
      %1668 = vmatmul.mubr.bf16.gmra.mrb[0].mxu0 %v1555
      %v1669 = vpop.f32.mrb[0].mxu0
      %v1670 = vadd.f32 %v1378, %v1669
      %v1671 = vpop.f32.mrb[0].mxu0
      %v1672 = vpop.f32.mrb[0].mxu0
      %v1673 = vadd.f32 %v1381, %v1672
      %v1674 = vpop.f32.mrb[0].mxu0
      %1675 = vmatprep.mubr.bf16.mxu0 0
      %1676 = vmatmul.mubr.bf16.gmra.mrb[0].mxu0 %v1558
      %v1677 = vpop.f32.mrb[0].mxu0
      %v1678 = vadd.f32 %v1386, %v1677
      %v1679 = vpop.f32.mrb[0].mxu0
      %v1680 = vpop.f32.mrb[0].mxu0
      %v1681 = vadd.f32 %v1389, %v1680
      %v1682 = vpop.f32.mrb[0].mxu0
      %1683 = vmatprep.mubr.bf16.mxu0 0
      %1684 = vmatmul.mubr.bf16.gmra.mrb[0].mxu0 %v1561
      %v1685 = vpop.f32.mrb[0].mxu0
      %v1686 = vadd.f32 %v1394, %v1685
      %v1687 = vpop.f32.mrb[0].mxu0
      %v1688 = vpop.f32.mrb[0].mxu0
      %v1689 = vadd.f32 %v1397, %v1688
      %v1690 = vpop.f32.mrb[0].mxu0
      %1691 = vmatprep.mubr.bf16.mxu0 0
      %1692 = vmatmul.mubr.bf16.gmra.mrb[0].mxu0 %v1564
      %v1693 = vpop.f32.mrb[0].mxu0
      %v1694 = vadd.f32 %v1402, %v1693
      %v1695 = vpop.f32.mrb[0].mxu0
      %v1696 = vpop.f32.mrb[0].mxu0
      %v1697 = vadd.f32 %v1405, %v1696
      %v1698 = vpop.f32.mrb[0].mxu0
      %1699 = vmatprep.mubr.bf16.mxu0 0
      %1700 = vmatmul.mubr.bf16.gmra.mrb[0].mxu0 %v1567
      %v1701 = vpop.f32.mrb[0].mxu0
      %v1702 = vadd.f32 %v1410, %v1701
      %v1703 = vpop.f32.mrb[0].mxu0
      %v1704 = vpop.f32.mrb[0].mxu0
      %v1705 = vadd.f32 %v1413, %v1704
      %v1706 = vpop.f32.mrb[0].mxu0
      %1707 = vmatprep.mubr.bf16.mxu0 0
      %1708 = vmatmul.mubr.bf16.gmra.mrb[0].mxu0 %v1570
      %v1709 = vpop.f32.mrb[0].mxu0
      %v1710 = vadd.f32 %v1418, %v1709
      %v1711 = vpop.f32.mrb[0].mxu0
      %v1712 = vpop.f32.mrb[0].mxu0
      %v1713 = vadd.f32 %v1421, %v1712
      %v1714 = vpop.f32.mrb[0].mxu0
      %1715 = vmatprep.mubr.bf16.mxu0 0
      %1716 = vmatmul.mubr.bf16.gmra.mrb[0].mxu0 %v1573
      %v1717 = vpop.f32.mrb[0].mxu0
      %v1718 = vadd.f32 %v1426, %v1717
      %v1719 = vpop.f32.mrb[0].mxu0
      %v1720 = vpop.f32.mrb[0].mxu0
      %v1721 = vadd.f32 %v1429, %v1720
      %v1722 = vpop.f32.mrb[0].mxu0
      %1723 = vmatprep.mubr.bf16.mxu0 0
      %1724 = vmatmul.mubr.bf16.gmra.mrb[0].mxu0 %v1576
      %v1725 = vpop.f32.mrb[0].mxu0
      %v1726 = vadd.f32 %v1434, %v1725
      %v1727 = vpop.f32.mrb[0].mxu0
      %v1728 = vpop.f32.mrb[0].mxu0
      %v1729 = vadd.f32 %v1437, %v1728
      %v1730 = vpop.f32.mrb[0].mxu0
      %1731 = vmatprep.mubr.bf16.mxu0 0
      %1732 = vmatmul.mubr.bf16.gmra.mrb[0].mxu0 %v1579
      %v1733 = vpop.f32.mrb[0].mxu0
      %v1734 = vadd.f32 %v1442, %v1733
      %v1735 = vpop.f32.mrb[0].mxu0
      %v1736 = vpop.f32.mrb[0].mxu0
      %v1737 = vadd.f32 %v1445, %v1736
      %v1738 = vpop.f32.mrb[0].mxu0
      %1739 = vmatprep.mubr.bf16.mxu0 0
      %1740 = vmatmul.mubr.bf16.gmra.mrb[0].mxu0 %v1582
      %v1741 = vpop.f32.mrb[0].mxu0
      %v1742 = vadd.f32 %v1450, %v1741
      %v1743 = vpop.f32.mrb[0].mxu0
      %v1744 = vpop.f32.mrb[0].mxu0
      %v1745 = vadd.f32 %v1453, %v1744
      %v1746 = vpop.f32.mrb[0].mxu0
      %1747 = vdwg.mxu0
      %v1748 = vld [vmem:[%s7 + $0x8] sm:$0xf]
      %v1750 = vsel %vm1242, %v1105, 0
      %v1753 = vsel %vm1242, %v1106, 0
      %v1756 = vsel %vm1242, %v1107, 0
      %v1759 = vsel %vm1242, %v1108, 0
      %v1762 = vsel %vm1242, %v1109, 0
      %v1765 = vsel %vm1242, %v1110, 0
      %v1768 = vsel %vm1242, %v1111, 0
      %v1771 = vsel %vm1242, %v1112, 0
      %v1774 = vsel %vm1242, %v1113, 0
      %v1777 = vsel %vm1242, %v1114, 0
      %v1780 = vsel %vm1242, %v1115, 0
      %v1783 = vsel %vm1242, %v1116, 0
      %v1786 = vsel %vm1242, %v1117, 0
      %v1789 = vsel %vm1242, %v1118, 0
      %v1792 = vsel %vm1242, %v1119, 0
      %v1795 = vsel %vm1242, %v1120, 0
      %v1798 = vsel %vm1291, %v1748, 0
      %1800 = vmatprep.subr.bf16.mxu0 0
      %1801 = vmatpush1.bf16.msra.mxu0 %v1798
      %1802 = vmatprep.subr.bf16.mxu0 0
      %1803 = vmatpush1.bf16.msra.mxu0 0
      %1804 = vmatprep.subr.bf16.mxu0 0
      %1805 = vmatpush1.bf16.msra.mxu0 0
      %1806 = vmatprep.subr.bf16.mxu0 0
      %1807 = vmatpush1.bf16.msra.mxu0 0
      %1808 = vmatprep.subr.bf16.mxu0 0
      %1809 = vmatpush1.bf16.msra.mxu0 0
      %1810 = vmatprep.subr.bf16.mxu0 0
      %1811 = vmatpush1.bf16.msra.mxu0 0
      %1812 = vmatprep.subr.bf16.mxu0 0
      %1813 = vmatpush1.bf16.msra.mxu0 0
      %1814 = vmatprep.subr.bf16.mxu0 0
      %1815 = vmatpush1.bf16.msra.mxu0 0
      %1816 = vmatprep.subr.bf16.mxu0 0
      %1817 = vmatpush1.bf16.msra.mxu0 0
      %1818 = vmatprep.subr.bf16.mxu0 0
      %1819 = vmatpush1.bf16.msra.mxu0 0
      %1820 = vmatprep.subr.bf16.mxu0 0
      %1821 = vmatpush1.bf16.msra.mxu0 0
      %1822 = vmatprep.subr.bf16.mxu0 0
      %1823 = vmatpush1.bf16.msra.mxu0 0
      %1824 = vmatprep.subr.bf16.mxu0 0
      %1825 = vmatpush1.bf16.msra.mxu0 0
      %1826 = vmatprep.subr.bf16.mxu0 0
      %1827 = vmatpush1.bf16.msra.mxu0 0
      %1828 = vmatprep.subr.bf16.mxu0 0
      %1829 = vmatpush1.bf16.msra.mxu0 0
      %1830 = vmatprep.subr.bf16.mxu0 0
      %1831 = vmatpush1.bf16.msra.mxu0 0
      %1832 = vmatprep.mubr.bf16.mxu0 0
      %1833 = vmatmul.mubr.bf16.gmra.mrb[0].mxu0 %v1750
      %v1834 = vpop.f32.mrb[0].mxu0
      %v1835 = vadd.f32 0.0, %v1834
      %v1836 = vpop.f32.mrb[0].mxu0
      %v1837 = vpop.f32.mrb[0].mxu0
      %v1838 = vadd.f32 0.0, %v1837
      %v1839 = vpop.f32.mrb[0].mxu0
      %1840 = vmatprep.mubr.bf16.mxu0 0
      %1841 = vmatmul.mubr.bf16.gmra.mrb[0].mxu0 %v1753
      %v1842 = vpop.f32.mrb[0].mxu0
      %v1843 = vadd.f32 0.0, %v1842
      %v1844 = vpop.f32.mrb[0].mxu0
      %v1845 = vpop.f32.mrb[0].mxu0
      %v1846 = vadd.f32 0.0, %v1845
      %v1847 = vpop.f32.mrb[0].mxu0
      %1848 = vmatprep.mubr.bf16.mxu0 0
      %1849 = vmatmul.mubr.bf16.gmra.mrb[0].mxu0 %v1756
      %v1850 = vpop.f32.mrb[0].mxu0
      %v1851 = vadd.f32 0.0, %v1850
      %v1852 = vpop.f32.mrb[0].mxu0
      %v1853 = vpop.f32.mrb[0].mxu0
      %v1854 = vadd.f32 0.0, %v1853
      %v1855 = vpop.f32.mrb[0].mxu0
      %1856 = vmatprep.mubr.bf16.mxu0 0
      %1857 = vmatmul.mubr.bf16.gmra.mrb[0].mxu0 %v1759
      %v1858 = vpop.f32.mrb[0].mxu0
      %v1859 = vadd.f32 0.0, %v1858
      %v1860 = vpop.f32.mrb[0].mxu0
      %v1861 = vpop.f32.mrb[0].mxu0
      %v1862 = vadd.f32 0.0, %v1861
      %v1863 = vpop.f32.mrb[0].mxu0
      %1864 = vmatprep.mubr.bf16.mxu0 0
      %1865 = vmatmul.mubr.bf16.gmra.mrb[0].mxu0 %v1762
      %v1866 = vpop.f32.mrb[0].mxu0
      %v1867 = vadd.f32 0.0, %v1866
      %v1868 = vpop.f32.mrb[0].mxu0
      %v1869 = vpop.f32.mrb[0].mxu0
      %v1870 = vadd.f32 0.0, %v1869
      %v1871 = vpop.f32.mrb[0].mxu0
      %1872 = vmatprep.mubr.bf16.mxu0 0
      %1873 = vmatmul.mubr.bf16.gmra.mrb[0].mxu0 %v1765
      %v1874 = vpop.f32.mrb[0].mxu0
      %v1875 = vadd.f32 0.0, %v1874
      %v1876 = vpop.f32.mrb[0].mxu0
      %v1877 = vpop.f32.mrb[0].mxu0
      %v1878 = vadd.f32 0.0, %v1877
      %v1879 = vpop.f32.mrb[0].mxu0
      %1880 = vmatprep.mubr.bf16.mxu0 0
      %1881 = vmatmul.mubr.bf16.gmra.mrb[0].mxu0 %v1768
      %v1882 = vpop.f32.mrb[0].mxu0
      %v1883 = vadd.f32 0.0, %v1882
      %v1884 = vpop.f32.mrb[0].mxu0
      %v1885 = vpop.f32.mrb[0].mxu0
      %v1886 = vadd.f32 0.0, %v1885
      %v1887 = vpop.f32.mrb[0].mxu0
      %1888 = vmatprep.mubr.bf16.mxu0 0
      %1889 = vmatmul.mubr.bf16.gmra.mrb[0].mxu0 %v1771
      %v1890 = vpop.f32.mrb[0].mxu0
      %v1891 = vadd.f32 0.0, %v1890
      %v1892 = vpop.f32.mrb[0].mxu0
      %v1893 = vpop.f32.mrb[0].mxu0
      %v1894 = vadd.f32 0.0, %v1893
      %v1895 = vpop.f32.mrb[0].mxu0
      %1896 = vmatprep.mubr.bf16.mxu0 0
      %1897 = vmatmul.mubr.bf16.gmra.mrb[0].mxu0 %v1774
      %v1898 = vpop.f32.mrb[0].mxu0
      %v1899 = vadd.f32 0.0, %v1898
      %v1900 = vpop.f32.mrb[0].mxu0
      %v1901 = vpop.f32.mrb[0].mxu0
      %v1902 = vadd.f32 0.0, %v1901
      %v1903 = vpop.f32.mrb[0].mxu0
      %1904 = vmatprep.mubr.bf16.mxu0 0
      %1905 = vmatmul.mubr.bf16.gmra.mrb[0].mxu0 %v1777
      %v1906 = vpop.f32.mrb[0].mxu0
      %v1907 = vadd.f32 0.0, %v1906
      %v1908 = vpop.f32.mrb[0].mxu0
      %v1909 = vpop.f32.mrb[0].mxu0
      %v1910 = vadd.f32 0.0, %v1909
      %v1911 = vpop.f32.mrb[0].mxu0
      %1912 = vmatprep.mubr.bf16.mxu0 0
      %1913 = vmatmul.mubr.bf16.gmra.mrb[0].mxu0 %v1780
      %v1914 = vpop.f32.mrb[0].mxu0
      %v1915 = vadd.f32 0.0, %v1914
      %v1916 = vpop.f32.mrb[0].mxu0
      %v1917 = vpop.f32.mrb[0].mxu0
      %v1918 = vadd.f32 0.0, %v1917
      %v1919 = vpop.f32.mrb[0].mxu0
      %1920 = vmatprep.mubr.bf16.mxu0 0
      %1921 = vmatmul.mubr.bf16.gmra.mrb[0].mxu0 %v1783
      %v1922 = vpop.f32.mrb[0].mxu0
      %v1923 = vadd.f32 0.0, %v1922
      %v1924 = vpop.f32.mrb[0].mxu0
      %v1925 = vpop.f32.mrb[0].mxu0
      %v1926 = vadd.f32 0.0, %v1925
      %v1927 = vpop.f32.mrb[0].mxu0
      %1928 = vmatprep.mubr.bf16.mxu0 0
      %1929 = vmatmul.mubr.bf16.gmra.mrb[0].mxu0 %v1786
      %v1930 = vpop.f32.mrb[0].mxu0
      %v1931 = vadd.f32 0.0, %v1930
      %v1932 = vpop.f32.mrb[0].mxu0
      %v1933 = vpop.f32.mrb[0].mxu0
      %v1934 = vadd.f32 0.0, %v1933
      %v1935 = vpop.f32.mrb[0].mxu0
      %1936 = vmatprep.mubr.bf16.mxu0 0
      %1937 = vmatmul.mubr.bf16.gmra.mrb[0].mxu0 %v1789
      %v1938 = vpop.f32.mrb[0].mxu0
      %v1939 = vadd.f32 0.0, %v1938
      %v1940 = vpop.f32.mrb[0].mxu0
      %v1941 = vpop.f32.mrb[0].mxu0
      %v1942 = vadd.f32 0.0, %v1941
      %v1943 = vpop.f32.mrb[0].mxu0
      %1944 = vmatprep.mubr.bf16.mxu0 0
      %1945 = vmatmul.mubr.bf16.gmra.mrb[0].mxu0 %v1792
      %v1946 = vpop.f32.mrb[0].mxu0
      %v1947 = vadd.f32 0.0, %v1946
      %v1948 = vpop.f32.mrb[0].mxu0
      %v1949 = vpop.f32.mrb[0].mxu0
      %v1950 = vadd.f32 0.0, %v1949
      %v1951 = vpop.f32.mrb[0].mxu0
      %1952 = vmatprep.mubr.bf16.mxu0 0
      %1953 = vmatmul.mubr.bf16.gmra.mrb[0].mxu0 %v1795
      %v1954 = vpop.f32.mrb[0].mxu0
      %v1955 = vadd.f32 0.0, %v1954
      %v1956 = vpop.f32.mrb[0].mxu0
      %v1957 = vpop.f32.mrb[0].mxu0
      %v1958 = vadd.f32 0.0, %v1957
      %v1959 = vpop.f32.mrb[0].mxu0
      %1960 = vdwg.mxu0
      %v1961 = vadd.f32 %v1622, %v1835
      %v1962 = vadd.f32 %v1625, %v1838
      %v1963 = vadd.f32 %v1630, %v1843
      %v1964 = vadd.f32 %v1633, %v1846
      %v1965 = vadd.f32 %v1638, %v1851
      %v1966 = vadd.f32 %v1641, %v1854
      %v1967 = vadd.f32 %v1646, %v1859
      %v1968 = vadd.f32 %v1649, %v1862
      %v1969 = vadd.f32 %v1654, %v1867
      %v1970 = vadd.f32 %v1657, %v1870
      %v1971 = vadd.f32 %v1662, %v1875
      %v1972 = vadd.f32 %v1665, %v1878
      %v1973 = vadd.f32 %v1670, %v1883
      %v1974 = vadd.f32 %v1673, %v1886
      %v1975 = vadd.f32 %v1678, %v1891
      %v1976 = vadd.f32 %v1681, %v1894
      %v1977 = vadd.f32 %v1686, %v1899
      %v1978 = vadd.f32 %v1689, %v1902
      %v1979 = vadd.f32 %v1694, %v1907
      %v1980 = vadd.f32 %v1697, %v1910
      %v1981 = vadd.f32 %v1702, %v1915
      %v1982 = vadd.f32 %v1705, %v1918
      %v1983 = vadd.f32 %v1710, %v1923
      %v1984 = vadd.f32 %v1713, %v1926
      %v1985 = vadd.f32 %v1718, %v1931
      %v1986 = vadd.f32 %v1721, %v1934
      %v1987 = vadd.f32 %v1726, %v1939
      %v1988 = vadd.f32 %v1729, %v1942
      %v1989 = vadd.f32 %v1734, %v1947
      %v1990 = vadd.f32 %v1737, %v1950
      %v1991 = vadd.f32 %v1742, %v1955
      %v1992 = vadd.f32 %v1745, %v1958
      %v1993 = vld [vmem:[%s7 + $0xc] sm:$0xf]
      %v1995 = vsel %vm1242, %v1224, 0
      %v1998 = vsel %vm1242, %v1225, 0
      %v2001 = vsel %vm1242, %v1226, 0
      %v2004 = vsel %vm1242, %v1227, 0
      %v2007 = vsel %vm1242, %v1228, 0
      %v2010 = vsel %vm1242, %v1229, 0
      %v2013 = vsel %vm1242, %v1230, 0
      %v2016 = vsel %vm1242, %v1231, 0
      %v2019 = vsel %vm1242, %v1232, 0
      %v2022 = vsel %vm1242, %v1233, 0
      %v2025 = vsel %vm1242, %v1234, 0
      %v2028 = vsel %vm1242, %v1235, 0
      %v2031 = vsel %vm1242, %v1236, 0
      %v2034 = vsel %vm1242, %v1237, 0
      %v2037 = vsel %vm1242, %v1238, 0
      %v2040 = vsel %vm1242, %v1239, 0
      %v2043 = vsel %vm1291, %v1993, 0
      %2045 = vmatprep.subr.bf16.mxu0 0
      %2046 = vmatpush1.bf16.msra.mxu0 %v2043
      %2047 = vmatprep.subr.bf16.mxu0 0
      %2048 = vmatpush1.bf16.msra.mxu0 0
      %2049 = vmatprep.subr.bf16.mxu0 0
      %2050 = vmatpush1.bf16.msra.mxu0 0
      %2051 = vmatprep.subr.bf16.mxu0 0
      %2052 = vmatpush1.bf16.msra.mxu0 0
      %2053 = vmatprep.subr.bf16.mxu0 0
      %2054 = vmatpush1.bf16.msra.mxu0 0
      %2055 = vmatprep.subr.bf16.mxu0 0
      %2056 = vmatpush1.bf16.msra.mxu0 0
      %2057 = vmatprep.subr.bf16.mxu0 0
      %2058 = vmatpush1.bf16.msra.mxu0 0
      %2059 = vmatprep.subr.bf16.mxu0 0
      %2060 = vmatpush1.bf16.msra.mxu0 0
      %2061 = vmatprep.subr.bf16.mxu0 0
      %2062 = vmatpush1.bf16.msra.mxu0 0
      %2063 = vmatprep.subr.bf16.mxu0 0
      %2064 = vmatpush1.bf16.msra.mxu0 0
      %2065 = vmatprep.subr.bf16.mxu0 0
      %2066 = vmatpush1.bf16.msra.mxu0 0
      %2067 = vmatprep.subr.bf16.mxu0 0
      %2068 = vmatpush1.bf16.msra.mxu0 0
      %2069 = vmatprep.subr.bf16.mxu0 0
      %2070 = vmatpush1.bf16.msra.mxu0 0
      %2071 = vmatprep.subr.bf16.mxu0 0
      %2072 = vmatpush1.bf16.msra.mxu0 0
      %2073 = vmatprep.subr.bf16.mxu0 0
      %2074 = vmatpush1.bf16.msra.mxu0 0
      %2075 = vmatprep.subr.bf16.mxu0 0
      %2076 = vmatpush1.bf16.msra.mxu0 0
      %2077 = vmatprep.mubr.bf16.mxu0 0
      %2078 = vmatmul.mubr.bf16.gmra.mrb[0].mxu0 %v1995
      %v2079 = vpop.f32.mrb[0].mxu0
      %v2080 = vadd.f32 0.0, %v2079
      %v2081 = vpop.f32.mrb[0].mxu0
      %v2082 = vpop.f32.mrb[0].mxu0
      %v2083 = vadd.f32 0.0, %v2082
      %v2084 = vpop.f32.mrb[0].mxu0
      %2085 = vmatprep.mubr.bf16.mxu0 0
      %2086 = vmatmul.mubr.bf16.gmra.mrb[0].mxu0 %v1998
      %v2087 = vpop.f32.mrb[0].mxu0
      %v2088 = vadd.f32 0.0, %v2087
      %v2089 = vpop.f32.mrb[0].mxu0
      %v2090 = vpop.f32.mrb[0].mxu0
      %v2091 = vadd.f32 0.0, %v2090
      %v2092 = vpop.f32.mrb[0].mxu0
      %2093 = vmatprep.mubr.bf16.mxu0 0
      %2094 = vmatmul.mubr.bf16.gmra.mrb[0].mxu0 %v2001
      %v2095 = vpop.f32.mrb[0].mxu0
      %v2096 = vadd.f32 0.0, %v2095
      %v2097 = vpop.f32.mrb[0].mxu0
      %v2098 = vpop.f32.mrb[0].mxu0
      %v2099 = vadd.f32 0.0, %v2098
      %v2100 = vpop.f32.mrb[0].mxu0
      %2101 = vmatprep.mubr.bf16.mxu0 0
      %2102 = vmatmul.mubr.bf16.gmra.mrb[0].mxu0 %v2004
      %v2103 = vpop.f32.mrb[0].mxu0
      %v2104 = vadd.f32 0.0, %v2103
      %v2105 = vpop.f32.mrb[0].mxu0
      %v2106 = vpop.f32.mrb[0].mxu0
      %v2107 = vadd.f32 0.0, %v2106
      %v2108 = vpop.f32.mrb[0].mxu0
      %2109 = vmatprep.mubr.bf16.mxu0 0
      %2110 = vmatmul.mubr.bf16.gmra.mrb[0].mxu0 %v2007
      %v2111 = vpop.f32.mrb[0].mxu0
      %v2112 = vadd.f32 0.0, %v2111
      %v2113 = vpop.f32.mrb[0].mxu0
      %v2114 = vpop.f32.mrb[0].mxu0
      %v2115 = vadd.f32 0.0, %v2114
      %v2116 = vpop.f32.mrb[0].mxu0
      %2117 = vmatprep.mubr.bf16.mxu0 0
      %2118 = vmatmul.mubr.bf16.gmra.mrb[0].mxu0 %v2010
      %v2119 = vpop.f32.mrb[0].mxu0
      %v2120 = vadd.f32 0.0, %v2119
      %v2121 = vpop.f32.mrb[0].mxu0
      %v2122 = vpop.f32.mrb[0].mxu0
      %v2123 = vadd.f32 0.0, %v2122
      %v2124 = vpop.f32.mrb[0].mxu0
      %2125 = vmatprep.mubr.bf16.mxu0 0
      %2126 = vmatmul.mubr.bf16.gmra.mrb[0].mxu0 %v2013
      %v2127 = vpop.f32.mrb[0].mxu0
      %v2128 = vadd.f32 0.0, %v2127
      %v2129 = vpop.f32.mrb[0].mxu0
      %v2130 = vpop.f32.mrb[0].mxu0
      %v2131 = vadd.f32 0.0, %v2130
      %v2132 = vpop.f32.mrb[0].mxu0
      %2133 = vmatprep.mubr.bf16.mxu0 0
      %2134 = vmatmul.mubr.bf16.gmra.mrb[0].mxu0 %v2016
      %v2135 = vpop.f32.mrb[0].mxu0
      %v2136 = vadd.f32 0.0, %v2135
      %v2137 = vpop.f32.mrb[0].mxu0
      %v2138 = vpop.f32.mrb[0].mxu0
      %v2139 = vadd.f32 0.0, %v2138
      %v2140 = vpop.f32.mrb[0].mxu0
      %2141 = vmatprep.mubr.bf16.mxu0 0
      %2142 = vmatmul.mubr.bf16.gmra.mrb[0].mxu0 %v2019
      %v2143 = vpop.f32.mrb[0].mxu0
      %v2144 = vadd.f32 0.0, %v2143
      %v2145 = vpop.f32.mrb[0].mxu0
      %v2146 = vpop.f32.mrb[0].mxu0
      %v2147 = vadd.f32 0.0, %v2146
      %v2148 = vpop.f32.mrb[0].mxu0
      %2149 = vmatprep.mubr.bf16.mxu0 0
      %2150 = vmatmul.mubr.bf16.gmra.mrb[0].mxu0 %v2022
      %v2151 = vpop.f32.mrb[0].mxu0
      %v2152 = vadd.f32 0.0, %v2151
      %v2153 = vpop.f32.mrb[0].mxu0
      %v2154 = vpop.f32.mrb[0].mxu0
      %v2155 = vadd.f32 0.0, %v2154
      %v2156 = vpop.f32.mrb[0].mxu0
      %2157 = vmatprep.mubr.bf16.mxu0 0
      %2158 = vmatmul.mubr.bf16.gmra.mrb[0].mxu0 %v2025
      %v2159 = vpop.f32.mrb[0].mxu0
      %v2160 = vadd.f32 0.0, %v2159
      %v2161 = vpop.f32.mrb[0].mxu0
      %v2162 = vpop.f32.mrb[0].mxu0
      %v2163 = vadd.f32 0.0, %v2162
      %v2164 = vpop.f32.mrb[0].mxu0
      %2165 = vmatprep.mubr.bf16.mxu0 0
      %2166 = vmatmul.mubr.bf16.gmra.mrb[0].mxu0 %v2028
      %v2167 = vpop.f32.mrb[0].mxu0
      %v2168 = vadd.f32 0.0, %v2167
      %v2169 = vpop.f32.mrb[0].mxu0
      %v2170 = vpop.f32.mrb[0].mxu0
      %v2171 = vadd.f32 0.0, %v2170
      %v2172 = vpop.f32.mrb[0].mxu0
      %2173 = vmatprep.mubr.bf16.mxu0 0
      %2174 = vmatmul.mubr.bf16.gmra.mrb[0].mxu0 %v2031
      %v2175 = vpop.f32.mrb[0].mxu0
      %v2176 = vadd.f32 0.0, %v2175
      %v2177 = vpop.f32.mrb[0].mxu0
      %v2178 = vpop.f32.mrb[0].mxu0
      %v2179 = vadd.f32 0.0, %v2178
      %v2180 = vpop.f32.mrb[0].mxu0
      %2181 = vmatprep.mubr.bf16.mxu0 0
      %2182 = vmatmul.mubr.bf16.gmra.mrb[0].mxu0 %v2034
      %v2183 = vpop.f32.mrb[0].mxu0
      %v2184 = vadd.f32 0.0, %v2183
      %v2185 = vpop.f32.mrb[0].mxu0
      %v2186 = vpop.f32.mrb[0].mxu0
      %v2187 = vadd.f32 0.0, %v2186
      %v2188 = vpop.f32.mrb[0].mxu0
      %2189 = vmatprep.mubr.bf16.mxu0 0
      %2190 = vmatmul.mubr.bf16.gmra.mrb[0].mxu0 %v2037
      %v2191 = vpop.f32.mrb[0].mxu0
      %v2192 = vadd.f32 0.0, %v2191
      %v2193 = vpop.f32.mrb[0].mxu0
      %v2194 = vpop.f32.mrb[0].mxu0
      %v2195 = vadd.f32 0.0, %v2194
      %v2196 = vpop.f32.mrb[0].mxu0
      %2197 = vmatprep.mubr.bf16.mxu0 0
      %2198 = vmatmul.mubr.bf16.gmra.mrb[0].mxu0 %v2040
      %v2199 = vpop.f32.mrb[0].mxu0
      %v2200 = vadd.f32 0.0, %v2199
      %v2201 = vpop.f32.mrb[0].mxu0
      %v2202 = vpop.f32.mrb[0].mxu0
      %v2203 = vadd.f32 0.0, %v2202
      %v2204 = vpop.f32.mrb[0].mxu0
      %2205 = vdwg.mxu0
      %v2206 = vadd.f32 %v1961, %v2080
      %v2207 = vadd.f32 %v1962, %v2083
      %v2208 = vadd.f32 %v1963, %v2088
      %v2209 = vadd.f32 %v1964, %v2091
      %v2210 = vadd.f32 %v1965, %v2096
      %v2211 = vadd.f32 %v1966, %v2099
      %v2212 = vadd.f32 %v1967, %v2104
      %v2213 = vadd.f32 %v1968, %v2107
      %v2214 = vadd.f32 %v1969, %v2112
      %v2215 = vadd.f32 %v1970, %v2115
      %v2216 = vadd.f32 %v1971, %v2120
      %v2217 = vadd.f32 %v1972, %v2123
      %v2218 = vadd.f32 %v1973, %v2128
      %v2219 = vadd.f32 %v1974, %v2131
      %v2220 = vadd.f32 %v1975, %v2136
      %v2221 = vadd.f32 %v1976, %v2139
      %v2222 = vadd.f32 %v1977, %v2144
      %v2223 = vadd.f32 %v1978, %v2147
      %v2224 = vadd.f32 %v1979, %v2152
      %v2225 = vadd.f32 %v1980, %v2155
      %v2226 = vadd.f32 %v1981, %v2160
      %v2227 = vadd.f32 %v1982, %v2163
      %v2228 = vadd.f32 %v1983, %v2168
      %v2229 = vadd.f32 %v1984, %v2171
      %v2230 = vadd.f32 %v1985, %v2176
      %v2231 = vadd.f32 %v1986, %v2179
      %v2232 = vadd.f32 %v1987, %v2184
      %v2233 = vadd.f32 %v1988, %v2187
      %v2234 = vadd.f32 %v1989, %v2192
      %v2235 = vadd.f32 %v1990, %v2195
      %v2236 = vadd.f32 %v1991, %v2200
      %v2237 = vadd.f32 %v1992, %v2203
      %v2238 = vld [vmem:[%s8] sm:$0x1]
      %v2239 = vld [vmem:[%s9] sm:$0x1]
      %v2241 = vlaneseq
      %v2242 = vshrl.u32 %v2241, 7
      %v2243 = vsub.s32 0, %v2242
      %v2244 = vrot.slane %v2238, %v2243
      %v2246 = vmul.f32 %v2206, %v2244
      %v2247 = vmul.f32 %v2207, %v2244
      %v2248 = vmul.f32 %v2208, %v2244
      %v2249 = vmul.f32 %v2209, %v2244
      %v2250 = vmul.f32 %v2210, %v2244
      %v2251 = vmul.f32 %v2211, %v2244
      %v2252 = vmul.f32 %v2212, %v2244
      %v2253 = vmul.f32 %v2213, %v2244
      %v2254 = vmul.f32 %v2214, %v2244
      %v2255 = vmul.f32 %v2215, %v2244
      %v2256 = vmul.f32 %v2216, %v2244
      %v2257 = vmul.f32 %v2217, %v2244
      %v2258 = vmul.f32 %v2218, %v2244
      %v2259 = vmul.f32 %v2219, %v2244
      %v2260 = vmul.f32 %v2220, %v2244
      %v2261 = vmul.f32 %v2221, %v2244
      %v2262 = vmul.f32 %v2222, %v2244
      %v2263 = vmul.f32 %v2223, %v2244
      %v2264 = vmul.f32 %v2224, %v2244
      %v2265 = vmul.f32 %v2225, %v2244
      %v2266 = vmul.f32 %v2226, %v2244
      %v2267 = vmul.f32 %v2227, %v2244
      %v2268 = vmul.f32 %v2228, %v2244
      %v2269 = vmul.f32 %v2229, %v2244
      %v2270 = vmul.f32 %v2230, %v2244
      %v2271 = vmul.f32 %v2231, %v2244
      %v2272 = vmul.f32 %v2232, %v2244
      %v2273 = vmul.f32 %v2233, %v2244
      %v2274 = vmul.f32 %v2234, %v2244
      %v2275 = vmul.f32 %v2235, %v2244
      %v2276 = vmul.f32 %v2236, %v2244
      %v2277 = vmul.f32 %v2237, %v2244
      %v2279 = vlaneseq
      %v2280 = vshrl.u32 %v2279, 7
      %v2281 = vsub.s32 0, %v2280
      %v2282 = vrot.slane %v2239, %v2281
      %v2284 = vadd.f32 %v2246, %v2282
      %v2285 = vadd.f32 %v2247, %v2282
      %v2286 = vadd.f32 %v2248, %v2282
      %v2287 = vadd.f32 %v2249, %v2282
      %v2288 = vadd.f32 %v2250, %v2282
      %v2289 = vadd.f32 %v2251, %v2282
      %v2290 = vadd.f32 %v2252, %v2282
      %v2291 = vadd.f32 %v2253, %v2282
      %v2292 = vadd.f32 %v2254, %v2282
      %v2293 = vadd.f32 %v2255, %v2282
      %v2294 = vadd.f32 %v2256, %v2282
      %v2295 = vadd.f32 %v2257, %v2282
      %v2296 = vadd.f32 %v2258, %v2282
      %v2297 = vadd.f32 %v2259, %v2282
      %v2298 = vadd.f32 %v2260, %v2282
      %v2299 = vadd.f32 %v2261, %v2282
      %v2300 = vadd.f32 %v2262, %v2282
      %v2301 = vadd.f32 %v2263, %v2282
      %v2302 = vadd.f32 %v2264, %v2282
      %v2303 = vadd.f32 %v2265, %v2282
      %v2304 = vadd.f32 %v2266, %v2282
      %v2305 = vadd.f32 %v2267, %v2282
      %v2306 = vadd.f32 %v2268, %v2282
      %v2307 = vadd.f32 %v2269, %v2282
      %v2308 = vadd.f32 %v2270, %v2282
      %v2309 = vadd.f32 %v2271, %v2282
      %v2310 = vadd.f32 %v2272, %v2282
      %v2311 = vadd.f32 %v2273, %v2282
      %v2312 = vadd.f32 %v2274, %v2282
      %v2313 = vadd.f32 %v2275, %v2282
      %v2314 = vadd.f32 %v2276, %v2282
      %v2315 = vadd.f32 %v2277, %v2282
      %v2316 = vsub.f32 0.0, %v2284
      %v2317 = vsub.f32 0.0, %v2285
      %v2318 = vsub.f32 0.0, %v2286
      %v2319 = vsub.f32 0.0, %v2287
      %v2320 = vsub.f32 0.0, %v2288
      %v2321 = vsub.f32 0.0, %v2289
      %v2322 = vsub.f32 0.0, %v2290
      %v2323 = vsub.f32 0.0, %v2291
      %v2324 = vsub.f32 0.0, %v2292
      %v2325 = vsub.f32 0.0, %v2293
      %v2326 = vsub.f32 0.0, %v2294
      %v2327 = vsub.f32 0.0, %v2295
      %v2328 = vsub.f32 0.0, %v2296
      %v2329 = vsub.f32 0.0, %v2297
      %v2330 = vsub.f32 0.0, %v2298
      %v2331 = vsub.f32 0.0, %v2299
      %v2332 = vsub.f32 0.0, %v2300
      %v2333 = vsub.f32 0.0, %v2301
      %v2334 = vsub.f32 0.0, %v2302
      %v2335 = vsub.f32 0.0, %v2303
      %v2336 = vsub.f32 0.0, %v2304
      %v2337 = vsub.f32 0.0, %v2305
      %v2338 = vsub.f32 0.0, %v2306
      %v2339 = vsub.f32 0.0, %v2307
      %v2340 = vsub.f32 0.0, %v2308
      %v2341 = vsub.f32 0.0, %v2309
      %v2342 = vsub.f32 0.0, %v2310
      %v2343 = vsub.f32 0.0, %v2311
      %v2344 = vsub.f32 0.0, %v2312
      %v2345 = vsub.f32 0.0, %v2313
      %v2346 = vsub.f32 0.0, %v2314
      %v2347 = vsub.f32 0.0, %v2315
      %v2348 = vmul.f32 %v2316, 1.442695
      %v2349 = vpow.pop %v2348
      %v2350 = vmul.f32 %v2317, 1.442695
      %v2351 = vpow.pop %v2350
      %v2352 = vmul.f32 %v2318, 1.442695
      %v2353 = vpow.pop %v2352
      %v2354 = vmul.f32 %v2319, 1.442695
      %v2355 = vpow.pop %v2354
      %v2356 = vmul.f32 %v2320, 1.442695
      %v2357 = vpow.pop %v2356
      %v2358 = vmul.f32 %v2321, 1.442695
      %v2359 = vpow.pop %v2358
      %v2360 = vmul.f32 %v2322, 1.442695
      %v2361 = vpow.pop %v2360
      %v2362 = vmul.f32 %v2323, 1.442695
      %v2363 = vpow.pop %v2362
      %v2364 = vmul.f32 %v2324, 1.442695
      %v2365 = vpow.pop %v2364
      %v2366 = vmul.f32 %v2325, 1.442695
      %v2367 = vpow.pop %v2366
      %v2368 = vmul.f32 %v2326, 1.442695
      %v2369 = vpow.pop %v2368
      %v2370 = vmul.f32 %v2327, 1.442695
      %v2371 = vpow.pop %v2370
      %v2372 = vmul.f32 %v2328, 1.442695
      %v2373 = vpow.pop %v2372
      %v2374 = vmul.f32 %v2329, 1.442695
      %v2375 = vpow.pop %v2374
      %v2376 = vmul.f32 %v2330, 1.442695
      %v2377 = vpow.pop %v2376
      %v2378 = vmul.f32 %v2331, 1.442695
      %v2379 = vpow.pop %v2378
      %v2380 = vmul.f32 %v2332, 1.442695
      %v2381 = vpow.pop %v2380
      %v2382 = vmul.f32 %v2333, 1.442695
      %v2383 = vpow.pop %v2382
      %v2384 = vmul.f32 %v2334, 1.442695
      %v2385 = vpow.pop %v2384
      %v2386 = vmul.f32 %v2335, 1.442695
      %v2387 = vpow.pop %v2386
      %v2388 = vmul.f32 %v2336, 1.442695
      %v2389 = vpow.pop %v2388
      %v2390 = vmul.f32 %v2337, 1.442695
      %v2391 = vpow.pop %v2390
      %v2392 = vmul.f32 %v2338, 1.442695
      %v2393 = vpow.pop %v2392
      %v2394 = vmul.f32 %v2339, 1.442695
      %v2395 = vpow.pop %v2394
      %v2396 = vmul.f32 %v2340, 1.442695
      %v2397 = vpow.pop %v2396
      %v2398 = vmul.f32 %v2341, 1.442695
      %v2399 = vpow.pop %v2398
      %v2400 = vmul.f32 %v2342, 1.442695
      %v2401 = vpow.pop %v2400
      %v2402 = vmul.f32 %v2343, 1.442695
      %v2403 = vpow.pop %v2402
      %v2404 = vmul.f32 %v2344, 1.442695
      %v2405 = vpow.pop %v2404
      %v2406 = vmul.f32 %v2345, 1.442695
      %v2407 = vpow.pop %v2406
      %v2408 = vmul.f32 %v2346, 1.442695
      %v2409 = vpow.pop %v2408
      %v2410 = vmul.f32 %v2347, 1.442695
      %v2411 = vpow.pop %v2410
      %v2412 = vadd.f32 %v2349, 1.0
      %v2413 = vadd.f32 %v2351, 1.0
      %v2414 = vadd.f32 %v2353, 1.0
      %v2415 = vadd.f32 %v2355, 1.0
      %v2416 = vadd.f32 %v2357, 1.0
      %v2417 = vadd.f32 %v2359, 1.0
      %v2418 = vadd.f32 %v2361, 1.0
      %v2419 = vadd.f32 %v2363, 1.0
      %v2420 = vadd.f32 %v2365, 1.0
      %v2421 = vadd.f32 %v2367, 1.0
      %v2422 = vadd.f32 %v2369, 1.0
      %v2423 = vadd.f32 %v2371, 1.0
      %v2424 = vadd.f32 %v2373, 1.0
      %v2425 = vadd.f32 %v2375, 1.0
      %v2426 = vadd.f32 %v2377, 1.0
      %v2427 = vadd.f32 %v2379, 1.0
      %v2428 = vadd.f32 %v2381, 1.0
      %v2429 = vadd.f32 %v2383, 1.0
      %v2430 = vadd.f32 %v2385, 1.0
      %v2431 = vadd.f32 %v2387, 1.0
      %v2432 = vadd.f32 %v2389, 1.0
      %v2433 = vadd.f32 %v2391, 1.0
      %v2434 = vadd.f32 %v2393, 1.0
      %v2435 = vadd.f32 %v2395, 1.0
      %v2436 = vadd.f32 %v2397, 1.0
      %v2437 = vadd.f32 %v2399, 1.0
      %v2438 = vadd.f32 %v2401, 1.0
      %v2439 = vadd.f32 %v2403, 1.0
      %v2440 = vadd.f32 %v2405, 1.0
      %v2441 = vadd.f32 %v2407, 1.0
      %v2442 = vadd.f32 %v2409, 1.0
      %v2443 = vadd.f32 %v2411, 1.0
      %v2444 = vrcp.pop %v2412
      %v2445 = vrcp.pop %v2413
      %v2446 = vrcp.pop %v2414
      %v2447 = vrcp.pop %v2415
      %v2448 = vrcp.pop %v2416
      %v2449 = vrcp.pop %v2417
      %v2450 = vrcp.pop %v2418
      %v2451 = vrcp.pop %v2419
      %v2452 = vrcp.pop %v2420
      %v2453 = vrcp.pop %v2421
      %v2454 = vrcp.pop %v2422
      %v2455 = vrcp.pop %v2423
      %v2456 = vrcp.pop %v2424
      %v2457 = vrcp.pop %v2425
      %v2458 = vrcp.pop %v2426
      %v2459 = vrcp.pop %v2427
      %v2460 = vrcp.pop %v2428
      %v2461 = vrcp.pop %v2429
      %v2462 = vrcp.pop %v2430
      %v2463 = vrcp.pop %v2431
      %v2464 = vrcp.pop %v2432
      %v2465 = vrcp.pop %v2433
      %v2466 = vrcp.pop %v2434
      %v2467 = vrcp.pop %v2435
      %v2468 = vrcp.pop %v2436
      %v2469 = vrcp.pop %v2437
      %v2470 = vrcp.pop %v2438
      %v2471 = vrcp.pop %v2439
      %v2472 = vrcp.pop %v2440
      %v2473 = vrcp.pop %v2441
      %v2474 = vrcp.pop %v2442
      %v2475 = vrcp.pop %v2443
      %v2476 = vmul.f32 %v2284, %v2444
      %v2477 = vmul.f32 %v2285, %v2445
      %v2478 = vmul.f32 %v2286, %v2446
      %v2479 = vmul.f32 %v2287, %v2447
      %v2480 = vmul.f32 %v2288, %v2448
      %v2481 = vmul.f32 %v2289, %v2449
      %v2482 = vmul.f32 %v2290, %v2450
      %v2483 = vmul.f32 %v2291, %v2451
      %v2484 = vmul.f32 %v2292, %v2452
      %v2485 = vmul.f32 %v2293, %v2453
      %v2486 = vmul.f32 %v2294, %v2454
      %v2487 = vmul.f32 %v2295, %v2455
      %v2488 = vmul.f32 %v2296, %v2456
      %v2489 = vmul.f32 %v2297, %v2457
      %v2490 = vmul.f32 %v2298, %v2458
      %v2491 = vmul.f32 %v2299, %v2459
      %v2492 = vmul.f32 %v2300, %v2460
      %v2493 = vmul.f32 %v2301, %v2461
      %v2494 = vmul.f32 %v2302, %v2462
      %v2495 = vmul.f32 %v2303, %v2463
      %v2496 = vmul.f32 %v2304, %v2464
      %v2497 = vmul.f32 %v2305, %v2465
      %v2498 = vmul.f32 %v2306, %v2466
      %v2499 = vmul.f32 %v2307, %v2467
      %v2500 = vmul.f32 %v2308, %v2468
      %v2501 = vmul.f32 %v2309, %v2469
      %v2502 = vmul.f32 %v2310, %v2470
      %v2503 = vmul.f32 %v2311, %v2471
      %v2504 = vmul.f32 %v2312, %v2472
      %v2505 = vmul.f32 %v2313, %v2473
      %v2506 = vmul.f32 %v2314, %v2474
      %v2507 = vmul.f32 %v2315, %v2475
      %vm2508 = vcmask 130048
      %2509 = vst.msk [vmem:[%s461] sm:$0xff] %vm2508, %v2476
      %2510 = vst.msk [vmem:[%s461 + $0x8] sm:$0xff] %vm2508, %v2477
      %2511 = vst.msk [vmem:[%s461 + $0x10] sm:$0xff] %vm2508, %v2478
      %2512 = vst.msk [vmem:[%s461 + $0x18] sm:$0xff] %vm2508, %v2479
      %2513 = vst.msk [vmem:[%s461 + $0x20] sm:$0xff] %vm2508, %v2480
      %2514 = vst.msk [vmem:[%s461 + $0x28] sm:$0xff] %vm2508, %v2481
      %2515 = vst.msk [vmem:[%s461 + $0x30] sm:$0xff] %vm2508, %v2482
      %2516 = vst.msk [vmem:[%s461 + $0x38] sm:$0xff] %vm2508, %v2483
      %2517 = vst.msk [vmem:[%s461 + $0x40] sm:$0xff] %vm2508, %v2484
      %2518 = vst.msk [vmem:[%s461 + $0x48] sm:$0xff] %vm2508, %v2485
      %2519 = vst.msk [vmem:[%s461 + $0x50] sm:$0xff] %vm2508, %v2486
      %2520 = vst.msk [vmem:[%s461 + $0x58] sm:$0xff] %vm2508, %v2487
      %2521 = vst.msk [vmem:[%s461 + $0x60] sm:$0xff] %vm2508, %v2488
      %2522 = vst.msk [vmem:[%s461 + $0x68] sm:$0xff] %vm2508, %v2489
      %2523 = vst.msk [vmem:[%s461 + $0x70] sm:$0xff] %vm2508, %v2490
      %2524 = vst.msk [vmem:[%s461 + $0x78] sm:$0xff] %vm2508, %v2491
      %2525 = vst.msk [vmem:[%s461 + $0x80] sm:$0xff] %vm2508, %v2492
      %2526 = vst.msk [vmem:[%s461 + $0x88] sm:$0xff] %vm2508, %v2493
      %2527 = vst.msk [vmem:[%s461 + $0x90] sm:$0xff] %vm2508, %v2494
      %2528 = vst.msk [vmem:[%s461 + $0x98] sm:$0xff] %vm2508, %v2495
      %2529 = vst.msk [vmem:[%s461 + $0xa0] sm:$0xff] %vm2508, %v2496
      %2530 = vst.msk [vmem:[%s461 + $0xa8] sm:$0xff] %vm2508, %v2497
      %2531 = vst.msk [vmem:[%s461 + $0xb0] sm:$0xff] %vm2508, %v2498
      %2532 = vst.msk [vmem:[%s461 + $0xb8] sm:$0xff] %vm2508, %v2499
      %2533 = vst.msk [vmem:[%s461 + $0xc0] sm:$0xff] %vm2508, %v2500
      %2534 = vst.msk [vmem:[%s461 + $0xc8] sm:$0xff] %vm2508, %v2501
      %2535 = vst.msk [vmem:[%s461 + $0xd0] sm:$0xff] %vm2508, %v2502
      %2536 = vst.msk [vmem:[%s461 + $0xd8] sm:$0xff] %vm2508, %v2503
      %2537 = vst.msk [vmem:[%s461 + $0xe0] sm:$0xff] %vm2508, %v2504
      %2538 = vst.msk [vmem:[%s461 + $0xe8] sm:$0xff] %vm2508, %v2505
      %2539 = vst.msk [vmem:[%s461 + $0xf0] sm:$0xff] %vm2508, %v2506
      %2540 = vst.msk [vmem:[%s461 + $0xf8] sm:$0xff] %vm2508, %v2507
      %p2541 = scmp.lt.s32.totalorder %s21, 1
      %s2542 = scalar_select %p2541, %s21, 1
      %s2543 = smul.addr %s2542, 32
      %s2544 = smul.addr %s2543, 8
      %s2545 = scalar_lea.vmem %s10, %s2544
      // Predicated region
      $region61: #{spp_bottleneck_pallas.7} parent=59 // pred_check
        %p2546 = pneg %p284
      $region62: #{spp_bottleneck_pallas.7} parent=59 // pred_check_branch
        %2548 = sbr.rel (%p2546) target = $region64
      $region63: #{spp_bottleneck_pallas.7} parent=59 // pred_region
        _
      $region64: #{spp_bottleneck_pallas.7} parent=59 // pred_fallthru
        _
    $region60: #{spp_bottleneck_pallas.7} parent=5 // pred_fallthru
      _
    %p2549 = scmp.le.s32.totalorder 2, %s16
    // Predicated region
    $region65: #{spp_bottleneck_pallas.7} parent=5 // pred_check
      %p2550 = pneg %p2549
    $region66: #{spp_bottleneck_pallas.7} parent=5 // pred_check_branch
      %2552 = sbr.rel (%p2550) target = $region68
    $region67: #{spp_bottleneck_pallas.7} parent=5 // pred_region
      %s2553 = ssub.s32 %s16, 2
      // Predicated region
      $region69: #{spp_bottleneck_pallas.7} parent=67 // pred_check
        %p2554 = pneg %p290
      $region70: #{spp_bottleneck_pallas.7} parent=67 // pred_check_branch
        %2556 = sbr.rel (%p2554) target = $region72
      $region71: #{spp_bottleneck_pallas.7} parent=67 // pred_region
        %p2557 = scmp.lt.s32.totalorder %s22, 1
        %s2558 = scalar_select %p2557, %s22, 1
        %s2559 = smul.addr %s2558, 32
        %s2560 = smul.addr %s2559, 8
        %s2561 = scalar_lea.vmem %s10, %s2560
      $region72: #{spp_bottleneck_pallas.7} parent=67 // pred_fallthru
        _
    $region68: #{spp_bottleneck_pallas.7} parent=5 // pred_fallthru
      _
  $region6: #{spp_bottleneck_pallas.7} parent=0 // loop_footer
    %s20 = sadd.s32 1, %s16
  $region7: #{spp_bottleneck_pallas.7} parent=0 // loop_footer_branch
    %15 = sbr.rel target = $region3
  $region8: #{spp_bottleneck_pallas.7} parent=0 // loop_exit
    _

</llo_original>
